<compile_context>
chip_gen: v7x
topology: tpu7x:2x2x1
jax: 0.10.0
libtpu: 0.0.40
codegen_flags: <defaults>
</compile_context>

<pallas_src>
import jax
import jax.numpy as jnp
from jax.experimental import pallas as pl
from jax.experimental.pallas import tpu as pltpu


# --------------------------- fused Pallas kernel ----------------------------

def _make_fused_kernel(plan, NR, H):
    """Build the single fused kernel.  `plan` holds only static metadata."""

    def kernel(x_ref, mask_ref, pool_ref, *rest):
        o_ref, feat_buf, tmp_buf = rest[-3], rest[-2], rest[-1]
        param_refs = rest[:-3]

        # Zero the halo-extended feature scratches once (halo rows must stay 0).
        feat_buf[...] = jnp.zeros_like(feat_buf)
        tmp_buf[...] = jnp.zeros_like(tmp_buf)
        mask = mask_ref[...]                                    # (NR, 1)

        pi = 0
        for op in plan:
            args = param_refs[pi:pi + op["n_args"]]
            pi += op["n_args"]
            kind = op["kind"]

            if kind == "trans":                                 # 1x1 conv + act
                if op["src"] == "input":
                    src = x_ref[...]
                else:
                    src = feat_buf[H:H + NR, 0:op["cin"]]
                y = jnp.dot(src, args[0][...],
                            preferred_element_type=jnp.float32)
                if op["alpha_zero"]:
                    y = jnp.maximum(y, 0.0)
                else:
                    y = jnp.where(y > 0, y, args[1][...] * y)
                # act(0) == 0, so the per-sample halo rows stay zero.
                feat_buf[H:H + NR, 0:op["cout"]] = y

            elif kind == "conv":                                # fused branch pass
                cin, growth = op["cin"], op["growth"]
                src_buf = feat_buf if op["src"] == "feats" else tmp_buf
                acc = None
                for oi, off in enumerate(op["offsets"]):
                    xs = src_buf[H + off:H + off + NR, 0:cin]   # shifted slab
                    wb = args[0][oi * cin:(oi + 1) * cin, :]    # packed taps
                    d = jnp.dot(xs, wb, preferred_element_type=jnp.float32)
                    acc = d if acc is None else acc + d
                y = acc + args[1][...]                          # folded bias + BN
                if op["alpha_zero"]:
                    y = jnp.maximum(y, 0.0)
                else:
                    y = jnp.where(y > 0, y, args[2][...] * y)
                y = y * mask                                    # re-zero halo rows
                if op["dst"] == "tmp":
                    tmp_buf[H:H + NR, 0:growth] = y
                else:                                           # dense concat slab
                    c0 = op["dst"]
                    feat_buf[H:H + NR, c0:c0 + growth] = y

            else:                                               # head
                feats = feat_buf[H:H + NR, 0:op["cin"]]         # (NR, F)
                mean = jnp.dot(pool_ref[...], feats,
                               preferred_element_type=jnp.float32)  # (B, F)
                o_ref[...] = (jnp.dot(mean, args[0][...],
                                      preferred_element_type=jnp.float32)
                              + args[1][...])

    return kernel


# ------------------------------ fused forward -------------------------------

def dense_tcn_forward_pallas(params, x, lengths, B_arg, cfg):
    """Mirrors DenseTCN.forward(x, lengths, B).  x: (B, T, input_size)."""
    del B_arg  # unused, as in the PyTorch module
    B, T, Cin = x.shape
    ks, ds = cfg["kernel_size_set"], cfg["dilation_size_set"]
    branches = [(k, d) for k in ks for d in ds]
    relu_zero = cfg["relu_type"] == "relu"
    R = cfg["reduced_size"]
    NC = cfg["num_classes"]

    offsets = tuple(sorted({j * d - (k - 1) // 2 * d
                            for (k, d) in branches for j in range(k)}))
    H = max((k - 1) // 2 * d for (k, d) in branches)   # global max halo
    # per-sample row stride, sublane (8) aligned; trailing pad rows >= H zeros
    P = ((T + 2 * H + 7) // 8) * 8
    NR = B * P

    # ----- trace-time packing: fold BN into conv weights, pack branches -----
    def pack_pass(branch_params, cin):
        cb = branch_params[0]["w"].shape[-1]
        growth = cb * len(branch_params)
        off_idx = {o: i for i, o in enumerate(offsets)}
        wp = jnp.zeros((len(offsets) * cin, growth), jnp.float32)
        shifts, alphas = [], []
        for bidx, ((k, d), p) in enumerate(zip(branches, branch_params)):
            assert p["w"].shape[1] == cin
            halo = (k - 1) // 2 * d
            w_sc = p["w"] * p["scale"][0][None, None, :]        # fold BN scale
            col = bidx * cb
            for j in range(k):
                oi = off_idx[j * d - halo]
                wp = wp.at[oi * cin:(oi + 1) * cin, col:col + cb].set(w_sc[j])
            shifts.append(p["b"] * p["scale"] + p["shift"])     # fold bias + BN
            alphas.append(p["alpha"])
        return (wp, jnp.concatenate(shifts, axis=-1),
                jnp.concatenate(alphas, axis=-1), growth)

    plan, flat = [], []

    def add_trans(tp, cin, src, alpha_zero):
        plan.append(dict(kind="trans", src=src, cin=cin,
                         cout=tp["w"].shape[1], alpha_zero=alpha_zero,
                         n_args=1 if alpha_zero else 2))
        flat.append(tp["w"])
        if not alpha_zero:
            flat.append(tp["alpha"])

    def add_conv(branch_params, cin, src, dst, alpha_zero):
        wp, shift, alpha, growth = pack_pass(branch_params, cin)
        plan.append(dict(kind="conv", src=src, dst=dst, cin=cin, growth=growth,
                         offsets=offsets, alpha_zero=alpha_zero,
                         n_args=2 if alpha_zero else 3))
        flat.extend([wp, shift])
        if not alpha_zero:
            flat.append(alpha)
        return growth

    # transition 0 (reference trunk hard-codes PReLU here)
    add_trans(params["trans"][0], Cin, "input", alpha_zero=False)
    cur = R
    f_max, g_max = R, 8
    for bi, num_layers in enumerate(cfg["block_config"]):
        for li in range(num_layers):
            lp = params["blocks"][bi][li]
            g = add_conv(lp["pass0"], cur, "feats", "tmp", relu_zero)
            g = add_conv(lp["pass1"], g, "tmp", cur, relu_zero)
            cur += g
            g_max = max(g_max, g)
            f_max = max(f_max, cur)
        if bi != len(cfg["block_config"]) - 1:
            add_trans(params["trans"][bi + 1], cur, "feats", relu_zero)
            cur = R

    # head: fold the final (eval-mode) BatchNorm into the Linear layer
    # (valid for lengths >= 1, which the masked-mean guard enforces)
    fcw_eff = params["fc_w"] * params["bn_scale"][0][:, None]
    fcb_eff = params["fc_b"] + params["bn_shift"] @ params["fc_w"]
    plan.append(dict(kind="head", cin=cur, n_args=2))
    flat.extend([fcw_eff, fcb_eff])

    # ----- runtime tensors in padded-flat layout (built with cheap XLA ops) --
    x_flat = jnp.pad(x.astype(jnp.float32),
                     ((0, 0), (H, P - T - H), (0, 0))).reshape(NR, Cin)
    tpos = jnp.arange(P) - H
    interior = ((tpos >= 0) & (tpos < T)).astype(jnp.float32)          # (P,)
    interior_mask = jnp.tile(interior, B).reshape(NR, 1)
    lens = lengths.astype(jnp.float32)
    denom = jnp.clip(lens, 1.0, float(T))                              # guard
    w_pool = (interior[None, :]
              * (tpos[None, :] < lens[:, None]).astype(jnp.float32)
              ) / denom[:, None]                                       # (B, P)
    pool = (jnp.eye(B, dtype=jnp.float32)[:, :, None]
            * w_pool[:, None, :]).reshape(B, NR)                       # (B, NR)

    kernel = _make_fused_kernel(tuple(plan), NR, H)
    # Single call, no grid: the whole net is VMEM-resident (well under any VMEM
    # budget, incl. v7x's 64 MiB).  With no grid there is nothing to shard, so
    # no dimension_semantics are needed for megacore.
    return pl.pallas_call(
        kernel,
        out_shape=jax.ShapeDtypeStruct((B, NC), jnp.float32),
        scratch_shapes=[pltpu.VMEM((NR + 2 * H, f_max), jnp.float32),
                        pltpu.VMEM((NR + 2 * H, g_max), jnp.float32)],
    )(x_flat, interior_mask, pool, *flat)


# ----------------------- plain-JAX reference (sanity) -----------------------

def conv_bn_act_ref(x, w, b, scale, shift, alpha, dilation):
    B, T, _ = x.shape
    K = w.shape[0]
    halo = (K - 1) // 2 * dilation
    xpad = jnp.pad(x, ((0, 0), (halo, halo), (0, 0)))
    acc = jnp.zeros((B, T, w.shape[-1]), jnp.float32)
    for j in range(K):
        s = j * dilation
        acc = acc + jnp.einsum("btc,co->bto", xpad[:, s:s + T, :], w[j],
                               precision=jax.lax.Precision.HIGHEST)
    y = (acc + b) * scale + shift
    return jnp.maximum(y, 0.0) + alpha * jnp.minimum(y, 0.0)


def pointwise_act_ref(x, w, alpha):
    y = jnp.einsum("btc,co->bto", x, w, precision=jax.lax.Precision.HIGHEST)
    return jnp.maximum(y, 0.0) + alpha * jnp.minimum(y, 0.0)


def head_ref(x, lengths, scale, shift, w, b):
    T = x.shape[1]
    y = x * scale + shift
    lens = lengths.astype(jnp.float32)
    mask = (jnp.arange(T)[None, :, None] < lens[:, None, None]).astype(jnp.float32)
    denom = jnp.clip(lens, 1.0, float(T))[:, None]
    mean = jnp.sum(y * mask, axis=1) / denom
    return mean @ w + b


def dense_tcn_forward_ref(params, x, lengths, B_arg, cfg):
    del B_arg
    ks, ds = cfg["kernel_size_set"], cfg["dilation_size_set"]
    branches = [(k, d) for k in ks for d in ds]
    h = pointwise_act_ref(x, params["trans"][0]["w"], params["trans"][0]["alpha"])
    for bi, num_layers in enumerate(cfg["block_config"]):
        feats = h
        for li in range(num_layers):
            lp = params["blocks"][bi][li]
            out0 = jnp.concatenate(
                [conv_bn_act_ref(feats, p["w"], p["b"], p["scale"], p["shift"],
                                 p["alpha"], d)
                 for (k, d), p in zip(branches, lp["pass0"])], axis=-1)
            # dropout0 / dropout1 are eval-mode no-ops (identity).
            out1 = jnp.concatenate(
                [conv_bn_act_ref(out0, p["w"], p["b"], p["scale"], p["shift"],
                                 p["alpha"], d)
                 for (k, d), p in zip(branches, lp["pass1"])], axis=-1)
            feats = jnp.concatenate([feats, out1], axis=-1)
        h = feats
        if bi != len(cfg["block_config"]) - 1:
            tp = params["trans"][bi + 1]
            h = pointwise_act_ref(h, tp["w"], tp["alpha"])
    return head_ref(h, lengths, params["bn_scale"], params["bn_shift"],
                    params["fc_w"], params["fc_b"])


# --------------------------- parameter construction --------------------------

def init_params(key, cfg):
    keys = iter(jax.random.split(key, 4096))

    def nrm(shape, s=0.1):
        return (s * jax.random.normal(next(keys), shape)).astype(jnp.float32)

    def conv_branch_params(K, cin, cout, alpha_val):
        return dict(
            w=nrm((K, cin, cout)),
            b=nrm((1, cout), 0.05),
            scale=1.0 + nrm((1, cout), 0.05),
            shift=nrm((1, cout), 0.05),
            alpha=jnp.full((1, cout), alpha_val, jnp.float32),
        )

    ks, ds = cfg["kernel_size_set"], cfg["dilation_size_set"]
    branches = [(k, d) for k in ks for d in ds]
    n_branch = len(branches)
    relu_alpha = 0.0 if cfg["relu_type"] == "relu" else 0.25

    params = {"trans": [], "blocks": []}
    params["trans"].append(dict(
        w=nrm((cfg["input_size"], cfg["reduced_size"])),
        alpha=jnp.full((1, cfg["reduced_size"]), 0.25, jnp.float32)))
    num_features = cfg["reduced_size"]
    for bi, num_layers in enumerate(cfg["block_config"]):
        growth = cfg["growth_rate_set"][bi]
        assert growth % n_branch == 0
        cb = growth // n_branch
        block = []
        for li in range(num_layers):
            cin = num_features + li * growth
            block.append(dict(
                pass0=[conv_branch_params(k, cin, cb, relu_alpha)
                       for (k, d) in branches],
                pass1=[conv_branch_params(k, growth, cb, relu_alpha)
                       for (k, d) in branches]))
        params["blocks"].append(block)
        num_features = num_features + num_layers * growth
        if bi != len(cfg["block_config"]) - 1:
            params["trans"].append(dict(
                w=nrm((num_features, cfg["reduced_size"])),
                alpha=jnp.full((1, cfg["reduced_size"]), relu_alpha, jnp.float32)))
            num_features = cfg["reduced_size"]

    params["bn_scale"] = 1.0 + nrm((1, num_features), 0.05)
    params["bn_shift"] = nrm((1, num_features), 0.05)
    params["fc_w"] = nrm((num_features, cfg["num_classes"]))
    params["fc_b"] = nrm((1, cfg["num_classes"]), 0.05)
    return params


# ----------------------------------- main -----------------------------------

if __name__ == "__main__":
    cfg = dict(
        block_config=[2, 2],
        growth_rate_set=[8, 8],
        input_size=32,
        reduced_size=16,
        num_classes=10,
        kernel_size_set=[3, 5],
        dilation_size_set=[1, 2],
        dropout=0.2,          # eval mode -> identity
        relu_type="relu",
    )
    B, T = 2, 12

    key = jax.random.PRNGKey(0)
    pkey, xkey = jax.random.split(key)
    params = init_params(pkey, cfg)

    x = jax.random.normal(xkey, (B, T, cfg["input_size"]), dtype=jnp.float32)
    lengths = jnp.array([12, 7], dtype=jnp.int32)

    fwd = jax.jit(lambda xx, ll: dense_tcn_forward_pallas(params, xx, ll, B, cfg))
    out = fwd(x, lengths)
    jax.block_until_ready(out)

    ref = dense_tcn_forward_ref(params, x, lengths, B, cfg)
    assert out.shape == (B, cfg["num_classes"])
    assert jnp.allclose(out, ref, atol=5e-3, rtol=5e-3), (out, ref)

    print("KERNEL_OK")
</pallas_src>

<mosaic_0001>
module attributes {stable_mosaic.version = 11 : i64} {
  func.func @kernel(%arg0: memref<48x32xf32, #tpu.memory_space<vmem>>, %arg1: memref<48x1xf32, #tpu.memory_space<vmem>>, %arg2: memref<2x48xf32, #tpu.memory_space<vmem>>, %arg3: memref<32x16xf32, #tpu.memory_space<vmem>>, %arg4: memref<1x16xf32, #tpu.memory_space<vmem>>, %arg5: memref<112x8xf32, #tpu.memory_space<vmem>>, %arg6: memref<1x8xf32, #tpu.memory_space<vmem>>, %arg7: memref<56x8xf32, #tpu.memory_space<vmem>>, %arg8: memref<1x8xf32, #tpu.memory_space<vmem>>, %arg9: memref<168x8xf32, #tpu.memory_space<vmem>>, %arg10: memref<1x8xf32, #tpu.memory_space<vmem>>, %arg11: memref<56x8xf32, #tpu.memory_space<vmem>>, %arg12: memref<1x8xf32, #tpu.memory_space<vmem>>, %arg13: memref<32x16xf32, #tpu.memory_space<vmem>>, %arg14: memref<112x8xf32, #tpu.memory_space<vmem>>, %arg15: memref<1x8xf32, #tpu.memory_space<vmem>>, %arg16: memref<56x8xf32, #tpu.memory_space<vmem>>, %arg17: memref<1x8xf32, #tpu.memory_space<vmem>>, %arg18: memref<168x8xf32, #tpu.memory_space<vmem>>, %arg19: memref<1x8xf32, #tpu.memory_space<vmem>>, %arg20: memref<56x8xf32, #tpu.memory_space<vmem>>, %arg21: memref<1x8xf32, #tpu.memory_space<vmem>>, %arg22: memref<32x10xf32, #tpu.memory_space<vmem>>, %arg23: memref<1x10xf32, #tpu.memory_space<vmem>>, %arg24: memref<2x10xf32, #tpu.memory_space<vmem>>, %arg25: memref<56x32xf32, #tpu.memory_space<vmem>>, %arg26: memref<56x8xf32, #tpu.memory_space<vmem>>) attributes {dimension_semantics = [], scalar_prefetch = 0 : i64, scratch_operands = 2 : i64, tpu.core_type = #tpu.core_type<tc>} {
    %cst = arith.constant 0.000000e+00 : f32
    %0 = vector.broadcast %cst : f32 to vector<56x32xf32>
    %c0 = arith.constant 0 : index
    %c0_0 = arith.constant 0 : index
    %1 = vector.load %arg25[%c0, %c0_0] : memref<56x32xf32, #tpu.memory_space<vmem>>, vector<56x32xf32>
    tpu.vector_store %arg25[%c0, %c0_0], %0 {strides = array<i32>} : memref<56x32xf32, #tpu.memory_space<vmem>>, vector<56x32xf32>,
    %cst_1 = arith.constant 0.000000e+00 : f32
    %2 = vector.broadcast %cst_1 : f32 to vector<56x8xf32>
    %c0_2 = arith.constant 0 : index
    %c0_3 = arith.constant 0 : index
    %3 = vector.load %arg26[%c0_2, %c0_3] : memref<56x8xf32, #tpu.memory_space<vmem>>, vector<56x8xf32>
    tpu.vector_store %arg26[%c0_2, %c0_3], %2 {strides = array<i32>} : memref<56x8xf32, #tpu.memory_space<vmem>>, vector<56x8xf32>,
    %c0_4 = arith.constant 0 : index
    %c0_5 = arith.constant 0 : index
    %4 = vector.load %arg1[%c0_4, %c0_5] : memref<48x1xf32, #tpu.memory_space<vmem>>, vector<48x1xf32>
    %c0_6 = arith.constant 0 : index
    %c0_7 = arith.constant 0 : index
    %5 = vector.load %arg0[%c0_6, %c0_7] : memref<48x32xf32, #tpu.memory_space<vmem>>, vector<48x32xf32>
    %c0_8 = arith.constant 0 : index
    %c0_9 = arith.constant 0 : index
    %6 = vector.load %arg3[%c0_8, %c0_9] : memref<32x16xf32, #tpu.memory_space<vmem>>, vector<32x16xf32>
    %cst_10 = arith.constant dense<0.000000e+00> : vector<48x16xf32>
    %7 = tpu.matmul %5, %6, %cst_10 {dimension_numbers = #tpu.dot_dimension_numbers<[1], [0], [0], [1], [0, 0, 1, 1], [], []>} : vector<48x32xf32>, vector<32x16xf32>, vector<48x16xf32> -> vector<48x16xf32>
    %cst_11 = arith.constant 0.000000e+00 : f32
    %8 = vector.broadcast %cst_11 : f32 to vector<48x16xf32>
    %9 = arith.cmpf ogt, %7, %8 : vector<48x16xf32>
    %c0_12 = arith.constant 0 : index
    %c0_13 = arith.constant 0 : index
    %10 = vector.load %arg4[%c0_12, %c0_13] : memref<1x16xf32, #tpu.memory_space<vmem>>, vector<1x16xf32>
    %11 = vector.broadcast %10 : vector<1x16xf32> to vector<48x16xf32>
    %12 = arith.mulf %11, %7 : vector<48x16xf32>
    %13 = arith.select %9, %7, %12 : vector<48x16xi1>, vector<48x16xf32>
    %c4 = arith.constant 4 : index
    %c0_14 = arith.constant 0 : index
    %14 = vector.load %arg25[%c4, %c0_14] : memref<56x32xf32, #tpu.memory_space<vmem>>, vector<48x16xf32>
    tpu.vector_store %arg25[%c4, %c0_14], %13 {strides = array<i32>} : memref<56x32xf32, #tpu.memory_space<vmem>>, vector<48x16xf32>,
    %c0_15 = arith.constant 0 : index
    %c0_16 = arith.constant 0 : index
    %15 = vector.load %arg25[%c0_15, %c0_16] : memref<56x32xf32, #tpu.memory_space<vmem>>, vector<48x16xf32>
    %c0_17 = arith.constant 0 : index
    %c0_18 = arith.constant 0 : index
    %16 = vector.load %arg5[%c0_17, %c0_18] : memref<112x8xf32, #tpu.memory_space<vmem>>, vector<16x8xf32>
    %cst_19 = arith.constant dense<0.000000e+00> : vector<48x8xf32>
    %17 = tpu.matmul %15, %16, %cst_19 {dimension_numbers = #tpu.dot_dimension_numbers<[1], [0], [0], [1], [0, 0, 1, 1], [], []>} : vector<48x16xf32>, vector<16x8xf32>, vector<48x8xf32> -> vector<48x8xf32>
    %c2 = arith.constant 2 : index
    %c0_20 = arith.constant 0 : index
    %18 = vector.load %arg25[%c2, %c0_20] : memref<56x32xf32, #tpu.memory_space<vmem>>, vector<48x16xf32>
    %c16 = arith.constant 16 : index
    %c0_21 = arith.constant 0 : index
    %19 = vector.load %arg5[%c16, %c0_21] : memref<112x8xf32, #tpu.memory_space<vmem>>, vector<16x8xf32>
    %cst_22 = arith.constant dense<0.000000e+00> : vector<48x8xf32>
    %20 = tpu.matmul %18, %19, %cst_22 {dimension_numbers = #tpu.dot_dimension_numbers<[1], [0], [0], [1], [0, 0, 1, 1], [], []>} : vector<48x16xf32>, vector<16x8xf32>, vector<48x8xf32> -> vector<48x8xf32>
    %21 = arith.addf %17, %20 : vector<48x8xf32>
    %c3 = arith.constant 3 : index
    %c0_23 = arith.constant 0 : index
    %22 = vector.load %arg25[%c3, %c0_23] : memref<56x32xf32, #tpu.memory_space<vmem>>, vector<48x16xf32>
    %c32 = arith.constant 32 : index
    %c0_24 = arith.constant 0 : index
    %23 = vector.load %arg5[%c32, %c0_24] : memref<112x8xf32, #tpu.memory_space<vmem>>, vector<16x8xf32>
    %cst_25 = arith.constant dense<0.000000e+00> : vector<48x8xf32>
    %24 = tpu.matmul %22, %23, %cst_25 {dimension_numbers = #tpu.dot_dimension_numbers<[1], [0], [0], [1], [0, 0, 1, 1], [], []>} : vector<48x16xf32>, vector<16x8xf32>, vector<48x8xf32> -> vector<48x8xf32>
    %25 = arith.addf %21, %24 : vector<48x8xf32>
    %c4_26 = arith.constant 4 : index
    %c0_27 = arith.constant 0 : index
    %26 = vector.load %arg25[%c4_26, %c0_27] : memref<56x32xf32, #tpu.memory_space<vmem>>, vector<48x16xf32>
    %c48 = arith.constant 48 : index
    %c0_28 = arith.constant 0 : index
    %27 = vector.load %arg5[%c48, %c0_28] : memref<112x8xf32, #tpu.memory_space<vmem>>, vector<16x8xf32>
    %cst_29 = arith.constant dense<0.000000e+00> : vector<48x8xf32>
    %28 = tpu.matmul %26, %27, %cst_29 {dimension_numbers = #tpu.dot_dimension_numbers<[1], [0], [0], [1], [0, 0, 1, 1], [], []>} : vector<48x16xf32>, vector<16x8xf32>, vector<48x8xf32> -> vector<48x8xf32>
    %29 = arith.addf %25, %28 : vector<48x8xf32>
    %c5 = arith.constant 5 : index
    %c0_30 = arith.constant 0 : index
    %30 = vector.load %arg25[%c5, %c0_30] : memref<56x32xf32, #tpu.memory_space<vmem>>, vector<48x16xf32>
    %c64 = arith.constant 64 : index
    %c0_31 = arith.constant 0 : index
    %31 = vector.load %arg5[%c64, %c0_31] : memref<112x8xf32, #tpu.memory_space<vmem>>, vector<16x8xf32>
    %cst_32 = arith.constant dense<0.000000e+00> : vector<48x8xf32>
    %32 = tpu.matmul %30, %31, %cst_32 {dimension_numbers = #tpu.dot_dimension_numbers<[1], [0], [0], [1], [0, 0, 1, 1], [], []>} : vector<48x16xf32>, vector<16x8xf32>, vector<48x8xf32> -> vector<48x8xf32>
    %33 = arith.addf %29, %32 : vector<48x8xf32>
    %c6 = arith.constant 6 : index
    %c0_33 = arith.constant 0 : index
    %34 = vector.load %arg25[%c6, %c0_33] : memref<56x32xf32, #tpu.memory_space<vmem>>, vector<48x16xf32>
    %c80 = arith.constant 80 : index
    %c0_34 = arith.constant 0 : index
    %35 = vector.load %arg5[%c80, %c0_34] : memref<112x8xf32, #tpu.memory_space<vmem>>, vector<16x8xf32>
    %cst_35 = arith.constant dense<0.000000e+00> : vector<48x8xf32>
    %36 = tpu.matmul %34, %35, %cst_35 {dimension_numbers = #tpu.dot_dimension_numbers<[1], [0], [0], [1], [0, 0, 1, 1], [], []>} : vector<48x16xf32>, vector<16x8xf32>, vector<48x8xf32> -> vector<48x8xf32>
    %37 = arith.addf %33, %36 : vector<48x8xf32>
    %c8 = arith.constant 8 : index
    %c0_36 = arith.constant 0 : index
    %38 = vector.load %arg25[%c8, %c0_36] : memref<56x32xf32, #tpu.memory_space<vmem>>, vector<48x16xf32>
    %c96 = arith.constant 96 : index
    %c0_37 = arith.constant 0 : index
    %39 = vector.load %arg5[%c96, %c0_37] : memref<112x8xf32, #tpu.memory_space<vmem>>, vector<16x8xf32>
    %cst_38 = arith.constant dense<0.000000e+00> : vector<48x8xf32>
    %40 = tpu.matmul %38, %39, %cst_38 {dimension_numbers = #tpu.dot_dimension_numbers<[1], [0], [0], [1], [0, 0, 1, 1], [], []>} : vector<48x16xf32>, vector<16x8xf32>, vector<48x8xf32> -> vector<48x8xf32>
    %41 = arith.addf %37, %40 : vector<48x8xf32>
    %c0_39 = arith.constant 0 : index
    %c0_40 = arith.constant 0 : index
    %42 = vector.load %arg6[%c0_39, %c0_40] : memref<1x8xf32, #tpu.memory_space<vmem>>, vector<1x8xf32>
    %43 = vector.broadcast %42 : vector<1x8xf32> to vector<48x8xf32>
    %44 = arith.addf %41, %43 : vector<48x8xf32>
    %cst_41 = arith.constant 0.000000e+00 : f32
    %45 = vector.broadcast %cst_41 : f32 to vector<48x8xf32>
    %46 = arith.maximumf %44, %45 : vector<48x8xf32>
    %47 = vector.broadcast %4 : vector<48x1xf32> to vector<48x8xf32>
    %48 = arith.mulf %46, %47 : vector<48x8xf32>
    %c4_42 = arith.constant 4 : index
    %c0_43 = arith.constant 0 : index
    %49 = vector.load %arg26[%c4_42, %c0_43] : memref<56x8xf32, #tpu.memory_space<vmem>>, vector<48x8xf32>
    tpu.vector_store %arg26[%c4_42, %c0_43], %48 {strides = array<i32>} : memref<56x8xf32, #tpu.memory_space<vmem>>, vector<48x8xf32>,
    %c0_44 = arith.constant 0 : index
    %c0_45 = arith.constant 0 : index
    %50 = vector.load %arg26[%c0_44, %c0_45] : memref<56x8xf32, #tpu.memory_space<vmem>>, vector<48x8xf32>
    %c0_46 = arith.constant 0 : index
    %c0_47 = arith.constant 0 : index
    %51 = vector.load %arg7[%c0_46, %c0_47] : memref<56x8xf32, #tpu.memory_space<vmem>>, vector<8x8xf32>
    %cst_48 = arith.constant dense<0.000000e+00> : vector<48x8xf32>
    %52 = tpu.matmul %50, %51, %cst_48 {dimension_numbers = #tpu.dot_dimension_numbers<[1], [0], [0], [1], [0, 0, 1, 1], [], []>} : vector<48x8xf32>, vector<8x8xf32>, vector<48x8xf32> -> vector<48x8xf32>
    %c2_49 = arith.constant 2 : index
    %c0_50 = arith.constant 0 : index
    %53 = vector.load %arg26[%c2_49, %c0_50] : memref<56x8xf32, #tpu.memory_space<vmem>>, vector<48x8xf32>
    %c8_51 = arith.constant 8 : index
    %c0_52 = arith.constant 0 : index
    %54 = vector.load %arg7[%c8_51, %c0_52] : memref<56x8xf32, #tpu.memory_space<vmem>>, vector<8x8xf32>
    %cst_53 = arith.constant dense<0.000000e+00> : vector<48x8xf32>
    %55 = tpu.matmul %53, %54, %cst_53 {dimension_numbers = #tpu.dot_dimension_numbers<[1], [0], [0], [1], [0, 0, 1, 1], [], []>} : vector<48x8xf32>, vector<8x8xf32>, vector<48x8xf32> -> vector<48x8xf32>
    %56 = arith.addf %52, %55 : vector<48x8xf32>
    %c3_54 = arith.constant 3 : index
    %c0_55 = arith.constant 0 : index
    %57 = vector.load %arg26[%c3_54, %c0_55] : memref<56x8xf32, #tpu.memory_space<vmem>>, vector<48x8xf32>
    %c16_56 = arith.constant 16 : index
    %c0_57 = arith.constant 0 : index
    %58 = vector.load %arg7[%c16_56, %c0_57] : memref<56x8xf32, #tpu.memory_space<vmem>>, vector<8x8xf32>
    %cst_58 = arith.constant dense<0.000000e+00> : vector<48x8xf32>
    %59 = tpu.matmul %57, %58, %cst_58 {dimension_numbers = #tpu.dot_dimension_numbers<[1], [0], [0], [1], [0, 0, 1, 1], [], []>} : vector<48x8xf32>, vector<8x8xf32>, vector<48x8xf32> -> vector<48x8xf32>
    %60 = arith.addf %56, %59 : vector<48x8xf32>
    %c4_59 = arith.constant 4 : index
    %c0_60 = arith.constant 0 : index
    %61 = vector.load %arg26[%c4_59, %c0_60] : memref<56x8xf32, #tpu.memory_space<vmem>>, vector<48x8xf32>
    %c24 = arith.constant 24 : index
    %c0_61 = arith.constant 0 : index
    %62 = vector.load %arg7[%c24, %c0_61] : memref<56x8xf32, #tpu.memory_space<vmem>>, vector<8x8xf32>
    %cst_62 = arith.constant dense<0.000000e+00> : vector<48x8xf32>
    %63 = tpu.matmul %61, %62, %cst_62 {dimension_numbers = #tpu.dot_dimension_numbers<[1], [0], [0], [1], [0, 0, 1, 1], [], []>} : vector<48x8xf32>, vector<8x8xf32>, vector<48x8xf32> -> vector<48x8xf32>
    %64 = arith.addf %60, %63 : vector<48x8xf32>
    %c5_63 = arith.constant 5 : index
    %c0_64 = arith.constant 0 : index
    %65 = vector.load %arg26[%c5_63, %c0_64] : memref<56x8xf32, #tpu.memory_space<vmem>>, vector<48x8xf32>
    %c32_65 = arith.constant 32 : index
    %c0_66 = arith.constant 0 : index
    %66 = vector.load %arg7[%c32_65, %c0_66] : memref<56x8xf32, #tpu.memory_space<vmem>>, vector<8x8xf32>
    %cst_67 = arith.constant dense<0.000000e+00> : vector<48x8xf32>
    %67 = tpu.matmul %65, %66, %cst_67 {dimension_numbers = #tpu.dot_dimension_numbers<[1], [0], [0], [1], [0, 0, 1, 1], [], []>} : vector<48x8xf32>, vector<8x8xf32>, vector<48x8xf32> -> vector<48x8xf32>
    %68 = arith.addf %64, %67 : vector<48x8xf32>
    %c6_68 = arith.constant 6 : index
    %c0_69 = arith.constant 0 : index
    %69 = vector.load %arg26[%c6_68, %c0_69] : memref<56x8xf32, #tpu.memory_space<vmem>>, vector<48x8xf32>
    %c40 = arith.constant 40 : index
    %c0_70 = arith.constant 0 : index
    %70 = vector.load %arg7[%c40, %c0_70] : memref<56x8xf32, #tpu.memory_space<vmem>>, vector<8x8xf32>
    %cst_71 = arith.constant dense<0.000000e+00> : vector<48x8xf32>
    %71 = tpu.matmul %69, %70, %cst_71 {dimension_numbers = #tpu.dot_dimension_numbers<[1], [0], [0], [1], [0, 0, 1, 1], [], []>} : vector<48x8xf32>, vector<8x8xf32>, vector<48x8xf32> -> vector<48x8xf32>
    %72 = arith.addf %68, %71 : vector<48x8xf32>
    %c8_72 = arith.constant 8 : index
    %c0_73 = arith.constant 0 : index
    %73 = vector.load %arg26[%c8_72, %c0_73] : memref<56x8xf32, #tpu.memory_space<vmem>>, vector<48x8xf32>
    %c48_74 = arith.constant 48 : index
    %c0_75 = arith.constant 0 : index
    %74 = vector.load %arg7[%c48_74, %c0_75] : memref<56x8xf32, #tpu.memory_space<vmem>>, vector<8x8xf32>
    %cst_76 = arith.constant dense<0.000000e+00> : vector<48x8xf32>
    %75 = tpu.matmul %73, %74, %cst_76 {dimension_numbers = #tpu.dot_dimension_numbers<[1], [0], [0], [1], [0, 0, 1, 1], [], []>} : vector<48x8xf32>, vector<8x8xf32>, vector<48x8xf32> -> vector<48x8xf32>
    %76 = arith.addf %72, %75 : vector<48x8xf32>
    %c0_77 = arith.constant 0 : index
    %c0_78 = arith.constant 0 : index
    %77 = vector.load %arg8[%c0_77, %c0_78] : memref<1x8xf32, #tpu.memory_space<vmem>>, vector<1x8xf32>
    %78 = vector.broadcast %77 : vector<1x8xf32> to vector<48x8xf32>
    %79 = arith.addf %76, %78 : vector<48x8xf32>
    %cst_79 = arith.constant 0.000000e+00 : f32
    %80 = vector.broadcast %cst_79 : f32 to vector<48x8xf32>
    %81 = arith.maximumf %79, %80 : vector<48x8xf32>
    %82 = vector.broadcast %4 : vector<48x1xf32> to vector<48x8xf32>
    %83 = arith.mulf %81, %82 : vector<48x8xf32>
    %c4_80 = arith.constant 4 : index
    %c16_81 = arith.constant 16 : index
    %84 = vector.load %arg25[%c4_80, %c16_81] : memref<56x32xf32, #tpu.memory_space<vmem>>, vector<48x8xf32>
    tpu.vector_store %arg25[%c4_80, %c16_81], %83 {strides = array<i32>} : memref<56x32xf32, #tpu.memory_space<vmem>>, vector<48x8xf32>,
    %c0_82 = arith.constant 0 : index
    %c0_83 = arith.constant 0 : index
    %85 = vector.load %arg25[%c0_82, %c0_83] : memref<56x32xf32, #tpu.memory_space<vmem>>, vector<48x24xf32>
    %c0_84 = arith.constant 0 : index
    %c0_85 = arith.constant 0 : index
    %86 = vector.load %arg9[%c0_84, %c0_85] : memref<168x8xf32, #tpu.memory_space<vmem>>, vector<24x8xf32>
    %cst_86 = arith.constant dense<0.000000e+00> : vector<48x8xf32>
    %87 = tpu.matmul %85, %86, %cst_86 {dimension_numbers = #tpu.dot_dimension_numbers<[1], [0], [0], [1], [0, 0, 1, 1], [], []>} : vector<48x24xf32>, vector<24x8xf32>, vector<48x8xf32> -> vector<48x8xf32>
    %c2_87 = arith.constant 2 : index
    %c0_88 = arith.constant 0 : index
    %88 = vector.load %arg25[%c2_87, %c0_88] : memref<56x32xf32, #tpu.memory_space<vmem>>, vector<48x24xf32>
    %c24_89 = arith.constant 24 : index
    %c0_90 = arith.constant 0 : index
    %89 = vector.load %arg9[%c24_89, %c0_90] : memref<168x8xf32, #tpu.memory_space<vmem>>, vector<24x8xf32>
    %cst_91 = arith.constant dense<0.000000e+00> : vector<48x8xf32>
    %90 = tpu.matmul %88, %89, %cst_91 {dimension_numbers = #tpu.dot_dimension_numbers<[1], [0], [0], [1], [0, 0, 1, 1], [], []>} : vector<48x24xf32>, vector<24x8xf32>, vector<48x8xf32> -> vector<48x8xf32>
    %91 = arith.addf %87, %90 : vector<48x8xf32>
    %c3_92 = arith.constant 3 : index
    %c0_93 = arith.constant 0 : index
    %92 = vector.load %arg25[%c3_92, %c0_93] : memref<56x32xf32, #tpu.memory_space<vmem>>, vector<48x24xf32>
    %c48_94 = arith.constant 48 : index
    %c0_95 = arith.constant 0 : index
    %93 = vector.load %arg9[%c48_94, %c0_95] : memref<168x8xf32, #tpu.memory_space<vmem>>, vector<24x8xf32>
    %cst_96 = arith.constant dense<0.000000e+00> : vector<48x8xf32>
    %94 = tpu.matmul %92, %93, %cst_96 {dimension_numbers = #tpu.dot_dimension_numbers<[1], [0], [0], [1], [0, 0, 1, 1], [], []>} : vector<48x24xf32>, vector<24x8xf32>, vector<48x8xf32> -> vector<48x8xf32>
    %95 = arith.addf %91, %94 : vector<48x8xf32>
    %c4_97 = arith.constant 4 : index
    %c0_98 = arith.constant 0 : index
    %96 = vector.load %arg25[%c4_97, %c0_98] : memref<56x32xf32, #tpu.memory_space<vmem>>, vector<48x24xf32>
    %c72 = arith.constant 72 : index
    %c0_99 = arith.constant 0 : index
    %97 = vector.load %arg9[%c72, %c0_99] : memref<168x8xf32, #tpu.memory_space<vmem>>, vector<24x8xf32>
    %cst_100 = arith.constant dense<0.000000e+00> : vector<48x8xf32>
    %98 = tpu.matmul %96, %97, %cst_100 {dimension_numbers = #tpu.dot_dimension_numbers<[1], [0], [0], [1], [0, 0, 1, 1], [], []>} : vector<48x24xf32>, vector<24x8xf32>, vector<48x8xf32> -> vector<48x8xf32>
    %99 = arith.addf %95, %98 : vector<48x8xf32>
    %c5_101 = arith.constant 5 : index
    %c0_102 = arith.constant 0 : index
    %100 = vector.load %arg25[%c5_101, %c0_102] : memref<56x32xf32, #tpu.memory_space<vmem>>, vector<48x24xf32>
    %c96_103 = arith.constant 96 : index
    %c0_104 = arith.constant 0 : index
    %101 = vector.load %arg9[%c96_103, %c0_104] : memref<168x8xf32, #tpu.memory_space<vmem>>, vector<24x8xf32>
    %cst_105 = arith.constant dense<0.000000e+00> : vector<48x8xf32>
    %102 = tpu.matmul %100, %101, %cst_105 {dimension_numbers = #tpu.dot_dimension_numbers<[1], [0], [0], [1], [0, 0, 1, 1], [], []>} : vector<48x24xf32>, vector<24x8xf32>, vector<48x8xf32> -> vector<48x8xf32>
    %103 = arith.addf %99, %102 : vector<48x8xf32>
    %c6_106 = arith.constant 6 : index
    %c0_107 = arith.constant 0 : index
    %104 = vector.load %arg25[%c6_106, %c0_107] : memref<56x32xf32, #tpu.memory_space<vmem>>, vector<48x24xf32>
    %c120 = arith.constant 120 : index
    %c0_108 = arith.constant 0 : index
    %105 = vector.load %arg9[%c120, %c0_108] : memref<168x8xf32, #tpu.memory_space<vmem>>, vector<24x8xf32>
    %cst_109 = arith.constant dense<0.000000e+00> : vector<48x8xf32>
    %106 = tpu.matmul %104, %105, %cst_109 {dimension_numbers = #tpu.dot_dimension_numbers<[1], [0], [0], [1], [0, 0, 1, 1], [], []>} : vector<48x24xf32>, vector<24x8xf32>, vector<48x8xf32> -> vector<48x8xf32>
    %107 = arith.addf %103, %106 : vector<48x8xf32>
    %c8_110 = arith.constant 8 : index
    %c0_111 = arith.constant 0 : index
    %108 = vector.load %arg25[%c8_110, %c0_111] : memref<56x32xf32, #tpu.memory_space<vmem>>, vector<48x24xf32>
    %c144 = arith.constant 144 : index
    %c0_112 = arith.constant 0 : index
    %109 = vector.load %arg9[%c144, %c0_112] : memref<168x8xf32, #tpu.memory_space<vmem>>, vector<24x8xf32>
    %cst_113 = arith.constant dense<0.000000e+00> : vector<48x8xf32>
    %110 = tpu.matmul %108, %109, %cst_113 {dimension_numbers = #tpu.dot_dimension_numbers<[1], [0], [0], [1], [0, 0, 1, 1], [], []>} : vector<48x24xf32>, vector<24x8xf32>, vector<48x8xf32> -> vector<48x8xf32>
    %111 = arith.addf %107, %110 : vector<48x8xf32>
    %c0_114 = arith.constant 0 : index
    %c0_115 = arith.constant 0 : index
    %112 = vector.load %arg10[%c0_114, %c0_115] : memref<1x8xf32, #tpu.memory_space<vmem>>, vector<1x8xf32>
    %113 = vector.broadcast %112 : vector<1x8xf32> to vector<48x8xf32>
    %114 = arith.addf %111, %113 : vector<48x8xf32>
    %cst_116 = arith.constant 0.000000e+00 : f32
    %115 = vector.broadcast %cst_116 : f32 to vector<48x8xf32>
    %116 = arith.maximumf %114, %115 : vector<48x8xf32>
    %117 = vector.broadcast %4 : vector<48x1xf32> to vector<48x8xf32>
    %118 = arith.mulf %116, %117 : vector<48x8xf32>
    %c4_117 = arith.constant 4 : index
    %c0_118 = arith.constant 0 : index
    %119 = vector.load %arg26[%c4_117, %c0_118] : memref<56x8xf32, #tpu.memory_space<vmem>>, vector<48x8xf32>
    tpu.vector_store %arg26[%c4_117, %c0_118], %118 {strides = array<i32>} : memref<56x8xf32, #tpu.memory_space<vmem>>, vector<48x8xf32>,
    %c0_119 = arith.constant 0 : index
    %c0_120 = arith.constant 0 : index
    %120 = vector.load %arg26[%c0_119, %c0_120] : memref<56x8xf32, #tpu.memory_space<vmem>>, vector<48x8xf32>
    %c0_121 = arith.constant 0 : index
    %c0_122 = arith.constant 0 : index
    %121 = vector.load %arg11[%c0_121, %c0_122] : memref<56x8xf32, #tpu.memory_space<vmem>>, vector<8x8xf32>
    %cst_123 = arith.constant dense<0.000000e+00> : vector<48x8xf32>
    %122 = tpu.matmul %120, %121, %cst_123 {dimension_numbers = #tpu.dot_dimension_numbers<[1], [0], [0], [1], [0, 0, 1, 1], [], []>} : vector<48x8xf32>, vector<8x8xf32>, vector<48x8xf32> -> vector<48x8xf32>
    %c2_124 = arith.constant 2 : index
    %c0_125 = arith.constant 0 : index
    %123 = vector.load %arg26[%c2_124, %c0_125] : memref<56x8xf32, #tpu.memory_space<vmem>>, vector<48x8xf32>
    %c8_126 = arith.constant 8 : index
    %c0_127 = arith.constant 0 : index
    %124 = vector.load %arg11[%c8_126, %c0_127] : memref<56x8xf32, #tpu.memory_space<vmem>>, vector<8x8xf32>
    %cst_128 = arith.constant dense<0.000000e+00> : vector<48x8xf32>
    %125 = tpu.matmul %123, %124, %cst_128 {dimension_numbers = #tpu.dot_dimension_numbers<[1], [0], [0], [1], [0, 0, 1, 1], [], []>} : vector<48x8xf32>, vector<8x8xf32>, vector<48x8xf32> -> vector<48x8xf32>
    %126 = arith.addf %122, %125 : vector<48x8xf32>
    %c3_129 = arith.constant 3 : index
    %c0_130 = arith.constant 0 : index
    %127 = vector.load %arg26[%c3_129, %c0_130] : memref<56x8xf32, #tpu.memory_space<vmem>>, vector<48x8xf32>
    %c16_131 = arith.constant 16 : index
    %c0_132 = arith.constant 0 : index
    %128 = vector.load %arg11[%c16_131, %c0_132] : memref<56x8xf32, #tpu.memory_space<vmem>>, vector<8x8xf32>
    %cst_133 = arith.constant dense<0.000000e+00> : vector<48x8xf32>
    %129 = tpu.matmul %127, %128, %cst_133 {dimension_numbers = #tpu.dot_dimension_numbers<[1], [0], [0], [1], [0, 0, 1, 1], [], []>} : vector<48x8xf32>, vector<8x8xf32>, vector<48x8xf32> -> vector<48x8xf32>
    %130 = arith.addf %126, %129 : vector<48x8xf32>
    %c4_134 = arith.constant 4 : index
    %c0_135 = arith.constant 0 : index
    %131 = vector.load %arg26[%c4_134, %c0_135] : memref<56x8xf32, #tpu.memory_space<vmem>>, vector<48x8xf32>
    %c24_136 = arith.constant 24 : index
    %c0_137 = arith.constant 0 : index
    %132 = vector.load %arg11[%c24_136, %c0_137] : memref<56x8xf32, #tpu.memory_space<vmem>>, vector<8x8xf32>
    %cst_138 = arith.constant dense<0.000000e+00> : vector<48x8xf32>
    %133 = tpu.matmul %131, %132, %cst_138 {dimension_numbers = #tpu.dot_dimension_numbers<[1], [0], [0], [1], [0, 0, 1, 1], [], []>} : vector<48x8xf32>, vector<8x8xf32>, vector<48x8xf32> -> vector<48x8xf32>
    %134 = arith.addf %130, %133 : vector<48x8xf32>
    %c5_139 = arith.constant 5 : index
    %c0_140 = arith.constant 0 : index
    %135 = vector.load %arg26[%c5_139, %c0_140] : memref<56x8xf32, #tpu.memory_space<vmem>>, vector<48x8xf32>
    %c32_141 = arith.constant 32 : index
    %c0_142 = arith.constant 0 : index
    %136 = vector.load %arg11[%c32_141, %c0_142] : memref<56x8xf32, #tpu.memory_space<vmem>>, vector<8x8xf32>
    %cst_143 = arith.constant dense<0.000000e+00> : vector<48x8xf32>
    %137 = tpu.matmul %135, %136, %cst_143 {dimension_numbers = #tpu.dot_dimension_numbers<[1], [0], [0], [1], [0, 0, 1, 1], [], []>} : vector<48x8xf32>, vector<8x8xf32>, vector<48x8xf32> -> vector<48x8xf32>
    %138 = arith.addf %134, %137 : vector<48x8xf32>
    %c6_144 = arith.constant 6 : index
    %c0_145 = arith.constant 0 : index
    %139 = vector.load %arg26[%c6_144, %c0_145] : memref<56x8xf32, #tpu.memory_space<vmem>>, vector<48x8xf32>
    %c40_146 = arith.constant 40 : index
    %c0_147 = arith.constant 0 : index
    %140 = vector.load %arg11[%c40_146, %c0_147] : memref<56x8xf32, #tpu.memory_space<vmem>>, vector<8x8xf32>
    %cst_148 = arith.constant dense<0.000000e+00> : vector<48x8xf32>
    %141 = tpu.matmul %139, %140, %cst_148 {dimension_numbers = #tpu.dot_dimension_numbers<[1], [0], [0], [1], [0, 0, 1, 1], [], []>} : vector<48x8xf32>, vector<8x8xf32>, vector<48x8xf32> -> vector<48x8xf32>
    %142 = arith.addf %138, %141 : vector<48x8xf32>
    %c8_149 = arith.constant 8 : index
    %c0_150 = arith.constant 0 : index
    %143 = vector.load %arg26[%c8_149, %c0_150] : memref<56x8xf32, #tpu.memory_space<vmem>>, vector<48x8xf32>
    %c48_151 = arith.constant 48 : index
    %c0_152 = arith.constant 0 : index
    %144 = vector.load %arg11[%c48_151, %c0_152] : memref<56x8xf32, #tpu.memory_space<vmem>>, vector<8x8xf32>
    %cst_153 = arith.constant dense<0.000000e+00> : vector<48x8xf32>
    %145 = tpu.matmul %143, %144, %cst_153 {dimension_numbers = #tpu.dot_dimension_numbers<[1], [0], [0], [1], [0, 0, 1, 1], [], []>} : vector<48x8xf32>, vector<8x8xf32>, vector<48x8xf32> -> vector<48x8xf32>
    %146 = arith.addf %142, %145 : vector<48x8xf32>
    %c0_154 = arith.constant 0 : index
    %c0_155 = arith.constant 0 : index
    %147 = vector.load %arg12[%c0_154, %c0_155] : memref<1x8xf32, #tpu.memory_space<vmem>>, vector<1x8xf32>
    %148 = vector.broadcast %147 : vector<1x8xf32> to vector<48x8xf32>
    %149 = arith.addf %146, %148 : vector<48x8xf32>
    %cst_156 = arith.constant 0.000000e+00 : f32
    %150 = vector.broadcast %cst_156 : f32 to vector<48x8xf32>
    %151 = arith.maximumf %149, %150 : vector<48x8xf32>
    %152 = vector.broadcast %4 : vector<48x1xf32> to vector<48x8xf32>
    %153 = arith.mulf %151, %152 : vector<48x8xf32>
    %c4_157 = arith.constant 4 : index
    %c24_158 = arith.constant 24 : index
    %154 = vector.load %arg25[%c4_157, %c24_158] : memref<56x32xf32, #tpu.memory_space<vmem>>, vector<48x8xf32>
    tpu.vector_store %arg25[%c4_157, %c24_158], %153 {strides = array<i32>} : memref<56x32xf32, #tpu.memory_space<vmem>>, vector<48x8xf32>,
    %c4_159 = arith.constant 4 : index
    %c0_160 = arith.constant 0 : index
    %155 = vector.load %arg25[%c4_159, %c0_160] : memref<56x32xf32, #tpu.memory_space<vmem>>, vector<48x32xf32>
    %c0_161 = arith.constant 0 : index
    %c0_162 = arith.constant 0 : index
    %156 = vector.load %arg13[%c0_161, %c0_162] : memref<32x16xf32, #tpu.memory_space<vmem>>, vector<32x16xf32>
    %cst_163 = arith.constant dense<0.000000e+00> : vector<48x16xf32>
    %157 = tpu.matmul %155, %156, %cst_163 {dimension_numbers = #tpu.dot_dimension_numbers<[1], [0], [0], [1], [0, 0, 1, 1], [], []>} : vector<48x32xf32>, vector<32x16xf32>, vector<48x16xf32> -> vector<48x16xf32>
    %cst_164 = arith.constant 0.000000e+00 : f32
    %158 = vector.broadcast %cst_164 : f32 to vector<48x16xf32>
    %159 = arith.maximumf %157, %158 : vector<48x16xf32>
    %c4_165 = arith.constant 4 : index
    %c0_166 = arith.constant 0 : index
    %160 = vector.load %arg25[%c4_165, %c0_166] : memref<56x32xf32, #tpu.memory_space<vmem>>, vector<48x16xf32>
    tpu.vector_store %arg25[%c4_165, %c0_166], %159 {strides = array<i32>} : memref<56x32xf32, #tpu.memory_space<vmem>>, vector<48x16xf32>,
    %c0_167 = arith.constant 0 : index
    %c0_168 = arith.constant 0 : index
    %161 = vector.load %arg25[%c0_167, %c0_168] : memref<56x32xf32, #tpu.memory_space<vmem>>, vector<48x16xf32>
    %c0_169 = arith.constant 0 : index
    %c0_170 = arith.constant 0 : index
    %162 = vector.load %arg14[%c0_169, %c0_170] : memref<112x8xf32, #tpu.memory_space<vmem>>, vector<16x8xf32>
    %cst_171 = arith.constant dense<0.000000e+00> : vector<48x8xf32>
    %163 = tpu.matmul %161, %162, %cst_171 {dimension_numbers = #tpu.dot_dimension_numbers<[1], [0], [0], [1], [0, 0, 1, 1], [], []>} : vector<48x16xf32>, vector<16x8xf32>, vector<48x8xf32> -> vector<48x8xf32>
    %c2_172 = arith.constant 2 : index
    %c0_173 = arith.constant 0 : index
    %164 = vector.load %arg25[%c2_172, %c0_173] : memref<56x32xf32, #tpu.memory_space<vmem>>, vector<48x16xf32>
    %c16_174 = arith.constant 16 : index
    %c0_175 = arith.constant 0 : index
    %165 = vector.load %arg14[%c16_174, %c0_175] : memref<112x8xf32, #tpu.memory_space<vmem>>, vector<16x8xf32>
    %cst_176 = arith.constant dense<0.000000e+00> : vector<48x8xf32>
    %166 = tpu.matmul %164, %165, %cst_176 {dimension_numbers = #tpu.dot_dimension_numbers<[1], [0], [0], [1], [0, 0, 1, 1], [], []>} : vector<48x16xf32>, vector<16x8xf32>, vector<48x8xf32> -> vector<48x8xf32>
    %167 = arith.addf %163, %166 : vector<48x8xf32>
    %c3_177 = arith.constant 3 : index
    %c0_178 = arith.constant 0 : index
    %168 = vector.load %arg25[%c3_177, %c0_178] : memref<56x32xf32, #tpu.memory_space<vmem>>, vector<48x16xf32>
    %c32_179 = arith.constant 32 : index
    %c0_180 = arith.constant 0 : index
    %169 = vector.load %arg14[%c32_179, %c0_180] : memref<112x8xf32, #tpu.memory_space<vmem>>, vector<16x8xf32>
    %cst_181 = arith.constant dense<0.000000e+00> : vector<48x8xf32>
    %170 = tpu.matmul %168, %169, %cst_181 {dimension_numbers = #tpu.dot_dimension_numbers<[1], [0], [0], [1], [0, 0, 1, 1], [], []>} : vector<48x16xf32>, vector<16x8xf32>, vector<48x8xf32> -> vector<48x8xf32>
    %171 = arith.addf %167, %170 : vector<48x8xf32>
    %c4_182 = arith.constant 4 : index
    %c0_183 = arith.constant 0 : index
    %172 = vector.load %arg25[%c4_182, %c0_183] : memref<56x32xf32, #tpu.memory_space<vmem>>, vector<48x16xf32>
    %c48_184 = arith.constant 48 : index
    %c0_185 = arith.constant 0 : index
    %173 = vector.load %arg14[%c48_184, %c0_185] : memref<112x8xf32, #tpu.memory_space<vmem>>, vector<16x8xf32>
    %cst_186 = arith.constant dense<0.000000e+00> : vector<48x8xf32>
    %174 = tpu.matmul %172, %173, %cst_186 {dimension_numbers = #tpu.dot_dimension_numbers<[1], [0], [0], [1], [0, 0, 1, 1], [], []>} : vector<48x16xf32>, vector<16x8xf32>, vector<48x8xf32> -> vector<48x8xf32>
    %175 = arith.addf %171, %174 : vector<48x8xf32>
    %c5_187 = arith.constant 5 : index
    %c0_188 = arith.constant 0 : index
    %176 = vector.load %arg25[%c5_187, %c0_188] : memref<56x32xf32, #tpu.memory_space<vmem>>, vector<48x16xf32>
    %c64_189 = arith.constant 64 : index
    %c0_190 = arith.constant 0 : index
    %177 = vector.load %arg14[%c64_189, %c0_190] : memref<112x8xf32, #tpu.memory_space<vmem>>, vector<16x8xf32>
    %cst_191 = arith.constant dense<0.000000e+00> : vector<48x8xf32>
    %178 = tpu.matmul %176, %177, %cst_191 {dimension_numbers = #tpu.dot_dimension_numbers<[1], [0], [0], [1], [0, 0, 1, 1], [], []>} : vector<48x16xf32>, vector<16x8xf32>, vector<48x8xf32> -> vector<48x8xf32>
    %179 = arith.addf %175, %178 : vector<48x8xf32>
    %c6_192 = arith.constant 6 : index
    %c0_193 = arith.constant 0 : index
    %180 = vector.load %arg25[%c6_192, %c0_193] : memref<56x32xf32, #tpu.memory_space<vmem>>, vector<48x16xf32>
    %c80_194 = arith.constant 80 : index
    %c0_195 = arith.constant 0 : index
    %181 = vector.load %arg14[%c80_194, %c0_195] : memref<112x8xf32, #tpu.memory_space<vmem>>, vector<16x8xf32>
    %cst_196 = arith.constant dense<0.000000e+00> : vector<48x8xf32>
    %182 = tpu.matmul %180, %181, %cst_196 {dimension_numbers = #tpu.dot_dimension_numbers<[1], [0], [0], [1], [0, 0, 1, 1], [], []>} : vector<48x16xf32>, vector<16x8xf32>, vector<48x8xf32> -> vector<48x8xf32>
    %183 = arith.addf %179, %182 : vector<48x8xf32>
    %c8_197 = arith.constant 8 : index
    %c0_198 = arith.constant 0 : index
    %184 = vector.load %arg25[%c8_197, %c0_198] : memref<56x32xf32, #tpu.memory_space<vmem>>, vector<48x16xf32>
    %c96_199 = arith.constant 96 : index
    %c0_200 = arith.constant 0 : index
    %185 = vector.load %arg14[%c96_199, %c0_200] : memref<112x8xf32, #tpu.memory_space<vmem>>, vector<16x8xf32>
    %cst_201 = arith.constant dense<0.000000e+00> : vector<48x8xf32>
    %186 = tpu.matmul %184, %185, %cst_201 {dimension_numbers = #tpu.dot_dimension_numbers<[1], [0], [0], [1], [0, 0, 1, 1], [], []>} : vector<48x16xf32>, vector<16x8xf32>, vector<48x8xf32> -> vector<48x8xf32>
    %187 = arith.addf %183, %186 : vector<48x8xf32>
    %c0_202 = arith.constant 0 : index
    %c0_203 = arith.constant 0 : index
    %188 = vector.load %arg15[%c0_202, %c0_203] : memref<1x8xf32, #tpu.memory_space<vmem>>, vector<1x8xf32>
    %189 = vector.broadcast %188 : vector<1x8xf32> to vector<48x8xf32>
    %190 = arith.addf %187, %189 : vector<48x8xf32>
    %cst_204 = arith.constant 0.000000e+00 : f32
    %191 = vector.broadcast %cst_204 : f32 to vector<48x8xf32>
    %192 = arith.maximumf %190, %191 : vector<48x8xf32>
    %193 = vector.broadcast %4 : vector<48x1xf32> to vector<48x8xf32>
    %194 = arith.mulf %192, %193 : vector<48x8xf32>
    %c4_205 = arith.constant 4 : index
    %c0_206 = arith.constant 0 : index
    %195 = vector.load %arg26[%c4_205, %c0_206] : memref<56x8xf32, #tpu.memory_space<vmem>>, vector<48x8xf32>
    tpu.vector_store %arg26[%c4_205, %c0_206], %194 {strides = array<i32>} : memref<56x8xf32, #tpu.memory_space<vmem>>, vector<48x8xf32>,
    %c0_207 = arith.constant 0 : index
    %c0_208 = arith.constant 0 : index
    %196 = vector.load %arg26[%c0_207, %c0_208] : memref<56x8xf32, #tpu.memory_space<vmem>>, vector<48x8xf32>
    %c0_209 = arith.constant 0 : index
    %c0_210 = arith.constant 0 : index
    %197 = vector.load %arg16[%c0_209, %c0_210] : memref<56x8xf32, #tpu.memory_space<vmem>>, vector<8x8xf32>
    %cst_211 = arith.constant dense<0.000000e+00> : vector<48x8xf32>
    %198 = tpu.matmul %196, %197, %cst_211 {dimension_numbers = #tpu.dot_dimension_numbers<[1], [0], [0], [1], [0, 0, 1, 1], [], []>} : vector<48x8xf32>, vector<8x8xf32>, vector<48x8xf32> -> vector<48x8xf32>
    %c2_212 = arith.constant 2 : index
    %c0_213 = arith.constant 0 : index
    %199 = vector.load %arg26[%c2_212, %c0_213] : memref<56x8xf32, #tpu.memory_space<vmem>>, vector<48x8xf32>
    %c8_214 = arith.constant 8 : index
    %c0_215 = arith.constant 0 : index
    %200 = vector.load %arg16[%c8_214, %c0_215] : memref<56x8xf32, #tpu.memory_space<vmem>>, vector<8x8xf32>
    %cst_216 = arith.constant dense<0.000000e+00> : vector<48x8xf32>
    %201 = tpu.matmul %199, %200, %cst_216 {dimension_numbers = #tpu.dot_dimension_numbers<[1], [0], [0], [1], [0, 0, 1, 1], [], []>} : vector<48x8xf32>, vector<8x8xf32>, vector<48x8xf32> -> vector<48x8xf32>
    %202 = arith.addf %198, %201 : vector<48x8xf32>
    %c3_217 = arith.constant 3 : index
    %c0_218 = arith.constant 0 : index
    %203 = vector.load %arg26[%c3_217, %c0_218] : memref<56x8xf32, #tpu.memory_space<vmem>>, vector<48x8xf32>
    %c16_219 = arith.constant 16 : index
    %c0_220 = arith.constant 0 : index
    %204 = vector.load %arg16[%c16_219, %c0_220] : memref<56x8xf32, #tpu.memory_space<vmem>>, vector<8x8xf32>
    %cst_221 = arith.constant dense<0.000000e+00> : vector<48x8xf32>
    %205 = tpu.matmul %203, %204, %cst_221 {dimension_numbers = #tpu.dot_dimension_numbers<[1], [0], [0], [1], [0, 0, 1, 1], [], []>} : vector<48x8xf32>, vector<8x8xf32>, vector<48x8xf32> -> vector<48x8xf32>
    %206 = arith.addf %202, %205 : vector<48x8xf32>
    %c4_222 = arith.constant 4 : index
    %c0_223 = arith.constant 0 : index
    %207 = vector.load %arg26[%c4_222, %c0_223] : memref<56x8xf32, #tpu.memory_space<vmem>>, vector<48x8xf32>
    %c24_224 = arith.constant 24 : index
    %c0_225 = arith.constant 0 : index
    %208 = vector.load %arg16[%c24_224, %c0_225] : memref<56x8xf32, #tpu.memory_space<vmem>>, vector<8x8xf32>
    %cst_226 = arith.constant dense<0.000000e+00> : vector<48x8xf32>
    %209 = tpu.matmul %207, %208, %cst_226 {dimension_numbers = #tpu.dot_dimension_numbers<[1], [0], [0], [1], [0, 0, 1, 1], [], []>} : vector<48x8xf32>, vector<8x8xf32>, vector<48x8xf32> -> vector<48x8xf32>
    %210 = arith.addf %206, %209 : vector<48x8xf32>
    %c5_227 = arith.constant 5 : index
    %c0_228 = arith.constant 0 : index
    %211 = vector.load %arg26[%c5_227, %c0_228] : memref<56x8xf32, #tpu.memory_space<vmem>>, vector<48x8xf32>
    %c32_229 = arith.constant 32 : index
    %c0_230 = arith.constant 0 : index
    %212 = vector.load %arg16[%c32_229, %c0_230] : memref<56x8xf32, #tpu.memory_space<vmem>>, vector<8x8xf32>
    %cst_231 = arith.constant dense<0.000000e+00> : vector<48x8xf32>
    %213 = tpu.matmul %211, %212, %cst_231 {dimension_numbers = #tpu.dot_dimension_numbers<[1], [0], [0], [1], [0, 0, 1, 1], [], []>} : vector<48x8xf32>, vector<8x8xf32>, vector<48x8xf32> -> vector<48x8xf32>
    %214 = arith.addf %210, %213 : vector<48x8xf32>
    %c6_232 = arith.constant 6 : index
    %c0_233 = arith.constant 0 : index
    %215 = vector.load %arg26[%c6_232, %c0_233] : memref<56x8xf32, #tpu.memory_space<vmem>>, vector<48x8xf32>
    %c40_234 = arith.constant 40 : index
    %c0_235 = arith.constant 0 : index
    %216 = vector.load %arg16[%c40_234, %c0_235] : memref<56x8xf32, #tpu.memory_space<vmem>>, vector<8x8xf32>
    %cst_236 = arith.constant dense<0.000000e+00> : vector<48x8xf32>
    %217 = tpu.matmul %215, %216, %cst_236 {dimension_numbers = #tpu.dot_dimension_numbers<[1], [0], [0], [1], [0, 0, 1, 1], [], []>} : vector<48x8xf32>, vector<8x8xf32>, vector<48x8xf32> -> vector<48x8xf32>
    %218 = arith.addf %214, %217 : vector<48x8xf32>
    %c8_237 = arith.constant 8 : index
    %c0_238 = arith.constant 0 : index
    %219 = vector.load %arg26[%c8_237, %c0_238] : memref<56x8xf32, #tpu.memory_space<vmem>>, vector<48x8xf32>
    %c48_239 = arith.constant 48 : index
    %c0_240 = arith.constant 0 : index
    %220 = vector.load %arg16[%c48_239, %c0_240] : memref<56x8xf32, #tpu.memory_space<vmem>>, vector<8x8xf32>
    %cst_241 = arith.constant dense<0.000000e+00> : vector<48x8xf32>
    %221 = tpu.matmul %219, %220, %cst_241 {dimension_numbers = #tpu.dot_dimension_numbers<[1], [0], [0], [1], [0, 0, 1, 1], [], []>} : vector<48x8xf32>, vector<8x8xf32>, vector<48x8xf32> -> vector<48x8xf32>
    %222 = arith.addf %218, %221 : vector<48x8xf32>
    %c0_242 = arith.constant 0 : index
    %c0_243 = arith.constant 0 : index
    %223 = vector.load %arg17[%c0_242, %c0_243] : memref<1x8xf32, #tpu.memory_space<vmem>>, vector<1x8xf32>
    %224 = vector.broadcast %223 : vector<1x8xf32> to vector<48x8xf32>
    %225 = arith.addf %222, %224 : vector<48x8xf32>
    %cst_244 = arith.constant 0.000000e+00 : f32
    %226 = vector.broadcast %cst_244 : f32 to vector<48x8xf32>
    %227 = arith.maximumf %225, %226 : vector<48x8xf32>
    %228 = vector.broadcast %4 : vector<48x1xf32> to vector<48x8xf32>
    %229 = arith.mulf %227, %228 : vector<48x8xf32>
    %c4_245 = arith.constant 4 : index
    %c16_246 = arith.constant 16 : index
    %230 = vector.load %arg25[%c4_245, %c16_246] : memref<56x32xf32, #tpu.memory_space<vmem>>, vector<48x8xf32>
    tpu.vector_store %arg25[%c4_245, %c16_246], %229 {strides = array<i32>} : memref<56x32xf32, #tpu.memory_space<vmem>>, vector<48x8xf32>,
    %c0_247 = arith.constant 0 : index
    %c0_248 = arith.constant 0 : index
    %231 = vector.load %arg25[%c0_247, %c0_248] : memref<56x32xf32, #tpu.memory_space<vmem>>, vector<48x24xf32>
    %c0_249 = arith.constant 0 : index
    %c0_250 = arith.constant 0 : index
    %232 = vector.load %arg18[%c0_249, %c0_250] : memref<168x8xf32, #tpu.memory_space<vmem>>, vector<24x8xf32>
    %cst_251 = arith.constant dense<0.000000e+00> : vector<48x8xf32>
    %233 = tpu.matmul %231, %232, %cst_251 {dimension_numbers = #tpu.dot_dimension_numbers<[1], [0], [0], [1], [0, 0, 1, 1], [], []>} : vector<48x24xf32>, vector<24x8xf32>, vector<48x8xf32> -> vector<48x8xf32>
    %c2_252 = arith.constant 2 : index
    %c0_253 = arith.constant 0 : index
    %234 = vector.load %arg25[%c2_252, %c0_253] : memref<56x32xf32, #tpu.memory_space<vmem>>, vector<48x24xf32>
    %c24_254 = arith.constant 24 : index
    %c0_255 = arith.constant 0 : index
    %235 = vector.load %arg18[%c24_254, %c0_255] : memref<168x8xf32, #tpu.memory_space<vmem>>, vector<24x8xf32>
    %cst_256 = arith.constant dense<0.000000e+00> : vector<48x8xf32>
    %236 = tpu.matmul %234, %235, %cst_256 {dimension_numbers = #tpu.dot_dimension_numbers<[1], [0], [0], [1], [0, 0, 1, 1], [], []>} : vector<48x24xf32>, vector<24x8xf32>, vector<48x8xf32> -> vector<48x8xf32>
    %237 = arith.addf %233, %236 : vector<48x8xf32>
    %c3_257 = arith.constant 3 : index
    %c0_258 = arith.constant 0 : index
    %238 = vector.load %arg25[%c3_257, %c0_258] : memref<56x32xf32, #tpu.memory_space<vmem>>, vector<48x24xf32>
    %c48_259 = arith.constant 48 : index
    %c0_260 = arith.constant 0 : index
    %239 = vector.load %arg18[%c48_259, %c0_260] : memref<168x8xf32, #tpu.memory_space<vmem>>, vector<24x8xf32>
    %cst_261 = arith.constant dense<0.000000e+00> : vector<48x8xf32>
    %240 = tpu.matmul %238, %239, %cst_261 {dimension_numbers = #tpu.dot_dimension_numbers<[1], [0], [0], [1], [0, 0, 1, 1], [], []>} : vector<48x24xf32>, vector<24x8xf32>, vector<48x8xf32> -> vector<48x8xf32>
    %241 = arith.addf %237, %240 : vector<48x8xf32>
    %c4_262 = arith.constant 4 : index
    %c0_263 = arith.constant 0 : index
    %242 = vector.load %arg25[%c4_262, %c0_263] : memref<56x32xf32, #tpu.memory_space<vmem>>, vector<48x24xf32>
    %c72_264 = arith.constant 72 : index
    %c0_265 = arith.constant 0 : index
    %243 = vector.load %arg18[%c72_264, %c0_265] : memref<168x8xf32, #tpu.memory_space<vmem>>, vector<24x8xf32>
    %cst_266 = arith.constant dense<0.000000e+00> : vector<48x8xf32>
    %244 = tpu.matmul %242, %243, %cst_266 {dimension_numbers = #tpu.dot_dimension_numbers<[1], [0], [0], [1], [0, 0, 1, 1], [], []>} : vector<48x24xf32>, vector<24x8xf32>, vector<48x8xf32> -> vector<48x8xf32>
    %245 = arith.addf %241, %244 : vector<48x8xf32>
    %c5_267 = arith.constant 5 : index
    %c0_268 = arith.constant 0 : index
    %246 = vector.load %arg25[%c5_267, %c0_268] : memref<56x32xf32, #tpu.memory_space<vmem>>, vector<48x24xf32>
    %c96_269 = arith.constant 96 : index
    %c0_270 = arith.constant 0 : index
    %247 = vector.load %arg18[%c96_269, %c0_270] : memref<168x8xf32, #tpu.memory_space<vmem>>, vector<24x8xf32>
    %cst_271 = arith.constant dense<0.000000e+00> : vector<48x8xf32>
    %248 = tpu.matmul %246, %247, %cst_271 {dimension_numbers = #tpu.dot_dimension_numbers<[1], [0], [0], [1], [0, 0, 1, 1], [], []>} : vector<48x24xf32>, vector<24x8xf32>, vector<48x8xf32> -> vector<48x8xf32>
    %249 = arith.addf %245, %248 : vector<48x8xf32>
    %c6_272 = arith.constant 6 : index
    %c0_273 = arith.constant 0 : index
    %250 = vector.load %arg25[%c6_272, %c0_273] : memref<56x32xf32, #tpu.memory_space<vmem>>, vector<48x24xf32>
    %c120_274 = arith.constant 120 : index
    %c0_275 = arith.constant 0 : index
    %251 = vector.load %arg18[%c120_274, %c0_275] : memref<168x8xf32, #tpu.memory_space<vmem>>, vector<24x8xf32>
    %cst_276 = arith.constant dense<0.000000e+00> : vector<48x8xf32>
    %252 = tpu.matmul %250, %251, %cst_276 {dimension_numbers = #tpu.dot_dimension_numbers<[1], [0], [0], [1], [0, 0, 1, 1], [], []>} : vector<48x24xf32>, vector<24x8xf32>, vector<48x8xf32> -> vector<48x8xf32>
    %253 = arith.addf %249, %252 : vector<48x8xf32>
    %c8_277 = arith.constant 8 : index
    %c0_278 = arith.constant 0 : index
    %254 = vector.load %arg25[%c8_277, %c0_278] : memref<56x32xf32, #tpu.memory_space<vmem>>, vector<48x24xf32>
    %c144_279 = arith.constant 144 : index
    %c0_280 = arith.constant 0 : index
    %255 = vector.load %arg18[%c144_279, %c0_280] : memref<168x8xf32, #tpu.memory_space<vmem>>, vector<24x8xf32>
    %cst_281 = arith.constant dense<0.000000e+00> : vector<48x8xf32>
    %256 = tpu.matmul %254, %255, %cst_281 {dimension_numbers = #tpu.dot_dimension_numbers<[1], [0], [0], [1], [0, 0, 1, 1], [], []>} : vector<48x24xf32>, vector<24x8xf32>, vector<48x8xf32> -> vector<48x8xf32>
    %257 = arith.addf %253, %256 : vector<48x8xf32>
    %c0_282 = arith.constant 0 : index
    %c0_283 = arith.constant 0 : index
    %258 = vector.load %arg19[%c0_282, %c0_283] : memref<1x8xf32, #tpu.memory_space<vmem>>, vector<1x8xf32>
    %259 = vector.broadcast %258 : vector<1x8xf32> to vector<48x8xf32>
    %260 = arith.addf %257, %259 : vector<48x8xf32>
    %cst_284 = arith.constant 0.000000e+00 : f32
    %261 = vector.broadcast %cst_284 : f32 to vector<48x8xf32>
    %262 = arith.maximumf %260, %261 : vector<48x8xf32>
    %263 = vector.broadcast %4 : vector<48x1xf32> to vector<48x8xf32>
    %264 = arith.mulf %262, %263 : vector<48x8xf32>
    %c4_285 = arith.constant 4 : index
    %c0_286 = arith.constant 0 : index
    %265 = vector.load %arg26[%c4_285, %c0_286] : memref<56x8xf32, #tpu.memory_space<vmem>>, vector<48x8xf32>
    tpu.vector_store %arg26[%c4_285, %c0_286], %264 {strides = array<i32>} : memref<56x8xf32, #tpu.memory_space<vmem>>, vector<48x8xf32>,
    %c0_287 = arith.constant 0 : index
    %c0_288 = arith.constant 0 : index
    %266 = vector.load %arg26[%c0_287, %c0_288] : memref<56x8xf32, #tpu.memory_space<vmem>>, vector<48x8xf32>
    %c0_289 = arith.constant 0 : index
    %c0_290 = arith.constant 0 : index
    %267 = vector.load %arg20[%c0_289, %c0_290] : memref<56x8xf32, #tpu.memory_space<vmem>>, vector<8x8xf32>
    %cst_291 = arith.constant dense<0.000000e+00> : vector<48x8xf32>
    %268 = tpu.matmul %266, %267, %cst_291 {dimension_numbers = #tpu.dot_dimension_numbers<[1], [0], [0], [1], [0, 0, 1, 1], [], []>} : vector<48x8xf32>, vector<8x8xf32>, vector<48x8xf32> -> vector<48x8xf32>
    %c2_292 = arith.constant 2 : index
    %c0_293 = arith.constant 0 : index
    %269 = vector.load %arg26[%c2_292, %c0_293] : memref<56x8xf32, #tpu.memory_space<vmem>>, vector<48x8xf32>
    %c8_294 = arith.constant 8 : index
    %c0_295 = arith.constant 0 : index
    %270 = vector.load %arg20[%c8_294, %c0_295] : memref<56x8xf32, #tpu.memory_space<vmem>>, vector<8x8xf32>
    %cst_296 = arith.constant dense<0.000000e+00> : vector<48x8xf32>
    %271 = tpu.matmul %269, %270, %cst_296 {dimension_numbers = #tpu.dot_dimension_numbers<[1], [0], [0], [1], [0, 0, 1, 1], [], []>} : vector<48x8xf32>, vector<8x8xf32>, vector<48x8xf32> -> vector<48x8xf32>
    %272 = arith.addf %268, %271 : vector<48x8xf32>
    %c3_297 = arith.constant 3 : index
    %c0_298 = arith.constant 0 : index
    %273 = vector.load %arg26[%c3_297, %c0_298] : memref<56x8xf32, #tpu.memory_space<vmem>>, vector<48x8xf32>
    %c16_299 = arith.constant 16 : index
    %c0_300 = arith.constant 0 : index
    %274 = vector.load %arg20[%c16_299, %c0_300] : memref<56x8xf32, #tpu.memory_space<vmem>>, vector<8x8xf32>
    %cst_301 = arith.constant dense<0.000000e+00> : vector<48x8xf32>
    %275 = tpu.matmul %273, %274, %cst_301 {dimension_numbers = #tpu.dot_dimension_numbers<[1], [0], [0], [1], [0, 0, 1, 1], [], []>} : vector<48x8xf32>, vector<8x8xf32>, vector<48x8xf32> -> vector<48x8xf32>
    %276 = arith.addf %272, %275 : vector<48x8xf32>
    %c4_302 = arith.constant 4 : index
    %c0_303 = arith.constant 0 : index
    %277 = vector.load %arg26[%c4_302, %c0_303] : memref<56x8xf32, #tpu.memory_space<vmem>>, vector<48x8xf32>
    %c24_304 = arith.constant 24 : index
    %c0_305 = arith.constant 0 : index
    %278 = vector.load %arg20[%c24_304, %c0_305] : memref<56x8xf32, #tpu.memory_space<vmem>>, vector<8x8xf32>
    %cst_306 = arith.constant dense<0.000000e+00> : vector<48x8xf32>
    %279 = tpu.matmul %277, %278, %cst_306 {dimension_numbers = #tpu.dot_dimension_numbers<[1], [0], [0], [1], [0, 0, 1, 1], [], []>} : vector<48x8xf32>, vector<8x8xf32>, vector<48x8xf32> -> vector<48x8xf32>
    %280 = arith.addf %276, %279 : vector<48x8xf32>
    %c5_307 = arith.constant 5 : index
    %c0_308 = arith.constant 0 : index
    %281 = vector.load %arg26[%c5_307, %c0_308] : memref<56x8xf32, #tpu.memory_space<vmem>>, vector<48x8xf32>
    %c32_309 = arith.constant 32 : index
    %c0_310 = arith.constant 0 : index
    %282 = vector.load %arg20[%c32_309, %c0_310] : memref<56x8xf32, #tpu.memory_space<vmem>>, vector<8x8xf32>
    %cst_311 = arith.constant dense<0.000000e+00> : vector<48x8xf32>
    %283 = tpu.matmul %281, %282, %cst_311 {dimension_numbers = #tpu.dot_dimension_numbers<[1], [0], [0], [1], [0, 0, 1, 1], [], []>} : vector<48x8xf32>, vector<8x8xf32>, vector<48x8xf32> -> vector<48x8xf32>
    %284 = arith.addf %280, %283 : vector<48x8xf32>
    %c6_312 = arith.constant 6 : index
    %c0_313 = arith.constant 0 : index
    %285 = vector.load %arg26[%c6_312, %c0_313] : memref<56x8xf32, #tpu.memory_space<vmem>>, vector<48x8xf32>
    %c40_314 = arith.constant 40 : index
    %c0_315 = arith.constant 0 : index
    %286 = vector.load %arg20[%c40_314, %c0_315] : memref<56x8xf32, #tpu.memory_space<vmem>>, vector<8x8xf32>
    %cst_316 = arith.constant dense<0.000000e+00> : vector<48x8xf32>
    %287 = tpu.matmul %285, %286, %cst_316 {dimension_numbers = #tpu.dot_dimension_numbers<[1], [0], [0], [1], [0, 0, 1, 1], [], []>} : vector<48x8xf32>, vector<8x8xf32>, vector<48x8xf32> -> vector<48x8xf32>
    %288 = arith.addf %284, %287 : vector<48x8xf32>
    %c8_317 = arith.constant 8 : index
    %c0_318 = arith.constant 0 : index
    %289 = vector.load %arg26[%c8_317, %c0_318] : memref<56x8xf32, #tpu.memory_space<vmem>>, vector<48x8xf32>
    %c48_319 = arith.constant 48 : index
    %c0_320 = arith.constant 0 : index
    %290 = vector.load %arg20[%c48_319, %c0_320] : memref<56x8xf32, #tpu.memory_space<vmem>>, vector<8x8xf32>
    %cst_321 = arith.constant dense<0.000000e+00> : vector<48x8xf32>
    %291 = tpu.matmul %289, %290, %cst_321 {dimension_numbers = #tpu.dot_dimension_numbers<[1], [0], [0], [1], [0, 0, 1, 1], [], []>} : vector<48x8xf32>, vector<8x8xf32>, vector<48x8xf32> -> vector<48x8xf32>
    %292 = arith.addf %288, %291 : vector<48x8xf32>
    %c0_322 = arith.constant 0 : index
    %c0_323 = arith.constant 0 : index
    %293 = vector.load %arg21[%c0_322, %c0_323] : memref<1x8xf32, #tpu.memory_space<vmem>>, vector<1x8xf32>
    %294 = vector.broadcast %293 : vector<1x8xf32> to vector<48x8xf32>
    %295 = arith.addf %292, %294 : vector<48x8xf32>
    %cst_324 = arith.constant 0.000000e+00 : f32
    %296 = vector.broadcast %cst_324 : f32 to vector<48x8xf32>
    %297 = arith.maximumf %295, %296 : vector<48x8xf32>
    %298 = vector.broadcast %4 : vector<48x1xf32> to vector<48x8xf32>
    %299 = arith.mulf %297, %298 : vector<48x8xf32>
    %c4_325 = arith.constant 4 : index
    %c24_326 = arith.constant 24 : index
    %300 = vector.load %arg25[%c4_325, %c24_326] : memref<56x32xf32, #tpu.memory_space<vmem>>, vector<48x8xf32>
    tpu.vector_store %arg25[%c4_325, %c24_326], %299 {strides = array<i32>} : memref<56x32xf32, #tpu.memory_space<vmem>>, vector<48x8xf32>,
    %c4_327 = arith.constant 4 : index
    %c0_328 = arith.constant 0 : index
    %301 = vector.load %arg25[%c4_327, %c0_328] : memref<56x32xf32, #tpu.memory_space<vmem>>, vector<48x32xf32>
    %c0_329 = arith.constant 0 : index
    %c0_330 = arith.constant 0 : index
    %302 = vector.load %arg2[%c0_329, %c0_330] : memref<2x48xf32, #tpu.memory_space<vmem>>, vector<2x48xf32>
    %cst_331 = arith.constant dense<0.000000e+00> : vector<2x32xf32>
    %303 = tpu.matmul %302, %301, %cst_331 {dimension_numbers = #tpu.dot_dimension_numbers<[1], [0], [0], [1], [0, 0, 1, 1], [], []>} : vector<2x48xf32>, vector<48x32xf32>, vector<2x32xf32> -> vector<2x32xf32>
    %c0_332 = arith.constant 0 : index
    %c0_333 = arith.constant 0 : index
    %304 = vector.load %arg22[%c0_332, %c0_333] : memref<32x10xf32, #tpu.memory_space<vmem>>, vector<32x10xf32>
    %cst_334 = arith.constant dense<0.000000e+00> : vector<2x10xf32>
    %305 = tpu.matmul %303, %304, %cst_334 {dimension_numbers = #tpu.dot_dimension_numbers<[1], [0], [0], [1], [0, 0, 1, 1], [], []>} : vector<2x32xf32>, vector<32x10xf32>, vector<2x10xf32> -> vector<2x10xf32>
    %c0_335 = arith.constant 0 : index
    %c0_336 = arith.constant 0 : index
    %306 = vector.load %arg23[%c0_335, %c0_336] : memref<1x10xf32, #tpu.memory_space<vmem>>, vector<1x10xf32>
    %307 = vector.broadcast %306 : vector<1x10xf32> to vector<2x10xf32>
    %308 = arith.addf %305, %307 : vector<2x10xf32>
    %c0_337 = arith.constant 0 : index
    %c0_338 = arith.constant 0 : index
    %309 = vector.load %arg24[%c0_337, %c0_338] : memref<2x10xf32, #tpu.memory_space<vmem>>, vector<2x10xf32>
    tpu.vector_store %arg24[%c0_337, %c0_338], %308 {strides = array<i32>} : memref<2x10xf32, #tpu.memory_space<vmem>>, vector<2x10xf32>,
    return
  }
}

</mosaic_0001>

<llo_original>
// kernel: tile.8
$region0: #{tile.8}
  #allocation0 [shape = 's32[1]{0}', space=sflag, size = 0x4, scoped, tag = 'scoped memory for tile.8']
  %s0 = inlined_call_operand.vmem [shape: f32[24], index: 0, kind: input, shape index: {}]
  %s1 = inlined_call_operand.vmem [shape: f32[2,24], index: 1, kind: output, shape index: {}]
  // Predicated region
  $region2: #{tile.8} parent=0 // pred_check
    _
  $region3: #{tile.8} parent=0 // pred_check_branch
    %3 = sbr.rel (0) target = $region5
  $region4: #{tile.8} parent=0 // pred_region
    _
  $region5: #{tile.8} parent=0 // pred_fallthru
    _
  %v4 = vld [vmem:[%s0] ss:$0 sm:$0xff]
  %5 = vst [vmem:[%s1] sm:$0x3] %v4

// kernel: tile.0
$region0: #{tile.0}
  %s0 = inlined_call_operand.vmem [shape: f32[2,24], index: 0, kind: input, shape index: {}]
  %s1 = inlined_call_operand.vmem [shape: f32[48,1], index: 1, kind: output, shape index: {}]
  $region1: #{tile.0} parent=0
    #allocation0 [shape = 'u8[4096]{0}', space=vmem, size = 0x1000, scoped, tag = 'scoped mem for input reshape']
    %s3 = sshllo.u32 0, 2
    %v4 = vld [vmem:[%s0] sm:%s3]
    %5 = vst [vmem:[#allocation0] sm:%s3] %v4
    %v6 = vld [vmem:[#allocation0] sm:$0x3]
    %vm7 = vcmask 7168
    %8 = vst.msk [vmem:[%s1] ss:$24 sm:$0x3] %vm7, %v6
    %v9 = vld [vmem:[#allocation0] sm:$0x3]
    %10 = vrot.lane.b32.xlu0 %v9, 127
    %v11 = vpop.permute.xlu0 %10
    %vm12 = vcmask 7168
    %s13 = scalar_lea.vmem %s1, 1
    %14 = vst.msk [vmem:[%s13] ss:$24 sm:$0x3] %vm12, %v11
    %v15 = vld [vmem:[#allocation0] sm:$0x3]
    %16 = vrot.lane.b32.xlu0 %v15, 126
    %v17 = vpop.permute.xlu0 %16
    %vm18 = vcmask 7168
    %s19 = scalar_lea.vmem %s1, 2
    %20 = vst.msk [vmem:[%s19] ss:$24 sm:$0x3] %vm18, %v17
    %v21 = vld [vmem:[#allocation0] sm:$0x3]
    %22 = vrot.lane.b32.xlu0 %v21, 125
    %v23 = vpop.permute.xlu0 %22
    %vm24 = vcmask 7168
    %s25 = scalar_lea.vmem %s1, 3
    %26 = vst.msk [vmem:[%s25] ss:$24 sm:$0x3] %vm24, %v23
    %v27 = vld [vmem:[#allocation0] sm:$0x3]
    %28 = vrot.lane.b32.xlu0 %v27, 124
    %v29 = vpop.permute.xlu0 %28
    %vm30 = vcmask 7168
    %s31 = scalar_lea.vmem %s1, 4
    %32 = vst.msk [vmem:[%s31] ss:$24 sm:$0x3] %vm30, %v29
    %v33 = vld [vmem:[#allocation0] sm:$0x3]
    %34 = vrot.lane.b32.xlu0 %v33, 123
    %v35 = vpop.permute.xlu0 %34
    %vm36 = vcmask 7168
    %s37 = scalar_lea.vmem %s1, 5
    %38 = vst.msk [vmem:[%s37] ss:$24 sm:$0x3] %vm36, %v35
    %v39 = vld [vmem:[#allocation0] sm:$0x3]
    %40 = vrot.lane.b32.xlu0 %v39, 122
    %v41 = vpop.permute.xlu0 %40
    %vm42 = vcmask 7168
    %s43 = scalar_lea.vmem %s1, 6
    %44 = vst.msk [vmem:[%s43] ss:$24 sm:$0x3] %vm42, %v41
    %v45 = vld [vmem:[#allocation0] sm:$0x3]
    %46 = vrot.lane.b32.xlu0 %v45, 121
    %v47 = vpop.permute.xlu0 %46
    %vm48 = vcmask 7168
    %s49 = scalar_lea.vmem %s1, 7
    %50 = vst.msk [vmem:[%s49] ss:$24 sm:$0x3] %vm48, %v47
    %s51 = scalar_lea.vmem [#allocation0], 1
    %s52 = smov 3
    %v53 = vld [vmem:[%s51] ss:$-1 sm:%s52]
    %54 = vrot.lane.b32.xlu0 %v53, 120
    %v55 = vpop.permute.xlu0 %54
    %vm56 = vcmask 7168
    %s57 = scalar_lea.vmem %s1, 32
    %58 = vst.msk [vmem:[%s57] ss:$-24 sm:$0x3] %vm56, %v55
    %s59 = scalar_lea.vmem [#allocation0], 1
    %s60 = smov 3
    %v61 = vld [vmem:[%s59] ss:$-1 sm:%s60]
    %62 = vrot.lane.b32.xlu0 %v61, 119
    %v63 = vpop.permute.xlu0 %62
    %vm64 = vcmask 7168
    %s65 = scalar_lea.vmem %s1, 33
    %66 = vst.msk [vmem:[%s65] ss:$-24 sm:$0x3] %vm64, %v63
    %s67 = scalar_lea.vmem [#allocation0], 1
    %s68 = smov 3
    %v69 = vld [vmem:[%s67] ss:$-1 sm:%s68]
    %70 = vrot.lane.b32.xlu0 %v69, 118
    %v71 = vpop.permute.xlu0 %70
    %vm72 = vcmask 7168
    %s73 = scalar_lea.vmem %s1, 34
    %74 = vst.msk [vmem:[%s73] ss:$-24 sm:$0x3] %vm72, %v71
    %s75 = scalar_lea.vmem [#allocation0], 1
    %s76 = smov 3
    %v77 = vld [vmem:[%s75] ss:$-1 sm:%s76]
    %78 = vrot.lane.b32.xlu0 %v77, 117
    %v79 = vpop.permute.xlu0 %78
    %vm80 = vcmask 7168
    %s81 = scalar_lea.vmem %s1, 35
    %82 = vst.msk [vmem:[%s81] ss:$-24 sm:$0x3] %vm80, %v79
    %s83 = scalar_lea.vmem [#allocation0], 1
    %s84 = smov 3
    %v85 = vld [vmem:[%s83] ss:$-1 sm:%s84]
    %86 = vrot.lane.b32.xlu0 %v85, 116
    %v87 = vpop.permute.xlu0 %86
    %vm88 = vcmask 7168
    %s89 = scalar_lea.vmem %s1, 36
    %90 = vst.msk [vmem:[%s89] ss:$-24 sm:$0x3] %vm88, %v87
    %s91 = scalar_lea.vmem [#allocation0], 1
    %s92 = smov 3
    %v93 = vld [vmem:[%s91] ss:$-1 sm:%s92]
    %94 = vrot.lane.b32.xlu0 %v93, 115
    %v95 = vpop.permute.xlu0 %94
    %vm96 = vcmask 7168
    %s97 = scalar_lea.vmem %s1, 37
    %98 = vst.msk [vmem:[%s97] ss:$-24 sm:$0x3] %vm96, %v95
    %s99 = scalar_lea.vmem [#allocation0], 1
    %s100 = smov 3
    %v101 = vld [vmem:[%s99] ss:$-1 sm:%s100]
    %102 = vrot.lane.b32.xlu0 %v101, 114
    %v103 = vpop.permute.xlu0 %102
    %vm104 = vcmask 7168
    %s105 = scalar_lea.vmem %s1, 38
    %106 = vst.msk [vmem:[%s105] ss:$-24 sm:$0x3] %vm104, %v103
    %s107 = scalar_lea.vmem [#allocation0], 1
    %s108 = smov 3
    %v109 = vld [vmem:[%s107] ss:$-1 sm:%s108]
    %110 = vrot.lane.b32.xlu0 %v109, 113
    %v111 = vpop.permute.xlu0 %110
    %vm112 = vcmask 7168
    %s113 = scalar_lea.vmem %s1, 39
    %114 = vst.msk [vmem:[%s113] ss:$-24 sm:$0x3] %vm112, %v111
    %s115 = scalar_lea.vmem [#allocation0], 1
    %s116 = smov 3
    %v117 = vld [vmem:[%s115] ss:$-1 sm:%s116]
    %118 = vrot.lane.b32.xlu0 %v117, 112
    %v119 = vpop.permute.xlu0 %118
    %vm120 = vcmask 7168
    %s121 = scalar_lea.vmem %s1, 40
    %122 = vst.msk [vmem:[%s121] ss:$-24 sm:$0x3] %vm120, %v119
    %s123 = scalar_lea.vmem [#allocation0], 1
    %s124 = smov 3
    %v125 = vld [vmem:[%s123] ss:$-1 sm:%s124]
    %126 = vrot.lane.b32.xlu0 %v125, 111
    %v127 = vpop.permute.xlu0 %126
    %vm128 = vcmask 7168
    %s129 = scalar_lea.vmem %s1, 41
    %130 = vst.msk [vmem:[%s129] ss:$-24 sm:$0x3] %vm128, %v127
    %s131 = scalar_lea.vmem [#allocation0], 1
    %s132 = smov 3
    %v133 = vld [vmem:[%s131] ss:$-1 sm:%s132]
    %134 = vrot.lane.b32.xlu0 %v133, 110
    %v135 = vpop.permute.xlu0 %134
    %vm136 = vcmask 7168
    %s137 = scalar_lea.vmem %s1, 42
    %138 = vst.msk [vmem:[%s137] ss:$-24 sm:$0x3] %vm136, %v135
    %s139 = scalar_lea.vmem [#allocation0], 1
    %s140 = smov 3
    %v141 = vld [vmem:[%s139] ss:$-1 sm:%s140]
    %142 = vrot.lane.b32.xlu0 %v141, 109
    %v143 = vpop.permute.xlu0 %142
    %vm144 = vcmask 7168
    %s145 = scalar_lea.vmem %s1, 43
    %146 = vst.msk [vmem:[%s145] ss:$-24 sm:$0x3] %vm144, %v143
    %s147 = scalar_lea.vmem [#allocation0], 1
    %s148 = smov 3
    %v149 = vld [vmem:[%s147] ss:$-1 sm:%s148]
    %150 = vrot.lane.b32.xlu0 %v149, 108
    %v151 = vpop.permute.xlu0 %150
    %vm152 = vcmask 7168
    %s153 = scalar_lea.vmem %s1, 44
    %154 = vst.msk [vmem:[%s153] ss:$-24 sm:$0x3] %vm152, %v151
    %s155 = scalar_lea.vmem [#allocation0], 1
    %s156 = smov 3
    %v157 = vld [vmem:[%s155] ss:$-1 sm:%s156]
    %158 = vrot.lane.b32.xlu0 %v157, 107
    %v159 = vpop.permute.xlu0 %158
    %vm160 = vcmask 7168
    %s161 = scalar_lea.vmem %s1, 45
    %162 = vst.msk [vmem:[%s161] ss:$-24 sm:$0x3] %vm160, %v159
    %s163 = scalar_lea.vmem [#allocation0], 1
    %s164 = smov 3
    %v165 = vld [vmem:[%s163] ss:$-1 sm:%s164]
    %166 = vrot.lane.b32.xlu0 %v165, 106
    %v167 = vpop.permute.xlu0 %166
    %vm168 = vcmask 7168
    %s169 = scalar_lea.vmem %s1, 46
    %170 = vst.msk [vmem:[%s169] ss:$-24 sm:$0x3] %vm168, %v167
    %s171 = scalar_lea.vmem [#allocation0], 1
    %s172 = smov 3
    %v173 = vld [vmem:[%s171] ss:$-1 sm:%s172]
    %174 = vrot.lane.b32.xlu0 %v173, 105
    %v175 = vpop.permute.xlu0 %174
    %vm176 = vcmask 7168
    %s177 = scalar_lea.vmem %s1, 47
    %178 = vst.msk [vmem:[%s177] ss:$-24 sm:$0x3] %vm176, %v175

// kernel: _lambda_.1
$region0: #{_lambda_.1}
  #allocation0 [shape = 'u32[]', space=smem, size = 0x4, offset = 0x4, fixed_abs, tag = 'smem constant byte address 0x4 - core index']
  #allocation1 [shape = 'u32[144,128]{1,0:T(1,128)}', space=vmem, size = 0x12000, scoped, tag = 'internal scratch']
  #allocation2 [shape = 'f32[56,32]{1,0:T(8,128)}', space=vmem, size = 0x7000, scoped, tag = 'scratch operand']
  #allocation3 [shape = 'f32[56,8]{1,0:T(8,128)}', space=vmem, size = 0x7000, scoped, tag = 'scratch operand']
  %s0 = inlined_call_operand.vmem [shape: f32[48,32], index: 0, kind: input, shape index: {}]
  %s1 = inlined_call_operand.vmem [shape: f32[48,1], index: 1, kind: input, shape index: {}]
  %s2 = inlined_call_operand.vmem [shape: f32[2,48], index: 2, kind: input, shape index: {}]
  %s3 = inlined_call_operand.vmem [shape: f32[32,16], index: 3, kind: input, shape index: {}]
  %s4 = inlined_call_operand.vmem [shape: f32[1,16], index: 4, kind: input, shape index: {}]
  %s5 = inlined_call_operand.vmem [shape: f32[112,8], index: 5, kind: input, shape index: {}]
  %s6 = inlined_call_operand.vmem [shape: f32[1,8], index: 6, kind: input, shape index: {}]
  %s7 = inlined_call_operand.vmem [shape: f32[56,8], index: 7, kind: input, shape index: {}]
  %s8 = inlined_call_operand.vmem [shape: f32[1,8], index: 8, kind: input, shape index: {}]
  %s9 = inlined_call_operand.vmem [shape: f32[168,8], index: 9, kind: input, shape index: {}]
  %s10 = inlined_call_operand.vmem [shape: f32[1,8], index: 10, kind: input, shape index: {}]
  %s11 = inlined_call_operand.vmem [shape: f32[56,8], index: 11, kind: input, shape index: {}]
  %s12 = inlined_call_operand.vmem [shape: f32[1,8], index: 12, kind: input, shape index: {}]
  %s13 = inlined_call_operand.vmem [shape: f32[32,16], index: 13, kind: input, shape index: {}]
  %s14 = inlined_call_operand.vmem [shape: f32[112,8], index: 14, kind: input, shape index: {}]
  %s15 = inlined_call_operand.vmem [shape: f32[1,8], index: 15, kind: input, shape index: {}]
  %s16 = inlined_call_operand.vmem [shape: f32[56,8], index: 16, kind: input, shape index: {}]
  %s17 = inlined_call_operand.vmem [shape: f32[1,8], index: 17, kind: input, shape index: {}]
  %s18 = inlined_call_operand.vmem [shape: f32[168,8], index: 18, kind: input, shape index: {}]
  %s19 = inlined_call_operand.vmem [shape: f32[1,8], index: 19, kind: input, shape index: {}]
  %s20 = inlined_call_operand.vmem [shape: f32[56,8], index: 20, kind: input, shape index: {}]
  %s21 = inlined_call_operand.vmem [shape: f32[1,8], index: 21, kind: input, shape index: {}]
  %s22 = inlined_call_operand.vmem [shape: f32[32,10], index: 22, kind: input, shape index: {}]
  %s23 = inlined_call_operand.vmem [shape: f32[1,10], index: 23, kind: input, shape index: {}]
  %s24 = inlined_call_operand.hbm [shape: f32[2,10], index: 24, kind: output, shape index: {}]
  %s25 = sld [smem:[#allocation0]]
  $region106: #{_lambda_.1} parent=0
    _
  %s27 = ssub.s32 1, %s25
  %s28 = scalar_select 0, %s27, %s25
  $region1: #{_lambda_.1} parent=0
    #allocation4 [shape = 'u8[1024]{0}', space=vmem, size = 0x400, scoped, tag = 'output window, operand 0, single buffered']
    #allocation5 [shape = 's32[1]{0}', space=sflag, size = 0x4, scoped, tag = 'scoped memory for _lambda_.1']
    %29 = vsyncpa [#allocation5], 0
    // Predicated region
    $region2: #{_lambda_.1} parent=1 // pred_check
      _
    $region3: #{_lambda_.1} parent=1 // pred_check_branch
      %31 = sbr.rel (0) target = $region5
    $region4: #{_lambda_.1} parent=1 // pred_region
      _
    $region5: #{_lambda_.1} parent=1 // pred_fallthru
      _
    // Predicated region
    $region6: #{_lambda_.1} parent=1 // pred_check
      _
    $region7: #{_lambda_.1} parent=1 // pred_check_branch
      %33 = sbr.rel (0) target = $region9
    $region8: #{_lambda_.1} parent=1 // pred_region
      _
    $region9: #{_lambda_.1} parent=1 // pred_fallthru
      _
    // Predicated region
    $region10: #{_lambda_.1} parent=1 // pred_check
      _
    $region11: #{_lambda_.1} parent=1 // pred_check_branch
      %35 = sbr.rel (0) target = $region13
    $region12: #{_lambda_.1} parent=1 // pred_region
      _
    $region13: #{_lambda_.1} parent=1 // pred_fallthru
      _
    // Predicated region
    $region14: #{_lambda_.1} parent=1 // pred_check
      _
    $region15: #{_lambda_.1} parent=1 // pred_check_branch
      %37 = sbr.rel (0) target = $region17
    $region16: #{_lambda_.1} parent=1 // pred_region
      _
    $region17: #{_lambda_.1} parent=1 // pred_fallthru
      _
    // Predicated region
    $region18: #{_lambda_.1} parent=1 // pred_check
      _
    $region19: #{_lambda_.1} parent=1 // pred_check_branch
      %39 = sbr.rel (0) target = $region21
    $region20: #{_lambda_.1} parent=1 // pred_region
      _
    $region21: #{_lambda_.1} parent=1 // pred_fallthru
      _
    // Predicated region
    $region22: #{_lambda_.1} parent=1 // pred_check
      _
    $region23: #{_lambda_.1} parent=1 // pred_check_branch
      %41 = sbr.rel (0) target = $region25
    $region24: #{_lambda_.1} parent=1 // pred_region
      _
    $region25: #{_lambda_.1} parent=1 // pred_fallthru
      _
    // Predicated region
    $region26: #{_lambda_.1} parent=1 // pred_check
      _
    $region27: #{_lambda_.1} parent=1 // pred_check_branch
      %43 = sbr.rel (0) target = $region29
    $region28: #{_lambda_.1} parent=1 // pred_region
      _
    $region29: #{_lambda_.1} parent=1 // pred_fallthru
      _
    // Predicated region
    $region30: #{_lambda_.1} parent=1 // pred_check
      _
    $region31: #{_lambda_.1} parent=1 // pred_check_branch
      %45 = sbr.rel (0) target = $region33
    $region32: #{_lambda_.1} parent=1 // pred_region
      _
    $region33: #{_lambda_.1} parent=1 // pred_fallthru
      _
    // Predicated region
    $region34: #{_lambda_.1} parent=1 // pred_check
      _
    $region35: #{_lambda_.1} parent=1 // pred_check_branch
      %47 = sbr.rel (0) target = $region37
    $region36: #{_lambda_.1} parent=1 // pred_region
      _
    $region37: #{_lambda_.1} parent=1 // pred_fallthru
      _
    // Predicated region
    $region38: #{_lambda_.1} parent=1 // pred_check
      _
    $region39: #{_lambda_.1} parent=1 // pred_check_branch
      %49 = sbr.rel (0) target = $region41
    $region40: #{_lambda_.1} parent=1 // pred_region
      _
    $region41: #{_lambda_.1} parent=1 // pred_fallthru
      _
    // Predicated region
    $region42: #{_lambda_.1} parent=1 // pred_check
      _
    $region43: #{_lambda_.1} parent=1 // pred_check_branch
      %51 = sbr.rel (0) target = $region45
    $region44: #{_lambda_.1} parent=1 // pred_region
      _
    $region45: #{_lambda_.1} parent=1 // pred_fallthru
      _
    // Predicated region
    $region46: #{_lambda_.1} parent=1 // pred_check
      _
    $region47: #{_lambda_.1} parent=1 // pred_check_branch
      %53 = sbr.rel (0) target = $region49
    $region48: #{_lambda_.1} parent=1 // pred_region
      _
    $region49: #{_lambda_.1} parent=1 // pred_fallthru
      _
    // Predicated region
    $region50: #{_lambda_.1} parent=1 // pred_check
      _
    $region51: #{_lambda_.1} parent=1 // pred_check_branch
      %55 = sbr.rel (0) target = $region53
    $region52: #{_lambda_.1} parent=1 // pred_region
      _
    $region53: #{_lambda_.1} parent=1 // pred_fallthru
      _
    // Predicated region
    $region54: #{_lambda_.1} parent=1 // pred_check
      _
    $region55: #{_lambda_.1} parent=1 // pred_check_branch
      %57 = sbr.rel (0) target = $region57
    $region56: #{_lambda_.1} parent=1 // pred_region
      _
    $region57: #{_lambda_.1} parent=1 // pred_fallthru
      _
    // Predicated region
    $region58: #{_lambda_.1} parent=1 // pred_check
      _
    $region59: #{_lambda_.1} parent=1 // pred_check_branch
      %59 = sbr.rel (0) target = $region61
    $region60: #{_lambda_.1} parent=1 // pred_region
      _
    $region61: #{_lambda_.1} parent=1 // pred_fallthru
      _
    // Predicated region
    $region62: #{_lambda_.1} parent=1 // pred_check
      _
    $region63: #{_lambda_.1} parent=1 // pred_check_branch
      %61 = sbr.rel (0) target = $region65
    $region64: #{_lambda_.1} parent=1 // pred_region
      _
    $region65: #{_lambda_.1} parent=1 // pred_fallthru
      _
    // Predicated region
    $region66: #{_lambda_.1} parent=1 // pred_check
      _
    $region67: #{_lambda_.1} parent=1 // pred_check_branch
      %63 = sbr.rel (0) target = $region69
    $region68: #{_lambda_.1} parent=1 // pred_region
      _
    $region69: #{_lambda_.1} parent=1 // pred_fallthru
      _
    // Predicated region
    $region70: #{_lambda_.1} parent=1 // pred_check
      _
    $region71: #{_lambda_.1} parent=1 // pred_check_branch
      %65 = sbr.rel (0) target = $region73
    $region72: #{_lambda_.1} parent=1 // pred_region
      _
    $region73: #{_lambda_.1} parent=1 // pred_fallthru
      _
    // Predicated region
    $region74: #{_lambda_.1} parent=1 // pred_check
      _
    $region75: #{_lambda_.1} parent=1 // pred_check_branch
      %67 = sbr.rel (0) target = $region77
    $region76: #{_lambda_.1} parent=1 // pred_region
      _
    $region77: #{_lambda_.1} parent=1 // pred_fallthru
      _
    // Predicated region
    $region78: #{_lambda_.1} parent=1 // pred_check
      _
    $region79: #{_lambda_.1} parent=1 // pred_check_branch
      %69 = sbr.rel (0) target = $region81
    $region80: #{_lambda_.1} parent=1 // pred_region
      _
    $region81: #{_lambda_.1} parent=1 // pred_fallthru
      _
    // Predicated region
    $region82: #{_lambda_.1} parent=1 // pred_check
      _
    $region83: #{_lambda_.1} parent=1 // pred_check_branch
      %71 = sbr.rel (0) target = $region85
    $region84: #{_lambda_.1} parent=1 // pred_region
      _
    $region85: #{_lambda_.1} parent=1 // pred_fallthru
      _
    // Predicated region
    $region86: #{_lambda_.1} parent=1 // pred_check
      _
    $region87: #{_lambda_.1} parent=1 // pred_check_branch
      %73 = sbr.rel (0) target = $region89
    $region88: #{_lambda_.1} parent=1 // pred_region
      _
    $region89: #{_lambda_.1} parent=1 // pred_fallthru
      _
    // Predicated region
    $region90: #{_lambda_.1} parent=1 // pred_check
      _
    $region91: #{_lambda_.1} parent=1 // pred_check_branch
      %75 = sbr.rel (0) target = $region93
    $region92: #{_lambda_.1} parent=1 // pred_region
      _
    $region93: #{_lambda_.1} parent=1 // pred_fallthru
      _
    // Predicated region
    $region94: #{_lambda_.1} parent=1 // pred_check
      _
    $region95: #{_lambda_.1} parent=1 // pred_check_branch
      %77 = sbr.rel (0) target = $region97
    $region96: #{_lambda_.1} parent=1 // pred_region
      _
    $region97: #{_lambda_.1} parent=1 // pred_fallthru
      _
    %vm78 = vcmask 261120
    %79 = vst.msk [vmem:[#allocation2] sm:$0xff] %vm78, 0.0
    %80 = vst.msk [vmem:[#allocation2 + $0x8] sm:$0xff] %vm78, 0.0
    %81 = vst.msk [vmem:[#allocation2 + $0x10] sm:$0xff] %vm78, 0.0
    %82 = vst.msk [vmem:[#allocation2 + $0x18] sm:$0xff] %vm78, 0.0
    %83 = vst.msk [vmem:[#allocation2 + $0x20] sm:$0xff] %vm78, 0.0
    %84 = vst.msk [vmem:[#allocation2 + $0x28] sm:$0xff] %vm78, 0.0
    %85 = vst.msk [vmem:[#allocation2 + $0x30] sm:$0xff] %vm78, 0.0
    %vm86 = vcmask 64512
    %87 = vst.msk [vmem:[#allocation3] sm:$0xff] %vm86, 0.0
    %88 = vst.msk [vmem:[#allocation3 + $0x8] sm:$0xff] %vm86, 0.0
    %89 = vst.msk [vmem:[#allocation3 + $0x10] sm:$0xff] %vm86, 0.0
    %90 = vst.msk [vmem:[#allocation3 + $0x18] sm:$0xff] %vm86, 0.0
    %91 = vst.msk [vmem:[#allocation3 + $0x20] sm:$0xff] %vm86, 0.0
    %92 = vst.msk [vmem:[#allocation3 + $0x28] sm:$0xff] %vm86, 0.0
    %93 = vst.msk [vmem:[#allocation3 + $0x30] sm:$0xff] %vm86, 0.0
    %v94 = vld [vmem:[%s1] sm:$0xff]
    %v95 = vld [vmem:[%s1 + $0x8] sm:$0xff]
    %v96 = vld [vmem:[%s1 + $0x10] sm:$0xff]
    %v97 = vld [vmem:[%s1 + $0x18] sm:$0xff]
    %v98 = vld [vmem:[%s1 + $0x20] sm:$0xff]
    %v99 = vld [vmem:[%s1 + $0x28] sm:$0xff]
    %v100 = vld [vmem:[%s0] sm:$0xff]
    %v101 = vld [vmem:[%s0 + $0x8] sm:$0xff]
    %v102 = vld [vmem:[%s0 + $0x10] sm:$0xff]
    %v103 = vld [vmem:[%s0 + $0x18] sm:$0xff]
    %v104 = vld [vmem:[%s0 + $0x20] sm:$0xff]
    %v105 = vld [vmem:[%s0 + $0x28] sm:$0xff]
    %v106 = vld [vmem:[%s3] sm:$0xff]
    %v107 = vld [vmem:[%s3 + $0x8] sm:$0xff]
    %v108 = vld [vmem:[%s3 + $0x10] sm:$0xff]
    %v109 = vld [vmem:[%s3 + $0x18] sm:$0xff]
    %v111 = vsel %vm78, %v100, 0
    %v114 = vsel %vm78, %v101, 0
    %v117 = vsel %vm78, %v102, 0
    %v120 = vsel %vm78, %v103, 0
    %v123 = vsel %vm78, %v104, 0
    %v126 = vsel %vm78, %v105, 0
    %128 = vmatprep.subr.mxu0 0.0
    %129 = vmatpush1.msra.mxu0 %v106
    %130 = vmatprep.subr.mxu0 0.0
    %131 = vmatpush1.msra.mxu0 %v107
    %132 = vmatprep.subr.mxu0 0.0
    %133 = vmatpush1.msra.mxu0 %v108
    %134 = vmatprep.subr.mxu0 0.0
    %135 = vmatpush1.msra.mxu0 %v109
    %136 = vmatprep.subr.mxu0 0.0
    %137 = vmatpush1.msra.mxu0 0.0
    %138 = vmatprep.subr.mxu0 0.0
    %139 = vmatpush1.msra.mxu0 0.0
    %140 = vmatprep.subr.mxu0 0.0
    %141 = vmatpush1.msra.mxu0 0.0
    %142 = vmatprep.subr.mxu0 0.0
    %143 = vmatpush1.msra.mxu0 0.0
    %144 = vmatprep.subr.mxu0 0.0
    %145 = vmatpush1.msra.mxu0 0.0
    %146 = vmatprep.subr.mxu0 0.0
    %147 = vmatpush1.msra.mxu0 0.0
    %148 = vmatprep.subr.mxu0 0.0
    %149 = vmatpush1.msra.mxu0 0.0
    %150 = vmatprep.subr.mxu0 0.0
    %151 = vmatpush1.msra.mxu0 0.0
    %152 = vmatprep.subr.mxu0 0.0
    %153 = vmatpush1.msra.mxu0 0.0
    %154 = vmatprep.subr.mxu0 0.0
    %155 = vmatpush1.msra.mxu0 0.0
    %156 = vmatprep.subr.mxu0 0.0
    %157 = vmatpush1.msra.mxu0 0.0
    %158 = vmatprep.subr.mxu0 0.0
    %159 = vmatpush1.msra.mxu0 0.0
    %160 = vmatprep.subr.mxu0 0.0
    %161 = vmatpush1.msra.mxu0 0.0
    %162 = vmatprep.subr.mxu0 0.0
    %163 = vmatpush1.msra.mxu0 0.0
    %164 = vmatprep.subr.mxu0 0.0
    %165 = vmatpush1.msra.mxu0 0.0
    %166 = vmatprep.subr.mxu0 0.0
    %167 = vmatpush1.msra.mxu0 0.0
    %168 = vmatprep.subr.mxu0 0.0
    %169 = vmatpush1.msra.mxu0 0.0
    %170 = vmatprep.subr.mxu0 0.0
    %171 = vmatpush1.msra.mxu0 0.0
    %172 = vmatprep.subr.mxu0 0.0
    %173 = vmatpush1.msra.mxu0 0.0
    %174 = vmatprep.subr.mxu0 0.0
    %175 = vmatpush1.msra.mxu0 0.0
    %176 = vmatprep.subr.mxu0 0.0
    %177 = vmatpush1.msra.mxu0 0.0
    %178 = vmatprep.subr.mxu0 0.0
    %179 = vmatpush1.msra.mxu0 0.0
    %180 = vmatprep.subr.mxu0 0.0
    %181 = vmatpush1.msra.mxu0 0.0
    %182 = vmatprep.subr.mxu0 0.0
    %183 = vmatpush1.msra.mxu0 0.0
    %184 = vmatprep.subr.mxu0 0.0
    %185 = vmatpush1.msra.mxu0 0.0
    %186 = vmatprep.subr.mxu0 0.0
    %187 = vmatpush1.msra.mxu0 0.0
    %188 = vmatprep.subr.mxu0 0.0
    %189 = vmatpush1.msra.mxu0 0.0
    %190 = vmatprep.subr.mxu0 0.0
    %191 = vmatpush1.msra.mxu0 0.0
    %192 = vmatprep.mubr.f32.mxu0 0.0
    %193 = vmatmul.mubr.f32.gmra.mrb[0].mxu0 %v111
    %v194 = vpop.f32.mrb[0].mxu0
    %v195 = vadd.f32 0.0, %v194
    %v196 = vpop.f32.mrb[0].mxu0
    %197 = vmatprep.mubr.f32.mxu0 0.0
    %198 = vmatmul.mubr.f32.gmra.mrb[0].mxu0 %v114
    %v199 = vpop.f32.mrb[0].mxu0
    %v200 = vadd.f32 0.0, %v199
    %v201 = vpop.f32.mrb[0].mxu0
    %202 = vmatprep.mubr.f32.mxu0 0.0
    %203 = vmatmul.mubr.f32.gmra.mrb[0].mxu0 %v117
    %v204 = vpop.f32.mrb[0].mxu0
    %v205 = vadd.f32 0.0, %v204
    %v206 = vpop.f32.mrb[0].mxu0
    %207 = vmatprep.mubr.f32.mxu0 0.0
    %208 = vmatmul.mubr.f32.gmra.mrb[0].mxu0 %v120
    %v209 = vpop.f32.mrb[0].mxu0
    %v210 = vadd.f32 0.0, %v209
    %v211 = vpop.f32.mrb[0].mxu0
    %212 = vmatprep.mubr.f32.mxu0 0.0
    %213 = vmatmul.mubr.f32.gmra.mrb[0].mxu0 %v123
    %v214 = vpop.f32.mrb[0].mxu0
    %v215 = vadd.f32 0.0, %v214
    %v216 = vpop.f32.mrb[0].mxu0
    %217 = vmatprep.mubr.f32.mxu0 0.0
    %218 = vmatmul.mubr.f32.gmra.mrb[0].mxu0 %v126
    %v219 = vpop.f32.mrb[0].mxu0
    %v220 = vadd.f32 0.0, %v219
    %v221 = vpop.f32.mrb[0].mxu0
    %222 = vdwg.mxu0
    %vm223 = vcmp.gt.f32.partialorder %v195, 0.0
    %vm224 = vcmp.gt.f32.partialorder %v200, 0.0
    %vm225 = vcmp.gt.f32.partialorder %v205, 0.0
    %vm226 = vcmp.gt.f32.partialorder %v210, 0.0
    %vm227 = vcmp.gt.f32.partialorder %v215, 0.0
    %vm228 = vcmp.gt.f32.partialorder %v220, 0.0
    %v229 = vld [vmem:[%s4] sm:$0x1]
    %v231 = vlaneseq
    %v232 = vshrl.u32 %v231, 7
    %v233 = vsub.s32 0, %v232
    %v234 = vrot.slane %v229, %v233
    %v236 = vmul.f32 %v234, %v195
    %v237 = vmul.f32 %v234, %v200
    %v238 = vmul.f32 %v234, %v205
    %v239 = vmul.f32 %v234, %v210
    %v240 = vmul.f32 %v234, %v215
    %v241 = vmul.f32 %v234, %v220
    %v242 = vsel %vm223, %v195, %v236
    %v243 = vsel %vm224, %v200, %v237
    %v244 = vsel %vm225, %v205, %v238
    %v245 = vsel %vm226, %v210, %v239
    %v246 = vsel %vm227, %v215, %v240
    %v247 = vsel %vm228, %v220, %v241
    %vm248 = vcmask 130048
    %249 = vst.msk [vmem:[#allocation2 + $0x4] sm:$0xff] %vm248, %v242
    %250 = vst.msk [vmem:[#allocation2 + $0xc] sm:$0xff] %vm248, %v243
    %251 = vst.msk [vmem:[#allocation2 + $0x14] sm:$0xff] %vm248, %v244
    %252 = vst.msk [vmem:[#allocation2 + $0x1c] sm:$0xff] %vm248, %v245
    %253 = vst.msk [vmem:[#allocation2 + $0x24] sm:$0xff] %vm248, %v246
    %254 = vst.msk [vmem:[#allocation2 + $0x2c] sm:$0xff] %vm248, %v247
    %v255 = vld [vmem:[#allocation2] sm:$0xff]
    %v256 = vld [vmem:[#allocation2 + $0x8] sm:$0xff]
    %v257 = vld [vmem:[#allocation2 + $0x10] sm:$0xff]
    %v258 = vld [vmem:[#allocation2 + $0x18] sm:$0xff]
    %v259 = vld [vmem:[#allocation2 + $0x20] sm:$0xff]
    %v260 = vld [vmem:[#allocation2 + $0x28] sm:$0xff]
    %v261 = vld [vmem:[%s5] sm:$0xff]
    %v262 = vld [vmem:[%s5 + $0x8] sm:$0xff]
    %v263 = vld [vmem:[#allocation2 + $0x2] sm:$0xff]
    %v264 = vld [vmem:[#allocation2 + $0xa] sm:$0xff]
    %v265 = vld [vmem:[#allocation2 + $0x12] sm:$0xff]
    %v266 = vld [vmem:[#allocation2 + $0x1a] sm:$0xff]
    %v267 = vld [vmem:[#allocation2 + $0x22] sm:$0xff]
    %v268 = vld [vmem:[#allocation2 + $0x2a] sm:$0xff]
    %v269 = vld [vmem:[%s5 + $0x10] sm:$0xff]
    %v270 = vld [vmem:[%s5 + $0x18] sm:$0xff]
    %v272 = vsel %vm248, %v263, 0
    %v275 = vsel %vm248, %v264, 0
    %v278 = vsel %vm248, %v265, 0
    %v281 = vsel %vm248, %v266, 0
    %v284 = vsel %vm248, %v267, 0
    %v287 = vsel %vm248, %v268, 0
    %289 = vmatprep.subr.mxu0 0.0
    %290 = vmatpush1.msra.mxu0 %v269
    %291 = vmatprep.subr.mxu0 0.0
    %292 = vmatpush1.msra.mxu0 %v270
    %293 = vmatprep.subr.mxu0 0.0
    %294 = vmatpush1.msra.mxu0 0.0
    %295 = vmatprep.subr.mxu0 0.0
    %296 = vmatpush1.msra.mxu0 0.0
    %297 = vmatprep.subr.mxu0 0.0
    %298 = vmatpush1.msra.mxu0 0.0
    %299 = vmatprep.subr.mxu0 0.0
    %300 = vmatpush1.msra.mxu0 0.0
    %301 = vmatprep.subr.mxu0 0.0
    %302 = vmatpush1.msra.mxu0 0.0
    %303 = vmatprep.subr.mxu0 0.0
    %304 = vmatpush1.msra.mxu0 0.0
    %305 = vmatprep.subr.mxu0 0.0
    %306 = vmatpush1.msra.mxu0 0.0
    %307 = vmatprep.subr.mxu0 0.0
    %308 = vmatpush1.msra.mxu0 0.0
    %309 = vmatprep.subr.mxu0 0.0
    %310 = vmatpush1.msra.mxu0 0.0
    %311 = vmatprep.subr.mxu0 0.0
    %312 = vmatpush1.msra.mxu0 0.0
    %313 = vmatprep.subr.mxu0 0.0
    %314 = vmatpush1.msra.mxu0 0.0
    %315 = vmatprep.subr.mxu0 0.0
    %316 = vmatpush1.msra.mxu0 0.0
    %317 = vmatprep.subr.mxu0 0.0
    %318 = vmatpush1.msra.mxu0 0.0
    %319 = vmatprep.subr.mxu0 0.0
    %320 = vmatpush1.msra.mxu0 0.0
    %321 = vmatprep.subr.mxu0 0.0
    %322 = vmatpush1.msra.mxu0 0.0
    %323 = vmatprep.subr.mxu0 0.0
    %324 = vmatpush1.msra.mxu0 0.0
    %325 = vmatprep.subr.mxu0 0.0
    %326 = vmatpush1.msra.mxu0 0.0
    %327 = vmatprep.subr.mxu0 0.0
    %328 = vmatpush1.msra.mxu0 0.0
    %329 = vmatprep.subr.mxu0 0.0
    %330 = vmatpush1.msra.mxu0 0.0
    %331 = vmatprep.subr.mxu0 0.0
    %332 = vmatpush1.msra.mxu0 0.0
    %333 = vmatprep.subr.mxu0 0.0
    %334 = vmatpush1.msra.mxu0 0.0
    %335 = vmatprep.subr.mxu0 0.0
    %336 = vmatpush1.msra.mxu0 0.0
    %337 = vmatprep.subr.mxu0 0.0
    %338 = vmatpush1.msra.mxu0 0.0
    %339 = vmatprep.subr.mxu0 0.0
    %340 = vmatpush1.msra.mxu0 0.0
    %341 = vmatprep.subr.mxu0 0.0
    %342 = vmatpush1.msra.mxu0 0.0
    %343 = vmatprep.subr.mxu0 0.0
    %344 = vmatpush1.msra.mxu0 0.0
    %345 = vmatprep.subr.mxu0 0.0
    %346 = vmatpush1.msra.mxu0 0.0
    %347 = vmatprep.subr.mxu0 0.0
    %348 = vmatpush1.msra.mxu0 0.0
    %349 = vmatprep.subr.mxu0 0.0
    %350 = vmatpush1.msra.mxu0 0.0
    %351 = vmatprep.subr.mxu0 0.0
    %352 = vmatpush1.msra.mxu0 0.0
    %353 = vmatprep.mubr.f32.mxu0 0.0
    %354 = vmatmul.mubr.f32.gmra.mrb[0].mxu0 %v272
    %v355 = vpop.f32.mrb[0].mxu0
    %v356 = vadd.f32 0.0, %v355
    %v357 = vpop.f32.mrb[0].mxu0
    %358 = vmatprep.mubr.f32.mxu0 0.0
    %359 = vmatmul.mubr.f32.gmra.mrb[0].mxu0 %v275
    %v360 = vpop.f32.mrb[0].mxu0
    %v361 = vadd.f32 0.0, %v360
    %v362 = vpop.f32.mrb[0].mxu0
    %363 = vmatprep.mubr.f32.mxu0 0.0
    %364 = vmatmul.mubr.f32.gmra.mrb[0].mxu0 %v278
    %v365 = vpop.f32.mrb[0].mxu0
    %v366 = vadd.f32 0.0, %v365
    %v367 = vpop.f32.mrb[0].mxu0
    %368 = vmatprep.mubr.f32.mxu0 0.0
    %369 = vmatmul.mubr.f32.gmra.mrb[0].mxu0 %v281
    %v370 = vpop.f32.mrb[0].mxu0
    %v371 = vadd.f32 0.0, %v370
    %v372 = vpop.f32.mrb[0].mxu0
    %373 = vmatprep.mubr.f32.mxu0 0.0
    %374 = vmatmul.mubr.f32.gmra.mrb[0].mxu0 %v284
    %v375 = vpop.f32.mrb[0].mxu0
    %v376 = vadd.f32 0.0, %v375
    %v377 = vpop.f32.mrb[0].mxu0
    %378 = vmatprep.mubr.f32.mxu0 0.0
    %379 = vmatmul.mubr.f32.gmra.mrb[0].mxu0 %v287
    %v380 = vpop.f32.mrb[0].mxu0
    %v381 = vadd.f32 0.0, %v380
    %v382 = vpop.f32.mrb[0].mxu0
    %383 = vdwg.mxu0
    %v385 = vsel %vm248, %v255, 0
    %v388 = vsel %vm248, %v256, 0
    %v391 = vsel %vm248, %v257, 0
    %v394 = vsel %vm248, %v258, 0
    %v397 = vsel %vm248, %v259, 0
    %v400 = vsel %vm248, %v260, 0
    %402 = vmatprep.subr.mxu0 0.0
    %403 = vmatpush1.msra.mxu0 %v261
    %404 = vmatprep.subr.mxu0 0.0
    %405 = vmatpush1.msra.mxu0 %v262
    %406 = vmatprep.subr.mxu0 0.0
    %407 = vmatpush1.msra.mxu0 0.0
    %408 = vmatprep.subr.mxu0 0.0
    %409 = vmatpush1.msra.mxu0 0.0
    %410 = vmatprep.subr.mxu0 0.0
    %411 = vmatpush1.msra.mxu0 0.0
    %412 = vmatprep.subr.mxu0 0.0
    %413 = vmatpush1.msra.mxu0 0.0
    %414 = vmatprep.subr.mxu0 0.0
    %415 = vmatpush1.msra.mxu0 0.0
    %416 = vmatprep.subr.mxu0 0.0
    %417 = vmatpush1.msra.mxu0 0.0
    %418 = vmatprep.subr.mxu0 0.0
    %419 = vmatpush1.msra.mxu0 0.0
    %420 = vmatprep.subr.mxu0 0.0
    %421 = vmatpush1.msra.mxu0 0.0
    %422 = vmatprep.subr.mxu0 0.0
    %423 = vmatpush1.msra.mxu0 0.0
    %424 = vmatprep.subr.mxu0 0.0
    %425 = vmatpush1.msra.mxu0 0.0
    %426 = vmatprep.subr.mxu0 0.0
    %427 = vmatpush1.msra.mxu0 0.0
    %428 = vmatprep.subr.mxu0 0.0
    %429 = vmatpush1.msra.mxu0 0.0
    %430 = vmatprep.subr.mxu0 0.0
    %431 = vmatpush1.msra.mxu0 0.0
    %432 = vmatprep.subr.mxu0 0.0
    %433 = vmatpush1.msra.mxu0 0.0
    %434 = vmatprep.subr.mxu0 0.0
    %435 = vmatpush1.msra.mxu0 0.0
    %436 = vmatprep.subr.mxu0 0.0
    %437 = vmatpush1.msra.mxu0 0.0
    %438 = vmatprep.subr.mxu0 0.0
    %439 = vmatpush1.msra.mxu0 0.0
    %440 = vmatprep.subr.mxu0 0.0
    %441 = vmatpush1.msra.mxu0 0.0
    %442 = vmatprep.subr.mxu0 0.0
    %443 = vmatpush1.msra.mxu0 0.0
    %444 = vmatprep.subr.mxu0 0.0
    %445 = vmatpush1.msra.mxu0 0.0
    %446 = vmatprep.subr.mxu0 0.0
    %447 = vmatpush1.msra.mxu0 0.0
    %448 = vmatprep.subr.mxu0 0.0
    %449 = vmatpush1.msra.mxu0 0.0
    %450 = vmatprep.subr.mxu0 0.0
    %451 = vmatpush1.msra.mxu0 0.0
    %452 = vmatprep.subr.mxu0 0.0
    %453 = vmatpush1.msra.mxu0 0.0
    %454 = vmatprep.subr.mxu0 0.0
    %455 = vmatpush1.msra.mxu0 0.0
    %456 = vmatprep.subr.mxu0 0.0
    %457 = vmatpush1.msra.mxu0 0.0
    %458 = vmatprep.subr.mxu0 0.0
    %459 = vmatpush1.msra.mxu0 0.0
    %460 = vmatprep.subr.mxu0 0.0
    %461 = vmatpush1.msra.mxu0 0.0
    %462 = vmatprep.subr.mxu0 0.0
    %463 = vmatpush1.msra.mxu0 0.0
    %464 = vmatprep.subr.mxu0 0.0
    %465 = vmatpush1.msra.mxu0 0.0
    %466 = vmatprep.mubr.f32.mxu0 0.0
    %467 = vmatmul.mubr.f32.gmra.mrb[0].mxu0 %v385
    %v468 = vpop.f32.mrb[0].mxu0
    %v469 = vadd.f32 %v356, %v468
    %v470 = vpop.f32.mrb[0].mxu0
    %471 = vmatprep.mubr.f32.mxu0 0.0
    %472 = vmatmul.mubr.f32.gmra.mrb[0].mxu0 %v388
    %v473 = vpop.f32.mrb[0].mxu0
    %v474 = vadd.f32 %v361, %v473
    %v475 = vpop.f32.mrb[0].mxu0
    %476 = vmatprep.mubr.f32.mxu0 0.0
    %477 = vmatmul.mubr.f32.gmra.mrb[0].mxu0 %v391
    %v478 = vpop.f32.mrb[0].mxu0
    %v479 = vadd.f32 %v366, %v478
    %v480 = vpop.f32.mrb[0].mxu0
    %481 = vmatprep.mubr.f32.mxu0 0.0
    %482 = vmatmul.mubr.f32.gmra.mrb[0].mxu0 %v394
    %v483 = vpop.f32.mrb[0].mxu0
    %v484 = vadd.f32 %v371, %v483
    %v485 = vpop.f32.mrb[0].mxu0
    %486 = vmatprep.mubr.f32.mxu0 0.0
    %487 = vmatmul.mubr.f32.gmra.mrb[0].mxu0 %v397
    %v488 = vpop.f32.mrb[0].mxu0
    %v489 = vadd.f32 %v376, %v488
    %v490 = vpop.f32.mrb[0].mxu0
    %491 = vmatprep.mubr.f32.mxu0 0.0
    %492 = vmatmul.mubr.f32.gmra.mrb[0].mxu0 %v400
    %v493 = vpop.f32.mrb[0].mxu0
    %v494 = vadd.f32 %v381, %v493
    %v495 = vpop.f32.mrb[0].mxu0
    %496 = vdwg.mxu0
    %v497 = vld [vmem:[#allocation2 + $0x3] sm:$0xff]
    %v498 = vld [vmem:[#allocation2 + $0xb] sm:$0xff]
    %v499 = vld [vmem:[#allocation2 + $0x13] sm:$0xff]
    %v500 = vld [vmem:[#allocation2 + $0x1b] sm:$0xff]
    %v501 = vld [vmem:[#allocation2 + $0x23] sm:$0xff]
    %v502 = vld [vmem:[#allocation2 + $0x2b] sm:$0xff]
    %v503 = vld [vmem:[%s5 + $0x20] sm:$0xff]
    %v504 = vld [vmem:[%s5 + $0x28] sm:$0xff]
    %v506 = vsel %vm248, %v497, 0
    %v509 = vsel %vm248, %v498, 0
    %v512 = vsel %vm248, %v499, 0
    %v515 = vsel %vm248, %v500, 0
    %v518 = vsel %vm248, %v501, 0
    %v521 = vsel %vm248, %v502, 0
    %523 = vmatprep.subr.mxu0 0.0
    %524 = vmatpush1.msra.mxu0 %v503
    %525 = vmatprep.subr.mxu0 0.0
    %526 = vmatpush1.msra.mxu0 %v504
    %527 = vmatprep.subr.mxu0 0.0
    %528 = vmatpush1.msra.mxu0 0.0
    %529 = vmatprep.subr.mxu0 0.0
    %530 = vmatpush1.msra.mxu0 0.0
    %531 = vmatprep.subr.mxu0 0.0
    %532 = vmatpush1.msra.mxu0 0.0
    %533 = vmatprep.subr.mxu0 0.0
    %534 = vmatpush1.msra.mxu0 0.0
    %535 = vmatprep.subr.mxu0 0.0
    %536 = vmatpush1.msra.mxu0 0.0
    %537 = vmatprep.subr.mxu0 0.0
    %538 = vmatpush1.msra.mxu0 0.0
    %539 = vmatprep.subr.mxu0 0.0
    %540 = vmatpush1.msra.mxu0 0.0
    %541 = vmatprep.subr.mxu0 0.0
    %542 = vmatpush1.msra.mxu0 0.0
    %543 = vmatprep.subr.mxu0 0.0
    %544 = vmatpush1.msra.mxu0 0.0
    %545 = vmatprep.subr.mxu0 0.0
    %546 = vmatpush1.msra.mxu0 0.0
    %547 = vmatprep.subr.mxu0 0.0
    %548 = vmatpush1.msra.mxu0 0.0
    %549 = vmatprep.subr.mxu0 0.0
    %550 = vmatpush1.msra.mxu0 0.0
    %551 = vmatprep.subr.mxu0 0.0
    %552 = vmatpush1.msra.mxu0 0.0
    %553 = vmatprep.subr.mxu0 0.0
    %554 = vmatpush1.msra.mxu0 0.0
    %555 = vmatprep.subr.mxu0 0.0
    %556 = vmatpush1.msra.mxu0 0.0
    %557 = vmatprep.subr.mxu0 0.0
    %558 = vmatpush1.msra.mxu0 0.0
    %559 = vmatprep.subr.mxu0 0.0
    %560 = vmatpush1.msra.mxu0 0.0
    %561 = vmatprep.subr.mxu0 0.0
    %562 = vmatpush1.msra.mxu0 0.0
    %563 = vmatprep.subr.mxu0 0.0
    %564 = vmatpush1.msra.mxu0 0.0
    %565 = vmatprep.subr.mxu0 0.0
    %566 = vmatpush1.msra.mxu0 0.0
    %567 = vmatprep.subr.mxu0 0.0
    %568 = vmatpush1.msra.mxu0 0.0
    %569 = vmatprep.subr.mxu0 0.0
    %570 = vmatpush1.msra.mxu0 0.0
    %571 = vmatprep.subr.mxu0 0.0
    %572 = vmatpush1.msra.mxu0 0.0
    %573 = vmatprep.subr.mxu0 0.0
    %574 = vmatpush1.msra.mxu0 0.0
    %575 = vmatprep.subr.mxu0 0.0
    %576 = vmatpush1.msra.mxu0 0.0
    %577 = vmatprep.subr.mxu0 0.0
    %578 = vmatpush1.msra.mxu0 0.0
    %579 = vmatprep.subr.mxu0 0.0
    %580 = vmatpush1.msra.mxu0 0.0
    %581 = vmatprep.subr.mxu0 0.0
    %582 = vmatpush1.msra.mxu0 0.0
    %583 = vmatprep.subr.mxu0 0.0
    %584 = vmatpush1.msra.mxu0 0.0
    %585 = vmatprep.subr.mxu0 0.0
    %586 = vmatpush1.msra.mxu0 0.0
    %587 = vmatprep.mubr.f32.mxu0 0.0
    %588 = vmatmul.mubr.f32.gmra.mrb[0].mxu0 %v506
    %v589 = vpop.f32.mrb[0].mxu0
    %v590 = vadd.f32 0.0, %v589
    %v591 = vpop.f32.mrb[0].mxu0
    %592 = vmatprep.mubr.f32.mxu0 0.0
    %593 = vmatmul.mubr.f32.gmra.mrb[0].mxu0 %v509
    %v594 = vpop.f32.mrb[0].mxu0
    %v595 = vadd.f32 0.0, %v594
    %v596 = vpop.f32.mrb[0].mxu0
    %597 = vmatprep.mubr.f32.mxu0 0.0
    %598 = vmatmul.mubr.f32.gmra.mrb[0].mxu0 %v512
    %v599 = vpop.f32.mrb[0].mxu0
    %v600 = vadd.f32 0.0, %v599
    %v601 = vpop.f32.mrb[0].mxu0
    %602 = vmatprep.mubr.f32.mxu0 0.0
    %603 = vmatmul.mubr.f32.gmra.mrb[0].mxu0 %v515
    %v604 = vpop.f32.mrb[0].mxu0
    %v605 = vadd.f32 0.0, %v604
    %v606 = vpop.f32.mrb[0].mxu0
    %607 = vmatprep.mubr.f32.mxu0 0.0
    %608 = vmatmul.mubr.f32.gmra.mrb[0].mxu0 %v518
    %v609 = vpop.f32.mrb[0].mxu0
    %v610 = vadd.f32 0.0, %v609
    %v611 = vpop.f32.mrb[0].mxu0
    %612 = vmatprep.mubr.f32.mxu0 0.0
    %613 = vmatmul.mubr.f32.gmra.mrb[0].mxu0 %v521
    %v614 = vpop.f32.mrb[0].mxu0
    %v615 = vadd.f32 0.0, %v614
    %v616 = vpop.f32.mrb[0].mxu0
    %617 = vdwg.mxu0
    %v618 = vadd.f32 %v469, %v590
    %v619 = vadd.f32 %v474, %v595
    %v620 = vadd.f32 %v479, %v600
    %v621 = vadd.f32 %v484, %v605
    %v622 = vadd.f32 %v489, %v610
    %v623 = vadd.f32 %v494, %v615
    %v624 = vld [vmem:[#allocation2 + $0x4] sm:$0xff]
    %v625 = vld [vmem:[#allocation2 + $0xc] sm:$0xff]
    %v626 = vld [vmem:[#allocation2 + $0x14] sm:$0xff]
    %v627 = vld [vmem:[#allocation2 + $0x1c] sm:$0xff]
    %v628 = vld [vmem:[#allocation2 + $0x24] sm:$0xff]
    %v629 = vld [vmem:[#allocation2 + $0x2c] sm:$0xff]
    %v630 = vld [vmem:[%s5 + $0x30] sm:$0xff]
    %v631 = vld [vmem:[%s5 + $0x38] sm:$0xff]
    %v633 = vsel %vm248, %v624, 0
    %v636 = vsel %vm248, %v625, 0
    %v639 = vsel %vm248, %v626, 0
    %v642 = vsel %vm248, %v627, 0
    %v645 = vsel %vm248, %v628, 0
    %v648 = vsel %vm248, %v629, 0
    %650 = vmatprep.subr.mxu0 0.0
    %651 = vmatpush1.msra.mxu0 %v630
    %652 = vmatprep.subr.mxu0 0.0
    %653 = vmatpush1.msra.mxu0 %v631
    %654 = vmatprep.subr.mxu0 0.0
    %655 = vmatpush1.msra.mxu0 0.0
    %656 = vmatprep.subr.mxu0 0.0
    %657 = vmatpush1.msra.mxu0 0.0
    %658 = vmatprep.subr.mxu0 0.0
    %659 = vmatpush1.msra.mxu0 0.0
    %660 = vmatprep.subr.mxu0 0.0
    %661 = vmatpush1.msra.mxu0 0.0
    %662 = vmatprep.subr.mxu0 0.0
    %663 = vmatpush1.msra.mxu0 0.0
    %664 = vmatprep.subr.mxu0 0.0
    %665 = vmatpush1.msra.mxu0 0.0
    %666 = vmatprep.subr.mxu0 0.0
    %667 = vmatpush1.msra.mxu0 0.0
    %668 = vmatprep.subr.mxu0 0.0
    %669 = vmatpush1.msra.mxu0 0.0
    %670 = vmatprep.subr.mxu0 0.0
    %671 = vmatpush1.msra.mxu0 0.0
    %672 = vmatprep.subr.mxu0 0.0
    %673 = vmatpush1.msra.mxu0 0.0
    %674 = vmatprep.subr.mxu0 0.0
    %675 = vmatpush1.msra.mxu0 0.0
    %676 = vmatprep.subr.mxu0 0.0
    %677 = vmatpush1.msra.mxu0 0.0
    %678 = vmatprep.subr.mxu0 0.0
    %679 = vmatpush1.msra.mxu0 0.0
    %680 = vmatprep.subr.mxu0 0.0
    %681 = vmatpush1.msra.mxu0 0.0
    %682 = vmatprep.subr.mxu0 0.0
    %683 = vmatpush1.msra.mxu0 0.0
    %684 = vmatprep.subr.mxu0 0.0
    %685 = vmatpush1.msra.mxu0 0.0
    %686 = vmatprep.subr.mxu0 0.0
    %687 = vmatpush1.msra.mxu0 0.0
    %688 = vmatprep.subr.mxu0 0.0
    %689 = vmatpush1.msra.mxu0 0.0
    %690 = vmatprep.subr.mxu0 0.0
    %691 = vmatpush1.msra.mxu0 0.0
    %692 = vmatprep.subr.mxu0 0.0
    %693 = vmatpush1.msra.mxu0 0.0
    %694 = vmatprep.subr.mxu0 0.0
    %695 = vmatpush1.msra.mxu0 0.0
    %696 = vmatprep.subr.mxu0 0.0
    %697 = vmatpush1.msra.mxu0 0.0
    %698 = vmatprep.subr.mxu0 0.0
    %699 = vmatpush1.msra.mxu0 0.0
    %700 = vmatprep.subr.mxu0 0.0
    %701 = vmatpush1.msra.mxu0 0.0
    %702 = vmatprep.subr.mxu0 0.0
    %703 = vmatpush1.msra.mxu0 0.0
    %704 = vmatprep.subr.mxu0 0.0
    %705 = vmatpush1.msra.mxu0 0.0
    %706 = vmatprep.subr.mxu0 0.0
    %707 = vmatpush1.msra.mxu0 0.0
    %708 = vmatprep.subr.mxu0 0.0
    %709 = vmatpush1.msra.mxu0 0.0
    %710 = vmatprep.subr.mxu0 0.0
    %711 = vmatpush1.msra.mxu0 0.0
    %712 = vmatprep.subr.mxu0 0.0
    %713 = vmatpush1.msra.mxu0 0.0
    %714 = vmatprep.mubr.f32.mxu0 0.0
    %715 = vmatmul.mubr.f32.gmra.mrb[0].mxu0 %v633
    %v716 = vpop.f32.mrb[0].mxu0
    %v717 = vadd.f32 0.0, %v716
    %v718 = vpop.f32.mrb[0].mxu0
    %719 = vmatprep.mubr.f32.mxu0 0.0
    %720 = vmatmul.mubr.f32.gmra.mrb[0].mxu0 %v636
    %v721 = vpop.f32.mrb[0].mxu0
    %v722 = vadd.f32 0.0, %v721
    %v723 = vpop.f32.mrb[0].mxu0
    %724 = vmatprep.mubr.f32.mxu0 0.0
    %725 = vmatmul.mubr.f32.gmra.mrb[0].mxu0 %v639
    %v726 = vpop.f32.mrb[0].mxu0
    %v727 = vadd.f32 0.0, %v726
    %v728 = vpop.f32.mrb[0].mxu0
    %729 = vmatprep.mubr.f32.mxu0 0.0
    %730 = vmatmul.mubr.f32.gmra.mrb[0].mxu0 %v642
    %v731 = vpop.f32.mrb[0].mxu0
    %v732 = vadd.f32 0.0, %v731
    %v733 = vpop.f32.mrb[0].mxu0
    %734 = vmatprep.mubr.f32.mxu0 0.0
    %735 = vmatmul.mubr.f32.gmra.mrb[0].mxu0 %v645
    %v736 = vpop.f32.mrb[0].mxu0
    %v737 = vadd.f32 0.0, %v736
    %v738 = vpop.f32.mrb[0].mxu0
    %739 = vmatprep.mubr.f32.mxu0 0.0
    %740 = vmatmul.mubr.f32.gmra.mrb[0].mxu0 %v648
    %v741 = vpop.f32.mrb[0].mxu0
    %v742 = vadd.f32 0.0, %v741
    %v743 = vpop.f32.mrb[0].mxu0
    %744 = vdwg.mxu0
    %v745 = vadd.f32 %v618, %v717
    %v746 = vadd.f32 %v619, %v722
    %v747 = vadd.f32 %v620, %v727
    %v748 = vadd.f32 %v621, %v732
    %v749 = vadd.f32 %v622, %v737
    %v750 = vadd.f32 %v623, %v742
    %v751 = vld [vmem:[#allocation2 + $0x5] sm:$0xff]
    %v752 = vld [vmem:[#allocation2 + $0xd] sm:$0xff]
    %v753 = vld [vmem:[#allocation2 + $0x15] sm:$0xff]
    %v754 = vld [vmem:[#allocation2 + $0x1d] sm:$0xff]
    %v755 = vld [vmem:[#allocation2 + $0x25] sm:$0xff]
    %v756 = vld [vmem:[#allocation2 + $0x2d] sm:$0xff]
    %v757 = vld [vmem:[%s5 + $0x40] sm:$0xff]
    %v758 = vld [vmem:[%s5 + $0x48] sm:$0xff]
    %v760 = vsel %vm248, %v751, 0
    %v763 = vsel %vm248, %v752, 0
    %v766 = vsel %vm248, %v753, 0
    %v769 = vsel %vm248, %v754, 0
    %v772 = vsel %vm248, %v755, 0
    %v775 = vsel %vm248, %v756, 0
    %777 = vmatprep.subr.mxu0 0.0
    %778 = vmatpush1.msra.mxu0 %v757
    %779 = vmatprep.subr.mxu0 0.0
    %780 = vmatpush1.msra.mxu0 %v758
    %781 = vmatprep.subr.mxu0 0.0
    %782 = vmatpush1.msra.mxu0 0.0
    %783 = vmatprep.subr.mxu0 0.0
    %784 = vmatpush1.msra.mxu0 0.0
    %785 = vmatprep.subr.mxu0 0.0
    %786 = vmatpush1.msra.mxu0 0.0
    %787 = vmatprep.subr.mxu0 0.0
    %788 = vmatpush1.msra.mxu0 0.0
    %789 = vmatprep.subr.mxu0 0.0
    %790 = vmatpush1.msra.mxu0 0.0
    %791 = vmatprep.subr.mxu0 0.0
    %792 = vmatpush1.msra.mxu0 0.0
    %793 = vmatprep.subr.mxu0 0.0
    %794 = vmatpush1.msra.mxu0 0.0
    %795 = vmatprep.subr.mxu0 0.0
    %796 = vmatpush1.msra.mxu0 0.0
    %797 = vmatprep.subr.mxu0 0.0
    %798 = vmatpush1.msra.mxu0 0.0
    %799 = vmatprep.subr.mxu0 0.0
    %800 = vmatpush1.msra.mxu0 0.0
    %801 = vmatprep.subr.mxu0 0.0
    %802 = vmatpush1.msra.mxu0 0.0
    %803 = vmatprep.subr.mxu0 0.0
    %804 = vmatpush1.msra.mxu0 0.0
    %805 = vmatprep.subr.mxu0 0.0
    %806 = vmatpush1.msra.mxu0 0.0
    %807 = vmatprep.subr.mxu0 0.0
    %808 = vmatpush1.msra.mxu0 0.0
    %809 = vmatprep.subr.mxu0 0.0
    %810 = vmatpush1.msra.mxu0 0.0
    %811 = vmatprep.subr.mxu0 0.0
    %812 = vmatpush1.msra.mxu0 0.0
    %813 = vmatprep.subr.mxu0 0.0
    %814 = vmatpush1.msra.mxu0 0.0
    %815 = vmatprep.subr.mxu0 0.0
    %816 = vmatpush1.msra.mxu0 0.0
    %817 = vmatprep.subr.mxu0 0.0
    %818 = vmatpush1.msra.mxu0 0.0
    %819 = vmatprep.subr.mxu0 0.0
    %820 = vmatpush1.msra.mxu0 0.0
    %821 = vmatprep.subr.mxu0 0.0
    %822 = vmatpush1.msra.mxu0 0.0
    %823 = vmatprep.subr.mxu0 0.0
    %824 = vmatpush1.msra.mxu0 0.0
    %825 = vmatprep.subr.mxu0 0.0
    %826 = vmatpush1.msra.mxu0 0.0
    %827 = vmatprep.subr.mxu0 0.0
    %828 = vmatpush1.msra.mxu0 0.0
    %829 = vmatprep.subr.mxu0 0.0
    %830 = vmatpush1.msra.mxu0 0.0
    %831 = vmatprep.subr.mxu0 0.0
    %832 = vmatpush1.msra.mxu0 0.0
    %833 = vmatprep.subr.mxu0 0.0
    %834 = vmatpush1.msra.mxu0 0.0
    %835 = vmatprep.subr.mxu0 0.0
    %836 = vmatpush1.msra.mxu0 0.0
    %837 = vmatprep.subr.mxu0 0.0
    %838 = vmatpush1.msra.mxu0 0.0
    %839 = vmatprep.subr.mxu0 0.0
    %840 = vmatpush1.msra.mxu0 0.0
    %841 = vmatprep.mubr.f32.mxu0 0.0
    %842 = vmatmul.mubr.f32.gmra.mrb[0].mxu0 %v760
    %v843 = vpop.f32.mrb[0].mxu0
    %v844 = vadd.f32 0.0, %v843
    %v845 = vpop.f32.mrb[0].mxu0
    %846 = vmatprep.mubr.f32.mxu0 0.0
    %847 = vmatmul.mubr.f32.gmra.mrb[0].mxu0 %v763
    %v848 = vpop.f32.mrb[0].mxu0
    %v849 = vadd.f32 0.0, %v848
    %v850 = vpop.f32.mrb[0].mxu0
    %851 = vmatprep.mubr.f32.mxu0 0.0
    %852 = vmatmul.mubr.f32.gmra.mrb[0].mxu0 %v766
    %v853 = vpop.f32.mrb[0].mxu0
    %v854 = vadd.f32 0.0, %v853
    %v855 = vpop.f32.mrb[0].mxu0
    %856 = vmatprep.mubr.f32.mxu0 0.0
    %857 = vmatmul.mubr.f32.gmra.mrb[0].mxu0 %v769
    %v858 = vpop.f32.mrb[0].mxu0
    %v859 = vadd.f32 0.0, %v858
    %v860 = vpop.f32.mrb[0].mxu0
    %861 = vmatprep.mubr.f32.mxu0 0.0
    %862 = vmatmul.mubr.f32.gmra.mrb[0].mxu0 %v772
    %v863 = vpop.f32.mrb[0].mxu0
    %v864 = vadd.f32 0.0, %v863
    %v865 = vpop.f32.mrb[0].mxu0
    %866 = vmatprep.mubr.f32.mxu0 0.0
    %867 = vmatmul.mubr.f32.gmra.mrb[0].mxu0 %v775
    %v868 = vpop.f32.mrb[0].mxu0
    %v869 = vadd.f32 0.0, %v868
    %v870 = vpop.f32.mrb[0].mxu0
    %871 = vdwg.mxu0
    %v872 = vadd.f32 %v745, %v844
    %v873 = vadd.f32 %v746, %v849
    %v874 = vadd.f32 %v747, %v854
    %v875 = vadd.f32 %v748, %v859
    %v876 = vadd.f32 %v749, %v864
    %v877 = vadd.f32 %v750, %v869
    %v878 = vld [vmem:[#allocation2 + $0x6] sm:$0xff]
    %v879 = vld [vmem:[#allocation2 + $0xe] sm:$0xff]
    %v880 = vld [vmem:[#allocation2 + $0x16] sm:$0xff]
    %v881 = vld [vmem:[#allocation2 + $0x1e] sm:$0xff]
    %v882 = vld [vmem:[#allocation2 + $0x26] sm:$0xff]
    %v883 = vld [vmem:[#allocation2 + $0x2e] sm:$0xff]
    %v884 = vld [vmem:[%s5 + $0x50] sm:$0xff]
    %v885 = vld [vmem:[%s5 + $0x58] sm:$0xff]
    %v887 = vsel %vm248, %v878, 0
    %v890 = vsel %vm248, %v879, 0
    %v893 = vsel %vm248, %v880, 0
    %v896 = vsel %vm248, %v881, 0
    %v899 = vsel %vm248, %v882, 0
    %v902 = vsel %vm248, %v883, 0
    %904 = vmatprep.subr.mxu0 0.0
    %905 = vmatpush1.msra.mxu0 %v884
    %906 = vmatprep.subr.mxu0 0.0
    %907 = vmatpush1.msra.mxu0 %v885
    %908 = vmatprep.subr.mxu0 0.0
    %909 = vmatpush1.msra.mxu0 0.0
    %910 = vmatprep.subr.mxu0 0.0
    %911 = vmatpush1.msra.mxu0 0.0
    %912 = vmatprep.subr.mxu0 0.0
    %913 = vmatpush1.msra.mxu0 0.0
    %914 = vmatprep.subr.mxu0 0.0
    %915 = vmatpush1.msra.mxu0 0.0
    %916 = vmatprep.subr.mxu0 0.0
    %917 = vmatpush1.msra.mxu0 0.0
    %918 = vmatprep.subr.mxu0 0.0
    %919 = vmatpush1.msra.mxu0 0.0
    %920 = vmatprep.subr.mxu0 0.0
    %921 = vmatpush1.msra.mxu0 0.0
    %922 = vmatprep.subr.mxu0 0.0
    %923 = vmatpush1.msra.mxu0 0.0
    %924 = vmatprep.subr.mxu0 0.0
    %925 = vmatpush1.msra.mxu0 0.0
    %926 = vmatprep.subr.mxu0 0.0
    %927 = vmatpush1.msra.mxu0 0.0
    %928 = vmatprep.subr.mxu0 0.0
    %929 = vmatpush1.msra.mxu0 0.0
    %930 = vmatprep.subr.mxu0 0.0
    %931 = vmatpush1.msra.mxu0 0.0
    %932 = vmatprep.subr.mxu0 0.0
    %933 = vmatpush1.msra.mxu0 0.0
    %934 = vmatprep.subr.mxu0 0.0
    %935 = vmatpush1.msra.mxu0 0.0
    %936 = vmatprep.subr.mxu0 0.0
    %937 = vmatpush1.msra.mxu0 0.0
    %938 = vmatprep.subr.mxu0 0.0
    %939 = vmatpush1.msra.mxu0 0.0
    %940 = vmatprep.subr.mxu0 0.0
    %941 = vmatpush1.msra.mxu0 0.0
    %942 = vmatprep.subr.mxu0 0.0
    %943 = vmatpush1.msra.mxu0 0.0
    %944 = vmatprep.subr.mxu0 0.0
    %945 = vmatpush1.msra.mxu0 0.0
    %946 = vmatprep.subr.mxu0 0.0
    %947 = vmatpush1.msra.mxu0 0.0
    %948 = vmatprep.subr.mxu0 0.0
    %949 = vmatpush1.msra.mxu0 0.0
    %950 = vmatprep.subr.mxu0 0.0
    %951 = vmatpush1.msra.mxu0 0.0
    %952 = vmatprep.subr.mxu0 0.0
    %953 = vmatpush1.msra.mxu0 0.0
    %954 = vmatprep.subr.mxu0 0.0
    %955 = vmatpush1.msra.mxu0 0.0
    %956 = vmatprep.subr.mxu0 0.0
    %957 = vmatpush1.msra.mxu0 0.0
    %958 = vmatprep.subr.mxu0 0.0
    %959 = vmatpush1.msra.mxu0 0.0
    %960 = vmatprep.subr.mxu0 0.0
    %961 = vmatpush1.msra.mxu0 0.0
    %962 = vmatprep.subr.mxu0 0.0
    %963 = vmatpush1.msra.mxu0 0.0
    %964 = vmatprep.subr.mxu0 0.0
    %965 = vmatpush1.msra.mxu0 0.0
    %966 = vmatprep.subr.mxu0 0.0
    %967 = vmatpush1.msra.mxu0 0.0
    %968 = vmatprep.mubr.f32.mxu0 0.0
    %969 = vmatmul.mubr.f32.gmra.mrb[0].mxu0 %v887
    %v970 = vpop.f32.mrb[0].mxu0
    %v971 = vadd.f32 0.0, %v970
    %v972 = vpop.f32.mrb[0].mxu0
    %973 = vmatprep.mubr.f32.mxu0 0.0
    %974 = vmatmul.mubr.f32.gmra.mrb[0].mxu0 %v890
    %v975 = vpop.f32.mrb[0].mxu0
    %v976 = vadd.f32 0.0, %v975
    %v977 = vpop.f32.mrb[0].mxu0
    %978 = vmatprep.mubr.f32.mxu0 0.0
    %979 = vmatmul.mubr.f32.gmra.mrb[0].mxu0 %v893
    %v980 = vpop.f32.mrb[0].mxu0
    %v981 = vadd.f32 0.0, %v980
    %v982 = vpop.f32.mrb[0].mxu0
    %983 = vmatprep.mubr.f32.mxu0 0.0
    %984 = vmatmul.mubr.f32.gmra.mrb[0].mxu0 %v896
    %v985 = vpop.f32.mrb[0].mxu0
    %v986 = vadd.f32 0.0, %v985
    %v987 = vpop.f32.mrb[0].mxu0
    %988 = vmatprep.mubr.f32.mxu0 0.0
    %989 = vmatmul.mubr.f32.gmra.mrb[0].mxu0 %v899
    %v990 = vpop.f32.mrb[0].mxu0
    %v991 = vadd.f32 0.0, %v990
    %v992 = vpop.f32.mrb[0].mxu0
    %993 = vmatprep.mubr.f32.mxu0 0.0
    %994 = vmatmul.mubr.f32.gmra.mrb[0].mxu0 %v902
    %v995 = vpop.f32.mrb[0].mxu0
    %v996 = vadd.f32 0.0, %v995
    %v997 = vpop.f32.mrb[0].mxu0
    %998 = vdwg.mxu0
    %v999 = vadd.f32 %v872, %v971
    %v1000 = vadd.f32 %v873, %v976
    %v1001 = vadd.f32 %v874, %v981
    %v1002 = vadd.f32 %v875, %v986
    %v1003 = vadd.f32 %v876, %v991
    %v1004 = vadd.f32 %v877, %v996
    %v1005 = vld [vmem:[#allocation2 + $0x8] sm:$0xff]
    %v1006 = vld [vmem:[#allocation2 + $0x10] sm:$0xff]
    %v1007 = vld [vmem:[#allocation2 + $0x18] sm:$0xff]
    %v1008 = vld [vmem:[#allocation2 + $0x20] sm:$0xff]
    %v1009 = vld [vmem:[#allocation2 + $0x28] sm:$0xff]
    %v1010 = vld [vmem:[#allocation2 + $0x30] sm:$0xff]
    %v1011 = vld [vmem:[%s5 + $0x60] sm:$0xff]
    %v1012 = vld [vmem:[%s5 + $0x68] sm:$0xff]
    %v1014 = vsel %vm248, %v1005, 0
    %v1017 = vsel %vm248, %v1006, 0
    %v1020 = vsel %vm248, %v1007, 0
    %v1023 = vsel %vm248, %v1008, 0
    %v1026 = vsel %vm248, %v1009, 0
    %v1029 = vsel %vm248, %v1010, 0
    %1031 = vmatprep.subr.mxu0 0.0
    %1032 = vmatpush1.msra.mxu0 %v1011
    %1033 = vmatprep.subr.mxu0 0.0
    %1034 = vmatpush1.msra.mxu0 %v1012
    %1035 = vmatprep.subr.mxu0 0.0
    %1036 = vmatpush1.msra.mxu0 0.0
    %1037 = vmatprep.subr.mxu0 0.0
    %1038 = vmatpush1.msra.mxu0 0.0
    %1039 = vmatprep.subr.mxu0 0.0
    %1040 = vmatpush1.msra.mxu0 0.0
    %1041 = vmatprep.subr.mxu0 0.0
    %1042 = vmatpush1.msra.mxu0 0.0
    %1043 = vmatprep.subr.mxu0 0.0
    %1044 = vmatpush1.msra.mxu0 0.0
    %1045 = vmatprep.subr.mxu0 0.0
    %1046 = vmatpush1.msra.mxu0 0.0
    %1047 = vmatprep.subr.mxu0 0.0
    %1048 = vmatpush1.msra.mxu0 0.0
    %1049 = vmatprep.subr.mxu0 0.0
    %1050 = vmatpush1.msra.mxu0 0.0
    %1051 = vmatprep.subr.mxu0 0.0
    %1052 = vmatpush1.msra.mxu0 0.0
    %1053 = vmatprep.subr.mxu0 0.0
    %1054 = vmatpush1.msra.mxu0 0.0
    %1055 = vmatprep.subr.mxu0 0.0
    %1056 = vmatpush1.msra.mxu0 0.0
    %1057 = vmatprep.subr.mxu0 0.0
    %1058 = vmatpush1.msra.mxu0 0.0
    %1059 = vmatprep.subr.mxu0 0.0
    %1060 = vmatpush1.msra.mxu0 0.0
    %1061 = vmatprep.subr.mxu0 0.0
    %1062 = vmatpush1.msra.mxu0 0.0
    %1063 = vmatprep.subr.mxu0 0.0
    %1064 = vmatpush1.msra.mxu0 0.0
    %1065 = vmatprep.subr.mxu0 0.0
    %1066 = vmatpush1.msra.mxu0 0.0
    %1067 = vmatprep.subr.mxu0 0.0
    %1068 = vmatpush1.msra.mxu0 0.0
    %1069 = vmatprep.subr.mxu0 0.0
    %1070 = vmatpush1.msra.mxu0 0.0
    %1071 = vmatprep.subr.mxu0 0.0
    %1072 = vmatpush1.msra.mxu0 0.0
    %1073 = vmatprep.subr.mxu0 0.0
    %1074 = vmatpush1.msra.mxu0 0.0
    %1075 = vmatprep.subr.mxu0 0.0
    %1076 = vmatpush1.msra.mxu0 0.0
    %1077 = vmatprep.subr.mxu0 0.0
    %1078 = vmatpush1.msra.mxu0 0.0
    %1079 = vmatprep.subr.mxu0 0.0
    %1080 = vmatpush1.msra.mxu0 0.0
    %1081 = vmatprep.subr.mxu0 0.0
    %1082 = vmatpush1.msra.mxu0 0.0
    %1083 = vmatprep.subr.mxu0 0.0
    %1084 = vmatpush1.msra.mxu0 0.0
    %1085 = vmatprep.subr.mxu0 0.0
    %1086 = vmatpush1.msra.mxu0 0.0
    %1087 = vmatprep.subr.mxu0 0.0
    %1088 = vmatpush1.msra.mxu0 0.0
    %1089 = vmatprep.subr.mxu0 0.0
    %1090 = vmatpush1.msra.mxu0 0.0
    %1091 = vmatprep.subr.mxu0 0.0
    %1092 = vmatpush1.msra.mxu0 0.0
    %1093 = vmatprep.subr.mxu0 0.0
    %1094 = vmatpush1.msra.mxu0 0.0
    %1095 = vmatprep.mubr.f32.mxu0 0.0
    %1096 = vmatmul.mubr.f32.gmra.mrb[0].mxu0 %v1014
    %v1097 = vpop.f32.mrb[0].mxu0
    %v1098 = vadd.f32 0.0, %v1097
    %v1099 = vpop.f32.mrb[0].mxu0
    %1100 = vmatprep.mubr.f32.mxu0 0.0
    %1101 = vmatmul.mubr.f32.gmra.mrb[0].mxu0 %v1017
    %v1102 = vpop.f32.mrb[0].mxu0
    %v1103 = vadd.f32 0.0, %v1102
    %v1104 = vpop.f32.mrb[0].mxu0
    %1105 = vmatprep.mubr.f32.mxu0 0.0
    %1106 = vmatmul.mubr.f32.gmra.mrb[0].mxu0 %v1020
    %v1107 = vpop.f32.mrb[0].mxu0
    %v1108 = vadd.f32 0.0, %v1107
    %v1109 = vpop.f32.mrb[0].mxu0
    %1110 = vmatprep.mubr.f32.mxu0 0.0
    %1111 = vmatmul.mubr.f32.gmra.mrb[0].mxu0 %v1023
    %v1112 = vpop.f32.mrb[0].mxu0
    %v1113 = vadd.f32 0.0, %v1112
    %v1114 = vpop.f32.mrb[0].mxu0
    %1115 = vmatprep.mubr.f32.mxu0 0.0
    %1116 = vmatmul.mubr.f32.gmra.mrb[0].mxu0 %v1026
    %v1117 = vpop.f32.mrb[0].mxu0
    %v1118 = vadd.f32 0.0, %v1117
    %v1119 = vpop.f32.mrb[0].mxu0
    %1120 = vmatprep.mubr.f32.mxu0 0.0
    %1121 = vmatmul.mubr.f32.gmra.mrb[0].mxu0 %v1029
    %v1122 = vpop.f32.mrb[0].mxu0
    %v1123 = vadd.f32 0.0, %v1122
    %v1124 = vpop.f32.mrb[0].mxu0
    %1125 = vdwg.mxu0
    %v1126 = vadd.f32 %v999, %v1098
    %v1127 = vadd.f32 %v1000, %v1103
    %v1128 = vadd.f32 %v1001, %v1108
    %v1129 = vadd.f32 %v1002, %v1113
    %v1130 = vadd.f32 %v1003, %v1118
    %v1131 = vadd.f32 %v1004, %v1123
    %v1132 = vld [vmem:[%s6] sm:$0x1]
    %v1134 = vlaneseq
    %v1135 = vshrl.u32 %v1134, 7
    %v1136 = vsub.s32 0, %v1135
    %v1137 = vrot.slane %v1132, %v1136
    %v1139 = vadd.f32 %v1126, %v1137
    %v1140 = vadd.f32 %v1127, %v1137
    %v1141 = vadd.f32 %v1128, %v1137
    %v1142 = vadd.f32 %v1129, %v1137
    %v1143 = vadd.f32 %v1130, %v1137
    %v1144 = vadd.f32 %v1131, %v1137
    %v1145 = vmax.f32 %v1139, 0.0
    %v1146 = vmax.f32 %v1140, 0.0
    %v1147 = vmax.f32 %v1141, 0.0
    %v1148 = vmax.f32 %v1142, 0.0
    %v1149 = vmax.f32 %v1143, 0.0
    %v1150 = vmax.f32 %v1144, 0.0
    %1152 = vset.pattern.permute.xlu0 0
    %1153 = vperm.xlu0 %1152, %v94
    %v1154 = vpop.permute.xlu0 %1153
    %1157 = vset.pattern.permute.xlu0 0
    %1158 = vperm.xlu0 %1157, %v95
    %v1159 = vpop.permute.xlu0 %1158
    %1162 = vset.pattern.permute.xlu0 0
    %1163 = vperm.xlu0 %1162, %v96
    %v1164 = vpop.permute.xlu0 %1163
    %1167 = vset.pattern.permute.xlu0 0
    %1168 = vperm.xlu0 %1167, %v97
    %v1169 = vpop.permute.xlu0 %1168
    %1172 = vset.pattern.permute.xlu0 0
    %1173 = vperm.xlu0 %1172, %v98
    %v1174 = vpop.permute.xlu0 %1173
    %1177 = vset.pattern.permute.xlu0 0
    %1178 = vperm.xlu0 %1177, %v99
    %v1179 = vpop.permute.xlu0 %1178
    %v1181 = vmul.f32 %v1145, %v1154
    %v1182 = vmul.f32 %v1146, %v1159
    %v1183 = vmul.f32 %v1147, %v1164
    %v1184 = vmul.f32 %v1148, %v1169
    %v1185 = vmul.f32 %v1149, %v1174
    %v1186 = vmul.f32 %v1150, %v1179
    %1187 = vst.msk [vmem:[#allocation3 + $0x4] sm:$0xff] %vm86, %v1181
    %1188 = vst.msk [vmem:[#allocation3 + $0xc] sm:$0xff] %vm86, %v1182
    %1189 = vst.msk [vmem:[#allocation3 + $0x14] sm:$0xff] %vm86, %v1183
    %1190 = vst.msk [vmem:[#allocation3 + $0x1c] sm:$0xff] %vm86, %v1184
    %1191 = vst.msk [vmem:[#allocation3 + $0x24] sm:$0xff] %vm86, %v1185
    %1192 = vst.msk [vmem:[#allocation3 + $0x2c] sm:$0xff] %vm86, %v1186
    %v1193 = vld [vmem:[#allocation3] sm:$0xff]
    %v1194 = vld [vmem:[#allocation3 + $0x8] sm:$0xff]
    %v1195 = vld [vmem:[#allocation3 + $0x10] sm:$0xff]
    %v1196 = vld [vmem:[#allocation3 + $0x18] sm:$0xff]
    %v1197 = vld [vmem:[#allocation3 + $0x20] sm:$0xff]
    %v1198 = vld [vmem:[#allocation3 + $0x28] sm:$0xff]
    %v1199 = vld [vmem:[%s7] sm:$0xff]
    %v1200 = vld [vmem:[#allocation3 + $0x2] sm:$0xff]
    %v1201 = vld [vmem:[#allocation3 + $0xa] sm:$0xff]
    %v1202 = vld [vmem:[#allocation3 + $0x12] sm:$0xff]
    %v1203 = vld [vmem:[#allocation3 + $0x1a] sm:$0xff]
    %v1204 = vld [vmem:[#allocation3 + $0x22] sm:$0xff]
    %v1205 = vld [vmem:[#allocation3 + $0x2a] sm:$0xff]
    %v1206 = vld [vmem:[%s7 + $0x8] sm:$0xff]
    %v1208 = vsel %vm86, %v1200, 0
    %v1211 = vsel %vm86, %v1201, 0
    %v1214 = vsel %vm86, %v1202, 0
    %v1217 = vsel %vm86, %v1203, 0
    %v1220 = vsel %vm86, %v1204, 0
    %v1223 = vsel %vm86, %v1205, 0
    %1225 = vmatprep.subr.mxu0 0.0
    %1226 = vmatpush1.msra.mxu0 %v1206
    %1227 = vmatprep.subr.mxu0 0.0
    %1228 = vmatpush1.msra.mxu0 0.0
    %1229 = vmatprep.subr.mxu0 0.0
    %1230 = vmatpush1.msra.mxu0 0.0
    %1231 = vmatprep.subr.mxu0 0.0
    %1232 = vmatpush1.msra.mxu0 0.0
    %1233 = vmatprep.subr.mxu0 0.0
    %1234 = vmatpush1.msra.mxu0 0.0
    %1235 = vmatprep.subr.mxu0 0.0
    %1236 = vmatpush1.msra.mxu0 0.0
    %1237 = vmatprep.subr.mxu0 0.0
    %1238 = vmatpush1.msra.mxu0 0.0
    %1239 = vmatprep.subr.mxu0 0.0
    %1240 = vmatpush1.msra.mxu0 0.0
    %1241 = vmatprep.subr.mxu0 0.0
    %1242 = vmatpush1.msra.mxu0 0.0
    %1243 = vmatprep.subr.mxu0 0.0
    %1244 = vmatpush1.msra.mxu0 0.0
    %1245 = vmatprep.subr.mxu0 0.0
    %1246 = vmatpush1.msra.mxu0 0.0
    %1247 = vmatprep.subr.mxu0 0.0
    %1248 = vmatpush1.msra.mxu0 0.0
    %1249 = vmatprep.subr.mxu0 0.0
    %1250 = vmatpush1.msra.mxu0 0.0
    %1251 = vmatprep.subr.mxu0 0.0
    %1252 = vmatpush1.msra.mxu0 0.0
    %1253 = vmatprep.subr.mxu0 0.0
    %1254 = vmatpush1.msra.mxu0 0.0
    %1255 = vmatprep.subr.mxu0 0.0
    %1256 = vmatpush1.msra.mxu0 0.0
    %1257 = vmatprep.subr.mxu0 0.0
    %1258 = vmatpush1.msra.mxu0 0.0
    %1259 = vmatprep.subr.mxu0 0.0
    %1260 = vmatpush1.msra.mxu0 0.0
    %1261 = vmatprep.subr.mxu0 0.0
    %1262 = vmatpush1.msra.mxu0 0.0
    %1263 = vmatprep.subr.mxu0 0.0
    %1264 = vmatpush1.msra.mxu0 0.0
    %1265 = vmatprep.subr.mxu0 0.0
    %1266 = vmatpush1.msra.mxu0 0.0
    %1267 = vmatprep.subr.mxu0 0.0
    %1268 = vmatpush1.msra.mxu0 0.0
    %1269 = vmatprep.subr.mxu0 0.0
    %1270 = vmatpush1.msra.mxu0 0.0
    %1271 = vmatprep.subr.mxu0 0.0
    %1272 = vmatpush1.msra.mxu0 0.0
    %1273 = vmatprep.subr.mxu0 0.0
    %1274 = vmatpush1.msra.mxu0 0.0
    %1275 = vmatprep.subr.mxu0 0.0
    %1276 = vmatpush1.msra.mxu0 0.0
    %1277 = vmatprep.subr.mxu0 0.0
    %1278 = vmatpush1.msra.mxu0 0.0
    %1279 = vmatprep.subr.mxu0 0.0
    %1280 = vmatpush1.msra.mxu0 0.0
    %1281 = vmatprep.subr.mxu0 0.0
    %1282 = vmatpush1.msra.mxu0 0.0
    %1283 = vmatprep.subr.mxu0 0.0
    %1284 = vmatpush1.msra.mxu0 0.0
    %1285 = vmatprep.subr.mxu0 0.0
    %1286 = vmatpush1.msra.mxu0 0.0
    %1287 = vmatprep.subr.mxu0 0.0
    %1288 = vmatpush1.msra.mxu0 0.0
    %1289 = vmatprep.mubr.f32.mxu0 0.0
    %1290 = vmatmul.mubr.f32.gmra.mrb[0].mxu0 %v1208
    %v1291 = vpop.f32.mrb[0].mxu0
    %v1292 = vadd.f32 0.0, %v1291
    %v1293 = vpop.f32.mrb[0].mxu0
    %1294 = vmatprep.mubr.f32.mxu0 0.0
    %1295 = vmatmul.mubr.f32.gmra.mrb[0].mxu0 %v1211
    %v1296 = vpop.f32.mrb[0].mxu0
    %v1297 = vadd.f32 0.0, %v1296
    %v1298 = vpop.f32.mrb[0].mxu0
    %1299 = vmatprep.mubr.f32.mxu0 0.0
    %1300 = vmatmul.mubr.f32.gmra.mrb[0].mxu0 %v1214
    %v1301 = vpop.f32.mrb[0].mxu0
    %v1302 = vadd.f32 0.0, %v1301
    %v1303 = vpop.f32.mrb[0].mxu0
    %1304 = vmatprep.mubr.f32.mxu0 0.0
    %1305 = vmatmul.mubr.f32.gmra.mrb[0].mxu0 %v1217
    %v1306 = vpop.f32.mrb[0].mxu0
    %v1307 = vadd.f32 0.0, %v1306
    %v1308 = vpop.f32.mrb[0].mxu0
    %1309 = vmatprep.mubr.f32.mxu0 0.0
    %1310 = vmatmul.mubr.f32.gmra.mrb[0].mxu0 %v1220
    %v1311 = vpop.f32.mrb[0].mxu0
    %v1312 = vadd.f32 0.0, %v1311
    %v1313 = vpop.f32.mrb[0].mxu0
    %1314 = vmatprep.mubr.f32.mxu0 0.0
    %1315 = vmatmul.mubr.f32.gmra.mrb[0].mxu0 %v1223
    %v1316 = vpop.f32.mrb[0].mxu0
    %v1317 = vadd.f32 0.0, %v1316
    %v1318 = vpop.f32.mrb[0].mxu0
    %1319 = vdwg.mxu0
    %v1321 = vsel %vm86, %v1193, 0
    %v1324 = vsel %vm86, %v1194, 0
    %v1327 = vsel %vm86, %v1195, 0
    %v1330 = vsel %vm86, %v1196, 0
    %v1333 = vsel %vm86, %v1197, 0
    %v1336 = vsel %vm86, %v1198, 0
    %1338 = vmatprep.subr.mxu0 0.0
    %1339 = vmatpush1.msra.mxu0 %v1199
    %1340 = vmatprep.subr.mxu0 0.0
    %1341 = vmatpush1.msra.mxu0 0.0
    %1342 = vmatprep.subr.mxu0 0.0
    %1343 = vmatpush1.msra.mxu0 0.0
    %1344 = vmatprep.subr.mxu0 0.0
    %1345 = vmatpush1.msra.mxu0 0.0
    %1346 = vmatprep.subr.mxu0 0.0
    %1347 = vmatpush1.msra.mxu0 0.0
    %1348 = vmatprep.subr.mxu0 0.0
    %1349 = vmatpush1.msra.mxu0 0.0
    %1350 = vmatprep.subr.mxu0 0.0
    %1351 = vmatpush1.msra.mxu0 0.0
    %1352 = vmatprep.subr.mxu0 0.0
    %1353 = vmatpush1.msra.mxu0 0.0
    %1354 = vmatprep.subr.mxu0 0.0
    %1355 = vmatpush1.msra.mxu0 0.0
    %1356 = vmatprep.subr.mxu0 0.0
    %1357 = vmatpush1.msra.mxu0 0.0
    %1358 = vmatprep.subr.mxu0 0.0
    %1359 = vmatpush1.msra.mxu0 0.0
    %1360 = vmatprep.subr.mxu0 0.0
    %1361 = vmatpush1.msra.mxu0 0.0
    %1362 = vmatprep.subr.mxu0 0.0
    %1363 = vmatpush1.msra.mxu0 0.0
    %1364 = vmatprep.subr.mxu0 0.0
    %1365 = vmatpush1.msra.mxu0 0.0
    %1366 = vmatprep.subr.mxu0 0.0
    %1367 = vmatpush1.msra.mxu0 0.0
    %1368 = vmatprep.subr.mxu0 0.0
    %1369 = vmatpush1.msra.mxu0 0.0
    %1370 = vmatprep.subr.mxu0 0.0
    %1371 = vmatpush1.msra.mxu0 0.0
    %1372 = vmatprep.subr.mxu0 0.0
    %1373 = vmatpush1.msra.mxu0 0.0
    %1374 = vmatprep.subr.mxu0 0.0
    %1375 = vmatpush1.msra.mxu0 0.0
    %1376 = vmatprep.subr.mxu0 0.0
    %1377 = vmatpush1.msra.mxu0 0.0
    %1378 = vmatprep.subr.mxu0 0.0
    %1379 = vmatpush1.msra.mxu0 0.0
    %1380 = vmatprep.subr.mxu0 0.0
    %1381 = vmatpush1.msra.mxu0 0.0
    %1382 = vmatprep.subr.mxu0 0.0
    %1383 = vmatpush1.msra.mxu0 0.0
    %1384 = vmatprep.subr.mxu0 0.0
    %1385 = vmatpush1.msra.mxu0 0.0
    %1386 = vmatprep.subr.mxu0 0.0
    %1387 = vmatpush1.msra.mxu0 0.0
    %1388 = vmatprep.subr.mxu0 0.0
    %1389 = vmatpush1.msra.mxu0 0.0
    %1390 = vmatprep.subr.mxu0 0.0
    %1391 = vmatpush1.msra.mxu0 0.0
    %1392 = vmatprep.subr.mxu0 0.0
    %1393 = vmatpush1.msra.mxu0 0.0
    %1394 = vmatprep.subr.mxu0 0.0
    %1395 = vmatpush1.msra.mxu0 0.0
    %1396 = vmatprep.subr.mxu0 0.0
    %1397 = vmatpush1.msra.mxu0 0.0
    %1398 = vmatprep.subr.mxu0 0.0
    %1399 = vmatpush1.msra.mxu0 0.0
    %1400 = vmatprep.subr.mxu0 0.0
    %1401 = vmatpush1.msra.mxu0 0.0
    %1402 = vmatprep.mubr.f32.mxu0 0.0
    %1403 = vmatmul.mubr.f32.gmra.mrb[0].mxu0 %v1321
    %v1404 = vpop.f32.mrb[0].mxu0
    %v1405 = vadd.f32 %v1292, %v1404
    %v1406 = vpop.f32.mrb[0].mxu0
    %1407 = vmatprep.mubr.f32.mxu0 0.0
    %1408 = vmatmul.mubr.f32.gmra.mrb[0].mxu0 %v1324
    %v1409 = vpop.f32.mrb[0].mxu0
    %v1410 = vadd.f32 %v1297, %v1409
    %v1411 = vpop.f32.mrb[0].mxu0
    %1412 = vmatprep.mubr.f32.mxu0 0.0
    %1413 = vmatmul.mubr.f32.gmra.mrb[0].mxu0 %v1327
    %v1414 = vpop.f32.mrb[0].mxu0
    %v1415 = vadd.f32 %v1302, %v1414
    %v1416 = vpop.f32.mrb[0].mxu0
    %1417 = vmatprep.mubr.f32.mxu0 0.0
    %1418 = vmatmul.mubr.f32.gmra.mrb[0].mxu0 %v1330
    %v1419 = vpop.f32.mrb[0].mxu0
    %v1420 = vadd.f32 %v1307, %v1419
    %v1421 = vpop.f32.mrb[0].mxu0
    %1422 = vmatprep.mubr.f32.mxu0 0.0
    %1423 = vmatmul.mubr.f32.gmra.mrb[0].mxu0 %v1333
    %v1424 = vpop.f32.mrb[0].mxu0
    %v1425 = vadd.f32 %v1312, %v1424
    %v1426 = vpop.f32.mrb[0].mxu0
    %1427 = vmatprep.mubr.f32.mxu0 0.0
    %1428 = vmatmul.mubr.f32.gmra.mrb[0].mxu0 %v1336
    %v1429 = vpop.f32.mrb[0].mxu0
    %v1430 = vadd.f32 %v1317, %v1429
    %v1431 = vpop.f32.mrb[0].mxu0
    %1432 = vdwg.mxu0
    %v1433 = vld [vmem:[#allocation3 + $0x3] sm:$0xff]
    %v1434 = vld [vmem:[#allocation3 + $0xb] sm:$0xff]
    %v1435 = vld [vmem:[#allocation3 + $0x13] sm:$0xff]
    %v1436 = vld [vmem:[#allocation3 + $0x1b] sm:$0xff]
    %v1437 = vld [vmem:[#allocation3 + $0x23] sm:$0xff]
    %v1438 = vld [vmem:[#allocation3 + $0x2b] sm:$0xff]
    %v1439 = vld [vmem:[%s7 + $0x10] sm:$0xff]
    %v1441 = vsel %vm86, %v1433, 0
    %v1444 = vsel %vm86, %v1434, 0
    %v1447 = vsel %vm86, %v1435, 0
    %v1450 = vsel %vm86, %v1436, 0
    %v1453 = vsel %vm86, %v1437, 0
    %v1456 = vsel %vm86, %v1438, 0
    %1458 = vmatprep.subr.mxu0 0.0
    %1459 = vmatpush1.msra.mxu0 %v1439
    %1460 = vmatprep.subr.mxu0 0.0
    %1461 = vmatpush1.msra.mxu0 0.0
    %1462 = vmatprep.subr.mxu0 0.0
    %1463 = vmatpush1.msra.mxu0 0.0
    %1464 = vmatprep.subr.mxu0 0.0
    %1465 = vmatpush1.msra.mxu0 0.0
    %1466 = vmatprep.subr.mxu0 0.0
    %1467 = vmatpush1.msra.mxu0 0.0
    %1468 = vmatprep.subr.mxu0 0.0
    %1469 = vmatpush1.msra.mxu0 0.0
    %1470 = vmatprep.subr.mxu0 0.0
    %1471 = vmatpush1.msra.mxu0 0.0
    %1472 = vmatprep.subr.mxu0 0.0
    %1473 = vmatpush1.msra.mxu0 0.0
    %1474 = vmatprep.subr.mxu0 0.0
    %1475 = vmatpush1.msra.mxu0 0.0
    %1476 = vmatprep.subr.mxu0 0.0
    %1477 = vmatpush1.msra.mxu0 0.0
    %1478 = vmatprep.subr.mxu0 0.0
    %1479 = vmatpush1.msra.mxu0 0.0
    %1480 = vmatprep.subr.mxu0 0.0
    %1481 = vmatpush1.msra.mxu0 0.0
    %1482 = vmatprep.subr.mxu0 0.0
    %1483 = vmatpush1.msra.mxu0 0.0
    %1484 = vmatprep.subr.mxu0 0.0
    %1485 = vmatpush1.msra.mxu0 0.0
    %1486 = vmatprep.subr.mxu0 0.0
    %1487 = vmatpush1.msra.mxu0 0.0
    %1488 = vmatprep.subr.mxu0 0.0
    %1489 = vmatpush1.msra.mxu0 0.0
    %1490 = vmatprep.subr.mxu0 0.0
    %1491 = vmatpush1.msra.mxu0 0.0
    %1492 = vmatprep.subr.mxu0 0.0
    %1493 = vmatpush1.msra.mxu0 0.0
    %1494 = vmatprep.subr.mxu0 0.0
    %1495 = vmatpush1.msra.mxu0 0.0
    %1496 = vmatprep.subr.mxu0 0.0
    %1497 = vmatpush1.msra.mxu0 0.0
    %1498 = vmatprep.subr.mxu0 0.0
    %1499 = vmatpush1.msra.mxu0 0.0
    %1500 = vmatprep.subr.mxu0 0.0
    %1501 = vmatpush1.msra.mxu0 0.0
    %1502 = vmatprep.subr.mxu0 0.0
    %1503 = vmatpush1.msra.mxu0 0.0
    %1504 = vmatprep.subr.mxu0 0.0
    %1505 = vmatpush1.msra.mxu0 0.0
    %1506 = vmatprep.subr.mxu0 0.0
    %1507 = vmatpush1.msra.mxu0 0.0
    %1508 = vmatprep.subr.mxu0 0.0
    %1509 = vmatpush1.msra.mxu0 0.0
    %1510 = vmatprep.subr.mxu0 0.0
    %1511 = vmatpush1.msra.mxu0 0.0
    %1512 = vmatprep.subr.mxu0 0.0
    %1513 = vmatpush1.msra.mxu0 0.0
    %1514 = vmatprep.subr.mxu0 0.0
    %1515 = vmatpush1.msra.mxu0 0.0
    %1516 = vmatprep.subr.mxu0 0.0
    %1517 = vmatpush1.msra.mxu0 0.0
    %1518 = vmatprep.subr.mxu0 0.0
    %1519 = vmatpush1.msra.mxu0 0.0
    %1520 = vmatprep.subr.mxu0 0.0
    %1521 = vmatpush1.msra.mxu0 0.0
    %1522 = vmatprep.mubr.f32.mxu0 0.0
    %1523 = vmatmul.mubr.f32.gmra.mrb[0].mxu0 %v1441
    %v1524 = vpop.f32.mrb[0].mxu0
    %v1525 = vadd.f32 0.0, %v1524
    %v1526 = vpop.f32.mrb[0].mxu0
    %1527 = vmatprep.mubr.f32.mxu0 0.0
    %1528 = vmatmul.mubr.f32.gmra.mrb[0].mxu0 %v1444
    %v1529 = vpop.f32.mrb[0].mxu0
    %v1530 = vadd.f32 0.0, %v1529
    %v1531 = vpop.f32.mrb[0].mxu0
    %1532 = vmatprep.mubr.f32.mxu0 0.0
    %1533 = vmatmul.mubr.f32.gmra.mrb[0].mxu0 %v1447
    %v1534 = vpop.f32.mrb[0].mxu0
    %v1535 = vadd.f32 0.0, %v1534
    %v1536 = vpop.f32.mrb[0].mxu0
    %1537 = vmatprep.mubr.f32.mxu0 0.0
    %1538 = vmatmul.mubr.f32.gmra.mrb[0].mxu0 %v1450
    %v1539 = vpop.f32.mrb[0].mxu0
    %v1540 = vadd.f32 0.0, %v1539
    %v1541 = vpop.f32.mrb[0].mxu0
    %1542 = vmatprep.mubr.f32.mxu0 0.0
    %1543 = vmatmul.mubr.f32.gmra.mrb[0].mxu0 %v1453
    %v1544 = vpop.f32.mrb[0].mxu0
    %v1545 = vadd.f32 0.0, %v1544
    %v1546 = vpop.f32.mrb[0].mxu0
    %1547 = vmatprep.mubr.f32.mxu0 0.0
    %1548 = vmatmul.mubr.f32.gmra.mrb[0].mxu0 %v1456
    %v1549 = vpop.f32.mrb[0].mxu0
    %v1550 = vadd.f32 0.0, %v1549
    %v1551 = vpop.f32.mrb[0].mxu0
    %1552 = vdwg.mxu0
    %v1553 = vadd.f32 %v1405, %v1525
    %v1554 = vadd.f32 %v1410, %v1530
    %v1555 = vadd.f32 %v1415, %v1535
    %v1556 = vadd.f32 %v1420, %v1540
    %v1557 = vadd.f32 %v1425, %v1545
    %v1558 = vadd.f32 %v1430, %v1550
    %v1559 = vld [vmem:[#allocation3 + $0x4] sm:$0xff]
    %v1560 = vld [vmem:[#allocation3 + $0xc] sm:$0xff]
    %v1561 = vld [vmem:[#allocation3 + $0x14] sm:$0xff]
    %v1562 = vld [vmem:[#allocation3 + $0x1c] sm:$0xff]
    %v1563 = vld [vmem:[#allocation3 + $0x24] sm:$0xff]
    %v1564 = vld [vmem:[#allocation3 + $0x2c] sm:$0xff]
    %v1565 = vld [vmem:[%s7 + $0x18] sm:$0xff]
    %v1567 = vsel %vm86, %v1559, 0
    %v1570 = vsel %vm86, %v1560, 0
    %v1573 = vsel %vm86, %v1561, 0
    %v1576 = vsel %vm86, %v1562, 0
    %v1579 = vsel %vm86, %v1563, 0
    %v1582 = vsel %vm86, %v1564, 0
    %1584 = vmatprep.subr.mxu0 0.0
    %1585 = vmatpush1.msra.mxu0 %v1565
    %1586 = vmatprep.subr.mxu0 0.0
    %1587 = vmatpush1.msra.mxu0 0.0
    %1588 = vmatprep.subr.mxu0 0.0
    %1589 = vmatpush1.msra.mxu0 0.0
    %1590 = vmatprep.subr.mxu0 0.0
    %1591 = vmatpush1.msra.mxu0 0.0
    %1592 = vmatprep.subr.mxu0 0.0
    %1593 = vmatpush1.msra.mxu0 0.0
    %1594 = vmatprep.subr.mxu0 0.0
    %1595 = vmatpush1.msra.mxu0 0.0
    %1596 = vmatprep.subr.mxu0 0.0
    %1597 = vmatpush1.msra.mxu0 0.0
    %1598 = vmatprep.subr.mxu0 0.0
    %1599 = vmatpush1.msra.mxu0 0.0
    %1600 = vmatprep.subr.mxu0 0.0
    %1601 = vmatpush1.msra.mxu0 0.0
    %1602 = vmatprep.subr.mxu0 0.0
    %1603 = vmatpush1.msra.mxu0 0.0
    %1604 = vmatprep.subr.mxu0 0.0
    %1605 = vmatpush1.msra.mxu0 0.0
    %1606 = vmatprep.subr.mxu0 0.0
    %1607 = vmatpush1.msra.mxu0 0.0
    %1608 = vmatprep.subr.mxu0 0.0
    %1609 = vmatpush1.msra.mxu0 0.0
    %1610 = vmatprep.subr.mxu0 0.0
    %1611 = vmatpush1.msra.mxu0 0.0
    %1612 = vmatprep.subr.mxu0 0.0
    %1613 = vmatpush1.msra.mxu0 0.0
    %1614 = vmatprep.subr.mxu0 0.0
    %1615 = vmatpush1.msra.mxu0 0.0
    %1616 = vmatprep.subr.mxu0 0.0
    %1617 = vmatpush1.msra.mxu0 0.0
    %1618 = vmatprep.subr.mxu0 0.0
    %1619 = vmatpush1.msra.mxu0 0.0
    %1620 = vmatprep.subr.mxu0 0.0
    %1621 = vmatpush1.msra.mxu0 0.0
    %1622 = vmatprep.subr.mxu0 0.0
    %1623 = vmatpush1.msra.mxu0 0.0
    %1624 = vmatprep.subr.mxu0 0.0
    %1625 = vmatpush1.msra.mxu0 0.0
    %1626 = vmatprep.subr.mxu0 0.0
    %1627 = vmatpush1.msra.mxu0 0.0
    %1628 = vmatprep.subr.mxu0 0.0
    %1629 = vmatpush1.msra.mxu0 0.0
    %1630 = vmatprep.subr.mxu0 0.0
    %1631 = vmatpush1.msra.mxu0 0.0
    %1632 = vmatprep.subr.mxu0 0.0
    %1633 = vmatpush1.msra.mxu0 0.0
    %1634 = vmatprep.subr.mxu0 0.0
    %1635 = vmatpush1.msra.mxu0 0.0
    %1636 = vmatprep.subr.mxu0 0.0
    %1637 = vmatpush1.msra.mxu0 0.0
    %1638 = vmatprep.subr.mxu0 0.0
    %1639 = vmatpush1.msra.mxu0 0.0
    %1640 = vmatprep.subr.mxu0 0.0
    %1641 = vmatpush1.msra.mxu0 0.0
    %1642 = vmatprep.subr.mxu0 0.0
    %1643 = vmatpush1.msra.mxu0 0.0
    %1644 = vmatprep.subr.mxu0 0.0
    %1645 = vmatpush1.msra.mxu0 0.0
    %1646 = vmatprep.subr.mxu0 0.0
    %1647 = vmatpush1.msra.mxu0 0.0
    %1648 = vmatprep.mubr.f32.mxu0 0.0
    %1649 = vmatmul.mubr.f32.gmra.mrb[0].mxu0 %v1567
    %v1650 = vpop.f32.mrb[0].mxu0
    %v1651 = vadd.f32 0.0, %v1650
    %v1652 = vpop.f32.mrb[0].mxu0
    %1653 = vmatprep.mubr.f32.mxu0 0.0
    %1654 = vmatmul.mubr.f32.gmra.mrb[0].mxu0 %v1570
    %v1655 = vpop.f32.mrb[0].mxu0
    %v1656 = vadd.f32 0.0, %v1655
    %v1657 = vpop.f32.mrb[0].mxu0
    %1658 = vmatprep.mubr.f32.mxu0 0.0
    %1659 = vmatmul.mubr.f32.gmra.mrb[0].mxu0 %v1573
    %v1660 = vpop.f32.mrb[0].mxu0
    %v1661 = vadd.f32 0.0, %v1660
    %v1662 = vpop.f32.mrb[0].mxu0
    %1663 = vmatprep.mubr.f32.mxu0 0.0
    %1664 = vmatmul.mubr.f32.gmra.mrb[0].mxu0 %v1576
    %v1665 = vpop.f32.mrb[0].mxu0
    %v1666 = vadd.f32 0.0, %v1665
    %v1667 = vpop.f32.mrb[0].mxu0
    %1668 = vmatprep.mubr.f32.mxu0 0.0
    %1669 = vmatmul.mubr.f32.gmra.mrb[0].mxu0 %v1579
    %v1670 = vpop.f32.mrb[0].mxu0
    %v1671 = vadd.f32 0.0, %v1670
    %v1672 = vpop.f32.mrb[0].mxu0
    %1673 = vmatprep.mubr.f32.mxu0 0.0
    %1674 = vmatmul.mubr.f32.gmra.mrb[0].mxu0 %v1582
    %v1675 = vpop.f32.mrb[0].mxu0
    %v1676 = vadd.f32 0.0, %v1675
    %v1677 = vpop.f32.mrb[0].mxu0
    %1678 = vdwg.mxu0
    %v1679 = vadd.f32 %v1553, %v1651
    %v1680 = vadd.f32 %v1554, %v1656
    %v1681 = vadd.f32 %v1555, %v1661
    %v1682 = vadd.f32 %v1556, %v1666
    %v1683 = vadd.f32 %v1557, %v1671
    %v1684 = vadd.f32 %v1558, %v1676
    %v1685 = vld [vmem:[#allocation3 + $0x5] sm:$0xff]
    %v1686 = vld [vmem:[#allocation3 + $0xd] sm:$0xff]
    %v1687 = vld [vmem:[#allocation3 + $0x15] sm:$0xff]
    %v1688 = vld [vmem:[#allocation3 + $0x1d] sm:$0xff]
    %v1689 = vld [vmem:[#allocation3 + $0x25] sm:$0xff]
    %v1690 = vld [vmem:[#allocation3 + $0x2d] sm:$0xff]
    %v1691 = vld [vmem:[%s7 + $0x20] sm:$0xff]
    %v1693 = vsel %vm86, %v1685, 0
    %v1696 = vsel %vm86, %v1686, 0
    %v1699 = vsel %vm86, %v1687, 0
    %v1702 = vsel %vm86, %v1688, 0
    %v1705 = vsel %vm86, %v1689, 0
    %v1708 = vsel %vm86, %v1690, 0
    %1710 = vmatprep.subr.mxu0 0.0
    %1711 = vmatpush1.msra.mxu0 %v1691
    %1712 = vmatprep.subr.mxu0 0.0
    %1713 = vmatpush1.msra.mxu0 0.0
    %1714 = vmatprep.subr.mxu0 0.0
    %1715 = vmatpush1.msra.mxu0 0.0
    %1716 = vmatprep.subr.mxu0 0.0
    %1717 = vmatpush1.msra.mxu0 0.0
    %1718 = vmatprep.subr.mxu0 0.0
    %1719 = vmatpush1.msra.mxu0 0.0
    %1720 = vmatprep.subr.mxu0 0.0
    %1721 = vmatpush1.msra.mxu0 0.0
    %1722 = vmatprep.subr.mxu0 0.0
    %1723 = vmatpush1.msra.mxu0 0.0
    %1724 = vmatprep.subr.mxu0 0.0
    %1725 = vmatpush1.msra.mxu0 0.0
    %1726 = vmatprep.subr.mxu0 0.0
    %1727 = vmatpush1.msra.mxu0 0.0
    %1728 = vmatprep.subr.mxu0 0.0
    %1729 = vmatpush1.msra.mxu0 0.0
    %1730 = vmatprep.subr.mxu0 0.0
    %1731 = vmatpush1.msra.mxu0 0.0
    %1732 = vmatprep.subr.mxu0 0.0
    %1733 = vmatpush1.msra.mxu0 0.0
    %1734 = vmatprep.subr.mxu0 0.0
    %1735 = vmatpush1.msra.mxu0 0.0
    %1736 = vmatprep.subr.mxu0 0.0
    %1737 = vmatpush1.msra.mxu0 0.0
    %1738 = vmatprep.subr.mxu0 0.0
    %1739 = vmatpush1.msra.mxu0 0.0
    %1740 = vmatprep.subr.mxu0 0.0
    %1741 = vmatpush1.msra.mxu0 0.0
    %1742 = vmatprep.subr.mxu0 0.0
    %1743 = vmatpush1.msra.mxu0 0.0
    %1744 = vmatprep.subr.mxu0 0.0
    %1745 = vmatpush1.msra.mxu0 0.0
    %1746 = vmatprep.subr.mxu0 0.0
    %1747 = vmatpush1.msra.mxu0 0.0
    %1748 = vmatprep.subr.mxu0 0.0
    %1749 = vmatpush1.msra.mxu0 0.0
    %1750 = vmatprep.subr.mxu0 0.0
    %1751 = vmatpush1.msra.mxu0 0.0
    %1752 = vmatprep.subr.mxu0 0.0
    %1753 = vmatpush1.msra.mxu0 0.0
    %1754 = vmatprep.subr.mxu0 0.0
    %1755 = vmatpush1.msra.mxu0 0.0
    %1756 = vmatprep.subr.mxu0 0.0
    %1757 = vmatpush1.msra.mxu0 0.0
    %1758 = vmatprep.subr.mxu0 0.0
    %1759 = vmatpush1.msra.mxu0 0.0
    %1760 = vmatprep.subr.mxu0 0.0
    %1761 = vmatpush1.msra.mxu0 0.0
    %1762 = vmatprep.subr.mxu0 0.0
    %1763 = vmatpush1.msra.mxu0 0.0
    %1764 = vmatprep.subr.mxu0 0.0
    %1765 = vmatpush1.msra.mxu0 0.0
    %1766 = vmatprep.subr.mxu0 0.0
    %1767 = vmatpush1.msra.mxu0 0.0
    %1768 = vmatprep.subr.mxu0 0.0
    %1769 = vmatpush1.msra.mxu0 0.0
    %1770 = vmatprep.subr.mxu0 0.0
    %1771 = vmatpush1.msra.mxu0 0.0
    %1772 = vmatprep.subr.mxu0 0.0
    %1773 = vmatpush1.msra.mxu0 0.0
    %1774 = vmatprep.mubr.f32.mxu0 0.0
    %1775 = vmatmul.mubr.f32.gmra.mrb[0].mxu0 %v1693
    %v1776 = vpop.f32.mrb[0].mxu0
    %v1777 = vadd.f32 0.0, %v1776
    %v1778 = vpop.f32.mrb[0].mxu0
    %1779 = vmatprep.mubr.f32.mxu0 0.0
    %1780 = vmatmul.mubr.f32.gmra.mrb[0].mxu0 %v1696
    %v1781 = vpop.f32.mrb[0].mxu0
    %v1782 = vadd.f32 0.0, %v1781
    %v1783 = vpop.f32.mrb[0].mxu0
    %1784 = vmatprep.mubr.f32.mxu0 0.0
    %1785 = vmatmul.mubr.f32.gmra.mrb[0].mxu0 %v1699
    %v1786 = vpop.f32.mrb[0].mxu0
    %v1787 = vadd.f32 0.0, %v1786
    %v1788 = vpop.f32.mrb[0].mxu0
    %1789 = vmatprep.mubr.f32.mxu0 0.0
    %1790 = vmatmul.mubr.f32.gmra.mrb[0].mxu0 %v1702
    %v1791 = vpop.f32.mrb[0].mxu0
    %v1792 = vadd.f32 0.0, %v1791
    %v1793 = vpop.f32.mrb[0].mxu0
    %1794 = vmatprep.mubr.f32.mxu0 0.0
    %1795 = vmatmul.mubr.f32.gmra.mrb[0].mxu0 %v1705
    %v1796 = vpop.f32.mrb[0].mxu0
    %v1797 = vadd.f32 0.0, %v1796
    %v1798 = vpop.f32.mrb[0].mxu0
    %1799 = vmatprep.mubr.f32.mxu0 0.0
    %1800 = vmatmul.mubr.f32.gmra.mrb[0].mxu0 %v1708
    %v1801 = vpop.f32.mrb[0].mxu0
    %v1802 = vadd.f32 0.0, %v1801
    %v1803 = vpop.f32.mrb[0].mxu0
    %1804 = vdwg.mxu0
    %v1805 = vadd.f32 %v1679, %v1777
    %v1806 = vadd.f32 %v1680, %v1782
    %v1807 = vadd.f32 %v1681, %v1787
    %v1808 = vadd.f32 %v1682, %v1792
    %v1809 = vadd.f32 %v1683, %v1797
    %v1810 = vadd.f32 %v1684, %v1802
    %v1811 = vld [vmem:[#allocation3 + $0x6] sm:$0xff]
    %v1812 = vld [vmem:[#allocation3 + $0xe] sm:$0xff]
    %v1813 = vld [vmem:[#allocation3 + $0x16] sm:$0xff]
    %v1814 = vld [vmem:[#allocation3 + $0x1e] sm:$0xff]
    %v1815 = vld [vmem:[#allocation3 + $0x26] sm:$0xff]
    %v1816 = vld [vmem:[#allocation3 + $0x2e] sm:$0xff]
    %v1817 = vld [vmem:[%s7 + $0x28] sm:$0xff]
    %v1819 = vsel %vm86, %v1811, 0
    %v1822 = vsel %vm86, %v1812, 0
    %v1825 = vsel %vm86, %v1813, 0
    %v1828 = vsel %vm86, %v1814, 0
    %v1831 = vsel %vm86, %v1815, 0
    %v1834 = vsel %vm86, %v1816, 0
    %1836 = vmatprep.subr.mxu0 0.0
    %1837 = vmatpush1.msra.mxu0 %v1817
    %1838 = vmatprep.subr.mxu0 0.0
    %1839 = vmatpush1.msra.mxu0 0.0
    %1840 = vmatprep.subr.mxu0 0.0
    %1841 = vmatpush1.msra.mxu0 0.0
    %1842 = vmatprep.subr.mxu0 0.0
    %1843 = vmatpush1.msra.mxu0 0.0
    %1844 = vmatprep.subr.mxu0 0.0
    %1845 = vmatpush1.msra.mxu0 0.0
    %1846 = vmatprep.subr.mxu0 0.0
    %1847 = vmatpush1.msra.mxu0 0.0
    %1848 = vmatprep.subr.mxu0 0.0
    %1849 = vmatpush1.msra.mxu0 0.0
    %1850 = vmatprep.subr.mxu0 0.0
    %1851 = vmatpush1.msra.mxu0 0.0
    %1852 = vmatprep.subr.mxu0 0.0
    %1853 = vmatpush1.msra.mxu0 0.0
    %1854 = vmatprep.subr.mxu0 0.0
    %1855 = vmatpush1.msra.mxu0 0.0
    %1856 = vmatprep.subr.mxu0 0.0
    %1857 = vmatpush1.msra.mxu0 0.0
    %1858 = vmatprep.subr.mxu0 0.0
    %1859 = vmatpush1.msra.mxu0 0.0
    %1860 = vmatprep.subr.mxu0 0.0
    %1861 = vmatpush1.msra.mxu0 0.0
    %1862 = vmatprep.subr.mxu0 0.0
    %1863 = vmatpush1.msra.mxu0 0.0
    %1864 = vmatprep.subr.mxu0 0.0
    %1865 = vmatpush1.msra.mxu0 0.0
    %1866 = vmatprep.subr.mxu0 0.0
    %1867 = vmatpush1.msra.mxu0 0.0
    %1868 = vmatprep.subr.mxu0 0.0
    %1869 = vmatpush1.msra.mxu0 0.0
    %1870 = vmatprep.subr.mxu0 0.0
    %1871 = vmatpush1.msra.mxu0 0.0
    %1872 = vmatprep.subr.mxu0 0.0
    %1873 = vmatpush1.msra.mxu0 0.0
    %1874 = vmatprep.subr.mxu0 0.0
    %1875 = vmatpush1.msra.mxu0 0.0
    %1876 = vmatprep.subr.mxu0 0.0
    %1877 = vmatpush1.msra.mxu0 0.0
    %1878 = vmatprep.subr.mxu0 0.0
    %1879 = vmatpush1.msra.mxu0 0.0
    %1880 = vmatprep.subr.mxu0 0.0
    %1881 = vmatpush1.msra.mxu0 0.0
    %1882 = vmatprep.subr.mxu0 0.0
    %1883 = vmatpush1.msra.mxu0 0.0
    %1884 = vmatprep.subr.mxu0 0.0
    %1885 = vmatpush1.msra.mxu0 0.0
    %1886 = vmatprep.subr.mxu0 0.0
    %1887 = vmatpush1.msra.mxu0 0.0
    %1888 = vmatprep.subr.mxu0 0.0
    %1889 = vmatpush1.msra.mxu0 0.0
    %1890 = vmatprep.subr.mxu0 0.0
    %1891 = vmatpush1.msra.mxu0 0.0
    %1892 = vmatprep.subr.mxu0 0.0
    %1893 = vmatpush1.msra.mxu0 0.0
    %1894 = vmatprep.subr.mxu0 0.0
    %1895 = vmatpush1.msra.mxu0 0.0
    %1896 = vmatprep.subr.mxu0 0.0
    %1897 = vmatpush1.msra.mxu0 0.0
    %1898 = vmatprep.subr.mxu0 0.0
    %1899 = vmatpush1.msra.mxu0 0.0
    %1900 = vmatprep.mubr.f32.mxu0 0.0
    %1901 = vmatmul.mubr.f32.gmra.mrb[0].mxu0 %v1819
    %v1902 = vpop.f32.mrb[0].mxu0
    %v1903 = vadd.f32 0.0, %v1902
    %v1904 = vpop.f32.mrb[0].mxu0
    %1905 = vmatprep.mubr.f32.mxu0 0.0
    %1906 = vmatmul.mubr.f32.gmra.mrb[0].mxu0 %v1822
    %v1907 = vpop.f32.mrb[0].mxu0
    %v1908 = vadd.f32 0.0, %v1907
    %v1909 = vpop.f32.mrb[0].mxu0
    %1910 = vmatprep.mubr.f32.mxu0 0.0
    %1911 = vmatmul.mubr.f32.gmra.mrb[0].mxu0 %v1825
    %v1912 = vpop.f32.mrb[0].mxu0
    %v1913 = vadd.f32 0.0, %v1912
    %v1914 = vpop.f32.mrb[0].mxu0
    %1915 = vmatprep.mubr.f32.mxu0 0.0
    %1916 = vmatmul.mubr.f32.gmra.mrb[0].mxu0 %v1828
    %v1917 = vpop.f32.mrb[0].mxu0
    %v1918 = vadd.f32 0.0, %v1917
    %v1919 = vpop.f32.mrb[0].mxu0
    %1920 = vmatprep.mubr.f32.mxu0 0.0
    %1921 = vmatmul.mubr.f32.gmra.mrb[0].mxu0 %v1831
    %v1922 = vpop.f32.mrb[0].mxu0
    %v1923 = vadd.f32 0.0, %v1922
    %v1924 = vpop.f32.mrb[0].mxu0
    %1925 = vmatprep.mubr.f32.mxu0 0.0
    %1926 = vmatmul.mubr.f32.gmra.mrb[0].mxu0 %v1834
    %v1927 = vpop.f32.mrb[0].mxu0
    %v1928 = vadd.f32 0.0, %v1927
    %v1929 = vpop.f32.mrb[0].mxu0
    %1930 = vdwg.mxu0
    %v1931 = vadd.f32 %v1805, %v1903
    %v1932 = vadd.f32 %v1806, %v1908
    %v1933 = vadd.f32 %v1807, %v1913
    %v1934 = vadd.f32 %v1808, %v1918
    %v1935 = vadd.f32 %v1809, %v1923
    %v1936 = vadd.f32 %v1810, %v1928
    %v1937 = vld [vmem:[#allocation3 + $0x8] sm:$0xff]
    %v1938 = vld [vmem:[#allocation3 + $0x10] sm:$0xff]
    %v1939 = vld [vmem:[#allocation3 + $0x18] sm:$0xff]
    %v1940 = vld [vmem:[#allocation3 + $0x20] sm:$0xff]
    %v1941 = vld [vmem:[#allocation3 + $0x28] sm:$0xff]
    %v1942 = vld [vmem:[#allocation3 + $0x30] sm:$0xff]
    %v1943 = vld [vmem:[%s7 + $0x30] sm:$0xff]
    %v1945 = vsel %vm86, %v1937, 0
    %v1948 = vsel %vm86, %v1938, 0
    %v1951 = vsel %vm86, %v1939, 0
    %v1954 = vsel %vm86, %v1940, 0
    %v1957 = vsel %vm86, %v1941, 0
    %v1960 = vsel %vm86, %v1942, 0
    %1962 = vmatprep.subr.mxu0 0.0
    %1963 = vmatpush1.msra.mxu0 %v1943
    %1964 = vmatprep.subr.mxu0 0.0
    %1965 = vmatpush1.msra.mxu0 0.0
    %1966 = vmatprep.subr.mxu0 0.0
    %1967 = vmatpush1.msra.mxu0 0.0
    %1968 = vmatprep.subr.mxu0 0.0
    %1969 = vmatpush1.msra.mxu0 0.0
    %1970 = vmatprep.subr.mxu0 0.0
    %1971 = vmatpush1.msra.mxu0 0.0
    %1972 = vmatprep.subr.mxu0 0.0
    %1973 = vmatpush1.msra.mxu0 0.0
    %1974 = vmatprep.subr.mxu0 0.0
    %1975 = vmatpush1.msra.mxu0 0.0
    %1976 = vmatprep.subr.mxu0 0.0
    %1977 = vmatpush1.msra.mxu0 0.0
    %1978 = vmatprep.subr.mxu0 0.0
    %1979 = vmatpush1.msra.mxu0 0.0
    %1980 = vmatprep.subr.mxu0 0.0
    %1981 = vmatpush1.msra.mxu0 0.0
    %1982 = vmatprep.subr.mxu0 0.0
    %1983 = vmatpush1.msra.mxu0 0.0
    %1984 = vmatprep.subr.mxu0 0.0
    %1985 = vmatpush1.msra.mxu0 0.0
    %1986 = vmatprep.subr.mxu0 0.0
    %1987 = vmatpush1.msra.mxu0 0.0
    %1988 = vmatprep.subr.mxu0 0.0
    %1989 = vmatpush1.msra.mxu0 0.0
    %1990 = vmatprep.subr.mxu0 0.0
    %1991 = vmatpush1.msra.mxu0 0.0
    %1992 = vmatprep.subr.mxu0 0.0
    %1993 = vmatpush1.msra.mxu0 0.0
    %1994 = vmatprep.subr.mxu0 0.0
    %1995 = vmatpush1.msra.mxu0 0.0
    %1996 = vmatprep.subr.mxu0 0.0
    %1997 = vmatpush1.msra.mxu0 0.0
    %1998 = vmatprep.subr.mxu0 0.0
    %1999 = vmatpush1.msra.mxu0 0.0
    %2000 = vmatprep.subr.mxu0 0.0
    %2001 = vmatpush1.msra.mxu0 0.0
    %2002 = vmatprep.subr.mxu0 0.0
    %2003 = vmatpush1.msra.mxu0 0.0
    %2004 = vmatprep.subr.mxu0 0.0
    %2005 = vmatpush1.msra.mxu0 0.0
    %2006 = vmatprep.subr.mxu0 0.0
    %2007 = vmatpush1.msra.mxu0 0.0
    %2008 = vmatprep.subr.mxu0 0.0
    %2009 = vmatpush1.msra.mxu0 0.0
    %2010 = vmatprep.subr.mxu0 0.0
    %2011 = vmatpush1.msra.mxu0 0.0
    %2012 = vmatprep.subr.mxu0 0.0
    %2013 = vmatpush1.msra.mxu0 0.0
    %2014 = vmatprep.subr.mxu0 0.0
    %2015 = vmatpush1.msra.mxu0 0.0
    %2016 = vmatprep.subr.mxu0 0.0
    %2017 = vmatpush1.msra.mxu0 0.0
    %2018 = vmatprep.subr.mxu0 0.0
    %2019 = vmatpush1.msra.mxu0 0.0
    %2020 = vmatprep.subr.mxu0 0.0
    %2021 = vmatpush1.msra.mxu0 0.0
    %2022 = vmatprep.subr.mxu0 0.0
    %2023 = vmatpush1.msra.mxu0 0.0
    %2024 = vmatprep.subr.mxu0 0.0
    %2025 = vmatpush1.msra.mxu0 0.0
    %2026 = vmatprep.mubr.f32.mxu0 0.0
    %2027 = vmatmul.mubr.f32.gmra.mrb[0].mxu0 %v1945
    %v2028 = vpop.f32.mrb[0].mxu0
    %v2029 = vadd.f32 0.0, %v2028
    %v2030 = vpop.f32.mrb[0].mxu0
    %2031 = vmatprep.mubr.f32.mxu0 0.0
    %2032 = vmatmul.mubr.f32.gmra.mrb[0].mxu0 %v1948
    %v2033 = vpop.f32.mrb[0].mxu0
    %v2034 = vadd.f32 0.0, %v2033
    %v2035 = vpop.f32.mrb[0].mxu0
    %2036 = vmatprep.mubr.f32.mxu0 0.0
    %2037 = vmatmul.mubr.f32.gmra.mrb[0].mxu0 %v1951
    %v2038 = vpop.f32.mrb[0].mxu0
    %v2039 = vadd.f32 0.0, %v2038
    %v2040 = vpop.f32.mrb[0].mxu0
    %2041 = vmatprep.mubr.f32.mxu0 0.0
    %2042 = vmatmul.mubr.f32.gmra.mrb[0].mxu0 %v1954
    %v2043 = vpop.f32.mrb[0].mxu0
    %v2044 = vadd.f32 0.0, %v2043
    %v2045 = vpop.f32.mrb[0].mxu0
    %2046 = vmatprep.mubr.f32.mxu0 0.0
    %2047 = vmatmul.mubr.f32.gmra.mrb[0].mxu0 %v1957
    %v2048 = vpop.f32.mrb[0].mxu0
    %v2049 = vadd.f32 0.0, %v2048
    %v2050 = vpop.f32.mrb[0].mxu0
    %2051 = vmatprep.mubr.f32.mxu0 0.0
    %2052 = vmatmul.mubr.f32.gmra.mrb[0].mxu0 %v1960
    %v2053 = vpop.f32.mrb[0].mxu0
    %v2054 = vadd.f32 0.0, %v2053
    %v2055 = vpop.f32.mrb[0].mxu0
    %2056 = vdwg.mxu0
    %v2057 = vadd.f32 %v1931, %v2029
    %v2058 = vadd.f32 %v1932, %v2034
    %v2059 = vadd.f32 %v1933, %v2039
    %v2060 = vadd.f32 %v1934, %v2044
    %v2061 = vadd.f32 %v1935, %v2049
    %v2062 = vadd.f32 %v1936, %v2054
    %v2063 = vld [vmem:[%s8] sm:$0x1]
    %v2065 = vlaneseq
    %v2066 = vshrl.u32 %v2065, 7
    %v2067 = vsub.s32 0, %v2066
    %v2068 = vrot.slane %v2063, %v2067
    %v2070 = vadd.f32 %v2057, %v2068
    %v2071 = vadd.f32 %v2058, %v2068
    %v2072 = vadd.f32 %v2059, %v2068
    %v2073 = vadd.f32 %v2060, %v2068
    %v2074 = vadd.f32 %v2061, %v2068
    %v2075 = vadd.f32 %v2062, %v2068
    %v2076 = vmax.f32 %v2070, 0.0
    %v2077 = vmax.f32 %v2071, 0.0
    %v2078 = vmax.f32 %v2072, 0.0
    %v2079 = vmax.f32 %v2073, 0.0
    %v2080 = vmax.f32 %v2074, 0.0
    %v2081 = vmax.f32 %v2075, 0.0
    %v2082 = vmul.f32 %v2076, %v1154
    %v2083 = vmul.f32 %v2077, %v1159
    %v2084 = vmul.f32 %v2078, %v1164
    %v2085 = vmul.f32 %v2079, %v1169
    %v2086 = vmul.f32 %v2080, %v1174
    %v2087 = vmul.f32 %v2081, %v1179
    %2094 = vrot.lane.b32.xlu0 %v2082, 16
    %v2095 = vpop.permute.xlu0 %2094
    %2096 = vrot.lane.b32.xlu0 %v2083, 16
    %v2097 = vpop.permute.xlu0 %2096
    %2098 = vrot.lane.b32.xlu0 %v2084, 16
    %v2099 = vpop.permute.xlu0 %2098
    %2100 = vrot.lane.b32.xlu0 %v2085, 16
    %v2101 = vpop.permute.xlu0 %2100
    %2102 = vrot.lane.b32.xlu0 %v2086, 16
    %v2103 = vpop.permute.xlu0 %2102
    %2104 = vrot.lane.b32.xlu0 %v2087, 16
    %v2105 = vpop.permute.xlu0 %2104
    %vm2112 = vcmask 195712
    %2113 = vst.msk [vmem:[#allocation2 + $0x4] sm:$0xff] %vm2112, %v2095
    %2114 = vst.msk [vmem:[#allocation2 + $0xc] sm:$0xff] %vm2112, %v2097
    %2115 = vst.msk [vmem:[#allocation2 + $0x14] sm:$0xff] %vm2112, %v2099
    %2116 = vst.msk [vmem:[#allocation2 + $0x1c] sm:$0xff] %vm2112, %v2101
    %2117 = vst.msk [vmem:[#allocation2 + $0x24] sm:$0xff] %vm2112, %v2103
    %2118 = vst.msk [vmem:[#allocation2 + $0x2c] sm:$0xff] %vm2112, %v2105
    %v2119 = vld [vmem:[#allocation2] sm:$0xff]
    %v2120 = vld [vmem:[#allocation2 + $0x8] sm:$0xff]
    %v2121 = vld [vmem:[#allocation2 + $0x10] sm:$0xff]
    %v2122 = vld [vmem:[#allocation2 + $0x18] sm:$0xff]
    %v2123 = vld [vmem:[#allocation2 + $0x20] sm:$0xff]
    %v2124 = vld [vmem:[#allocation2 + $0x28] sm:$0xff]
    %v2125 = vld [vmem:[%s9] sm:$0xff]
    %v2126 = vld [vmem:[%s9 + $0x8] sm:$0xff]
    %v2127 = vld [vmem:[%s9 + $0x10] sm:$0xff]
    %v2128 = vld [vmem:[#allocation2 + $0x2] sm:$0xff]
    %v2129 = vld [vmem:[#allocation2 + $0xa] sm:$0xff]
    %v2130 = vld [vmem:[#allocation2 + $0x12] sm:$0xff]
    %v2131 = vld [vmem:[#allocation2 + $0x1a] sm:$0xff]
    %v2132 = vld [vmem:[#allocation2 + $0x22] sm:$0xff]
    %v2133 = vld [vmem:[#allocation2 + $0x2a] sm:$0xff]
    %v2134 = vld [vmem:[%s9 + $0x18] sm:$0xff]
    %v2135 = vld [vmem:[%s9 + $0x20] sm:$0xff]
    %v2136 = vld [vmem:[%s9 + $0x28] sm:$0xff]
    %vm2137 = vcmask 195584
    %v2139 = vsel %vm2137, %v2128, 0
    %v2142 = vsel %vm2137, %v2129, 0
    %v2145 = vsel %vm2137, %v2130, 0
    %v2148 = vsel %vm2137, %v2131, 0
    %v2151 = vsel %vm2137, %v2132, 0
    %v2154 = vsel %vm2137, %v2133, 0
    %2156 = vmatprep.subr.mxu0 0.0
    %2157 = vmatpush1.msra.mxu0 %v2134
    %2158 = vmatprep.subr.mxu0 0.0
    %2159 = vmatpush1.msra.mxu0 %v2135
    %2160 = vmatprep.subr.mxu0 0.0
    %2161 = vmatpush1.msra.mxu0 %v2136
    %2162 = vmatprep.subr.mxu0 0.0
    %2163 = vmatpush1.msra.mxu0 0.0
    %2164 = vmatprep.subr.mxu0 0.0
    %2165 = vmatpush1.msra.mxu0 0.0
    %2166 = vmatprep.subr.mxu0 0.0
    %2167 = vmatpush1.msra.mxu0 0.0
    %2168 = vmatprep.subr.mxu0 0.0
    %2169 = vmatpush1.msra.mxu0 0.0
    %2170 = vmatprep.subr.mxu0 0.0
    %2171 = vmatpush1.msra.mxu0 0.0
    %2172 = vmatprep.subr.mxu0 0.0
    %2173 = vmatpush1.msra.mxu0 0.0
    %2174 = vmatprep.subr.mxu0 0.0
    %2175 = vmatpush1.msra.mxu0 0.0
    %2176 = vmatprep.subr.mxu0 0.0
    %2177 = vmatpush1.msra.mxu0 0.0
    %2178 = vmatprep.subr.mxu0 0.0
    %2179 = vmatpush1.msra.mxu0 0.0
    %2180 = vmatprep.subr.mxu0 0.0
    %2181 = vmatpush1.msra.mxu0 0.0
    %2182 = vmatprep.subr.mxu0 0.0
    %2183 = vmatpush1.msra.mxu0 0.0
    %2184 = vmatprep.subr.mxu0 0.0
    %2185 = vmatpush1.msra.mxu0 0.0
    %2186 = vmatprep.subr.mxu0 0.0
    %2187 = vmatpush1.msra.mxu0 0.0
    %2188 = vmatprep.subr.mxu0 0.0
    %2189 = vmatpush1.msra.mxu0 0.0
    %2190 = vmatprep.subr.mxu0 0.0
    %2191 = vmatpush1.msra.mxu0 0.0
    %2192 = vmatprep.subr.mxu0 0.0
    %2193 = vmatpush1.msra.mxu0 0.0
    %2194 = vmatprep.subr.mxu0 0.0
    %2195 = vmatpush1.msra.mxu0 0.0
    %2196 = vmatprep.subr.mxu0 0.0
    %2197 = vmatpush1.msra.mxu0 0.0
    %2198 = vmatprep.subr.mxu0 0.0
    %2199 = vmatpush1.msra.mxu0 0.0
    %2200 = vmatprep.subr.mxu0 0.0
    %2201 = vmatpush1.msra.mxu0 0.0
    %2202 = vmatprep.subr.mxu0 0.0
    %2203 = vmatpush1.msra.mxu0 0.0
    %2204 = vmatprep.subr.mxu0 0.0
    %2205 = vmatpush1.msra.mxu0 0.0
    %2206 = vmatprep.subr.mxu0 0.0
    %2207 = vmatpush1.msra.mxu0 0.0
    %2208 = vmatprep.subr.mxu0 0.0
    %2209 = vmatpush1.msra.mxu0 0.0
    %2210 = vmatprep.subr.mxu0 0.0
    %2211 = vmatpush1.msra.mxu0 0.0
    %2212 = vmatprep.subr.mxu0 0.0
    %2213 = vmatpush1.msra.mxu0 0.0
    %2214 = vmatprep.subr.mxu0 0.0
    %2215 = vmatpush1.msra.mxu0 0.0
    %2216 = vmatprep.subr.mxu0 0.0
    %2217 = vmatpush1.msra.mxu0 0.0
    %2218 = vmatprep.subr.mxu0 0.0
    %2219 = vmatpush1.msra.mxu0 0.0
    %2220 = vmatprep.mubr.f32.mxu0 0.0
    %2221 = vmatmul.mubr.f32.gmra.mrb[0].mxu0 %v2139
    %v2222 = vpop.f32.mrb[0].mxu0
    %v2223 = vadd.f32 0.0, %v2222
    %v2224 = vpop.f32.mrb[0].mxu0
    %2225 = vmatprep.mubr.f32.mxu0 0.0
    %2226 = vmatmul.mubr.f32.gmra.mrb[0].mxu0 %v2142
    %v2227 = vpop.f32.mrb[0].mxu0
    %v2228 = vadd.f32 0.0, %v2227
    %v2229 = vpop.f32.mrb[0].mxu0
    %2230 = vmatprep.mubr.f32.mxu0 0.0
    %2231 = vmatmul.mubr.f32.gmra.mrb[0].mxu0 %v2145
    %v2232 = vpop.f32.mrb[0].mxu0
    %v2233 = vadd.f32 0.0, %v2232
    %v2234 = vpop.f32.mrb[0].mxu0
    %2235 = vmatprep.mubr.f32.mxu0 0.0
    %2236 = vmatmul.mubr.f32.gmra.mrb[0].mxu0 %v2148
    %v2237 = vpop.f32.mrb[0].mxu0
    %v2238 = vadd.f32 0.0, %v2237
    %v2239 = vpop.f32.mrb[0].mxu0
    %2240 = vmatprep.mubr.f32.mxu0 0.0
    %2241 = vmatmul.mubr.f32.gmra.mrb[0].mxu0 %v2151
    %v2242 = vpop.f32.mrb[0].mxu0
    %v2243 = vadd.f32 0.0, %v2242
    %v2244 = vpop.f32.mrb[0].mxu0
    %2245 = vmatprep.mubr.f32.mxu0 0.0
    %2246 = vmatmul.mubr.f32.gmra.mrb[0].mxu0 %v2154
    %v2247 = vpop.f32.mrb[0].mxu0
    %v2248 = vadd.f32 0.0, %v2247
    %v2249 = vpop.f32.mrb[0].mxu0
    %2250 = vdwg.mxu0
    %v2252 = vsel %vm2137, %v2119, 0
    %v2255 = vsel %vm2137, %v2120, 0
    %v2258 = vsel %vm2137, %v2121, 0
    %v2261 = vsel %vm2137, %v2122, 0
    %v2264 = vsel %vm2137, %v2123, 0
    %v2267 = vsel %vm2137, %v2124, 0
    %2269 = vmatprep.subr.mxu0 0.0
    %2270 = vmatpush1.msra.mxu0 %v2125
    %2271 = vmatprep.subr.mxu0 0.0
    %2272 = vmatpush1.msra.mxu0 %v2126
    %2273 = vmatprep.subr.mxu0 0.0
    %2274 = vmatpush1.msra.mxu0 %v2127
    %2275 = vmatprep.subr.mxu0 0.0
    %2276 = vmatpush1.msra.mxu0 0.0
    %2277 = vmatprep.subr.mxu0 0.0
    %2278 = vmatpush1.msra.mxu0 0.0
    %2279 = vmatprep.subr.mxu0 0.0
    %2280 = vmatpush1.msra.mxu0 0.0
    %2281 = vmatprep.subr.mxu0 0.0
    %2282 = vmatpush1.msra.mxu0 0.0
    %2283 = vmatprep.subr.mxu0 0.0
    %2284 = vmatpush1.msra.mxu0 0.0
    %2285 = vmatprep.subr.mxu0 0.0
    %2286 = vmatpush1.msra.mxu0 0.0
    %2287 = vmatprep.subr.mxu0 0.0
    %2288 = vmatpush1.msra.mxu0 0.0
    %2289 = vmatprep.subr.mxu0 0.0
    %2290 = vmatpush1.msra.mxu0 0.0
    %2291 = vmatprep.subr.mxu0 0.0
    %2292 = vmatpush1.msra.mxu0 0.0
    %2293 = vmatprep.subr.mxu0 0.0
    %2294 = vmatpush1.msra.mxu0 0.0
    %2295 = vmatprep.subr.mxu0 0.0
    %2296 = vmatpush1.msra.mxu0 0.0
    %2297 = vmatprep.subr.mxu0 0.0
    %2298 = vmatpush1.msra.mxu0 0.0
    %2299 = vmatprep.subr.mxu0 0.0
    %2300 = vmatpush1.msra.mxu0 0.0
    %2301 = vmatprep.subr.mxu0 0.0
    %2302 = vmatpush1.msra.mxu0 0.0
    %2303 = vmatprep.subr.mxu0 0.0
    %2304 = vmatpush1.msra.mxu0 0.0
    %2305 = vmatprep.subr.mxu0 0.0
    %2306 = vmatpush1.msra.mxu0 0.0
    %2307 = vmatprep.subr.mxu0 0.0
    %2308 = vmatpush1.msra.mxu0 0.0
    %2309 = vmatprep.subr.mxu0 0.0
    %2310 = vmatpush1.msra.mxu0 0.0
    %2311 = vmatprep.subr.mxu0 0.0
    %2312 = vmatpush1.msra.mxu0 0.0
    %2313 = vmatprep.subr.mxu0 0.0
    %2314 = vmatpush1.msra.mxu0 0.0
    %2315 = vmatprep.subr.mxu0 0.0
    %2316 = vmatpush1.msra.mxu0 0.0
    %2317 = vmatprep.subr.mxu0 0.0
    %2318 = vmatpush1.msra.mxu0 0.0
    %2319 = vmatprep.subr.mxu0 0.0
    %2320 = vmatpush1.msra.mxu0 0.0
    %2321 = vmatprep.subr.mxu0 0.0
    %2322 = vmatpush1.msra.mxu0 0.0
    %2323 = vmatprep.subr.mxu0 0.0
    %2324 = vmatpush1.msra.mxu0 0.0
    %2325 = vmatprep.subr.mxu0 0.0
    %2326 = vmatpush1.msra.mxu0 0.0
    %2327 = vmatprep.subr.mxu0 0.0
    %2328 = vmatpush1.msra.mxu0 0.0
    %2329 = vmatprep.subr.mxu0 0.0
    %2330 = vmatpush1.msra.mxu0 0.0
    %2331 = vmatprep.subr.mxu0 0.0
    %2332 = vmatpush1.msra.mxu0 0.0
    %2333 = vmatprep.mubr.f32.mxu0 0.0
    %2334 = vmatmul.mubr.f32.gmra.mrb[0].mxu0 %v2252
    %v2335 = vpop.f32.mrb[0].mxu0
    %v2336 = vadd.f32 %v2223, %v2335
    %v2337 = vpop.f32.mrb[0].mxu0
    %2338 = vmatprep.mubr.f32.mxu0 0.0
    %2339 = vmatmul.mubr.f32.gmra.mrb[0].mxu0 %v2255
    %v2340 = vpop.f32.mrb[0].mxu0
    %v2341 = vadd.f32 %v2228, %v2340
    %v2342 = vpop.f32.mrb[0].mxu0
    %2343 = vmatprep.mubr.f32.mxu0 0.0
    %2344 = vmatmul.mubr.f32.gmra.mrb[0].mxu0 %v2258
    %v2345 = vpop.f32.mrb[0].mxu0
    %v2346 = vadd.f32 %v2233, %v2345
    %v2347 = vpop.f32.mrb[0].mxu0
    %2348 = vmatprep.mubr.f32.mxu0 0.0
    %2349 = vmatmul.mubr.f32.gmra.mrb[0].mxu0 %v2261
    %v2350 = vpop.f32.mrb[0].mxu0
    %v2351 = vadd.f32 %v2238, %v2350
    %v2352 = vpop.f32.mrb[0].mxu0
    %2353 = vmatprep.mubr.f32.mxu0 0.0
    %2354 = vmatmul.mubr.f32.gmra.mrb[0].mxu0 %v2264
    %v2355 = vpop.f32.mrb[0].mxu0
    %v2356 = vadd.f32 %v2243, %v2355
    %v2357 = vpop.f32.mrb[0].mxu0
    %2358 = vmatprep.mubr.f32.mxu0 0.0
    %2359 = vmatmul.mubr.f32.gmra.mrb[0].mxu0 %v2267
    %v2360 = vpop.f32.mrb[0].mxu0
    %v2361 = vadd.f32 %v2248, %v2360
    %v2362 = vpop.f32.mrb[0].mxu0
    %2363 = vdwg.mxu0
    %v2364 = vld [vmem:[#allocation2 + $0x3] sm:$0xff]
    %v2365 = vld [vmem:[#allocation2 + $0xb] sm:$0xff]
    %v2366 = vld [vmem:[#allocation2 + $0x13] sm:$0xff]
    %v2367 = vld [vmem:[#allocation2 + $0x1b] sm:$0xff]
    %v2368 = vld [vmem:[#allocation2 + $0x23] sm:$0xff]
    %v2369 = vld [vmem:[#allocation2 + $0x2b] sm:$0xff]
    %v2370 = vld [vmem:[%s9 + $0x30] sm:$0xff]
    %v2371 = vld [vmem:[%s9 + $0x38] sm:$0xff]
    %v2372 = vld [vmem:[%s9 + $0x40] sm:$0xff]
    %v2374 = vsel %vm2137, %v2364, 0
    %v2377 = vsel %vm2137, %v2365, 0
    %v2380 = vsel %vm2137, %v2366, 0
    %v2383 = vsel %vm2137, %v2367, 0
    %v2386 = vsel %vm2137, %v2368, 0
    %v2389 = vsel %vm2137, %v2369, 0
    %2391 = vmatprep.subr.mxu0 0.0
    %2392 = vmatpush1.msra.mxu0 %v2370
    %2393 = vmatprep.subr.mxu0 0.0
    %2394 = vmatpush1.msra.mxu0 %v2371
    %2395 = vmatprep.subr.mxu0 0.0
    %2396 = vmatpush1.msra.mxu0 %v2372
    %2397 = vmatprep.subr.mxu0 0.0
    %2398 = vmatpush1.msra.mxu0 0.0
    %2399 = vmatprep.subr.mxu0 0.0
    %2400 = vmatpush1.msra.mxu0 0.0
    %2401 = vmatprep.subr.mxu0 0.0
    %2402 = vmatpush1.msra.mxu0 0.0
    %2403 = vmatprep.subr.mxu0 0.0
    %2404 = vmatpush1.msra.mxu0 0.0
    %2405 = vmatprep.subr.mxu0 0.0
    %2406 = vmatpush1.msra.mxu0 0.0
    %2407 = vmatprep.subr.mxu0 0.0
    %2408 = vmatpush1.msra.mxu0 0.0
    %2409 = vmatprep.subr.mxu0 0.0
    %2410 = vmatpush1.msra.mxu0 0.0
    %2411 = vmatprep.subr.mxu0 0.0
    %2412 = vmatpush1.msra.mxu0 0.0
    %2413 = vmatprep.subr.mxu0 0.0
    %2414 = vmatpush1.msra.mxu0 0.0
    %2415 = vmatprep.subr.mxu0 0.0
    %2416 = vmatpush1.msra.mxu0 0.0
    %2417 = vmatprep.subr.mxu0 0.0
    %2418 = vmatpush1.msra.mxu0 0.0
    %2419 = vmatprep.subr.mxu0 0.0
    %2420 = vmatpush1.msra.mxu0 0.0
    %2421 = vmatprep.subr.mxu0 0.0
    %2422 = vmatpush1.msra.mxu0 0.0
    %2423 = vmatprep.subr.mxu0 0.0
    %2424 = vmatpush1.msra.mxu0 0.0
    %2425 = vmatprep.subr.mxu0 0.0
    %2426 = vmatpush1.msra.mxu0 0.0
    %2427 = vmatprep.subr.mxu0 0.0
    %2428 = vmatpush1.msra.mxu0 0.0
    %2429 = vmatprep.subr.mxu0 0.0
    %2430 = vmatpush1.msra.mxu0 0.0
    %2431 = vmatprep.subr.mxu0 0.0
    %2432 = vmatpush1.msra.mxu0 0.0
    %2433 = vmatprep.subr.mxu0 0.0
    %2434 = vmatpush1.msra.mxu0 0.0
    %2435 = vmatprep.subr.mxu0 0.0
    %2436 = vmatpush1.msra.mxu0 0.0
    %2437 = vmatprep.subr.mxu0 0.0
    %2438 = vmatpush1.msra.mxu0 0.0
    %2439 = vmatprep.subr.mxu0 0.0
    %2440 = vmatpush1.msra.mxu0 0.0
    %2441 = vmatprep.subr.mxu0 0.0
    %2442 = vmatpush1.msra.mxu0 0.0
    %2443 = vmatprep.subr.mxu0 0.0
    %2444 = vmatpush1.msra.mxu0 0.0
    %2445 = vmatprep.subr.mxu0 0.0
    %2446 = vmatpush1.msra.mxu0 0.0
    %2447 = vmatprep.subr.mxu0 0.0
    %2448 = vmatpush1.msra.mxu0 0.0
    %2449 = vmatprep.subr.mxu0 0.0
    %2450 = vmatpush1.msra.mxu0 0.0
    %2451 = vmatprep.subr.mxu0 0.0
    %2452 = vmatpush1.msra.mxu0 0.0
    %2453 = vmatprep.subr.mxu0 0.0
    %2454 = vmatpush1.msra.mxu0 0.0
    %2455 = vmatprep.mubr.f32.mxu0 0.0
    %2456 = vmatmul.mubr.f32.gmra.mrb[0].mxu0 %v2374
    %v2457 = vpop.f32.mrb[0].mxu0
    %v2458 = vadd.f32 0.0, %v2457
    %v2459 = vpop.f32.mrb[0].mxu0
    %2460 = vmatprep.mubr.f32.mxu0 0.0
    %2461 = vmatmul.mubr.f32.gmra.mrb[0].mxu0 %v2377
    %v2462 = vpop.f32.mrb[0].mxu0
    %v2463 = vadd.f32 0.0, %v2462
    %v2464 = vpop.f32.mrb[0].mxu0
    %2465 = vmatprep.mubr.f32.mxu0 0.0
    %2466 = vmatmul.mubr.f32.gmra.mrb[0].mxu0 %v2380
    %v2467 = vpop.f32.mrb[0].mxu0
    %v2468 = vadd.f32 0.0, %v2467
    %v2469 = vpop.f32.mrb[0].mxu0
    %2470 = vmatprep.mubr.f32.mxu0 0.0
    %2471 = vmatmul.mubr.f32.gmra.mrb[0].mxu0 %v2383
    %v2472 = vpop.f32.mrb[0].mxu0
    %v2473 = vadd.f32 0.0, %v2472
    %v2474 = vpop.f32.mrb[0].mxu0
    %2475 = vmatprep.mubr.f32.mxu0 0.0
    %2476 = vmatmul.mubr.f32.gmra.mrb[0].mxu0 %v2386
    %v2477 = vpop.f32.mrb[0].mxu0
    %v2478 = vadd.f32 0.0, %v2477
    %v2479 = vpop.f32.mrb[0].mxu0
    %2480 = vmatprep.mubr.f32.mxu0 0.0
    %2481 = vmatmul.mubr.f32.gmra.mrb[0].mxu0 %v2389
    %v2482 = vpop.f32.mrb[0].mxu0
    %v2483 = vadd.f32 0.0, %v2482
    %v2484 = vpop.f32.mrb[0].mxu0
    %2485 = vdwg.mxu0
    %v2486 = vadd.f32 %v2336, %v2458
    %v2487 = vadd.f32 %v2341, %v2463
    %v2488 = vadd.f32 %v2346, %v2468
    %v2489 = vadd.f32 %v2351, %v2473
    %v2490 = vadd.f32 %v2356, %v2478
    %v2491 = vadd.f32 %v2361, %v2483
    %v2492 = vld [vmem:[#allocation2 + $0x4] sm:$0xff]
    %v2493 = vld [vmem:[#allocation2 + $0xc] sm:$0xff]
    %v2494 = vld [vmem:[#allocation2 + $0x14] sm:$0xff]
    %v2495 = vld [vmem:[#allocation2 + $0x1c] sm:$0xff]
    %v2496 = vld [vmem:[#allocation2 + $0x24] sm:$0xff]
    %v2497 = vld [vmem:[#allocation2 + $0x2c] sm:$0xff]
    %v2498 = vld [vmem:[%s9 + $0x48] sm:$0xff]
    %v2499 = vld [vmem:[%s9 + $0x50] sm:$0xff]
    %v2500 = vld [vmem:[%s9 + $0x58] sm:$0xff]
    %v2502 = vsel %vm2137, %v2492, 0
    %v2505 = vsel %vm2137, %v2493, 0
    %v2508 = vsel %vm2137, %v2494, 0
    %v2511 = vsel %vm2137, %v2495, 0
    %v2514 = vsel %vm2137, %v2496, 0
    %v2517 = vsel %vm2137, %v2497, 0
    %2519 = vmatprep.subr.mxu0 0.0
    %2520 = vmatpush1.msra.mxu0 %v2498
    %2521 = vmatprep.subr.mxu0 0.0
    %2522 = vmatpush1.msra.mxu0 %v2499
    %2523 = vmatprep.subr.mxu0 0.0
    %2524 = vmatpush1.msra.mxu0 %v2500
    %2525 = vmatprep.subr.mxu0 0.0
    %2526 = vmatpush1.msra.mxu0 0.0
    %2527 = vmatprep.subr.mxu0 0.0
    %2528 = vmatpush1.msra.mxu0 0.0
    %2529 = vmatprep.subr.mxu0 0.0
    %2530 = vmatpush1.msra.mxu0 0.0
    %2531 = vmatprep.subr.mxu0 0.0
    %2532 = vmatpush1.msra.mxu0 0.0
    %2533 = vmatprep.subr.mxu0 0.0
    %2534 = vmatpush1.msra.mxu0 0.0
    %2535 = vmatprep.subr.mxu0 0.0
    %2536 = vmatpush1.msra.mxu0 0.0
    %2537 = vmatprep.subr.mxu0 0.0
    %2538 = vmatpush1.msra.mxu0 0.0
    %2539 = vmatprep.subr.mxu0 0.0
    %2540 = vmatpush1.msra.mxu0 0.0
    %2541 = vmatprep.subr.mxu0 0.0
    %2542 = vmatpush1.msra.mxu0 0.0
    %2543 = vmatprep.subr.mxu0 0.0
    %2544 = vmatpush1.msra.mxu0 0.0
    %2545 = vmatprep.subr.mxu0 0.0
    %2546 = vmatpush1.msra.mxu0 0.0
    %2547 = vmatprep.subr.mxu0 0.0
    %2548 = vmatpush1.msra.mxu0 0.0
    %2549 = vmatprep.subr.mxu0 0.0
    %2550 = vmatpush1.msra.mxu0 0.0
    %2551 = vmatprep.subr.mxu0 0.0
    %2552 = vmatpush1.msra.mxu0 0.0
    %2553 = vmatprep.subr.mxu0 0.0
    %2554 = vmatpush1.msra.mxu0 0.0
    %2555 = vmatprep.subr.mxu0 0.0
    %2556 = vmatpush1.msra.mxu0 0.0
    %2557 = vmatprep.subr.mxu0 0.0
    %2558 = vmatpush1.msra.mxu0 0.0
    %2559 = vmatprep.subr.mxu0 0.0
    %2560 = vmatpush1.msra.mxu0 0.0
    %2561 = vmatprep.subr.mxu0 0.0
    %2562 = vmatpush1.msra.mxu0 0.0
    %2563 = vmatprep.subr.mxu0 0.0
    %2564 = vmatpush1.msra.mxu0 0.0
    %2565 = vmatprep.subr.mxu0 0.0
    %2566 = vmatpush1.msra.mxu0 0.0
    %2567 = vmatprep.subr.mxu0 0.0
    %2568 = vmatpush1.msra.mxu0 0.0
    %2569 = vmatprep.subr.mxu0 0.0
    %2570 = vmatpush1.msra.mxu0 0.0
    %2571 = vmatprep.subr.mxu0 0.0
    %2572 = vmatpush1.msra.mxu0 0.0
    %2573 = vmatprep.subr.mxu0 0.0
    %2574 = vmatpush1.msra.mxu0 0.0
    %2575 = vmatprep.subr.mxu0 0.0
    %2576 = vmatpush1.msra.mxu0 0.0
    %2577 = vmatprep.subr.mxu0 0.0
    %2578 = vmatpush1.msra.mxu0 0.0
    %2579 = vmatprep.subr.mxu0 0.0
    %2580 = vmatpush1.msra.mxu0 0.0
    %2581 = vmatprep.subr.mxu0 0.0
    %2582 = vmatpush1.msra.mxu0 0.0
    %2583 = vmatprep.mubr.f32.mxu0 0.0
    %2584 = vmatmul.mubr.f32.gmra.mrb[0].mxu0 %v2502
    %v2585 = vpop.f32.mrb[0].mxu0
    %v2586 = vadd.f32 0.0, %v2585
    %v2587 = vpop.f32.mrb[0].mxu0
    %2588 = vmatprep.mubr.f32.mxu0 0.0
    %2589 = vmatmul.mubr.f32.gmra.mrb[0].mxu0 %v2505
    %v2590 = vpop.f32.mrb[0].mxu0
    %v2591 = vadd.f32 0.0, %v2590
    %v2592 = vpop.f32.mrb[0].mxu0
    %2593 = vmatprep.mubr.f32.mxu0 0.0
    %2594 = vmatmul.mubr.f32.gmra.mrb[0].mxu0 %v2508
    %v2595 = vpop.f32.mrb[0].mxu0
    %v2596 = vadd.f32 0.0, %v2595
    %v2597 = vpop.f32.mrb[0].mxu0
    %2598 = vmatprep.mubr.f32.mxu0 0.0
    %2599 = vmatmul.mubr.f32.gmra.mrb[0].mxu0 %v2511
    %v2600 = vpop.f32.mrb[0].mxu0
    %v2601 = vadd.f32 0.0, %v2600
    %v2602 = vpop.f32.mrb[0].mxu0
    %2603 = vmatprep.mubr.f32.mxu0 0.0
    %2604 = vmatmul.mubr.f32.gmra.mrb[0].mxu0 %v2514
    %v2605 = vpop.f32.mrb[0].mxu0
    %v2606 = vadd.f32 0.0, %v2605
    %v2607 = vpop.f32.mrb[0].mxu0
    %2608 = vmatprep.mubr.f32.mxu0 0.0
    %2609 = vmatmul.mubr.f32.gmra.mrb[0].mxu0 %v2517
    %v2610 = vpop.f32.mrb[0].mxu0
    %v2611 = vadd.f32 0.0, %v2610
    %v2612 = vpop.f32.mrb[0].mxu0
    %2613 = vdwg.mxu0
    %v2614 = vadd.f32 %v2486, %v2586
    %v2615 = vadd.f32 %v2487, %v2591
    %v2616 = vadd.f32 %v2488, %v2596
    %v2617 = vadd.f32 %v2489, %v2601
    %v2618 = vadd.f32 %v2490, %v2606
    %v2619 = vadd.f32 %v2491, %v2611
    %v2620 = vld [vmem:[#allocation2 + $0x5] sm:$0xff]
    %v2621 = vld [vmem:[#allocation2 + $0xd] sm:$0xff]
    %v2622 = vld [vmem:[#allocation2 + $0x15] sm:$0xff]
    %v2623 = vld [vmem:[#allocation2 + $0x1d] sm:$0xff]
    %v2624 = vld [vmem:[#allocation2 + $0x25] sm:$0xff]
    %v2625 = vld [vmem:[#allocation2 + $0x2d] sm:$0xff]
    %v2626 = vld [vmem:[%s9 + $0x60] sm:$0xff]
    %v2627 = vld [vmem:[%s9 + $0x68] sm:$0xff]
    %v2628 = vld [vmem:[%s9 + $0x70] sm:$0xff]
    %v2630 = vsel %vm2137, %v2620, 0
    %v2633 = vsel %vm2137, %v2621, 0
    %v2636 = vsel %vm2137, %v2622, 0
    %v2639 = vsel %vm2137, %v2623, 0
    %v2642 = vsel %vm2137, %v2624, 0
    %v2645 = vsel %vm2137, %v2625, 0
    %2647 = vmatprep.subr.mxu0 0.0
    %2648 = vmatpush1.msra.mxu0 %v2626
    %2649 = vmatprep.subr.mxu0 0.0
    %2650 = vmatpush1.msra.mxu0 %v2627
    %2651 = vmatprep.subr.mxu0 0.0
    %2652 = vmatpush1.msra.mxu0 %v2628
    %2653 = vmatprep.subr.mxu0 0.0
    %2654 = vmatpush1.msra.mxu0 0.0
    %2655 = vmatprep.subr.mxu0 0.0
    %2656 = vmatpush1.msra.mxu0 0.0
    %2657 = vmatprep.subr.mxu0 0.0
    %2658 = vmatpush1.msra.mxu0 0.0
    %2659 = vmatprep.subr.mxu0 0.0
    %2660 = vmatpush1.msra.mxu0 0.0
    %2661 = vmatprep.subr.mxu0 0.0
    %2662 = vmatpush1.msra.mxu0 0.0
    %2663 = vmatprep.subr.mxu0 0.0
    %2664 = vmatpush1.msra.mxu0 0.0
    %2665 = vmatprep.subr.mxu0 0.0
    %2666 = vmatpush1.msra.mxu0 0.0
    %2667 = vmatprep.subr.mxu0 0.0
    %2668 = vmatpush1.msra.mxu0 0.0
    %2669 = vmatprep.subr.mxu0 0.0
    %2670 = vmatpush1.msra.mxu0 0.0
    %2671 = vmatprep.subr.mxu0 0.0
    %2672 = vmatpush1.msra.mxu0 0.0
    %2673 = vmatprep.subr.mxu0 0.0
    %2674 = vmatpush1.msra.mxu0 0.0
    %2675 = vmatprep.subr.mxu0 0.0
    %2676 = vmatpush1.msra.mxu0 0.0
    %2677 = vmatprep.subr.mxu0 0.0
    %2678 = vmatpush1.msra.mxu0 0.0
    %2679 = vmatprep.subr.mxu0 0.0
    %2680 = vmatpush1.msra.mxu0 0.0
    %2681 = vmatprep.subr.mxu0 0.0
    %2682 = vmatpush1.msra.mxu0 0.0
    %2683 = vmatprep.subr.mxu0 0.0
    %2684 = vmatpush1.msra.mxu0 0.0
    %2685 = vmatprep.subr.mxu0 0.0
    %2686 = vmatpush1.msra.mxu0 0.0
    %2687 = vmatprep.subr.mxu0 0.0
    %2688 = vmatpush1.msra.mxu0 0.0
    %2689 = vmatprep.subr.mxu0 0.0
    %2690 = vmatpush1.msra.mxu0 0.0
    %2691 = vmatprep.subr.mxu0 0.0
    %2692 = vmatpush1.msra.mxu0 0.0
    %2693 = vmatprep.subr.mxu0 0.0
    %2694 = vmatpush1.msra.mxu0 0.0
    %2695 = vmatprep.subr.mxu0 0.0
    %2696 = vmatpush1.msra.mxu0 0.0
    %2697 = vmatprep.subr.mxu0 0.0
    %2698 = vmatpush1.msra.mxu0 0.0
    %2699 = vmatprep.subr.mxu0 0.0
    %2700 = vmatpush1.msra.mxu0 0.0
    %2701 = vmatprep.subr.mxu0 0.0
    %2702 = vmatpush1.msra.mxu0 0.0
    %2703 = vmatprep.subr.mxu0 0.0
    %2704 = vmatpush1.msra.mxu0 0.0
    %2705 = vmatprep.subr.mxu0 0.0
    %2706 = vmatpush1.msra.mxu0 0.0
    %2707 = vmatprep.subr.mxu0 0.0
    %2708 = vmatpush1.msra.mxu0 0.0
    %2709 = vmatprep.subr.mxu0 0.0
    %2710 = vmatpush1.msra.mxu0 0.0
    %2711 = vmatprep.mubr.f32.mxu0 0.0
    %2712 = vmatmul.mubr.f32.gmra.mrb[0].mxu0 %v2630
    %v2713 = vpop.f32.mrb[0].mxu0
    %v2714 = vadd.f32 0.0, %v2713
    %v2715 = vpop.f32.mrb[0].mxu0
    %2716 = vmatprep.mubr.f32.mxu0 0.0
    %2717 = vmatmul.mubr.f32.gmra.mrb[0].mxu0 %v2633
    %v2718 = vpop.f32.mrb[0].mxu0
    %v2719 = vadd.f32 0.0, %v2718
    %v2720 = vpop.f32.mrb[0].mxu0
    %2721 = vmatprep.mubr.f32.mxu0 0.0
    %2722 = vmatmul.mubr.f32.gmra.mrb[0].mxu0 %v2636
    %v2723 = vpop.f32.mrb[0].mxu0
    %v2724 = vadd.f32 0.0, %v2723
    %v2725 = vpop.f32.mrb[0].mxu0
    %2726 = vmatprep.mubr.f32.mxu0 0.0
    %2727 = vmatmul.mubr.f32.gmra.mrb[0].mxu0 %v2639
    %v2728 = vpop.f32.mrb[0].mxu0
    %v2729 = vadd.f32 0.0, %v2728
    %v2730 = vpop.f32.mrb[0].mxu0
    %2731 = vmatprep.mubr.f32.mxu0 0.0
    %2732 = vmatmul.mubr.f32.gmra.mrb[0].mxu0 %v2642
    %v2733 = vpop.f32.mrb[0].mxu0
    %v2734 = vadd.f32 0.0, %v2733
    %v2735 = vpop.f32.mrb[0].mxu0
    %2736 = vmatprep.mubr.f32.mxu0 0.0
    %2737 = vmatmul.mubr.f32.gmra.mrb[0].mxu0 %v2645
    %v2738 = vpop.f32.mrb[0].mxu0
    %v2739 = vadd.f32 0.0, %v2738
    %v2740 = vpop.f32.mrb[0].mxu0
    %2741 = vdwg.mxu0
    %v2742 = vadd.f32 %v2614, %v2714
    %v2743 = vadd.f32 %v2615, %v2719
    %v2744 = vadd.f32 %v2616, %v2724
    %v2745 = vadd.f32 %v2617, %v2729
    %v2746 = vadd.f32 %v2618, %v2734
    %v2747 = vadd.f32 %v2619, %v2739
    %v2748 = vld [vmem:[#allocation2 + $0x6] sm:$0xff]
    %v2749 = vld [vmem:[#allocation2 + $0xe] sm:$0xff]
    %v2750 = vld [vmem:[#allocation2 + $0x16] sm:$0xff]
    %v2751 = vld [vmem:[#allocation2 + $0x1e] sm:$0xff]
    %v2752 = vld [vmem:[#allocation2 + $0x26] sm:$0xff]
    %v2753 = vld [vmem:[#allocation2 + $0x2e] sm:$0xff]
    %v2754 = vld [vmem:[%s9 + $0x78] sm:$0xff]
    %v2755 = vld [vmem:[%s9 + $0x80] sm:$0xff]
    %v2756 = vld [vmem:[%s9 + $0x88] sm:$0xff]
    %v2758 = vsel %vm2137, %v2748, 0
    %v2761 = vsel %vm2137, %v2749, 0
    %v2764 = vsel %vm2137, %v2750, 0
    %v2767 = vsel %vm2137, %v2751, 0
    %v2770 = vsel %vm2137, %v2752, 0
    %v2773 = vsel %vm2137, %v2753, 0
    %2775 = vmatprep.subr.mxu0 0.0
    %2776 = vmatpush1.msra.mxu0 %v2754
    %2777 = vmatprep.subr.mxu0 0.0
    %2778 = vmatpush1.msra.mxu0 %v2755
    %2779 = vmatprep.subr.mxu0 0.0
    %2780 = vmatpush1.msra.mxu0 %v2756
    %2781 = vmatprep.subr.mxu0 0.0
    %2782 = vmatpush1.msra.mxu0 0.0
    %2783 = vmatprep.subr.mxu0 0.0
    %2784 = vmatpush1.msra.mxu0 0.0
    %2785 = vmatprep.subr.mxu0 0.0
    %2786 = vmatpush1.msra.mxu0 0.0
    %2787 = vmatprep.subr.mxu0 0.0
    %2788 = vmatpush1.msra.mxu0 0.0
    %2789 = vmatprep.subr.mxu0 0.0
    %2790 = vmatpush1.msra.mxu0 0.0
    %2791 = vmatprep.subr.mxu0 0.0
    %2792 = vmatpush1.msra.mxu0 0.0
    %2793 = vmatprep.subr.mxu0 0.0
    %2794 = vmatpush1.msra.mxu0 0.0
    %2795 = vmatprep.subr.mxu0 0.0
    %2796 = vmatpush1.msra.mxu0 0.0
    %2797 = vmatprep.subr.mxu0 0.0
    %2798 = vmatpush1.msra.mxu0 0.0
    %2799 = vmatprep.subr.mxu0 0.0
    %2800 = vmatpush1.msra.mxu0 0.0
    %2801 = vmatprep.subr.mxu0 0.0
    %2802 = vmatpush1.msra.mxu0 0.0
    %2803 = vmatprep.subr.mxu0 0.0
    %2804 = vmatpush1.msra.mxu0 0.0
    %2805 = vmatprep.subr.mxu0 0.0
    %2806 = vmatpush1.msra.mxu0 0.0
    %2807 = vmatprep.subr.mxu0 0.0
    %2808 = vmatpush1.msra.mxu0 0.0
    %2809 = vmatprep.subr.mxu0 0.0
    %2810 = vmatpush1.msra.mxu0 0.0
    %2811 = vmatprep.subr.mxu0 0.0
    %2812 = vmatpush1.msra.mxu0 0.0
    %2813 = vmatprep.subr.mxu0 0.0
    %2814 = vmatpush1.msra.mxu0 0.0
    %2815 = vmatprep.subr.mxu0 0.0
    %2816 = vmatpush1.msra.mxu0 0.0
    %2817 = vmatprep.subr.mxu0 0.0
    %2818 = vmatpush1.msra.mxu0 0.0
    %2819 = vmatprep.subr.mxu0 0.0
    %2820 = vmatpush1.msra.mxu0 0.0
    %2821 = vmatprep.subr.mxu0 0.0
    %2822 = vmatpush1.msra.mxu0 0.0
    %2823 = vmatprep.subr.mxu0 0.0
    %2824 = vmatpush1.msra.mxu0 0.0
    %2825 = vmatprep.subr.mxu0 0.0
    %2826 = vmatpush1.msra.mxu0 0.0
    %2827 = vmatprep.subr.mxu0 0.0
    %2828 = vmatpush1.msra.mxu0 0.0
    %2829 = vmatprep.subr.mxu0 0.0
    %2830 = vmatpush1.msra.mxu0 0.0
    %2831 = vmatprep.subr.mxu0 0.0
    %2832 = vmatpush1.msra.mxu0 0.0
    %2833 = vmatprep.subr.mxu0 0.0
    %2834 = vmatpush1.msra.mxu0 0.0
    %2835 = vmatprep.subr.mxu0 0.0
    %2836 = vmatpush1.msra.mxu0 0.0
    %2837 = vmatprep.subr.mxu0 0.0
    %2838 = vmatpush1.msra.mxu0 0.0
    %2839 = vmatprep.mubr.f32.mxu0 0.0
    %2840 = vmatmul.mubr.f32.gmra.mrb[0].mxu0 %v2758
    %v2841 = vpop.f32.mrb[0].mxu0
    %v2842 = vadd.f32 0.0, %v2841
    %v2843 = vpop.f32.mrb[0].mxu0
    %2844 = vmatprep.mubr.f32.mxu0 0.0
    %2845 = vmatmul.mubr.f32.gmra.mrb[0].mxu0 %v2761
    %v2846 = vpop.f32.mrb[0].mxu0
    %v2847 = vadd.f32 0.0, %v2846
    %v2848 = vpop.f32.mrb[0].mxu0
    %2849 = vmatprep.mubr.f32.mxu0 0.0
    %2850 = vmatmul.mubr.f32.gmra.mrb[0].mxu0 %v2764
    %v2851 = vpop.f32.mrb[0].mxu0
    %v2852 = vadd.f32 0.0, %v2851
    %v2853 = vpop.f32.mrb[0].mxu0
    %2854 = vmatprep.mubr.f32.mxu0 0.0
    %2855 = vmatmul.mubr.f32.gmra.mrb[0].mxu0 %v2767
    %v2856 = vpop.f32.mrb[0].mxu0
    %v2857 = vadd.f32 0.0, %v2856
    %v2858 = vpop.f32.mrb[0].mxu0
    %2859 = vmatprep.mubr.f32.mxu0 0.0
    %2860 = vmatmul.mubr.f32.gmra.mrb[0].mxu0 %v2770
    %v2861 = vpop.f32.mrb[0].mxu0
    %v2862 = vadd.f32 0.0, %v2861
    %v2863 = vpop.f32.mrb[0].mxu0
    %2864 = vmatprep.mubr.f32.mxu0 0.0
    %2865 = vmatmul.mubr.f32.gmra.mrb[0].mxu0 %v2773
    %v2866 = vpop.f32.mrb[0].mxu0
    %v2867 = vadd.f32 0.0, %v2866
    %v2868 = vpop.f32.mrb[0].mxu0
    %2869 = vdwg.mxu0
    %v2870 = vadd.f32 %v2742, %v2842
    %v2871 = vadd.f32 %v2743, %v2847
    %v2872 = vadd.f32 %v2744, %v2852
    %v2873 = vadd.f32 %v2745, %v2857
    %v2874 = vadd.f32 %v2746, %v2862
    %v2875 = vadd.f32 %v2747, %v2867
    %v2876 = vld [vmem:[#allocation2 + $0x8] sm:$0xff]
    %v2877 = vld [vmem:[#allocation2 + $0x10] sm:$0xff]
    %v2878 = vld [vmem:[#allocation2 + $0x18] sm:$0xff]
    %v2879 = vld [vmem:[#allocation2 + $0x20] sm:$0xff]
    %v2880 = vld [vmem:[#allocation2 + $0x28] sm:$0xff]
    %v2881 = vld [vmem:[#allocation2 + $0x30] sm:$0xff]
    %v2882 = vld [vmem:[%s9 + $0x90] sm:$0xff]
    %v2883 = vld [vmem:[%s9 + $0x98] sm:$0xff]
    %v2884 = vld [vmem:[%s9 + $0xa0] sm:$0xff]
    %v2886 = vsel %vm2137, %v2876, 0
    %v2889 = vsel %vm2137, %v2877, 0
    %v2892 = vsel %vm2137, %v2878, 0
    %v2895 = vsel %vm2137, %v2879, 0
    %v2898 = vsel %vm2137, %v2880, 0
    %v2901 = vsel %vm2137, %v2881, 0
    %2903 = vmatprep.subr.mxu0 0.0
    %2904 = vmatpush1.msra.mxu0 %v2882
    %2905 = vmatprep.subr.mxu0 0.0
    %2906 = vmatpush1.msra.mxu0 %v2883
    %2907 = vmatprep.subr.mxu0 0.0
    %2908 = vmatpush1.msra.mxu0 %v2884
    %2909 = vmatprep.subr.mxu0 0.0
    %2910 = vmatpush1.msra.mxu0 0.0
    %2911 = vmatprep.subr.mxu0 0.0
    %2912 = vmatpush1.msra.mxu0 0.0
    %2913 = vmatprep.subr.mxu0 0.0
    %2914 = vmatpush1.msra.mxu0 0.0
    %2915 = vmatprep.subr.mxu0 0.0
    %2916 = vmatpush1.msra.mxu0 0.0
    %2917 = vmatprep.subr.mxu0 0.0
    %2918 = vmatpush1.msra.mxu0 0.0
    %2919 = vmatprep.subr.mxu0 0.0
    %2920 = vmatpush1.msra.mxu0 0.0
    %2921 = vmatprep.subr.mxu0 0.0
    %2922 = vmatpush1.msra.mxu0 0.0
    %2923 = vmatprep.subr.mxu0 0.0
    %2924 = vmatpush1.msra.mxu0 0.0
    %2925 = vmatprep.subr.mxu0 0.0
    %2926 = vmatpush1.msra.mxu0 0.0
    %2927 = vmatprep.subr.mxu0 0.0
    %2928 = vmatpush1.msra.mxu0 0.0
    %2929 = vmatprep.subr.mxu0 0.0
    %2930 = vmatpush1.msra.mxu0 0.0
    %2931 = vmatprep.subr.mxu0 0.0
    %2932 = vmatpush1.msra.mxu0 0.0
    %2933 = vmatprep.subr.mxu0 0.0
    %2934 = vmatpush1.msra.mxu0 0.0
    %2935 = vmatprep.subr.mxu0 0.0
    %2936 = vmatpush1.msra.mxu0 0.0
    %2937 = vmatprep.subr.mxu0 0.0
    %2938 = vmatpush1.msra.mxu0 0.0
    %2939 = vmatprep.subr.mxu0 0.0
    %2940 = vmatpush1.msra.mxu0 0.0
    %2941 = vmatprep.subr.mxu0 0.0
    %2942 = vmatpush1.msra.mxu0 0.0
    %2943 = vmatprep.subr.mxu0 0.0
    %2944 = vmatpush1.msra.mxu0 0.0
    %2945 = vmatprep.subr.mxu0 0.0
    %2946 = vmatpush1.msra.mxu0 0.0
    %2947 = vmatprep.subr.mxu0 0.0
    %2948 = vmatpush1.msra.mxu0 0.0
    %2949 = vmatprep.subr.mxu0 0.0
    %2950 = vmatpush1.msra.mxu0 0.0
    %2951 = vmatprep.subr.mxu0 0.0
    %2952 = vmatpush1.msra.mxu0 0.0
    %2953 = vmatprep.subr.mxu0 0.0
    %2954 = vmatpush1.msra.mxu0 0.0
    %2955 = vmatprep.subr.mxu0 0.0
    %2956 = vmatpush1.msra.mxu0 0.0
    %2957 = vmatprep.subr.mxu0 0.0
    %2958 = vmatpush1.msra.mxu0 0.0
    %2959 = vmatprep.subr.mxu0 0.0
    %2960 = vmatpush1.msra.mxu0 0.0
    %2961 = vmatprep.subr.mxu0 0.0
    %2962 = vmatpush1.msra.mxu0 0.0
    %2963 = vmatprep.subr.mxu0 0.0
    %2964 = vmatpush1.msra.mxu0 0.0
    %2965 = vmatprep.subr.mxu0 0.0
    %2966 = vmatpush1.msra.mxu0 0.0
    %2967 = vmatprep.mubr.f32.mxu0 0.0
    %2968 = vmatmul.mubr.f32.gmra.mrb[0].mxu0 %v2886
    %v2969 = vpop.f32.mrb[0].mxu0
    %v2970 = vadd.f32 0.0, %v2969
    %v2971 = vpop.f32.mrb[0].mxu0
    %2972 = vmatprep.mubr.f32.mxu0 0.0
    %2973 = vmatmul.mubr.f32.gmra.mrb[0].mxu0 %v2889
    %v2974 = vpop.f32.mrb[0].mxu0
    %v2975 = vadd.f32 0.0, %v2974
    %v2976 = vpop.f32.mrb[0].mxu0
    %2977 = vmatprep.mubr.f32.mxu0 0.0
    %2978 = vmatmul.mubr.f32.gmra.mrb[0].mxu0 %v2892
    %v2979 = vpop.f32.mrb[0].mxu0
    %v2980 = vadd.f32 0.0, %v2979
    %v2981 = vpop.f32.mrb[0].mxu0
    %2982 = vmatprep.mubr.f32.mxu0 0.0
    %2983 = vmatmul.mubr.f32.gmra.mrb[0].mxu0 %v2895
    %v2984 = vpop.f32.mrb[0].mxu0
    %v2985 = vadd.f32 0.0, %v2984
    %v2986 = vpop.f32.mrb[0].mxu0
    %2987 = vmatprep.mubr.f32.mxu0 0.0
    %2988 = vmatmul.mubr.f32.gmra.mrb[0].mxu0 %v2898
    %v2989 = vpop.f32.mrb[0].mxu0
    %v2990 = vadd.f32 0.0, %v2989
    %v2991 = vpop.f32.mrb[0].mxu0
    %2992 = vmatprep.mubr.f32.mxu0 0.0
    %2993 = vmatmul.mubr.f32.gmra.mrb[0].mxu0 %v2901
    %v2994 = vpop.f32.mrb[0].mxu0
    %v2995 = vadd.f32 0.0, %v2994
    %v2996 = vpop.f32.mrb[0].mxu0
    %2997 = vdwg.mxu0
    %v2998 = vadd.f32 %v2870, %v2970
    %v2999 = vadd.f32 %v2871, %v2975
    %v3000 = vadd.f32 %v2872, %v2980
    %v3001 = vadd.f32 %v2873, %v2985
    %v3002 = vadd.f32 %v2874, %v2990
    %v3003 = vadd.f32 %v2875, %v2995
    %v3004 = vld [vmem:[%s10] sm:$0x1]
    %v3006 = vlaneseq
    %v3007 = vshrl.u32 %v3006, 7
    %v3008 = vsub.s32 0, %v3007
    %v3009 = vrot.slane %v3004, %v3008
    %v3011 = vadd.f32 %v2998, %v3009
    %v3012 = vadd.f32 %v2999, %v3009
    %v3013 = vadd.f32 %v3000, %v3009
    %v3014 = vadd.f32 %v3001, %v3009
    %v3015 = vadd.f32 %v3002, %v3009
    %v3016 = vadd.f32 %v3003, %v3009
    %v3017 = vmax.f32 %v3011, 0.0
    %v3018 = vmax.f32 %v3012, 0.0
    %v3019 = vmax.f32 %v3013, 0.0
    %v3020 = vmax.f32 %v3014, 0.0
    %v3021 = vmax.f32 %v3015, 0.0
    %v3022 = vmax.f32 %v3016, 0.0
    %v3023 = vmul.f32 %v3017, %v1154
    %v3024 = vmul.f32 %v3018, %v1159
    %v3025 = vmul.f32 %v3019, %v1164
    %v3026 = vmul.f32 %v3020, %v1169
    %v3027 = vmul.f32 %v3021, %v1174
    %v3028 = vmul.f32 %v3022, %v1179
    %3029 = vst.msk [vmem:[#allocation3 + $0x4] sm:$0xff] %vm86, %v3023
    %3030 = vst.msk [vmem:[#allocation3 + $0xc] sm:$0xff] %vm86, %v3024
    %3031 = vst.msk [vmem:[#allocation3 + $0x14] sm:$0xff] %vm86, %v3025
    %3032 = vst.msk [vmem:[#allocation3 + $0x1c] sm:$0xff] %vm86, %v3026
    %3033 = vst.msk [vmem:[#allocation3 + $0x24] sm:$0xff] %vm86, %v3027
    %3034 = vst.msk [vmem:[#allocation3 + $0x2c] sm:$0xff] %vm86, %v3028
    %v3035 = vld [vmem:[#allocation3] sm:$0xff]
    %v3036 = vld [vmem:[#allocation3 + $0x8] sm:$0xff]
    %v3037 = vld [vmem:[#allocation3 + $0x10] sm:$0xff]
    %v3038 = vld [vmem:[#allocation3 + $0x18] sm:$0xff]
    %v3039 = vld [vmem:[#allocation3 + $0x20] sm:$0xff]
    %v3040 = vld [vmem:[#allocation3 + $0x28] sm:$0xff]
    %v3041 = vld [vmem:[%s11] sm:$0xff]
    %v3042 = vld [vmem:[#allocation3 + $0x2] sm:$0xff]
    %v3043 = vld [vmem:[#allocation3 + $0xa] sm:$0xff]
    %v3044 = vld [vmem:[#allocation3 + $0x12] sm:$0xff]
    %v3045 = vld [vmem:[#allocation3 + $0x1a] sm:$0xff]
    %v3046 = vld [vmem:[#allocation3 + $0x22] sm:$0xff]
    %v3047 = vld [vmem:[#allocation3 + $0x2a] sm:$0xff]
    %v3048 = vld [vmem:[%s11 + $0x8] sm:$0xff]
    %v3050 = vsel %vm86, %v3042, 0
    %v3053 = vsel %vm86, %v3043, 0
    %v3056 = vsel %vm86, %v3044, 0
    %v3059 = vsel %vm86, %v3045, 0
    %v3062 = vsel %vm86, %v3046, 0
    %v3065 = vsel %vm86, %v3047, 0
    %3067 = vmatprep.subr.mxu0 0.0
    %3068 = vmatpush1.msra.mxu0 %v3048
    %3069 = vmatprep.subr.mxu0 0.0
    %3070 = vmatpush1.msra.mxu0 0.0
    %3071 = vmatprep.subr.mxu0 0.0
    %3072 = vmatpush1.msra.mxu0 0.0
    %3073 = vmatprep.subr.mxu0 0.0
    %3074 = vmatpush1.msra.mxu0 0.0
    %3075 = vmatprep.subr.mxu0 0.0
    %3076 = vmatpush1.msra.mxu0 0.0
    %3077 = vmatprep.subr.mxu0 0.0
    %3078 = vmatpush1.msra.mxu0 0.0
    %3079 = vmatprep.subr.mxu0 0.0
    %3080 = vmatpush1.msra.mxu0 0.0
    %3081 = vmatprep.subr.mxu0 0.0
    %3082 = vmatpush1.msra.mxu0 0.0
    %3083 = vmatprep.subr.mxu0 0.0
    %3084 = vmatpush1.msra.mxu0 0.0
    %3085 = vmatprep.subr.mxu0 0.0
    %3086 = vmatpush1.msra.mxu0 0.0
    %3087 = vmatprep.subr.mxu0 0.0
    %3088 = vmatpush1.msra.mxu0 0.0
    %3089 = vmatprep.subr.mxu0 0.0
    %3090 = vmatpush1.msra.mxu0 0.0
    %3091 = vmatprep.subr.mxu0 0.0
    %3092 = vmatpush1.msra.mxu0 0.0
    %3093 = vmatprep.subr.mxu0 0.0
    %3094 = vmatpush1.msra.mxu0 0.0
    %3095 = vmatprep.subr.mxu0 0.0
    %3096 = vmatpush1.msra.mxu0 0.0
    %3097 = vmatprep.subr.mxu0 0.0
    %3098 = vmatpush1.msra.mxu0 0.0
    %3099 = vmatprep.subr.mxu0 0.0
    %3100 = vmatpush1.msra.mxu0 0.0
    %3101 = vmatprep.subr.mxu0 0.0
    %3102 = vmatpush1.msra.mxu0 0.0
    %3103 = vmatprep.subr.mxu0 0.0
    %3104 = vmatpush1.msra.mxu0 0.0
    %3105 = vmatprep.subr.mxu0 0.0
    %3106 = vmatpush1.msra.mxu0 0.0
    %3107 = vmatprep.subr.mxu0 0.0
    %3108 = vmatpush1.msra.mxu0 0.0
    %3109 = vmatprep.subr.mxu0 0.0
    %3110 = vmatpush1.msra.mxu0 0.0
    %3111 = vmatprep.subr.mxu0 0.0
    %3112 = vmatpush1.msra.mxu0 0.0
    %3113 = vmatprep.subr.mxu0 0.0
    %3114 = vmatpush1.msra.mxu0 0.0
    %3115 = vmatprep.subr.mxu0 0.0
    %3116 = vmatpush1.msra.mxu0 0.0
    %3117 = vmatprep.subr.mxu0 0.0
    %3118 = vmatpush1.msra.mxu0 0.0
    %3119 = vmatprep.subr.mxu0 0.0
    %3120 = vmatpush1.msra.mxu0 0.0
    %3121 = vmatprep.subr.mxu0 0.0
    %3122 = vmatpush1.msra.mxu0 0.0
    %3123 = vmatprep.subr.mxu0 0.0
    %3124 = vmatpush1.msra.mxu0 0.0
    %3125 = vmatprep.subr.mxu0 0.0
    %3126 = vmatpush1.msra.mxu0 0.0
    %3127 = vmatprep.subr.mxu0 0.0
    %3128 = vmatpush1.msra.mxu0 0.0
    %3129 = vmatprep.subr.mxu0 0.0
    %3130 = vmatpush1.msra.mxu0 0.0
    %3131 = vmatprep.mubr.f32.mxu0 0.0
    %3132 = vmatmul.mubr.f32.gmra.mrb[0].mxu0 %v3050
    %v3133 = vpop.f32.mrb[0].mxu0
    %v3134 = vadd.f32 0.0, %v3133
    %v3135 = vpop.f32.mrb[0].mxu0
    %3136 = vmatprep.mubr.f32.mxu0 0.0
    %3137 = vmatmul.mubr.f32.gmra.mrb[0].mxu0 %v3053
    %v3138 = vpop.f32.mrb[0].mxu0
    %v3139 = vadd.f32 0.0, %v3138
    %v3140 = vpop.f32.mrb[0].mxu0
    %3141 = vmatprep.mubr.f32.mxu0 0.0
    %3142 = vmatmul.mubr.f32.gmra.mrb[0].mxu0 %v3056
    %v3143 = vpop.f32.mrb[0].mxu0
    %v3144 = vadd.f32 0.0, %v3143
    %v3145 = vpop.f32.mrb[0].mxu0
    %3146 = vmatprep.mubr.f32.mxu0 0.0
    %3147 = vmatmul.mubr.f32.gmra.mrb[0].mxu0 %v3059
    %v3148 = vpop.f32.mrb[0].mxu0
    %v3149 = vadd.f32 0.0, %v3148
    %v3150 = vpop.f32.mrb[0].mxu0
    %3151 = vmatprep.mubr.f32.mxu0 0.0
    %3152 = vmatmul.mubr.f32.gmra.mrb[0].mxu0 %v3062
    %v3153 = vpop.f32.mrb[0].mxu0
    %v3154 = vadd.f32 0.0, %v3153
    %v3155 = vpop.f32.mrb[0].mxu0
    %3156 = vmatprep.mubr.f32.mxu0 0.0
    %3157 = vmatmul.mubr.f32.gmra.mrb[0].mxu0 %v3065
    %v3158 = vpop.f32.mrb[0].mxu0
    %v3159 = vadd.f32 0.0, %v3158
    %v3160 = vpop.f32.mrb[0].mxu0
    %3161 = vdwg.mxu0
    %v3163 = vsel %vm86, %v3035, 0
    %v3166 = vsel %vm86, %v3036, 0
    %v3169 = vsel %vm86, %v3037, 0
    %v3172 = vsel %vm86, %v3038, 0
    %v3175 = vsel %vm86, %v3039, 0
    %v3178 = vsel %vm86, %v3040, 0
    %3180 = vmatprep.subr.mxu0 0.0
    %3181 = vmatpush1.msra.mxu0 %v3041
    %3182 = vmatprep.subr.mxu0 0.0
    %3183 = vmatpush1.msra.mxu0 0.0
    %3184 = vmatprep.subr.mxu0 0.0
    %3185 = vmatpush1.msra.mxu0 0.0
    %3186 = vmatprep.subr.mxu0 0.0
    %3187 = vmatpush1.msra.mxu0 0.0
    %3188 = vmatprep.subr.mxu0 0.0
    %3189 = vmatpush1.msra.mxu0 0.0
    %3190 = vmatprep.subr.mxu0 0.0
    %3191 = vmatpush1.msra.mxu0 0.0
    %3192 = vmatprep.subr.mxu0 0.0
    %3193 = vmatpush1.msra.mxu0 0.0
    %3194 = vmatprep.subr.mxu0 0.0
    %3195 = vmatpush1.msra.mxu0 0.0
    %3196 = vmatprep.subr.mxu0 0.0
    %3197 = vmatpush1.msra.mxu0 0.0
    %3198 = vmatprep.subr.mxu0 0.0
    %3199 = vmatpush1.msra.mxu0 0.0
    %3200 = vmatprep.subr.mxu0 0.0
    %3201 = vmatpush1.msra.mxu0 0.0
    %3202 = vmatprep.subr.mxu0 0.0
    %3203 = vmatpush1.msra.mxu0 0.0
    %3204 = vmatprep.subr.mxu0 0.0
    %3205 = vmatpush1.msra.mxu0 0.0
    %3206 = vmatprep.subr.mxu0 0.0
    %3207 = vmatpush1.msra.mxu0 0.0
    %3208 = vmatprep.subr.mxu0 0.0
    %3209 = vmatpush1.msra.mxu0 0.0
    %3210 = vmatprep.subr.mxu0 0.0
    %3211 = vmatpush1.msra.mxu0 0.0
    %3212 = vmatprep.subr.mxu0 0.0
    %3213 = vmatpush1.msra.mxu0 0.0
    %3214 = vmatprep.subr.mxu0 0.0
    %3215 = vmatpush1.msra.mxu0 0.0
    %3216 = vmatprep.subr.mxu0 0.0
    %3217 = vmatpush1.msra.mxu0 0.0
    %3218 = vmatprep.subr.mxu0 0.0
    %3219 = vmatpush1.msra.mxu0 0.0
    %3220 = vmatprep.subr.mxu0 0.0
    %3221 = vmatpush1.msra.mxu0 0.0
    %3222 = vmatprep.subr.mxu0 0.0
    %3223 = vmatpush1.msra.mxu0 0.0
    %3224 = vmatprep.subr.mxu0 0.0
    %3225 = vmatpush1.msra.mxu0 0.0
    %3226 = vmatprep.subr.mxu0 0.0
    %3227 = vmatpush1.msra.mxu0 0.0
    %3228 = vmatprep.subr.mxu0 0.0
    %3229 = vmatpush1.msra.mxu0 0.0
    %3230 = vmatprep.subr.mxu0 0.0
    %3231 = vmatpush1.msra.mxu0 0.0
    %3232 = vmatprep.subr.mxu0 0.0
    %3233 = vmatpush1.msra.mxu0 0.0
    %3234 = vmatprep.subr.mxu0 0.0
    %3235 = vmatpush1.msra.mxu0 0.0
    %3236 = vmatprep.subr.mxu0 0.0
    %3237 = vmatpush1.msra.mxu0 0.0
    %3238 = vmatprep.subr.mxu0 0.0
    %3239 = vmatpush1.msra.mxu0 0.0
    %3240 = vmatprep.subr.mxu0 0.0
    %3241 = vmatpush1.msra.mxu0 0.0
    %3242 = vmatprep.subr.mxu0 0.0
    %3243 = vmatpush1.msra.mxu0 0.0
    %3244 = vmatprep.mubr.f32.mxu0 0.0
    %3245 = vmatmul.mubr.f32.gmra.mrb[0].mxu0 %v3163
    %v3246 = vpop.f32.mrb[0].mxu0
    %v3247 = vadd.f32 %v3134, %v3246
    %v3248 = vpop.f32.mrb[0].mxu0
    %3249 = vmatprep.mubr.f32.mxu0 0.0
    %3250 = vmatmul.mubr.f32.gmra.mrb[0].mxu0 %v3166
    %v3251 = vpop.f32.mrb[0].mxu0
    %v3252 = vadd.f32 %v3139, %v3251
    %v3253 = vpop.f32.mrb[0].mxu0
    %3254 = vmatprep.mubr.f32.mxu0 0.0
    %3255 = vmatmul.mubr.f32.gmra.mrb[0].mxu0 %v3169
    %v3256 = vpop.f32.mrb[0].mxu0
    %v3257 = vadd.f32 %v3144, %v3256
    %v3258 = vpop.f32.mrb[0].mxu0
    %3259 = vmatprep.mubr.f32.mxu0 0.0
    %3260 = vmatmul.mubr.f32.gmra.mrb[0].mxu0 %v3172
    %v3261 = vpop.f32.mrb[0].mxu0
    %v3262 = vadd.f32 %v3149, %v3261
    %v3263 = vpop.f32.mrb[0].mxu0
    %3264 = vmatprep.mubr.f32.mxu0 0.0
    %3265 = vmatmul.mubr.f32.gmra.mrb[0].mxu0 %v3175
    %v3266 = vpop.f32.mrb[0].mxu0
    %v3267 = vadd.f32 %v3154, %v3266
    %v3268 = vpop.f32.mrb[0].mxu0
    %3269 = vmatprep.mubr.f32.mxu0 0.0
    %3270 = vmatmul.mubr.f32.gmra.mrb[0].mxu0 %v3178
    %v3271 = vpop.f32.mrb[0].mxu0
    %v3272 = vadd.f32 %v3159, %v3271
    %v3273 = vpop.f32.mrb[0].mxu0
    %3274 = vdwg.mxu0
    %v3275 = vld [vmem:[#allocation3 + $0x3] sm:$0xff]
    %v3276 = vld [vmem:[#allocation3 + $0xb] sm:$0xff]
    %v3277 = vld [vmem:[#allocation3 + $0x13] sm:$0xff]
    %v3278 = vld [vmem:[#allocation3 + $0x1b] sm:$0xff]
    %v3279 = vld [vmem:[#allocation3 + $0x23] sm:$0xff]
    %v3280 = vld [vmem:[#allocation3 + $0x2b] sm:$0xff]
    %v3281 = vld [vmem:[%s11 + $0x10] sm:$0xff]
    %v3283 = vsel %vm86, %v3275, 0
    %v3286 = vsel %vm86, %v3276, 0
    %v3289 = vsel %vm86, %v3277, 0
    %v3292 = vsel %vm86, %v3278, 0
    %v3295 = vsel %vm86, %v3279, 0
    %v3298 = vsel %vm86, %v3280, 0
    %3300 = vmatprep.subr.mxu0 0.0
    %3301 = vmatpush1.msra.mxu0 %v3281
    %3302 = vmatprep.subr.mxu0 0.0
    %3303 = vmatpush1.msra.mxu0 0.0
    %3304 = vmatprep.subr.mxu0 0.0
    %3305 = vmatpush1.msra.mxu0 0.0
    %3306 = vmatprep.subr.mxu0 0.0
    %3307 = vmatpush1.msra.mxu0 0.0
    %3308 = vmatprep.subr.mxu0 0.0
    %3309 = vmatpush1.msra.mxu0 0.0
    %3310 = vmatprep.subr.mxu0 0.0
    %3311 = vmatpush1.msra.mxu0 0.0
    %3312 = vmatprep.subr.mxu0 0.0
    %3313 = vmatpush1.msra.mxu0 0.0
    %3314 = vmatprep.subr.mxu0 0.0
    %3315 = vmatpush1.msra.mxu0 0.0
    %3316 = vmatprep.subr.mxu0 0.0
    %3317 = vmatpush1.msra.mxu0 0.0
    %3318 = vmatprep.subr.mxu0 0.0
    %3319 = vmatpush1.msra.mxu0 0.0
    %3320 = vmatprep.subr.mxu0 0.0
    %3321 = vmatpush1.msra.mxu0 0.0
    %3322 = vmatprep.subr.mxu0 0.0
    %3323 = vmatpush1.msra.mxu0 0.0
    %3324 = vmatprep.subr.mxu0 0.0
    %3325 = vmatpush1.msra.mxu0 0.0
    %3326 = vmatprep.subr.mxu0 0.0
    %3327 = vmatpush1.msra.mxu0 0.0
    %3328 = vmatprep.subr.mxu0 0.0
    %3329 = vmatpush1.msra.mxu0 0.0
    %3330 = vmatprep.subr.mxu0 0.0
    %3331 = vmatpush1.msra.mxu0 0.0
    %3332 = vmatprep.subr.mxu0 0.0
    %3333 = vmatpush1.msra.mxu0 0.0
    %3334 = vmatprep.subr.mxu0 0.0
    %3335 = vmatpush1.msra.mxu0 0.0
    %3336 = vmatprep.subr.mxu0 0.0
    %3337 = vmatpush1.msra.mxu0 0.0
    %3338 = vmatprep.subr.mxu0 0.0
    %3339 = vmatpush1.msra.mxu0 0.0
    %3340 = vmatprep.subr.mxu0 0.0
    %3341 = vmatpush1.msra.mxu0 0.0
    %3342 = vmatprep.subr.mxu0 0.0
    %3343 = vmatpush1.msra.mxu0 0.0
    %3344 = vmatprep.subr.mxu0 0.0
    %3345 = vmatpush1.msra.mxu0 0.0
    %3346 = vmatprep.subr.mxu0 0.0
    %3347 = vmatpush1.msra.mxu0 0.0
    %3348 = vmatprep.subr.mxu0 0.0
    %3349 = vmatpush1.msra.mxu0 0.0
    %3350 = vmatprep.subr.mxu0 0.0
    %3351 = vmatpush1.msra.mxu0 0.0
    %3352 = vmatprep.subr.mxu0 0.0
    %3353 = vmatpush1.msra.mxu0 0.0
    %3354 = vmatprep.subr.mxu0 0.0
    %3355 = vmatpush1.msra.mxu0 0.0
    %3356 = vmatprep.subr.mxu0 0.0
    %3357 = vmatpush1.msra.mxu0 0.0
    %3358 = vmatprep.subr.mxu0 0.0
    %3359 = vmatpush1.msra.mxu0 0.0
    %3360 = vmatprep.subr.mxu0 0.0
    %3361 = vmatpush1.msra.mxu0 0.0
    %3362 = vmatprep.subr.mxu0 0.0
    %3363 = vmatpush1.msra.mxu0 0.0
    %3364 = vmatprep.mubr.f32.mxu0 0.0
    %3365 = vmatmul.mubr.f32.gmra.mrb[0].mxu0 %v3283
    %v3366 = vpop.f32.mrb[0].mxu0
    %v3367 = vadd.f32 0.0, %v3366
    %v3368 = vpop.f32.mrb[0].mxu0
    %3369 = vmatprep.mubr.f32.mxu0 0.0
    %3370 = vmatmul.mubr.f32.gmra.mrb[0].mxu0 %v3286
    %v3371 = vpop.f32.mrb[0].mxu0
    %v3372 = vadd.f32 0.0, %v3371
    %v3373 = vpop.f32.mrb[0].mxu0
    %3374 = vmatprep.mubr.f32.mxu0 0.0
    %3375 = vmatmul.mubr.f32.gmra.mrb[0].mxu0 %v3289
    %v3376 = vpop.f32.mrb[0].mxu0
    %v3377 = vadd.f32 0.0, %v3376
    %v3378 = vpop.f32.mrb[0].mxu0
    %3379 = vmatprep.mubr.f32.mxu0 0.0
    %3380 = vmatmul.mubr.f32.gmra.mrb[0].mxu0 %v3292
    %v3381 = vpop.f32.mrb[0].mxu0
    %v3382 = vadd.f32 0.0, %v3381
    %v3383 = vpop.f32.mrb[0].mxu0
    %3384 = vmatprep.mubr.f32.mxu0 0.0
    %3385 = vmatmul.mubr.f32.gmra.mrb[0].mxu0 %v3295
    %v3386 = vpop.f32.mrb[0].mxu0
    %v3387 = vadd.f32 0.0, %v3386
    %v3388 = vpop.f32.mrb[0].mxu0
    %3389 = vmatprep.mubr.f32.mxu0 0.0
    %3390 = vmatmul.mubr.f32.gmra.mrb[0].mxu0 %v3298
    %v3391 = vpop.f32.mrb[0].mxu0
    %v3392 = vadd.f32 0.0, %v3391
    %v3393 = vpop.f32.mrb[0].mxu0
    %3394 = vdwg.mxu0
    %v3395 = vadd.f32 %v3247, %v3367
    %v3396 = vadd.f32 %v3252, %v3372
    %v3397 = vadd.f32 %v3257, %v3377
    %v3398 = vadd.f32 %v3262, %v3382
    %v3399 = vadd.f32 %v3267, %v3387
    %v3400 = vadd.f32 %v3272, %v3392
    %v3401 = vld [vmem:[#allocation3 + $0x4] sm:$0xff]
    %v3402 = vld [vmem:[#allocation3 + $0xc] sm:$0xff]
    %v3403 = vld [vmem:[#allocation3 + $0x14] sm:$0xff]
    %v3404 = vld [vmem:[#allocation3 + $0x1c] sm:$0xff]
    %v3405 = vld [vmem:[#allocation3 + $0x24] sm:$0xff]
    %v3406 = vld [vmem:[#allocation3 + $0x2c] sm:$0xff]
    %v3407 = vld [vmem:[%s11 + $0x18] sm:$0xff]
    %v3409 = vsel %vm86, %v3401, 0
    %v3412 = vsel %vm86, %v3402, 0
    %v3415 = vsel %vm86, %v3403, 0
    %v3418 = vsel %vm86, %v3404, 0
    %v3421 = vsel %vm86, %v3405, 0
    %v3424 = vsel %vm86, %v3406, 0
    %3426 = vmatprep.subr.mxu0 0.0
    %3427 = vmatpush1.msra.mxu0 %v3407
    %3428 = vmatprep.subr.mxu0 0.0
    %3429 = vmatpush1.msra.mxu0 0.0
    %3430 = vmatprep.subr.mxu0 0.0
    %3431 = vmatpush1.msra.mxu0 0.0
    %3432 = vmatprep.subr.mxu0 0.0
    %3433 = vmatpush1.msra.mxu0 0.0
    %3434 = vmatprep.subr.mxu0 0.0
    %3435 = vmatpush1.msra.mxu0 0.0
    %3436 = vmatprep.subr.mxu0 0.0
    %3437 = vmatpush1.msra.mxu0 0.0
    %3438 = vmatprep.subr.mxu0 0.0
    %3439 = vmatpush1.msra.mxu0 0.0
    %3440 = vmatprep.subr.mxu0 0.0
    %3441 = vmatpush1.msra.mxu0 0.0
    %3442 = vmatprep.subr.mxu0 0.0
    %3443 = vmatpush1.msra.mxu0 0.0
    %3444 = vmatprep.subr.mxu0 0.0
    %3445 = vmatpush1.msra.mxu0 0.0
    %3446 = vmatprep.subr.mxu0 0.0
    %3447 = vmatpush1.msra.mxu0 0.0
    %3448 = vmatprep.subr.mxu0 0.0
    %3449 = vmatpush1.msra.mxu0 0.0
    %3450 = vmatprep.subr.mxu0 0.0
    %3451 = vmatpush1.msra.mxu0 0.0
    %3452 = vmatprep.subr.mxu0 0.0
    %3453 = vmatpush1.msra.mxu0 0.0
    %3454 = vmatprep.subr.mxu0 0.0
    %3455 = vmatpush1.msra.mxu0 0.0
    %3456 = vmatprep.subr.mxu0 0.0
    %3457 = vmatpush1.msra.mxu0 0.0
    %3458 = vmatprep.subr.mxu0 0.0
    %3459 = vmatpush1.msra.mxu0 0.0
    %3460 = vmatprep.subr.mxu0 0.0
    %3461 = vmatpush1.msra.mxu0 0.0
    %3462 = vmatprep.subr.mxu0 0.0
    %3463 = vmatpush1.msra.mxu0 0.0
    %3464 = vmatprep.subr.mxu0 0.0
    %3465 = vmatpush1.msra.mxu0 0.0
    %3466 = vmatprep.subr.mxu0 0.0
    %3467 = vmatpush1.msra.mxu0 0.0
    %3468 = vmatprep.subr.mxu0 0.0
    %3469 = vmatpush1.msra.mxu0 0.0
    %3470 = vmatprep.subr.mxu0 0.0
    %3471 = vmatpush1.msra.mxu0 0.0
    %3472 = vmatprep.subr.mxu0 0.0
    %3473 = vmatpush1.msra.mxu0 0.0
    %3474 = vmatprep.subr.mxu0 0.0
    %3475 = vmatpush1.msra.mxu0 0.0
    %3476 = vmatprep.subr.mxu0 0.0
    %3477 = vmatpush1.msra.mxu0 0.0
    %3478 = vmatprep.subr.mxu0 0.0
    %3479 = vmatpush1.msra.mxu0 0.0
    %3480 = vmatprep.subr.mxu0 0.0
    %3481 = vmatpush1.msra.mxu0 0.0
    %3482 = vmatprep.subr.mxu0 0.0
    %3483 = vmatpush1.msra.mxu0 0.0
    %3484 = vmatprep.subr.mxu0 0.0
    %3485 = vmatpush1.msra.mxu0 0.0
    %3486 = vmatprep.subr.mxu0 0.0
    %3487 = vmatpush1.msra.mxu0 0.0
    %3488 = vmatprep.subr.mxu0 0.0
    %3489 = vmatpush1.msra.mxu0 0.0
    %3490 = vmatprep.mubr.f32.mxu0 0.0
    %3491 = vmatmul.mubr.f32.gmra.mrb[0].mxu0 %v3409
    %v3492 = vpop.f32.mrb[0].mxu0
    %v3493 = vadd.f32 0.0, %v3492
    %v3494 = vpop.f32.mrb[0].mxu0
    %3495 = vmatprep.mubr.f32.mxu0 0.0
    %3496 = vmatmul.mubr.f32.gmra.mrb[0].mxu0 %v3412
    %v3497 = vpop.f32.mrb[0].mxu0
    %v3498 = vadd.f32 0.0, %v3497
    %v3499 = vpop.f32.mrb[0].mxu0
    %3500 = vmatprep.mubr.f32.mxu0 0.0
    %3501 = vmatmul.mubr.f32.gmra.mrb[0].mxu0 %v3415
    %v3502 = vpop.f32.mrb[0].mxu0
    %v3503 = vadd.f32 0.0, %v3502
    %v3504 = vpop.f32.mrb[0].mxu0
    %3505 = vmatprep.mubr.f32.mxu0 0.0
    %3506 = vmatmul.mubr.f32.gmra.mrb[0].mxu0 %v3418
    %v3507 = vpop.f32.mrb[0].mxu0
    %v3508 = vadd.f32 0.0, %v3507
    %v3509 = vpop.f32.mrb[0].mxu0
    %3510 = vmatprep.mubr.f32.mxu0 0.0
    %3511 = vmatmul.mubr.f32.gmra.mrb[0].mxu0 %v3421
    %v3512 = vpop.f32.mrb[0].mxu0
    %v3513 = vadd.f32 0.0, %v3512
    %v3514 = vpop.f32.mrb[0].mxu0
    %3515 = vmatprep.mubr.f32.mxu0 0.0
    %3516 = vmatmul.mubr.f32.gmra.mrb[0].mxu0 %v3424
    %v3517 = vpop.f32.mrb[0].mxu0
    %v3518 = vadd.f32 0.0, %v3517
    %v3519 = vpop.f32.mrb[0].mxu0
    %3520 = vdwg.mxu0
    %v3521 = vadd.f32 %v3395, %v3493
    %v3522 = vadd.f32 %v3396, %v3498
    %v3523 = vadd.f32 %v3397, %v3503
    %v3524 = vadd.f32 %v3398, %v3508
    %v3525 = vadd.f32 %v3399, %v3513
    %v3526 = vadd.f32 %v3400, %v3518
    %v3527 = vld [vmem:[#allocation3 + $0x5] sm:$0xff]
    %v3528 = vld [vmem:[#allocation3 + $0xd] sm:$0xff]
    %v3529 = vld [vmem:[#allocation3 + $0x15] sm:$0xff]
    %v3530 = vld [vmem:[#allocation3 + $0x1d] sm:$0xff]
    %v3531 = vld [vmem:[#allocation3 + $0x25] sm:$0xff]
    %v3532 = vld [vmem:[#allocation3 + $0x2d] sm:$0xff]
    %v3533 = vld [vmem:[%s11 + $0x20] sm:$0xff]
    %v3535 = vsel %vm86, %v3527, 0
    %v3538 = vsel %vm86, %v3528, 0
    %v3541 = vsel %vm86, %v3529, 0
    %v3544 = vsel %vm86, %v3530, 0
    %v3547 = vsel %vm86, %v3531, 0
    %v3550 = vsel %vm86, %v3532, 0
    %3552 = vmatprep.subr.mxu0 0.0
    %3553 = vmatpush1.msra.mxu0 %v3533
    %3554 = vmatprep.subr.mxu0 0.0
    %3555 = vmatpush1.msra.mxu0 0.0
    %3556 = vmatprep.subr.mxu0 0.0
    %3557 = vmatpush1.msra.mxu0 0.0
    %3558 = vmatprep.subr.mxu0 0.0
    %3559 = vmatpush1.msra.mxu0 0.0
    %3560 = vmatprep.subr.mxu0 0.0
    %3561 = vmatpush1.msra.mxu0 0.0
    %3562 = vmatprep.subr.mxu0 0.0
    %3563 = vmatpush1.msra.mxu0 0.0
    %3564 = vmatprep.subr.mxu0 0.0
    %3565 = vmatpush1.msra.mxu0 0.0
    %3566 = vmatprep.subr.mxu0 0.0
    %3567 = vmatpush1.msra.mxu0 0.0
    %3568 = vmatprep.subr.mxu0 0.0
    %3569 = vmatpush1.msra.mxu0 0.0
    %3570 = vmatprep.subr.mxu0 0.0
    %3571 = vmatpush1.msra.mxu0 0.0
    %3572 = vmatprep.subr.mxu0 0.0
    %3573 = vmatpush1.msra.mxu0 0.0
    %3574 = vmatprep.subr.mxu0 0.0
    %3575 = vmatpush1.msra.mxu0 0.0
    %3576 = vmatprep.subr.mxu0 0.0
    %3577 = vmatpush1.msra.mxu0 0.0
    %3578 = vmatprep.subr.mxu0 0.0
    %3579 = vmatpush1.msra.mxu0 0.0
    %3580 = vmatprep.subr.mxu0 0.0
    %3581 = vmatpush1.msra.mxu0 0.0
    %3582 = vmatprep.subr.mxu0 0.0
    %3583 = vmatpush1.msra.mxu0 0.0
    %3584 = vmatprep.subr.mxu0 0.0
    %3585 = vmatpush1.msra.mxu0 0.0
    %3586 = vmatprep.subr.mxu0 0.0
    %3587 = vmatpush1.msra.mxu0 0.0
    %3588 = vmatprep.subr.mxu0 0.0
    %3589 = vmatpush1.msra.mxu0 0.0
    %3590 = vmatprep.subr.mxu0 0.0
    %3591 = vmatpush1.msra.mxu0 0.0
    %3592 = vmatprep.subr.mxu0 0.0
    %3593 = vmatpush1.msra.mxu0 0.0
    %3594 = vmatprep.subr.mxu0 0.0
    %3595 = vmatpush1.msra.mxu0 0.0
    %3596 = vmatprep.subr.mxu0 0.0
    %3597 = vmatpush1.msra.mxu0 0.0
    %3598 = vmatprep.subr.mxu0 0.0
    %3599 = vmatpush1.msra.mxu0 0.0
    %3600 = vmatprep.subr.mxu0 0.0
    %3601 = vmatpush1.msra.mxu0 0.0
    %3602 = vmatprep.subr.mxu0 0.0
    %3603 = vmatpush1.msra.mxu0 0.0
    %3604 = vmatprep.subr.mxu0 0.0
    %3605 = vmatpush1.msra.mxu0 0.0
    %3606 = vmatprep.subr.mxu0 0.0
    %3607 = vmatpush1.msra.mxu0 0.0
    %3608 = vmatprep.subr.mxu0 0.0
    %3609 = vmatpush1.msra.mxu0 0.0
    %3610 = vmatprep.subr.mxu0 0.0
    %3611 = vmatpush1.msra.mxu0 0.0
    %3612 = vmatprep.subr.mxu0 0.0
    %3613 = vmatpush1.msra.mxu0 0.0
    %3614 = vmatprep.subr.mxu0 0.0
    %3615 = vmatpush1.msra.mxu0 0.0
    %3616 = vmatprep.mubr.f32.mxu0 0.0
    %3617 = vmatmul.mubr.f32.gmra.mrb[0].mxu0 %v3535
    %v3618 = vpop.f32.mrb[0].mxu0
    %v3619 = vadd.f32 0.0, %v3618
    %v3620 = vpop.f32.mrb[0].mxu0
    %3621 = vmatprep.mubr.f32.mxu0 0.0
    %3622 = vmatmul.mubr.f32.gmra.mrb[0].mxu0 %v3538
    %v3623 = vpop.f32.mrb[0].mxu0
    %v3624 = vadd.f32 0.0, %v3623
    %v3625 = vpop.f32.mrb[0].mxu0
    %3626 = vmatprep.mubr.f32.mxu0 0.0
    %3627 = vmatmul.mubr.f32.gmra.mrb[0].mxu0 %v3541
    %v3628 = vpop.f32.mrb[0].mxu0
    %v3629 = vadd.f32 0.0, %v3628
    %v3630 = vpop.f32.mrb[0].mxu0
    %3631 = vmatprep.mubr.f32.mxu0 0.0
    %3632 = vmatmul.mubr.f32.gmra.mrb[0].mxu0 %v3544
    %v3633 = vpop.f32.mrb[0].mxu0
    %v3634 = vadd.f32 0.0, %v3633
    %v3635 = vpop.f32.mrb[0].mxu0
    %3636 = vmatprep.mubr.f32.mxu0 0.0
    %3637 = vmatmul.mubr.f32.gmra.mrb[0].mxu0 %v3547
    %v3638 = vpop.f32.mrb[0].mxu0
    %v3639 = vadd.f32 0.0, %v3638
    %v3640 = vpop.f32.mrb[0].mxu0
    %3641 = vmatprep.mubr.f32.mxu0 0.0
    %3642 = vmatmul.mubr.f32.gmra.mrb[0].mxu0 %v3550
    %v3643 = vpop.f32.mrb[0].mxu0
    %v3644 = vadd.f32 0.0, %v3643
    %v3645 = vpop.f32.mrb[0].mxu0
    %3646 = vdwg.mxu0
    %v3647 = vadd.f32 %v3521, %v3619
    %v3648 = vadd.f32 %v3522, %v3624
    %v3649 = vadd.f32 %v3523, %v3629
    %v3650 = vadd.f32 %v3524, %v3634
    %v3651 = vadd.f32 %v3525, %v3639
    %v3652 = vadd.f32 %v3526, %v3644
    %v3653 = vld [vmem:[#allocation3 + $0x6] sm:$0xff]
    %v3654 = vld [vmem:[#allocation3 + $0xe] sm:$0xff]
    %v3655 = vld [vmem:[#allocation3 + $0x16] sm:$0xff]
    %v3656 = vld [vmem:[#allocation3 + $0x1e] sm:$0xff]
    %v3657 = vld [vmem:[#allocation3 + $0x26] sm:$0xff]
    %v3658 = vld [vmem:[#allocation3 + $0x2e] sm:$0xff]
    %v3659 = vld [vmem:[%s11 + $0x28] sm:$0xff]
    %v3661 = vsel %vm86, %v3653, 0
    %v3664 = vsel %vm86, %v3654, 0
    %v3667 = vsel %vm86, %v3655, 0
    %v3670 = vsel %vm86, %v3656, 0
    %v3673 = vsel %vm86, %v3657, 0
    %v3676 = vsel %vm86, %v3658, 0
    %3678 = vmatprep.subr.mxu0 0.0
    %3679 = vmatpush1.msra.mxu0 %v3659
    %3680 = vmatprep.subr.mxu0 0.0
    %3681 = vmatpush1.msra.mxu0 0.0
    %3682 = vmatprep.subr.mxu0 0.0
    %3683 = vmatpush1.msra.mxu0 0.0
    %3684 = vmatprep.subr.mxu0 0.0
    %3685 = vmatpush1.msra.mxu0 0.0
    %3686 = vmatprep.subr.mxu0 0.0
    %3687 = vmatpush1.msra.mxu0 0.0
    %3688 = vmatprep.subr.mxu0 0.0
    %3689 = vmatpush1.msra.mxu0 0.0
    %3690 = vmatprep.subr.mxu0 0.0
    %3691 = vmatpush1.msra.mxu0 0.0
    %3692 = vmatprep.subr.mxu0 0.0
    %3693 = vmatpush1.msra.mxu0 0.0
    %3694 = vmatprep.subr.mxu0 0.0
    %3695 = vmatpush1.msra.mxu0 0.0
    %3696 = vmatprep.subr.mxu0 0.0
    %3697 = vmatpush1.msra.mxu0 0.0
    %3698 = vmatprep.subr.mxu0 0.0
    %3699 = vmatpush1.msra.mxu0 0.0
    %3700 = vmatprep.subr.mxu0 0.0
    %3701 = vmatpush1.msra.mxu0 0.0
    %3702 = vmatprep.subr.mxu0 0.0
    %3703 = vmatpush1.msra.mxu0 0.0
    %3704 = vmatprep.subr.mxu0 0.0
    %3705 = vmatpush1.msra.mxu0 0.0
    %3706 = vmatprep.subr.mxu0 0.0
    %3707 = vmatpush1.msra.mxu0 0.0
    %3708 = vmatprep.subr.mxu0 0.0
    %3709 = vmatpush1.msra.mxu0 0.0
    %3710 = vmatprep.subr.mxu0 0.0
    %3711 = vmatpush1.msra.mxu0 0.0
    %3712 = vmatprep.subr.mxu0 0.0
    %3713 = vmatpush1.msra.mxu0 0.0
    %3714 = vmatprep.subr.mxu0 0.0
    %3715 = vmatpush1.msra.mxu0 0.0
    %3716 = vmatprep.subr.mxu0 0.0
    %3717 = vmatpush1.msra.mxu0 0.0
    %3718 = vmatprep.subr.mxu0 0.0
    %3719 = vmatpush1.msra.mxu0 0.0
    %3720 = vmatprep.subr.mxu0 0.0
    %3721 = vmatpush1.msra.mxu0 0.0
    %3722 = vmatprep.subr.mxu0 0.0
    %3723 = vmatpush1.msra.mxu0 0.0
    %3724 = vmatprep.subr.mxu0 0.0
    %3725 = vmatpush1.msra.mxu0 0.0
    %3726 = vmatprep.subr.mxu0 0.0
    %3727 = vmatpush1.msra.mxu0 0.0
    %3728 = vmatprep.subr.mxu0 0.0
    %3729 = vmatpush1.msra.mxu0 0.0
    %3730 = vmatprep.subr.mxu0 0.0
    %3731 = vmatpush1.msra.mxu0 0.0
    %3732 = vmatprep.subr.mxu0 0.0
    %3733 = vmatpush1.msra.mxu0 0.0
    %3734 = vmatprep.subr.mxu0 0.0
    %3735 = vmatpush1.msra.mxu0 0.0
    %3736 = vmatprep.subr.mxu0 0.0
    %3737 = vmatpush1.msra.mxu0 0.0
    %3738 = vmatprep.subr.mxu0 0.0
    %3739 = vmatpush1.msra.mxu0 0.0
    %3740 = vmatprep.subr.mxu0 0.0
    %3741 = vmatpush1.msra.mxu0 0.0
    %3742 = vmatprep.mubr.f32.mxu0 0.0
    %3743 = vmatmul.mubr.f32.gmra.mrb[0].mxu0 %v3661
    %v3744 = vpop.f32.mrb[0].mxu0
    %v3745 = vadd.f32 0.0, %v3744
    %v3746 = vpop.f32.mrb[0].mxu0
    %3747 = vmatprep.mubr.f32.mxu0 0.0
    %3748 = vmatmul.mubr.f32.gmra.mrb[0].mxu0 %v3664
    %v3749 = vpop.f32.mrb[0].mxu0
    %v3750 = vadd.f32 0.0, %v3749
    %v3751 = vpop.f32.mrb[0].mxu0
    %3752 = vmatprep.mubr.f32.mxu0 0.0
    %3753 = vmatmul.mubr.f32.gmra.mrb[0].mxu0 %v3667
    %v3754 = vpop.f32.mrb[0].mxu0
    %v3755 = vadd.f32 0.0, %v3754
    %v3756 = vpop.f32.mrb[0].mxu0
    %3757 = vmatprep.mubr.f32.mxu0 0.0
    %3758 = vmatmul.mubr.f32.gmra.mrb[0].mxu0 %v3670
    %v3759 = vpop.f32.mrb[0].mxu0
    %v3760 = vadd.f32 0.0, %v3759
    %v3761 = vpop.f32.mrb[0].mxu0
    %3762 = vmatprep.mubr.f32.mxu0 0.0
    %3763 = vmatmul.mubr.f32.gmra.mrb[0].mxu0 %v3673
    %v3764 = vpop.f32.mrb[0].mxu0
    %v3765 = vadd.f32 0.0, %v3764
    %v3766 = vpop.f32.mrb[0].mxu0
    %3767 = vmatprep.mubr.f32.mxu0 0.0
    %3768 = vmatmul.mubr.f32.gmra.mrb[0].mxu0 %v3676
    %v3769 = vpop.f32.mrb[0].mxu0
    %v3770 = vadd.f32 0.0, %v3769
    %v3771 = vpop.f32.mrb[0].mxu0
    %3772 = vdwg.mxu0
    %v3773 = vadd.f32 %v3647, %v3745
    %v3774 = vadd.f32 %v3648, %v3750
    %v3775 = vadd.f32 %v3649, %v3755
    %v3776 = vadd.f32 %v3650, %v3760
    %v3777 = vadd.f32 %v3651, %v3765
    %v3778 = vadd.f32 %v3652, %v3770
    %v3779 = vld [vmem:[#allocation3 + $0x8] sm:$0xff]
    %v3780 = vld [vmem:[#allocation3 + $0x10] sm:$0xff]
    %v3781 = vld [vmem:[#allocation3 + $0x18] sm:$0xff]
    %v3782 = vld [vmem:[#allocation3 + $0x20] sm:$0xff]
    %v3783 = vld [vmem:[#allocation3 + $0x28] sm:$0xff]
    %v3784 = vld [vmem:[#allocation3 + $0x30] sm:$0xff]
    %v3785 = vld [vmem:[%s11 + $0x30] sm:$0xff]
    %v3787 = vsel %vm86, %v3779, 0
    %v3790 = vsel %vm86, %v3780, 0
    %v3793 = vsel %vm86, %v3781, 0
    %v3796 = vsel %vm86, %v3782, 0
    %v3799 = vsel %vm86, %v3783, 0
    %v3802 = vsel %vm86, %v3784, 0
    %3804 = vmatprep.subr.mxu0 0.0
    %3805 = vmatpush1.msra.mxu0 %v3785
    %3806 = vmatprep.subr.mxu0 0.0
    %3807 = vmatpush1.msra.mxu0 0.0
    %3808 = vmatprep.subr.mxu0 0.0
    %3809 = vmatpush1.msra.mxu0 0.0
    %3810 = vmatprep.subr.mxu0 0.0
    %3811 = vmatpush1.msra.mxu0 0.0
    %3812 = vmatprep.subr.mxu0 0.0
    %3813 = vmatpush1.msra.mxu0 0.0
    %3814 = vmatprep.subr.mxu0 0.0
    %3815 = vmatpush1.msra.mxu0 0.0
    %3816 = vmatprep.subr.mxu0 0.0
    %3817 = vmatpush1.msra.mxu0 0.0
    %3818 = vmatprep.subr.mxu0 0.0
    %3819 = vmatpush1.msra.mxu0 0.0
    %3820 = vmatprep.subr.mxu0 0.0
    %3821 = vmatpush1.msra.mxu0 0.0
    %3822 = vmatprep.subr.mxu0 0.0
    %3823 = vmatpush1.msra.mxu0 0.0
    %3824 = vmatprep.subr.mxu0 0.0
    %3825 = vmatpush1.msra.mxu0 0.0
    %3826 = vmatprep.subr.mxu0 0.0
    %3827 = vmatpush1.msra.mxu0 0.0
    %3828 = vmatprep.subr.mxu0 0.0
    %3829 = vmatpush1.msra.mxu0 0.0
    %3830 = vmatprep.subr.mxu0 0.0
    %3831 = vmatpush1.msra.mxu0 0.0
    %3832 = vmatprep.subr.mxu0 0.0
    %3833 = vmatpush1.msra.mxu0 0.0
    %3834 = vmatprep.subr.mxu0 0.0
    %3835 = vmatpush1.msra.mxu0 0.0
    %3836 = vmatprep.subr.mxu0 0.0
    %3837 = vmatpush1.msra.mxu0 0.0
    %3838 = vmatprep.subr.mxu0 0.0
    %3839 = vmatpush1.msra.mxu0 0.0
    %3840 = vmatprep.subr.mxu0 0.0
    %3841 = vmatpush1.msra.mxu0 0.0
    %3842 = vmatprep.subr.mxu0 0.0
    %3843 = vmatpush1.msra.mxu0 0.0
    %3844 = vmatprep.subr.mxu0 0.0
    %3845 = vmatpush1.msra.mxu0 0.0
    %3846 = vmatprep.subr.mxu0 0.0
    %3847 = vmatpush1.msra.mxu0 0.0
    %3848 = vmatprep.subr.mxu0 0.0
    %3849 = vmatpush1.msra.mxu0 0.0
    %3850 = vmatprep.subr.mxu0 0.0
    %3851 = vmatpush1.msra.mxu0 0.0
    %3852 = vmatprep.subr.mxu0 0.0
    %3853 = vmatpush1.msra.mxu0 0.0
    %3854 = vmatprep.subr.mxu0 0.0
    %3855 = vmatpush1.msra.mxu0 0.0
    %3856 = vmatprep.subr.mxu0 0.0
    %3857 = vmatpush1.msra.mxu0 0.0
    %3858 = vmatprep.subr.mxu0 0.0
    %3859 = vmatpush1.msra.mxu0 0.0
    %3860 = vmatprep.subr.mxu0 0.0
    %3861 = vmatpush1.msra.mxu0 0.0
    %3862 = vmatprep.subr.mxu0 0.0
    %3863 = vmatpush1.msra.mxu0 0.0
    %3864 = vmatprep.subr.mxu0 0.0
    %3865 = vmatpush1.msra.mxu0 0.0
    %3866 = vmatprep.subr.mxu0 0.0
    %3867 = vmatpush1.msra.mxu0 0.0
    %3868 = vmatprep.mubr.f32.mxu0 0.0
    %3869 = vmatmul.mubr.f32.gmra.mrb[0].mxu0 %v3787
    %v3870 = vpop.f32.mrb[0].mxu0
    %v3871 = vadd.f32 0.0, %v3870
    %v3872 = vpop.f32.mrb[0].mxu0
    %3873 = vmatprep.mubr.f32.mxu0 0.0
    %3874 = vmatmul.mubr.f32.gmra.mrb[0].mxu0 %v3790
    %v3875 = vpop.f32.mrb[0].mxu0
    %v3876 = vadd.f32 0.0, %v3875
    %v3877 = vpop.f32.mrb[0].mxu0
    %3878 = vmatprep.mubr.f32.mxu0 0.0
    %3879 = vmatmul.mubr.f32.gmra.mrb[0].mxu0 %v3793
    %v3880 = vpop.f32.mrb[0].mxu0
    %v3881 = vadd.f32 0.0, %v3880
    %v3882 = vpop.f32.mrb[0].mxu0
    %3883 = vmatprep.mubr.f32.mxu0 0.0
    %3884 = vmatmul.mubr.f32.gmra.mrb[0].mxu0 %v3796
    %v3885 = vpop.f32.mrb[0].mxu0
    %v3886 = vadd.f32 0.0, %v3885
    %v3887 = vpop.f32.mrb[0].mxu0
    %3888 = vmatprep.mubr.f32.mxu0 0.0
    %3889 = vmatmul.mubr.f32.gmra.mrb[0].mxu0 %v3799
    %v3890 = vpop.f32.mrb[0].mxu0
    %v3891 = vadd.f32 0.0, %v3890
    %v3892 = vpop.f32.mrb[0].mxu0
    %3893 = vmatprep.mubr.f32.mxu0 0.0
    %3894 = vmatmul.mubr.f32.gmra.mrb[0].mxu0 %v3802
    %v3895 = vpop.f32.mrb[0].mxu0
    %v3896 = vadd.f32 0.0, %v3895
    %v3897 = vpop.f32.mrb[0].mxu0
    %3898 = vdwg.mxu0
    %v3899 = vadd.f32 %v3773, %v3871
    %v3900 = vadd.f32 %v3774, %v3876
    %v3901 = vadd.f32 %v3775, %v3881
    %v3902 = vadd.f32 %v3776, %v3886
    %v3903 = vadd.f32 %v3777, %v3891
    %v3904 = vadd.f32 %v3778, %v3896
    %v3905 = vld [vmem:[%s12] sm:$0x1]
    %v3907 = vlaneseq
    %v3908 = vshrl.u32 %v3907, 7
    %v3909 = vsub.s32 0, %v3908
    %v3910 = vrot.slane %v3905, %v3909
    %v3912 = vadd.f32 %v3899, %v3910
    %v3913 = vadd.f32 %v3900, %v3910
    %v3914 = vadd.f32 %v3901, %v3910
    %v3915 = vadd.f32 %v3902, %v3910
    %v3916 = vadd.f32 %v3903, %v3910
    %v3917 = vadd.f32 %v3904, %v3910
    %v3918 = vmax.f32 %v3912, 0.0
    %v3919 = vmax.f32 %v3913, 0.0
    %v3920 = vmax.f32 %v3914, 0.0
    %v3921 = vmax.f32 %v3915, 0.0
    %v3922 = vmax.f32 %v3916, 0.0
    %v3923 = vmax.f32 %v3917, 0.0
    %v3924 = vmul.f32 %v3918, %v1154
    %v3925 = vmul.f32 %v3919, %v1159
    %v3926 = vmul.f32 %v3920, %v1164
    %v3927 = vmul.f32 %v3921, %v1169
    %v3928 = vmul.f32 %v3922, %v1174
    %v3929 = vmul.f32 %v3923, %v1179
    %3936 = vrot.lane.b32.xlu0 %v3924, 24
    %v3937 = vpop.permute.xlu0 %3936
    %3938 = vrot.lane.b32.xlu0 %v3925, 24
    %v3939 = vpop.permute.xlu0 %3938
    %3940 = vrot.lane.b32.xlu0 %v3926, 24
    %v3941 = vpop.permute.xlu0 %3940
    %3942 = vrot.lane.b32.xlu0 %v3927, 24
    %v3943 = vpop.permute.xlu0 %3942
    %3944 = vrot.lane.b32.xlu0 %v3928, 24
    %v3945 = vpop.permute.xlu0 %3944
    %3946 = vrot.lane.b32.xlu0 %v3929, 24
    %v3947 = vpop.permute.xlu0 %3946
    %vm3954 = vcmask 261312
    %3955 = vst.msk [vmem:[#allocation2 + $0x4] sm:$0xff] %vm3954, %v3937
    %3956 = vst.msk [vmem:[#allocation2 + $0xc] sm:$0xff] %vm3954, %v3939
    %3957 = vst.msk [vmem:[#allocation2 + $0x14] sm:$0xff] %vm3954, %v3941
    %3958 = vst.msk [vmem:[#allocation2 + $0x1c] sm:$0xff] %vm3954, %v3943
    %3959 = vst.msk [vmem:[#allocation2 + $0x24] sm:$0xff] %vm3954, %v3945
    %3960 = vst.msk [vmem:[#allocation2 + $0x2c] sm:$0xff] %vm3954, %v3947
    %v3961 = vld [vmem:[#allocation2 + $0x4] sm:$0xff]
    %v3962 = vld [vmem:[#allocation2 + $0xc] sm:$0xff]
    %v3963 = vld [vmem:[#allocation2 + $0x14] sm:$0xff]
    %v3964 = vld [vmem:[#allocation2 + $0x1c] sm:$0xff]
    %v3965 = vld [vmem:[#allocation2 + $0x24] sm:$0xff]
    %v3966 = vld [vmem:[#allocation2 + $0x2c] sm:$0xff]
    %v3967 = vld [vmem:[%s13] sm:$0xff]
    %v3968 = vld [vmem:[%s13 + $0x8] sm:$0xff]
    %v3969 = vld [vmem:[%s13 + $0x10] sm:$0xff]
    %v3970 = vld [vmem:[%s13 + $0x18] sm:$0xff]
    %v3972 = vsel %vm78, %v3961, 0
    %v3975 = vsel %vm78, %v3962, 0
    %v3978 = vsel %vm78, %v3963, 0
    %v3981 = vsel %vm78, %v3964, 0
    %v3984 = vsel %vm78, %v3965, 0
    %v3987 = vsel %vm78, %v3966, 0
    %3989 = vmatprep.subr.mxu0 0.0
    %3990 = vmatpush1.msra.mxu0 %v3967
    %3991 = vmatprep.subr.mxu0 0.0
    %3992 = vmatpush1.msra.mxu0 %v3968
    %3993 = vmatprep.subr.mxu0 0.0
    %3994 = vmatpush1.msra.mxu0 %v3969
    %3995 = vmatprep.subr.mxu0 0.0
    %3996 = vmatpush1.msra.mxu0 %v3970
    %3997 = vmatprep.subr.mxu0 0.0
    %3998 = vmatpush1.msra.mxu0 0.0
    %3999 = vmatprep.subr.mxu0 0.0
    %4000 = vmatpush1.msra.mxu0 0.0
    %4001 = vmatprep.subr.mxu0 0.0
    %4002 = vmatpush1.msra.mxu0 0.0
    %4003 = vmatprep.subr.mxu0 0.0
    %4004 = vmatpush1.msra.mxu0 0.0
    %4005 = vmatprep.subr.mxu0 0.0
    %4006 = vmatpush1.msra.mxu0 0.0
    %4007 = vmatprep.subr.mxu0 0.0
    %4008 = vmatpush1.msra.mxu0 0.0
    %4009 = vmatprep.subr.mxu0 0.0
    %4010 = vmatpush1.msra.mxu0 0.0
    %4011 = vmatprep.subr.mxu0 0.0
    %4012 = vmatpush1.msra.mxu0 0.0
    %4013 = vmatprep.subr.mxu0 0.0
    %4014 = vmatpush1.msra.mxu0 0.0
    %4015 = vmatprep.subr.mxu0 0.0
    %4016 = vmatpush1.msra.mxu0 0.0
    %4017 = vmatprep.subr.mxu0 0.0
    %4018 = vmatpush1.msra.mxu0 0.0
    %4019 = vmatprep.subr.mxu0 0.0
    %4020 = vmatpush1.msra.mxu0 0.0
    %4021 = vmatprep.subr.mxu0 0.0
    %4022 = vmatpush1.msra.mxu0 0.0
    %4023 = vmatprep.subr.mxu0 0.0
    %4024 = vmatpush1.msra.mxu0 0.0
    %4025 = vmatprep.subr.mxu0 0.0
    %4026 = vmatpush1.msra.mxu0 0.0
    %4027 = vmatprep.subr.mxu0 0.0
    %4028 = vmatpush1.msra.mxu0 0.0
    %4029 = vmatprep.subr.mxu0 0.0
    %4030 = vmatpush1.msra.mxu0 0.0
    %4031 = vmatprep.subr.mxu0 0.0
    %4032 = vmatpush1.msra.mxu0 0.0
    %4033 = vmatprep.subr.mxu0 0.0
    %4034 = vmatpush1.msra.mxu0 0.0
    %4035 = vmatprep.subr.mxu0 0.0
    %4036 = vmatpush1.msra.mxu0 0.0
    %4037 = vmatprep.subr.mxu0 0.0
    %4038 = vmatpush1.msra.mxu0 0.0
    %4039 = vmatprep.subr.mxu0 0.0
    %4040 = vmatpush1.msra.mxu0 0.0
    %4041 = vmatprep.subr.mxu0 0.0
    %4042 = vmatpush1.msra.mxu0 0.0
    %4043 = vmatprep.subr.mxu0 0.0
    %4044 = vmatpush1.msra.mxu0 0.0
    %4045 = vmatprep.subr.mxu0 0.0
    %4046 = vmatpush1.msra.mxu0 0.0
    %4047 = vmatprep.subr.mxu0 0.0
    %4048 = vmatpush1.msra.mxu0 0.0
    %4049 = vmatprep.subr.mxu0 0.0
    %4050 = vmatpush1.msra.mxu0 0.0
    %4051 = vmatprep.subr.mxu0 0.0
    %4052 = vmatpush1.msra.mxu0 0.0
    %4053 = vmatprep.mubr.f32.mxu0 0.0
    %4054 = vmatmul.mubr.f32.gmra.mrb[0].mxu0 %v3972
    %v4055 = vpop.f32.mrb[0].mxu0
    %v4056 = vadd.f32 0.0, %v4055
    %v4057 = vpop.f32.mrb[0].mxu0
    %4058 = vmatprep.mubr.f32.mxu0 0.0
    %4059 = vmatmul.mubr.f32.gmra.mrb[0].mxu0 %v3975
    %v4060 = vpop.f32.mrb[0].mxu0
    %v4061 = vadd.f32 0.0, %v4060
    %v4062 = vpop.f32.mrb[0].mxu0
    %4063 = vmatprep.mubr.f32.mxu0 0.0
    %4064 = vmatmul.mubr.f32.gmra.mrb[0].mxu0 %v3978
    %v4065 = vpop.f32.mrb[0].mxu0
    %v4066 = vadd.f32 0.0, %v4065
    %v4067 = vpop.f32.mrb[0].mxu0
    %4068 = vmatprep.mubr.f32.mxu0 0.0
    %4069 = vmatmul.mubr.f32.gmra.mrb[0].mxu0 %v3981
    %v4070 = vpop.f32.mrb[0].mxu0
    %v4071 = vadd.f32 0.0, %v4070
    %v4072 = vpop.f32.mrb[0].mxu0
    %4073 = vmatprep.mubr.f32.mxu0 0.0
    %4074 = vmatmul.mubr.f32.gmra.mrb[0].mxu0 %v3984
    %v4075 = vpop.f32.mrb[0].mxu0
    %v4076 = vadd.f32 0.0, %v4075
    %v4077 = vpop.f32.mrb[0].mxu0
    %4078 = vmatprep.mubr.f32.mxu0 0.0
    %4079 = vmatmul.mubr.f32.gmra.mrb[0].mxu0 %v3987
    %v4080 = vpop.f32.mrb[0].mxu0
    %v4081 = vadd.f32 0.0, %v4080
    %v4082 = vpop.f32.mrb[0].mxu0
    %4083 = vdwg.mxu0
    %v4084 = vmax.f32 %v4056, 0.0
    %v4085 = vmax.f32 %v4061, 0.0
    %v4086 = vmax.f32 %v4066, 0.0
    %v4087 = vmax.f32 %v4071, 0.0
    %v4088 = vmax.f32 %v4076, 0.0
    %v4089 = vmax.f32 %v4081, 0.0
    %4090 = vst.msk [vmem:[#allocation2 + $0x4] sm:$0xff] %vm248, %v4084
    %4091 = vst.msk [vmem:[#allocation2 + $0xc] sm:$0xff] %vm248, %v4085
    %4092 = vst.msk [vmem:[#allocation2 + $0x14] sm:$0xff] %vm248, %v4086
    %4093 = vst.msk [vmem:[#allocation2 + $0x1c] sm:$0xff] %vm248, %v4087
    %4094 = vst.msk [vmem:[#allocation2 + $0x24] sm:$0xff] %vm248, %v4088
    %4095 = vst.msk [vmem:[#allocation2 + $0x2c] sm:$0xff] %vm248, %v4089
    %v4096 = vld [vmem:[#allocation2] sm:$0xff]
    %v4097 = vld [vmem:[#allocation2 + $0x8] sm:$0xff]
    %v4098 = vld [vmem:[#allocation2 + $0x10] sm:$0xff]
    %v4099 = vld [vmem:[#allocation2 + $0x18] sm:$0xff]
    %v4100 = vld [vmem:[#allocation2 + $0x20] sm:$0xff]
    %v4101 = vld [vmem:[#allocation2 + $0x28] sm:$0xff]
    %v4102 = vld [vmem:[%s14] sm:$0xff]
    %v4103 = vld [vmem:[%s14 + $0x8] sm:$0xff]
    %v4104 = vld [vmem:[#allocation2 + $0x2] sm:$0xff]
    %v4105 = vld [vmem:[#allocation2 + $0xa] sm:$0xff]
    %v4106 = vld [vmem:[#allocation2 + $0x12] sm:$0xff]
    %v4107 = vld [vmem:[#allocation2 + $0x1a] sm:$0xff]
    %v4108 = vld [vmem:[#allocation2 + $0x22] sm:$0xff]
    %v4109 = vld [vmem:[#allocation2 + $0x2a] sm:$0xff]
    %v4110 = vld [vmem:[%s14 + $0x10] sm:$0xff]
    %v4111 = vld [vmem:[%s14 + $0x18] sm:$0xff]
    %v4113 = vsel %vm248, %v4104, 0
    %v4116 = vsel %vm248, %v4105, 0
    %v4119 = vsel %vm248, %v4106, 0
    %v4122 = vsel %vm248, %v4107, 0
    %v4125 = vsel %vm248, %v4108, 0
    %v4128 = vsel %vm248, %v4109, 0
    %4130 = vmatprep.subr.mxu0 0.0
    %4131 = vmatpush1.msra.mxu0 %v4110
    %4132 = vmatprep.subr.mxu0 0.0
    %4133 = vmatpush1.msra.mxu0 %v4111
    %4134 = vmatprep.subr.mxu0 0.0
    %4135 = vmatpush1.msra.mxu0 0.0
    %4136 = vmatprep.subr.mxu0 0.0
    %4137 = vmatpush1.msra.mxu0 0.0
    %4138 = vmatprep.subr.mxu0 0.0
    %4139 = vmatpush1.msra.mxu0 0.0
    %4140 = vmatprep.subr.mxu0 0.0
    %4141 = vmatpush1.msra.mxu0 0.0
    %4142 = vmatprep.subr.mxu0 0.0
    %4143 = vmatpush1.msra.mxu0 0.0
    %4144 = vmatprep.subr.mxu0 0.0
    %4145 = vmatpush1.msra.mxu0 0.0
    %4146 = vmatprep.subr.mxu0 0.0
    %4147 = vmatpush1.msra.mxu0 0.0
    %4148 = vmatprep.subr.mxu0 0.0
    %4149 = vmatpush1.msra.mxu0 0.0
    %4150 = vmatprep.subr.mxu0 0.0
    %4151 = vmatpush1.msra.mxu0 0.0
    %4152 = vmatprep.subr.mxu0 0.0
    %4153 = vmatpush1.msra.mxu0 0.0
    %4154 = vmatprep.subr.mxu0 0.0
    %4155 = vmatpush1.msra.mxu0 0.0
    %4156 = vmatprep.subr.mxu0 0.0
    %4157 = vmatpush1.msra.mxu0 0.0
    %4158 = vmatprep.subr.mxu0 0.0
    %4159 = vmatpush1.msra.mxu0 0.0
    %4160 = vmatprep.subr.mxu0 0.0
    %4161 = vmatpush1.msra.mxu0 0.0
    %4162 = vmatprep.subr.mxu0 0.0
    %4163 = vmatpush1.msra.mxu0 0.0
    %4164 = vmatprep.subr.mxu0 0.0
    %4165 = vmatpush1.msra.mxu0 0.0
    %4166 = vmatprep.subr.mxu0 0.0
    %4167 = vmatpush1.msra.mxu0 0.0
    %4168 = vmatprep.subr.mxu0 0.0
    %4169 = vmatpush1.msra.mxu0 0.0
    %4170 = vmatprep.subr.mxu0 0.0
    %4171 = vmatpush1.msra.mxu0 0.0
    %4172 = vmatprep.subr.mxu0 0.0
    %4173 = vmatpush1.msra.mxu0 0.0
    %4174 = vmatprep.subr.mxu0 0.0
    %4175 = vmatpush1.msra.mxu0 0.0
    %4176 = vmatprep.subr.mxu0 0.0
    %4177 = vmatpush1.msra.mxu0 0.0
    %4178 = vmatprep.subr.mxu0 0.0
    %4179 = vmatpush1.msra.mxu0 0.0
    %4180 = vmatprep.subr.mxu0 0.0
    %4181 = vmatpush1.msra.mxu0 0.0
    %4182 = vmatprep.subr.mxu0 0.0
    %4183 = vmatpush1.msra.mxu0 0.0
    %4184 = vmatprep.subr.mxu0 0.0
    %4185 = vmatpush1.msra.mxu0 0.0
    %4186 = vmatprep.subr.mxu0 0.0
    %4187 = vmatpush1.msra.mxu0 0.0
    %4188 = vmatprep.subr.mxu0 0.0
    %4189 = vmatpush1.msra.mxu0 0.0
    %4190 = vmatprep.subr.mxu0 0.0
    %4191 = vmatpush1.msra.mxu0 0.0
    %4192 = vmatprep.subr.mxu0 0.0
    %4193 = vmatpush1.msra.mxu0 0.0
    %4194 = vmatprep.mubr.f32.mxu0 0.0
    %4195 = vmatmul.mubr.f32.gmra.mrb[0].mxu0 %v4113
    %v4196 = vpop.f32.mrb[0].mxu0
    %v4197 = vadd.f32 0.0, %v4196
    %v4198 = vpop.f32.mrb[0].mxu0
    %4199 = vmatprep.mubr.f32.mxu0 0.0
    %4200 = vmatmul.mubr.f32.gmra.mrb[0].mxu0 %v4116
    %v4201 = vpop.f32.mrb[0].mxu0
    %v4202 = vadd.f32 0.0, %v4201
    %v4203 = vpop.f32.mrb[0].mxu0
    %4204 = vmatprep.mubr.f32.mxu0 0.0
    %4205 = vmatmul.mubr.f32.gmra.mrb[0].mxu0 %v4119
    %v4206 = vpop.f32.mrb[0].mxu0
    %v4207 = vadd.f32 0.0, %v4206
    %v4208 = vpop.f32.mrb[0].mxu0
    %4209 = vmatprep.mubr.f32.mxu0 0.0
    %4210 = vmatmul.mubr.f32.gmra.mrb[0].mxu0 %v4122
    %v4211 = vpop.f32.mrb[0].mxu0
    %v4212 = vadd.f32 0.0, %v4211
    %v4213 = vpop.f32.mrb[0].mxu0
    %4214 = vmatprep.mubr.f32.mxu0 0.0
    %4215 = vmatmul.mubr.f32.gmra.mrb[0].mxu0 %v4125
    %v4216 = vpop.f32.mrb[0].mxu0
    %v4217 = vadd.f32 0.0, %v4216
    %v4218 = vpop.f32.mrb[0].mxu0
    %4219 = vmatprep.mubr.f32.mxu0 0.0
    %4220 = vmatmul.mubr.f32.gmra.mrb[0].mxu0 %v4128
    %v4221 = vpop.f32.mrb[0].mxu0
    %v4222 = vadd.f32 0.0, %v4221
    %v4223 = vpop.f32.mrb[0].mxu0
    %4224 = vdwg.mxu0
    %v4226 = vsel %vm248, %v4096, 0
    %v4229 = vsel %vm248, %v4097, 0
    %v4232 = vsel %vm248, %v4098, 0
    %v4235 = vsel %vm248, %v4099, 0
    %v4238 = vsel %vm248, %v4100, 0
    %v4241 = vsel %vm248, %v4101, 0
    %4243 = vmatprep.subr.mxu0 0.0
    %4244 = vmatpush1.msra.mxu0 %v4102
    %4245 = vmatprep.subr.mxu0 0.0
    %4246 = vmatpush1.msra.mxu0 %v4103
    %4247 = vmatprep.subr.mxu0 0.0
    %4248 = vmatpush1.msra.mxu0 0.0
    %4249 = vmatprep.subr.mxu0 0.0
    %4250 = vmatpush1.msra.mxu0 0.0
    %4251 = vmatprep.subr.mxu0 0.0
    %4252 = vmatpush1.msra.mxu0 0.0
    %4253 = vmatprep.subr.mxu0 0.0
    %4254 = vmatpush1.msra.mxu0 0.0
    %4255 = vmatprep.subr.mxu0 0.0
    %4256 = vmatpush1.msra.mxu0 0.0
    %4257 = vmatprep.subr.mxu0 0.0
    %4258 = vmatpush1.msra.mxu0 0.0
    %4259 = vmatprep.subr.mxu0 0.0
    %4260 = vmatpush1.msra.mxu0 0.0
    %4261 = vmatprep.subr.mxu0 0.0
    %4262 = vmatpush1.msra.mxu0 0.0
    %4263 = vmatprep.subr.mxu0 0.0
    %4264 = vmatpush1.msra.mxu0 0.0
    %4265 = vmatprep.subr.mxu0 0.0
    %4266 = vmatpush1.msra.mxu0 0.0
    %4267 = vmatprep.subr.mxu0 0.0
    %4268 = vmatpush1.msra.mxu0 0.0
    %4269 = vmatprep.subr.mxu0 0.0
    %4270 = vmatpush1.msra.mxu0 0.0
    %4271 = vmatprep.subr.mxu0 0.0
    %4272 = vmatpush1.msra.mxu0 0.0
    %4273 = vmatprep.subr.mxu0 0.0
    %4274 = vmatpush1.msra.mxu0 0.0
    %4275 = vmatprep.subr.mxu0 0.0
    %4276 = vmatpush1.msra.mxu0 0.0
    %4277 = vmatprep.subr.mxu0 0.0
    %4278 = vmatpush1.msra.mxu0 0.0
    %4279 = vmatprep.subr.mxu0 0.0
    %4280 = vmatpush1.msra.mxu0 0.0
    %4281 = vmatprep.subr.mxu0 0.0
    %4282 = vmatpush1.msra.mxu0 0.0
    %4283 = vmatprep.subr.mxu0 0.0
    %4284 = vmatpush1.msra.mxu0 0.0
    %4285 = vmatprep.subr.mxu0 0.0
    %4286 = vmatpush1.msra.mxu0 0.0
    %4287 = vmatprep.subr.mxu0 0.0
    %4288 = vmatpush1.msra.mxu0 0.0
    %4289 = vmatprep.subr.mxu0 0.0
    %4290 = vmatpush1.msra.mxu0 0.0
    %4291 = vmatprep.subr.mxu0 0.0
    %4292 = vmatpush1.msra.mxu0 0.0
    %4293 = vmatprep.subr.mxu0 0.0
    %4294 = vmatpush1.msra.mxu0 0.0
    %4295 = vmatprep.subr.mxu0 0.0
    %4296 = vmatpush1.msra.mxu0 0.0
    %4297 = vmatprep.subr.mxu0 0.0
    %4298 = vmatpush1.msra.mxu0 0.0
    %4299 = vmatprep.subr.mxu0 0.0
    %4300 = vmatpush1.msra.mxu0 0.0
    %4301 = vmatprep.subr.mxu0 0.0
    %4302 = vmatpush1.msra.mxu0 0.0
    %4303 = vmatprep.subr.mxu0 0.0
    %4304 = vmatpush1.msra.mxu0 0.0
    %4305 = vmatprep.subr.mxu0 0.0
    %4306 = vmatpush1.msra.mxu0 0.0
    %4307 = vmatprep.mubr.f32.mxu0 0.0
    %4308 = vmatmul.mubr.f32.gmra.mrb[0].mxu0 %v4226
    %v4309 = vpop.f32.mrb[0].mxu0
    %v4310 = vadd.f32 %v4197, %v4309
    %v4311 = vpop.f32.mrb[0].mxu0
    %4312 = vmatprep.mubr.f32.mxu0 0.0
    %4313 = vmatmul.mubr.f32.gmra.mrb[0].mxu0 %v4229
    %v4314 = vpop.f32.mrb[0].mxu0
    %v4315 = vadd.f32 %v4202, %v4314
    %v4316 = vpop.f32.mrb[0].mxu0
    %4317 = vmatprep.mubr.f32.mxu0 0.0
    %4318 = vmatmul.mubr.f32.gmra.mrb[0].mxu0 %v4232
    %v4319 = vpop.f32.mrb[0].mxu0
    %v4320 = vadd.f32 %v4207, %v4319
    %v4321 = vpop.f32.mrb[0].mxu0
    %4322 = vmatprep.mubr.f32.mxu0 0.0
    %4323 = vmatmul.mubr.f32.gmra.mrb[0].mxu0 %v4235
    %v4324 = vpop.f32.mrb[0].mxu0
    %v4325 = vadd.f32 %v4212, %v4324
    %v4326 = vpop.f32.mrb[0].mxu0
    %4327 = vmatprep.mubr.f32.mxu0 0.0
    %4328 = vmatmul.mubr.f32.gmra.mrb[0].mxu0 %v4238
    %v4329 = vpop.f32.mrb[0].mxu0
    %v4330 = vadd.f32 %v4217, %v4329
    %v4331 = vpop.f32.mrb[0].mxu0
    %4332 = vmatprep.mubr.f32.mxu0 0.0
    %4333 = vmatmul.mubr.f32.gmra.mrb[0].mxu0 %v4241
    %v4334 = vpop.f32.mrb[0].mxu0
    %v4335 = vadd.f32 %v4222, %v4334
    %v4336 = vpop.f32.mrb[0].mxu0
    %4337 = vdwg.mxu0
    %v4338 = vld [vmem:[#allocation2 + $0x3] sm:$0xff]
    %v4339 = vld [vmem:[#allocation2 + $0xb] sm:$0xff]
    %v4340 = vld [vmem:[#allocation2 + $0x13] sm:$0xff]
    %v4341 = vld [vmem:[#allocation2 + $0x1b] sm:$0xff]
    %v4342 = vld [vmem:[#allocation2 + $0x23] sm:$0xff]
    %v4343 = vld [vmem:[#allocation2 + $0x2b] sm:$0xff]
    %v4344 = vld [vmem:[%s14 + $0x20] sm:$0xff]
    %v4345 = vld [vmem:[%s14 + $0x28] sm:$0xff]
    %v4347 = vsel %vm248, %v4338, 0
    %v4350 = vsel %vm248, %v4339, 0
    %v4353 = vsel %vm248, %v4340, 0
    %v4356 = vsel %vm248, %v4341, 0
    %v4359 = vsel %vm248, %v4342, 0
    %v4362 = vsel %vm248, %v4343, 0
    %4364 = vmatprep.subr.mxu0 0.0
    %4365 = vmatpush1.msra.mxu0 %v4344
    %4366 = vmatprep.subr.mxu0 0.0
    %4367 = vmatpush1.msra.mxu0 %v4345
    %4368 = vmatprep.subr.mxu0 0.0
    %4369 = vmatpush1.msra.mxu0 0.0
    %4370 = vmatprep.subr.mxu0 0.0
    %4371 = vmatpush1.msra.mxu0 0.0
    %4372 = vmatprep.subr.mxu0 0.0
    %4373 = vmatpush1.msra.mxu0 0.0
    %4374 = vmatprep.subr.mxu0 0.0
    %4375 = vmatpush1.msra.mxu0 0.0
    %4376 = vmatprep.subr.mxu0 0.0
    %4377 = vmatpush1.msra.mxu0 0.0
    %4378 = vmatprep.subr.mxu0 0.0
    %4379 = vmatpush1.msra.mxu0 0.0
    %4380 = vmatprep.subr.mxu0 0.0
    %4381 = vmatpush1.msra.mxu0 0.0
    %4382 = vmatprep.subr.mxu0 0.0
    %4383 = vmatpush1.msra.mxu0 0.0
    %4384 = vmatprep.subr.mxu0 0.0
    %4385 = vmatpush1.msra.mxu0 0.0
    %4386 = vmatprep.subr.mxu0 0.0
    %4387 = vmatpush1.msra.mxu0 0.0
    %4388 = vmatprep.subr.mxu0 0.0
    %4389 = vmatpush1.msra.mxu0 0.0
    %4390 = vmatprep.subr.mxu0 0.0
    %4391 = vmatpush1.msra.mxu0 0.0
    %4392 = vmatprep.subr.mxu0 0.0
    %4393 = vmatpush1.msra.mxu0 0.0
    %4394 = vmatprep.subr.mxu0 0.0
    %4395 = vmatpush1.msra.mxu0 0.0
    %4396 = vmatprep.subr.mxu0 0.0
    %4397 = vmatpush1.msra.mxu0 0.0
    %4398 = vmatprep.subr.mxu0 0.0
    %4399 = vmatpush1.msra.mxu0 0.0
    %4400 = vmatprep.subr.mxu0 0.0
    %4401 = vmatpush1.msra.mxu0 0.0
    %4402 = vmatprep.subr.mxu0 0.0
    %4403 = vmatpush1.msra.mxu0 0.0
    %4404 = vmatprep.subr.mxu0 0.0
    %4405 = vmatpush1.msra.mxu0 0.0
    %4406 = vmatprep.subr.mxu0 0.0
    %4407 = vmatpush1.msra.mxu0 0.0
    %4408 = vmatprep.subr.mxu0 0.0
    %4409 = vmatpush1.msra.mxu0 0.0
    %4410 = vmatprep.subr.mxu0 0.0
    %4411 = vmatpush1.msra.mxu0 0.0
    %4412 = vmatprep.subr.mxu0 0.0
    %4413 = vmatpush1.msra.mxu0 0.0
    %4414 = vmatprep.subr.mxu0 0.0
    %4415 = vmatpush1.msra.mxu0 0.0
    %4416 = vmatprep.subr.mxu0 0.0
    %4417 = vmatpush1.msra.mxu0 0.0
    %4418 = vmatprep.subr.mxu0 0.0
    %4419 = vmatpush1.msra.mxu0 0.0
    %4420 = vmatprep.subr.mxu0 0.0
    %4421 = vmatpush1.msra.mxu0 0.0
    %4422 = vmatprep.subr.mxu0 0.0
    %4423 = vmatpush1.msra.mxu0 0.0
    %4424 = vmatprep.subr.mxu0 0.0
    %4425 = vmatpush1.msra.mxu0 0.0
    %4426 = vmatprep.subr.mxu0 0.0
    %4427 = vmatpush1.msra.mxu0 0.0
    %4428 = vmatprep.mubr.f32.mxu0 0.0
    %4429 = vmatmul.mubr.f32.gmra.mrb[0].mxu0 %v4347
    %v4430 = vpop.f32.mrb[0].mxu0
    %v4431 = vadd.f32 0.0, %v4430
    %v4432 = vpop.f32.mrb[0].mxu0
    %4433 = vmatprep.mubr.f32.mxu0 0.0
    %4434 = vmatmul.mubr.f32.gmra.mrb[0].mxu0 %v4350
    %v4435 = vpop.f32.mrb[0].mxu0
    %v4436 = vadd.f32 0.0, %v4435
    %v4437 = vpop.f32.mrb[0].mxu0
    %4438 = vmatprep.mubr.f32.mxu0 0.0
    %4439 = vmatmul.mubr.f32.gmra.mrb[0].mxu0 %v4353
    %v4440 = vpop.f32.mrb[0].mxu0
    %v4441 = vadd.f32 0.0, %v4440
    %v4442 = vpop.f32.mrb[0].mxu0
    %4443 = vmatprep.mubr.f32.mxu0 0.0
    %4444 = vmatmul.mubr.f32.gmra.mrb[0].mxu0 %v4356
    %v4445 = vpop.f32.mrb[0].mxu0
    %v4446 = vadd.f32 0.0, %v4445
    %v4447 = vpop.f32.mrb[0].mxu0
    %4448 = vmatprep.mubr.f32.mxu0 0.0
    %4449 = vmatmul.mubr.f32.gmra.mrb[0].mxu0 %v4359
    %v4450 = vpop.f32.mrb[0].mxu0
    %v4451 = vadd.f32 0.0, %v4450
    %v4452 = vpop.f32.mrb[0].mxu0
    %4453 = vmatprep.mubr.f32.mxu0 0.0
    %4454 = vmatmul.mubr.f32.gmra.mrb[0].mxu0 %v4362
    %v4455 = vpop.f32.mrb[0].mxu0
    %v4456 = vadd.f32 0.0, %v4455
    %v4457 = vpop.f32.mrb[0].mxu0
    %4458 = vdwg.mxu0
    %v4459 = vadd.f32 %v4310, %v4431
    %v4460 = vadd.f32 %v4315, %v4436
    %v4461 = vadd.f32 %v4320, %v4441
    %v4462 = vadd.f32 %v4325, %v4446
    %v4463 = vadd.f32 %v4330, %v4451
    %v4464 = vadd.f32 %v4335, %v4456
    %v4465 = vld [vmem:[#allocation2 + $0x4] sm:$0xff]
    %v4466 = vld [vmem:[#allocation2 + $0xc] sm:$0xff]
    %v4467 = vld [vmem:[#allocation2 + $0x14] sm:$0xff]
    %v4468 = vld [vmem:[#allocation2 + $0x1c] sm:$0xff]
    %v4469 = vld [vmem:[#allocation2 + $0x24] sm:$0xff]
    %v4470 = vld [vmem:[#allocation2 + $0x2c] sm:$0xff]
    %v4471 = vld [vmem:[%s14 + $0x30] sm:$0xff]
    %v4472 = vld [vmem:[%s14 + $0x38] sm:$0xff]
    %v4474 = vsel %vm248, %v4465, 0
    %v4477 = vsel %vm248, %v4466, 0
    %v4480 = vsel %vm248, %v4467, 0
    %v4483 = vsel %vm248, %v4468, 0
    %v4486 = vsel %vm248, %v4469, 0
    %v4489 = vsel %vm248, %v4470, 0
    %4491 = vmatprep.subr.mxu0 0.0
    %4492 = vmatpush1.msra.mxu0 %v4471
    %4493 = vmatprep.subr.mxu0 0.0
    %4494 = vmatpush1.msra.mxu0 %v4472
    %4495 = vmatprep.subr.mxu0 0.0
    %4496 = vmatpush1.msra.mxu0 0.0
    %4497 = vmatprep.subr.mxu0 0.0
    %4498 = vmatpush1.msra.mxu0 0.0
    %4499 = vmatprep.subr.mxu0 0.0
    %4500 = vmatpush1.msra.mxu0 0.0
    %4501 = vmatprep.subr.mxu0 0.0
    %4502 = vmatpush1.msra.mxu0 0.0
    %4503 = vmatprep.subr.mxu0 0.0
    %4504 = vmatpush1.msra.mxu0 0.0
    %4505 = vmatprep.subr.mxu0 0.0
    %4506 = vmatpush1.msra.mxu0 0.0
    %4507 = vmatprep.subr.mxu0 0.0
    %4508 = vmatpush1.msra.mxu0 0.0
    %4509 = vmatprep.subr.mxu0 0.0
    %4510 = vmatpush1.msra.mxu0 0.0
    %4511 = vmatprep.subr.mxu0 0.0
    %4512 = vmatpush1.msra.mxu0 0.0
    %4513 = vmatprep.subr.mxu0 0.0
    %4514 = vmatpush1.msra.mxu0 0.0
    %4515 = vmatprep.subr.mxu0 0.0
    %4516 = vmatpush1.msra.mxu0 0.0
    %4517 = vmatprep.subr.mxu0 0.0
    %4518 = vmatpush1.msra.mxu0 0.0
    %4519 = vmatprep.subr.mxu0 0.0
    %4520 = vmatpush1.msra.mxu0 0.0
    %4521 = vmatprep.subr.mxu0 0.0
    %4522 = vmatpush1.msra.mxu0 0.0
    %4523 = vmatprep.subr.mxu0 0.0
    %4524 = vmatpush1.msra.mxu0 0.0
    %4525 = vmatprep.subr.mxu0 0.0
    %4526 = vmatpush1.msra.mxu0 0.0
    %4527 = vmatprep.subr.mxu0 0.0
    %4528 = vmatpush1.msra.mxu0 0.0
    %4529 = vmatprep.subr.mxu0 0.0
    %4530 = vmatpush1.msra.mxu0 0.0
    %4531 = vmatprep.subr.mxu0 0.0
    %4532 = vmatpush1.msra.mxu0 0.0
    %4533 = vmatprep.subr.mxu0 0.0
    %4534 = vmatpush1.msra.mxu0 0.0
    %4535 = vmatprep.subr.mxu0 0.0
    %4536 = vmatpush1.msra.mxu0 0.0
    %4537 = vmatprep.subr.mxu0 0.0
    %4538 = vmatpush1.msra.mxu0 0.0
    %4539 = vmatprep.subr.mxu0 0.0
    %4540 = vmatpush1.msra.mxu0 0.0
    %4541 = vmatprep.subr.mxu0 0.0
    %4542 = vmatpush1.msra.mxu0 0.0
    %4543 = vmatprep.subr.mxu0 0.0
    %4544 = vmatpush1.msra.mxu0 0.0
    %4545 = vmatprep.subr.mxu0 0.0
    %4546 = vmatpush1.msra.mxu0 0.0
    %4547 = vmatprep.subr.mxu0 0.0
    %4548 = vmatpush1.msra.mxu0 0.0
    %4549 = vmatprep.subr.mxu0 0.0
    %4550 = vmatpush1.msra.mxu0 0.0
    %4551 = vmatprep.subr.mxu0 0.0
    %4552 = vmatpush1.msra.mxu0 0.0
    %4553 = vmatprep.subr.mxu0 0.0
    %4554 = vmatpush1.msra.mxu0 0.0
    %4555 = vmatprep.mubr.f32.mxu0 0.0
    %4556 = vmatmul.mubr.f32.gmra.mrb[0].mxu0 %v4474
    %v4557 = vpop.f32.mrb[0].mxu0
    %v4558 = vadd.f32 0.0, %v4557
    %v4559 = vpop.f32.mrb[0].mxu0
    %4560 = vmatprep.mubr.f32.mxu0 0.0
    %4561 = vmatmul.mubr.f32.gmra.mrb[0].mxu0 %v4477
    %v4562 = vpop.f32.mrb[0].mxu0
    %v4563 = vadd.f32 0.0, %v4562
    %v4564 = vpop.f32.mrb[0].mxu0
    %4565 = vmatprep.mubr.f32.mxu0 0.0
    %4566 = vmatmul.mubr.f32.gmra.mrb[0].mxu0 %v4480
    %v4567 = vpop.f32.mrb[0].mxu0
    %v4568 = vadd.f32 0.0, %v4567
    %v4569 = vpop.f32.mrb[0].mxu0
    %4570 = vmatprep.mubr.f32.mxu0 0.0
    %4571 = vmatmul.mubr.f32.gmra.mrb[0].mxu0 %v4483
    %v4572 = vpop.f32.mrb[0].mxu0
    %v4573 = vadd.f32 0.0, %v4572
    %v4574 = vpop.f32.mrb[0].mxu0
    %4575 = vmatprep.mubr.f32.mxu0 0.0
    %4576 = vmatmul.mubr.f32.gmra.mrb[0].mxu0 %v4486
    %v4577 = vpop.f32.mrb[0].mxu0
    %v4578 = vadd.f32 0.0, %v4577
    %v4579 = vpop.f32.mrb[0].mxu0
    %4580 = vmatprep.mubr.f32.mxu0 0.0
    %4581 = vmatmul.mubr.f32.gmra.mrb[0].mxu0 %v4489
    %v4582 = vpop.f32.mrb[0].mxu0
    %v4583 = vadd.f32 0.0, %v4582
    %v4584 = vpop.f32.mrb[0].mxu0
    %4585 = vdwg.mxu0
    %v4586 = vadd.f32 %v4459, %v4558
    %v4587 = vadd.f32 %v4460, %v4563
    %v4588 = vadd.f32 %v4461, %v4568
    %v4589 = vadd.f32 %v4462, %v4573
    %v4590 = vadd.f32 %v4463, %v4578
    %v4591 = vadd.f32 %v4464, %v4583
    %v4592 = vld [vmem:[#allocation2 + $0x5] sm:$0xff]
    %v4593 = vld [vmem:[#allocation2 + $0xd] sm:$0xff]
    %v4594 = vld [vmem:[#allocation2 + $0x15] sm:$0xff]
    %v4595 = vld [vmem:[#allocation2 + $0x1d] sm:$0xff]
    %v4596 = vld [vmem:[#allocation2 + $0x25] sm:$0xff]
    %v4597 = vld [vmem:[#allocation2 + $0x2d] sm:$0xff]
    %v4598 = vld [vmem:[%s14 + $0x40] sm:$0xff]
    %v4599 = vld [vmem:[%s14 + $0x48] sm:$0xff]
    %v4601 = vsel %vm248, %v4592, 0
    %v4604 = vsel %vm248, %v4593, 0
    %v4607 = vsel %vm248, %v4594, 0
    %v4610 = vsel %vm248, %v4595, 0
    %v4613 = vsel %vm248, %v4596, 0
    %v4616 = vsel %vm248, %v4597, 0
    %4618 = vmatprep.subr.mxu0 0.0
    %4619 = vmatpush1.msra.mxu0 %v4598
    %4620 = vmatprep.subr.mxu0 0.0
    %4621 = vmatpush1.msra.mxu0 %v4599
    %4622 = vmatprep.subr.mxu0 0.0
    %4623 = vmatpush1.msra.mxu0 0.0
    %4624 = vmatprep.subr.mxu0 0.0
    %4625 = vmatpush1.msra.mxu0 0.0
    %4626 = vmatprep.subr.mxu0 0.0
    %4627 = vmatpush1.msra.mxu0 0.0
    %4628 = vmatprep.subr.mxu0 0.0
    %4629 = vmatpush1.msra.mxu0 0.0
    %4630 = vmatprep.subr.mxu0 0.0
    %4631 = vmatpush1.msra.mxu0 0.0
    %4632 = vmatprep.subr.mxu0 0.0
    %4633 = vmatpush1.msra.mxu0 0.0
    %4634 = vmatprep.subr.mxu0 0.0
    %4635 = vmatpush1.msra.mxu0 0.0
    %4636 = vmatprep.subr.mxu0 0.0
    %4637 = vmatpush1.msra.mxu0 0.0
    %4638 = vmatprep.subr.mxu0 0.0
    %4639 = vmatpush1.msra.mxu0 0.0
    %4640 = vmatprep.subr.mxu0 0.0
    %4641 = vmatpush1.msra.mxu0 0.0
    %4642 = vmatprep.subr.mxu0 0.0
    %4643 = vmatpush1.msra.mxu0 0.0
    %4644 = vmatprep.subr.mxu0 0.0
    %4645 = vmatpush1.msra.mxu0 0.0
    %4646 = vmatprep.subr.mxu0 0.0
    %4647 = vmatpush1.msra.mxu0 0.0
    %4648 = vmatprep.subr.mxu0 0.0
    %4649 = vmatpush1.msra.mxu0 0.0
    %4650 = vmatprep.subr.mxu0 0.0
    %4651 = vmatpush1.msra.mxu0 0.0
    %4652 = vmatprep.subr.mxu0 0.0
    %4653 = vmatpush1.msra.mxu0 0.0
    %4654 = vmatprep.subr.mxu0 0.0
    %4655 = vmatpush1.msra.mxu0 0.0
    %4656 = vmatprep.subr.mxu0 0.0
    %4657 = vmatpush1.msra.mxu0 0.0
    %4658 = vmatprep.subr.mxu0 0.0
    %4659 = vmatpush1.msra.mxu0 0.0
    %4660 = vmatprep.subr.mxu0 0.0
    %4661 = vmatpush1.msra.mxu0 0.0
    %4662 = vmatprep.subr.mxu0 0.0
    %4663 = vmatpush1.msra.mxu0 0.0
    %4664 = vmatprep.subr.mxu0 0.0
    %4665 = vmatpush1.msra.mxu0 0.0
    %4666 = vmatprep.subr.mxu0 0.0
    %4667 = vmatpush1.msra.mxu0 0.0
    %4668 = vmatprep.subr.mxu0 0.0
    %4669 = vmatpush1.msra.mxu0 0.0
    %4670 = vmatprep.subr.mxu0 0.0
    %4671 = vmatpush1.msra.mxu0 0.0
    %4672 = vmatprep.subr.mxu0 0.0
    %4673 = vmatpush1.msra.mxu0 0.0
    %4674 = vmatprep.subr.mxu0 0.0
    %4675 = vmatpush1.msra.mxu0 0.0
    %4676 = vmatprep.subr.mxu0 0.0
    %4677 = vmatpush1.msra.mxu0 0.0
    %4678 = vmatprep.subr.mxu0 0.0
    %4679 = vmatpush1.msra.mxu0 0.0
    %4680 = vmatprep.subr.mxu0 0.0
    %4681 = vmatpush1.msra.mxu0 0.0
    %4682 = vmatprep.mubr.f32.mxu0 0.0
    %4683 = vmatmul.mubr.f32.gmra.mrb[0].mxu0 %v4601
    %v4684 = vpop.f32.mrb[0].mxu0
    %v4685 = vadd.f32 0.0, %v4684
    %v4686 = vpop.f32.mrb[0].mxu0
    %4687 = vmatprep.mubr.f32.mxu0 0.0
    %4688 = vmatmul.mubr.f32.gmra.mrb[0].mxu0 %v4604
    %v4689 = vpop.f32.mrb[0].mxu0
    %v4690 = vadd.f32 0.0, %v4689
    %v4691 = vpop.f32.mrb[0].mxu0
    %4692 = vmatprep.mubr.f32.mxu0 0.0
    %4693 = vmatmul.mubr.f32.gmra.mrb[0].mxu0 %v4607
    %v4694 = vpop.f32.mrb[0].mxu0
    %v4695 = vadd.f32 0.0, %v4694
    %v4696 = vpop.f32.mrb[0].mxu0
    %4697 = vmatprep.mubr.f32.mxu0 0.0
    %4698 = vmatmul.mubr.f32.gmra.mrb[0].mxu0 %v4610
    %v4699 = vpop.f32.mrb[0].mxu0
    %v4700 = vadd.f32 0.0, %v4699
    %v4701 = vpop.f32.mrb[0].mxu0
    %4702 = vmatprep.mubr.f32.mxu0 0.0
    %4703 = vmatmul.mubr.f32.gmra.mrb[0].mxu0 %v4613
    %v4704 = vpop.f32.mrb[0].mxu0
    %v4705 = vadd.f32 0.0, %v4704
    %v4706 = vpop.f32.mrb[0].mxu0
    %4707 = vmatprep.mubr.f32.mxu0 0.0
    %4708 = vmatmul.mubr.f32.gmra.mrb[0].mxu0 %v4616
    %v4709 = vpop.f32.mrb[0].mxu0
    %v4710 = vadd.f32 0.0, %v4709
    %v4711 = vpop.f32.mrb[0].mxu0
    %4712 = vdwg.mxu0
    %v4713 = vadd.f32 %v4586, %v4685
    %v4714 = vadd.f32 %v4587, %v4690
    %v4715 = vadd.f32 %v4588, %v4695
    %v4716 = vadd.f32 %v4589, %v4700
    %v4717 = vadd.f32 %v4590, %v4705
    %v4718 = vadd.f32 %v4591, %v4710
    %v4719 = vld [vmem:[#allocation2 + $0x6] sm:$0xff]
    %v4720 = vld [vmem:[#allocation2 + $0xe] sm:$0xff]
    %v4721 = vld [vmem:[#allocation2 + $0x16] sm:$0xff]
    %v4722 = vld [vmem:[#allocation2 + $0x1e] sm:$0xff]
    %v4723 = vld [vmem:[#allocation2 + $0x26] sm:$0xff]
    %v4724 = vld [vmem:[#allocation2 + $0x2e] sm:$0xff]
    %v4725 = vld [vmem:[%s14 + $0x50] sm:$0xff]
    %v4726 = vld [vmem:[%s14 + $0x58] sm:$0xff]
    %v4728 = vsel %vm248, %v4719, 0
    %v4731 = vsel %vm248, %v4720, 0
    %v4734 = vsel %vm248, %v4721, 0
    %v4737 = vsel %vm248, %v4722, 0
    %v4740 = vsel %vm248, %v4723, 0
    %v4743 = vsel %vm248, %v4724, 0
    %4745 = vmatprep.subr.mxu0 0.0
    %4746 = vmatpush1.msra.mxu0 %v4725
    %4747 = vmatprep.subr.mxu0 0.0
    %4748 = vmatpush1.msra.mxu0 %v4726
    %4749 = vmatprep.subr.mxu0 0.0
    %4750 = vmatpush1.msra.mxu0 0.0
    %4751 = vmatprep.subr.mxu0 0.0
    %4752 = vmatpush1.msra.mxu0 0.0
    %4753 = vmatprep.subr.mxu0 0.0
    %4754 = vmatpush1.msra.mxu0 0.0
    %4755 = vmatprep.subr.mxu0 0.0
    %4756 = vmatpush1.msra.mxu0 0.0
    %4757 = vmatprep.subr.mxu0 0.0
    %4758 = vmatpush1.msra.mxu0 0.0
    %4759 = vmatprep.subr.mxu0 0.0
    %4760 = vmatpush1.msra.mxu0 0.0
    %4761 = vmatprep.subr.mxu0 0.0
    %4762 = vmatpush1.msra.mxu0 0.0
    %4763 = vmatprep.subr.mxu0 0.0
    %4764 = vmatpush1.msra.mxu0 0.0
    %4765 = vmatprep.subr.mxu0 0.0
    %4766 = vmatpush1.msra.mxu0 0.0
    %4767 = vmatprep.subr.mxu0 0.0
    %4768 = vmatpush1.msra.mxu0 0.0
    %4769 = vmatprep.subr.mxu0 0.0
    %4770 = vmatpush1.msra.mxu0 0.0
    %4771 = vmatprep.subr.mxu0 0.0
    %4772 = vmatpush1.msra.mxu0 0.0
    %4773 = vmatprep.subr.mxu0 0.0
    %4774 = vmatpush1.msra.mxu0 0.0
    %4775 = vmatprep.subr.mxu0 0.0
    %4776 = vmatpush1.msra.mxu0 0.0
    %4777 = vmatprep.subr.mxu0 0.0
    %4778 = vmatpush1.msra.mxu0 0.0
    %4779 = vmatprep.subr.mxu0 0.0
    %4780 = vmatpush1.msra.mxu0 0.0
    %4781 = vmatprep.subr.mxu0 0.0
    %4782 = vmatpush1.msra.mxu0 0.0
    %4783 = vmatprep.subr.mxu0 0.0
    %4784 = vmatpush1.msra.mxu0 0.0
    %4785 = vmatprep.subr.mxu0 0.0
    %4786 = vmatpush1.msra.mxu0 0.0
    %4787 = vmatprep.subr.mxu0 0.0
    %4788 = vmatpush1.msra.mxu0 0.0
    %4789 = vmatprep.subr.mxu0 0.0
    %4790 = vmatpush1.msra.mxu0 0.0
    %4791 = vmatprep.subr.mxu0 0.0
    %4792 = vmatpush1.msra.mxu0 0.0
    %4793 = vmatprep.subr.mxu0 0.0
    %4794 = vmatpush1.msra.mxu0 0.0
    %4795 = vmatprep.subr.mxu0 0.0
    %4796 = vmatpush1.msra.mxu0 0.0
    %4797 = vmatprep.subr.mxu0 0.0
    %4798 = vmatpush1.msra.mxu0 0.0
    %4799 = vmatprep.subr.mxu0 0.0
    %4800 = vmatpush1.msra.mxu0 0.0
    %4801 = vmatprep.subr.mxu0 0.0
    %4802 = vmatpush1.msra.mxu0 0.0
    %4803 = vmatprep.subr.mxu0 0.0
    %4804 = vmatpush1.msra.mxu0 0.0
    %4805 = vmatprep.subr.mxu0 0.0
    %4806 = vmatpush1.msra.mxu0 0.0
    %4807 = vmatprep.subr.mxu0 0.0
    %4808 = vmatpush1.msra.mxu0 0.0
    %4809 = vmatprep.mubr.f32.mxu0 0.0
    %4810 = vmatmul.mubr.f32.gmra.mrb[0].mxu0 %v4728
    %v4811 = vpop.f32.mrb[0].mxu0
    %v4812 = vadd.f32 0.0, %v4811
    %v4813 = vpop.f32.mrb[0].mxu0
    %4814 = vmatprep.mubr.f32.mxu0 0.0
    %4815 = vmatmul.mubr.f32.gmra.mrb[0].mxu0 %v4731
    %v4816 = vpop.f32.mrb[0].mxu0
    %v4817 = vadd.f32 0.0, %v4816
    %v4818 = vpop.f32.mrb[0].mxu0
    %4819 = vmatprep.mubr.f32.mxu0 0.0
    %4820 = vmatmul.mubr.f32.gmra.mrb[0].mxu0 %v4734
    %v4821 = vpop.f32.mrb[0].mxu0
    %v4822 = vadd.f32 0.0, %v4821
    %v4823 = vpop.f32.mrb[0].mxu0
    %4824 = vmatprep.mubr.f32.mxu0 0.0
    %4825 = vmatmul.mubr.f32.gmra.mrb[0].mxu0 %v4737
    %v4826 = vpop.f32.mrb[0].mxu0
    %v4827 = vadd.f32 0.0, %v4826
    %v4828 = vpop.f32.mrb[0].mxu0
    %4829 = vmatprep.mubr.f32.mxu0 0.0
    %4830 = vmatmul.mubr.f32.gmra.mrb[0].mxu0 %v4740
    %v4831 = vpop.f32.mrb[0].mxu0
    %v4832 = vadd.f32 0.0, %v4831
    %v4833 = vpop.f32.mrb[0].mxu0
    %4834 = vmatprep.mubr.f32.mxu0 0.0
    %4835 = vmatmul.mubr.f32.gmra.mrb[0].mxu0 %v4743
    %v4836 = vpop.f32.mrb[0].mxu0
    %v4837 = vadd.f32 0.0, %v4836
    %v4838 = vpop.f32.mrb[0].mxu0
    %4839 = vdwg.mxu0
    %v4840 = vadd.f32 %v4713, %v4812
    %v4841 = vadd.f32 %v4714, %v4817
    %v4842 = vadd.f32 %v4715, %v4822
    %v4843 = vadd.f32 %v4716, %v4827
    %v4844 = vadd.f32 %v4717, %v4832
    %v4845 = vadd.f32 %v4718, %v4837
    %v4846 = vld [vmem:[#allocation2 + $0x8] sm:$0xff]
    %v4847 = vld [vmem:[#allocation2 + $0x10] sm:$0xff]
    %v4848 = vld [vmem:[#allocation2 + $0x18] sm:$0xff]
    %v4849 = vld [vmem:[#allocation2 + $0x20] sm:$0xff]
    %v4850 = vld [vmem:[#allocation2 + $0x28] sm:$0xff]
    %v4851 = vld [vmem:[#allocation2 + $0x30] sm:$0xff]
    %v4852 = vld [vmem:[%s14 + $0x60] sm:$0xff]
    %v4853 = vld [vmem:[%s14 + $0x68] sm:$0xff]
    %v4855 = vsel %vm248, %v4846, 0
    %v4858 = vsel %vm248, %v4847, 0
    %v4861 = vsel %vm248, %v4848, 0
    %v4864 = vsel %vm248, %v4849, 0
    %v4867 = vsel %vm248, %v4850, 0
    %v4870 = vsel %vm248, %v4851, 0
    %4872 = vmatprep.subr.mxu0 0.0
    %4873 = vmatpush1.msra.mxu0 %v4852
    %4874 = vmatprep.subr.mxu0 0.0
    %4875 = vmatpush1.msra.mxu0 %v4853
    %4876 = vmatprep.subr.mxu0 0.0
    %4877 = vmatpush1.msra.mxu0 0.0
    %4878 = vmatprep.subr.mxu0 0.0
    %4879 = vmatpush1.msra.mxu0 0.0
    %4880 = vmatprep.subr.mxu0 0.0
    %4881 = vmatpush1.msra.mxu0 0.0
    %4882 = vmatprep.subr.mxu0 0.0
    %4883 = vmatpush1.msra.mxu0 0.0
    %4884 = vmatprep.subr.mxu0 0.0
    %4885 = vmatpush1.msra.mxu0 0.0
    %4886 = vmatprep.subr.mxu0 0.0
    %4887 = vmatpush1.msra.mxu0 0.0
    %4888 = vmatprep.subr.mxu0 0.0
    %4889 = vmatpush1.msra.mxu0 0.0
    %4890 = vmatprep.subr.mxu0 0.0
    %4891 = vmatpush1.msra.mxu0 0.0
    %4892 = vmatprep.subr.mxu0 0.0
    %4893 = vmatpush1.msra.mxu0 0.0
    %4894 = vmatprep.subr.mxu0 0.0
    %4895 = vmatpush1.msra.mxu0 0.0
    %4896 = vmatprep.subr.mxu0 0.0
    %4897 = vmatpush1.msra.mxu0 0.0
    %4898 = vmatprep.subr.mxu0 0.0
    %4899 = vmatpush1.msra.mxu0 0.0
    %4900 = vmatprep.subr.mxu0 0.0
    %4901 = vmatpush1.msra.mxu0 0.0
    %4902 = vmatprep.subr.mxu0 0.0
    %4903 = vmatpush1.msra.mxu0 0.0
    %4904 = vmatprep.subr.mxu0 0.0
    %4905 = vmatpush1.msra.mxu0 0.0
    %4906 = vmatprep.subr.mxu0 0.0
    %4907 = vmatpush1.msra.mxu0 0.0
    %4908 = vmatprep.subr.mxu0 0.0
    %4909 = vmatpush1.msra.mxu0 0.0
    %4910 = vmatprep.subr.mxu0 0.0
    %4911 = vmatpush1.msra.mxu0 0.0
    %4912 = vmatprep.subr.mxu0 0.0
    %4913 = vmatpush1.msra.mxu0 0.0
    %4914 = vmatprep.subr.mxu0 0.0
    %4915 = vmatpush1.msra.mxu0 0.0
    %4916 = vmatprep.subr.mxu0 0.0
    %4917 = vmatpush1.msra.mxu0 0.0
    %4918 = vmatprep.subr.mxu0 0.0
    %4919 = vmatpush1.msra.mxu0 0.0
    %4920 = vmatprep.subr.mxu0 0.0
    %4921 = vmatpush1.msra.mxu0 0.0
    %4922 = vmatprep.subr.mxu0 0.0
    %4923 = vmatpush1.msra.mxu0 0.0
    %4924 = vmatprep.subr.mxu0 0.0
    %4925 = vmatpush1.msra.mxu0 0.0
    %4926 = vmatprep.subr.mxu0 0.0
    %4927 = vmatpush1.msra.mxu0 0.0
    %4928 = vmatprep.subr.mxu0 0.0
    %4929 = vmatpush1.msra.mxu0 0.0
    %4930 = vmatprep.subr.mxu0 0.0
    %4931 = vmatpush1.msra.mxu0 0.0
    %4932 = vmatprep.subr.mxu0 0.0
    %4933 = vmatpush1.msra.mxu0 0.0
    %4934 = vmatprep.subr.mxu0 0.0
    %4935 = vmatpush1.msra.mxu0 0.0
    %4936 = vmatprep.mubr.f32.mxu0 0.0
    %4937 = vmatmul.mubr.f32.gmra.mrb[0].mxu0 %v4855
    %v4938 = vpop.f32.mrb[0].mxu0
    %v4939 = vadd.f32 0.0, %v4938
    %v4940 = vpop.f32.mrb[0].mxu0
    %4941 = vmatprep.mubr.f32.mxu0 0.0
    %4942 = vmatmul.mubr.f32.gmra.mrb[0].mxu0 %v4858
    %v4943 = vpop.f32.mrb[0].mxu0
    %v4944 = vadd.f32 0.0, %v4943
    %v4945 = vpop.f32.mrb[0].mxu0
    %4946 = vmatprep.mubr.f32.mxu0 0.0
    %4947 = vmatmul.mubr.f32.gmra.mrb[0].mxu0 %v4861
    %v4948 = vpop.f32.mrb[0].mxu0
    %v4949 = vadd.f32 0.0, %v4948
    %v4950 = vpop.f32.mrb[0].mxu0
    %4951 = vmatprep.mubr.f32.mxu0 0.0
    %4952 = vmatmul.mubr.f32.gmra.mrb[0].mxu0 %v4864
    %v4953 = vpop.f32.mrb[0].mxu0
    %v4954 = vadd.f32 0.0, %v4953
    %v4955 = vpop.f32.mrb[0].mxu0
    %4956 = vmatprep.mubr.f32.mxu0 0.0
    %4957 = vmatmul.mubr.f32.gmra.mrb[0].mxu0 %v4867
    %v4958 = vpop.f32.mrb[0].mxu0
    %v4959 = vadd.f32 0.0, %v4958
    %v4960 = vpop.f32.mrb[0].mxu0
    %4961 = vmatprep.mubr.f32.mxu0 0.0
    %4962 = vmatmul.mubr.f32.gmra.mrb[0].mxu0 %v4870
    %v4963 = vpop.f32.mrb[0].mxu0
    %v4964 = vadd.f32 0.0, %v4963
    %v4965 = vpop.f32.mrb[0].mxu0
    %4966 = vdwg.mxu0
    %v4967 = vadd.f32 %v4840, %v4939
    %v4968 = vadd.f32 %v4841, %v4944
    %v4969 = vadd.f32 %v4842, %v4949
    %v4970 = vadd.f32 %v4843, %v4954
    %v4971 = vadd.f32 %v4844, %v4959
    %v4972 = vadd.f32 %v4845, %v4964
    %v4973 = vld [vmem:[%s15] sm:$0x1]
    %v4975 = vlaneseq
    %v4976 = vshrl.u32 %v4975, 7
    %v4977 = vsub.s32 0, %v4976
    %v4978 = vrot.slane %v4973, %v4977
    %v4980 = vadd.f32 %v4967, %v4978
    %v4981 = vadd.f32 %v4968, %v4978
    %v4982 = vadd.f32 %v4969, %v4978
    %v4983 = vadd.f32 %v4970, %v4978
    %v4984 = vadd.f32 %v4971, %v4978
    %v4985 = vadd.f32 %v4972, %v4978
    %v4986 = vmax.f32 %v4980, 0.0
    %v4987 = vmax.f32 %v4981, 0.0
    %v4988 = vmax.f32 %v4982, 0.0
    %v4989 = vmax.f32 %v4983, 0.0
    %v4990 = vmax.f32 %v4984, 0.0
    %v4991 = vmax.f32 %v4985, 0.0
    %v4992 = vmul.f32 %v4986, %v1154
    %v4993 = vmul.f32 %v4987, %v1159
    %v4994 = vmul.f32 %v4988, %v1164
    %v4995 = vmul.f32 %v4989, %v1169
    %v4996 = vmul.f32 %v4990, %v1174
    %v4997 = vmul.f32 %v4991, %v1179
    %4998 = vst.msk [vmem:[#allocation3 + $0x4] sm:$0xff] %vm86, %v4992
    %4999 = vst.msk [vmem:[#allocation3 + $0xc] sm:$0xff] %vm86, %v4993
    %5000 = vst.msk [vmem:[#allocation3 + $0x14] sm:$0xff] %vm86, %v4994
    %5001 = vst.msk [vmem:[#allocation3 + $0x1c] sm:$0xff] %vm86, %v4995
    %5002 = vst.msk [vmem:[#allocation3 + $0x24] sm:$0xff] %vm86, %v4996
    %5003 = vst.msk [vmem:[#allocation3 + $0x2c] sm:$0xff] %vm86, %v4997
    %v5004 = vld [vmem:[#allocation3] sm:$0xff]
    %v5005 = vld [vmem:[#allocation3 + $0x8] sm:$0xff]
    %v5006 = vld [vmem:[#allocation3 + $0x10] sm:$0xff]
    %v5007 = vld [vmem:[#allocation3 + $0x18] sm:$0xff]
    %v5008 = vld [vmem:[#allocation3 + $0x20] sm:$0xff]
    %v5009 = vld [vmem:[#allocation3 + $0x28] sm:$0xff]
    %v5010 = vld [vmem:[%s16] sm:$0xff]
    %v5011 = vld [vmem:[#allocation3 + $0x2] sm:$0xff]
    %v5012 = vld [vmem:[#allocation3 + $0xa] sm:$0xff]
    %v5013 = vld [vmem:[#allocation3 + $0x12] sm:$0xff]
    %v5014 = vld [vmem:[#allocation3 + $0x1a] sm:$0xff]
    %v5015 = vld [vmem:[#allocation3 + $0x22] sm:$0xff]
    %v5016 = vld [vmem:[#allocation3 + $0x2a] sm:$0xff]
    %v5017 = vld [vmem:[%s16 + $0x8] sm:$0xff]
    %v5019 = vsel %vm86, %v5011, 0
    %v5022 = vsel %vm86, %v5012, 0
    %v5025 = vsel %vm86, %v5013, 0
    %v5028 = vsel %vm86, %v5014, 0
    %v5031 = vsel %vm86, %v5015, 0
    %v5034 = vsel %vm86, %v5016, 0
    %5036 = vmatprep.subr.mxu0 0.0
    %5037 = vmatpush1.msra.mxu0 %v5017
    %5038 = vmatprep.subr.mxu0 0.0
    %5039 = vmatpush1.msra.mxu0 0.0
    %5040 = vmatprep.subr.mxu0 0.0
    %5041 = vmatpush1.msra.mxu0 0.0
    %5042 = vmatprep.subr.mxu0 0.0
    %5043 = vmatpush1.msra.mxu0 0.0
    %5044 = vmatprep.subr.mxu0 0.0
    %5045 = vmatpush1.msra.mxu0 0.0
    %5046 = vmatprep.subr.mxu0 0.0
    %5047 = vmatpush1.msra.mxu0 0.0
    %5048 = vmatprep.subr.mxu0 0.0
    %5049 = vmatpush1.msra.mxu0 0.0
    %5050 = vmatprep.subr.mxu0 0.0
    %5051 = vmatpush1.msra.mxu0 0.0
    %5052 = vmatprep.subr.mxu0 0.0
    %5053 = vmatpush1.msra.mxu0 0.0
    %5054 = vmatprep.subr.mxu0 0.0
    %5055 = vmatpush1.msra.mxu0 0.0
    %5056 = vmatprep.subr.mxu0 0.0
    %5057 = vmatpush1.msra.mxu0 0.0
    %5058 = vmatprep.subr.mxu0 0.0
    %5059 = vmatpush1.msra.mxu0 0.0
    %5060 = vmatprep.subr.mxu0 0.0
    %5061 = vmatpush1.msra.mxu0 0.0
    %5062 = vmatprep.subr.mxu0 0.0
    %5063 = vmatpush1.msra.mxu0 0.0
    %5064 = vmatprep.subr.mxu0 0.0
    %5065 = vmatpush1.msra.mxu0 0.0
    %5066 = vmatprep.subr.mxu0 0.0
    %5067 = vmatpush1.msra.mxu0 0.0
    %5068 = vmatprep.subr.mxu0 0.0
    %5069 = vmatpush1.msra.mxu0 0.0
    %5070 = vmatprep.subr.mxu0 0.0
    %5071 = vmatpush1.msra.mxu0 0.0
    %5072 = vmatprep.subr.mxu0 0.0
    %5073 = vmatpush1.msra.mxu0 0.0
    %5074 = vmatprep.subr.mxu0 0.0
    %5075 = vmatpush1.msra.mxu0 0.0
    %5076 = vmatprep.subr.mxu0 0.0
    %5077 = vmatpush1.msra.mxu0 0.0
    %5078 = vmatprep.subr.mxu0 0.0
    %5079 = vmatpush1.msra.mxu0 0.0
    %5080 = vmatprep.subr.mxu0 0.0
    %5081 = vmatpush1.msra.mxu0 0.0
    %5082 = vmatprep.subr.mxu0 0.0
    %5083 = vmatpush1.msra.mxu0 0.0
    %5084 = vmatprep.subr.mxu0 0.0
    %5085 = vmatpush1.msra.mxu0 0.0
    %5086 = vmatprep.subr.mxu0 0.0
    %5087 = vmatpush1.msra.mxu0 0.0
    %5088 = vmatprep.subr.mxu0 0.0
    %5089 = vmatpush1.msra.mxu0 0.0
    %5090 = vmatprep.subr.mxu0 0.0
    %5091 = vmatpush1.msra.mxu0 0.0
    %5092 = vmatprep.subr.mxu0 0.0
    %5093 = vmatpush1.msra.mxu0 0.0
    %5094 = vmatprep.subr.mxu0 0.0
    %5095 = vmatpush1.msra.mxu0 0.0
    %5096 = vmatprep.subr.mxu0 0.0
    %5097 = vmatpush1.msra.mxu0 0.0
    %5098 = vmatprep.subr.mxu0 0.0
    %5099 = vmatpush1.msra.mxu0 0.0
    %5100 = vmatprep.mubr.f32.mxu0 0.0
    %5101 = vmatmul.mubr.f32.gmra.mrb[0].mxu0 %v5019
    %v5102 = vpop.f32.mrb[0].mxu0
    %v5103 = vadd.f32 0.0, %v5102
    %v5104 = vpop.f32.mrb[0].mxu0
    %5105 = vmatprep.mubr.f32.mxu0 0.0
    %5106 = vmatmul.mubr.f32.gmra.mrb[0].mxu0 %v5022
    %v5107 = vpop.f32.mrb[0].mxu0
    %v5108 = vadd.f32 0.0, %v5107
    %v5109 = vpop.f32.mrb[0].mxu0
    %5110 = vmatprep.mubr.f32.mxu0 0.0
    %5111 = vmatmul.mubr.f32.gmra.mrb[0].mxu0 %v5025
    %v5112 = vpop.f32.mrb[0].mxu0
    %v5113 = vadd.f32 0.0, %v5112
    %v5114 = vpop.f32.mrb[0].mxu0
    %5115 = vmatprep.mubr.f32.mxu0 0.0
    %5116 = vmatmul.mubr.f32.gmra.mrb[0].mxu0 %v5028
    %v5117 = vpop.f32.mrb[0].mxu0
    %v5118 = vadd.f32 0.0, %v5117
    %v5119 = vpop.f32.mrb[0].mxu0
    %5120 = vmatprep.mubr.f32.mxu0 0.0
    %5121 = vmatmul.mubr.f32.gmra.mrb[0].mxu0 %v5031
    %v5122 = vpop.f32.mrb[0].mxu0
    %v5123 = vadd.f32 0.0, %v5122
    %v5124 = vpop.f32.mrb[0].mxu0
    %5125 = vmatprep.mubr.f32.mxu0 0.0
    %5126 = vmatmul.mubr.f32.gmra.mrb[0].mxu0 %v5034
    %v5127 = vpop.f32.mrb[0].mxu0
    %v5128 = vadd.f32 0.0, %v5127
    %v5129 = vpop.f32.mrb[0].mxu0
    %5130 = vdwg.mxu0
    %v5132 = vsel %vm86, %v5004, 0
    %v5135 = vsel %vm86, %v5005, 0
    %v5138 = vsel %vm86, %v5006, 0
    %v5141 = vsel %vm86, %v5007, 0
    %v5144 = vsel %vm86, %v5008, 0
    %v5147 = vsel %vm86, %v5009, 0
    %5149 = vmatprep.subr.mxu0 0.0
    %5150 = vmatpush1.msra.mxu0 %v5010
    %5151 = vmatprep.subr.mxu0 0.0
    %5152 = vmatpush1.msra.mxu0 0.0
    %5153 = vmatprep.subr.mxu0 0.0
    %5154 = vmatpush1.msra.mxu0 0.0
    %5155 = vmatprep.subr.mxu0 0.0
    %5156 = vmatpush1.msra.mxu0 0.0
    %5157 = vmatprep.subr.mxu0 0.0
    %5158 = vmatpush1.msra.mxu0 0.0
    %5159 = vmatprep.subr.mxu0 0.0
    %5160 = vmatpush1.msra.mxu0 0.0
    %5161 = vmatprep.subr.mxu0 0.0
    %5162 = vmatpush1.msra.mxu0 0.0
    %5163 = vmatprep.subr.mxu0 0.0
    %5164 = vmatpush1.msra.mxu0 0.0
    %5165 = vmatprep.subr.mxu0 0.0
    %5166 = vmatpush1.msra.mxu0 0.0
    %5167 = vmatprep.subr.mxu0 0.0
    %5168 = vmatpush1.msra.mxu0 0.0
    %5169 = vmatprep.subr.mxu0 0.0
    %5170 = vmatpush1.msra.mxu0 0.0
    %5171 = vmatprep.subr.mxu0 0.0
    %5172 = vmatpush1.msra.mxu0 0.0
    %5173 = vmatprep.subr.mxu0 0.0
    %5174 = vmatpush1.msra.mxu0 0.0
    %5175 = vmatprep.subr.mxu0 0.0
    %5176 = vmatpush1.msra.mxu0 0.0
    %5177 = vmatprep.subr.mxu0 0.0
    %5178 = vmatpush1.msra.mxu0 0.0
    %5179 = vmatprep.subr.mxu0 0.0
    %5180 = vmatpush1.msra.mxu0 0.0
    %5181 = vmatprep.subr.mxu0 0.0
    %5182 = vmatpush1.msra.mxu0 0.0
    %5183 = vmatprep.subr.mxu0 0.0
    %5184 = vmatpush1.msra.mxu0 0.0
    %5185 = vmatprep.subr.mxu0 0.0
    %5186 = vmatpush1.msra.mxu0 0.0
    %5187 = vmatprep.subr.mxu0 0.0
    %5188 = vmatpush1.msra.mxu0 0.0
    %5189 = vmatprep.subr.mxu0 0.0
    %5190 = vmatpush1.msra.mxu0 0.0
    %5191 = vmatprep.subr.mxu0 0.0
    %5192 = vmatpush1.msra.mxu0 0.0
    %5193 = vmatprep.subr.mxu0 0.0
    %5194 = vmatpush1.msra.mxu0 0.0
    %5195 = vmatprep.subr.mxu0 0.0
    %5196 = vmatpush1.msra.mxu0 0.0
    %5197 = vmatprep.subr.mxu0 0.0
    %5198 = vmatpush1.msra.mxu0 0.0
    %5199 = vmatprep.subr.mxu0 0.0
    %5200 = vmatpush1.msra.mxu0 0.0
    %5201 = vmatprep.subr.mxu0 0.0
    %5202 = vmatpush1.msra.mxu0 0.0
    %5203 = vmatprep.subr.mxu0 0.0
    %5204 = vmatpush1.msra.mxu0 0.0
    %5205 = vmatprep.subr.mxu0 0.0
    %5206 = vmatpush1.msra.mxu0 0.0
    %5207 = vmatprep.subr.mxu0 0.0
    %5208 = vmatpush1.msra.mxu0 0.0
    %5209 = vmatprep.subr.mxu0 0.0
    %5210 = vmatpush1.msra.mxu0 0.0
    %5211 = vmatprep.subr.mxu0 0.0
    %5212 = vmatpush1.msra.mxu0 0.0
    %5213 = vmatprep.mubr.f32.mxu0 0.0
    %5214 = vmatmul.mubr.f32.gmra.mrb[0].mxu0 %v5132
    %v5215 = vpop.f32.mrb[0].mxu0
    %v5216 = vadd.f32 %v5103, %v5215
    %v5217 = vpop.f32.mrb[0].mxu0
    %5218 = vmatprep.mubr.f32.mxu0 0.0
    %5219 = vmatmul.mubr.f32.gmra.mrb[0].mxu0 %v5135
    %v5220 = vpop.f32.mrb[0].mxu0
    %v5221 = vadd.f32 %v5108, %v5220
    %v5222 = vpop.f32.mrb[0].mxu0
    %5223 = vmatprep.mubr.f32.mxu0 0.0
    %5224 = vmatmul.mubr.f32.gmra.mrb[0].mxu0 %v5138
    %v5225 = vpop.f32.mrb[0].mxu0
    %v5226 = vadd.f32 %v5113, %v5225
    %v5227 = vpop.f32.mrb[0].mxu0
    %5228 = vmatprep.mubr.f32.mxu0 0.0
    %5229 = vmatmul.mubr.f32.gmra.mrb[0].mxu0 %v5141
    %v5230 = vpop.f32.mrb[0].mxu0
    %v5231 = vadd.f32 %v5118, %v5230
    %v5232 = vpop.f32.mrb[0].mxu0
    %5233 = vmatprep.mubr.f32.mxu0 0.0
    %5234 = vmatmul.mubr.f32.gmra.mrb[0].mxu0 %v5144
    %v5235 = vpop.f32.mrb[0].mxu0
    %v5236 = vadd.f32 %v5123, %v5235
    %v5237 = vpop.f32.mrb[0].mxu0
    %5238 = vmatprep.mubr.f32.mxu0 0.0
    %5239 = vmatmul.mubr.f32.gmra.mrb[0].mxu0 %v5147
    %v5240 = vpop.f32.mrb[0].mxu0
    %v5241 = vadd.f32 %v5128, %v5240
    %v5242 = vpop.f32.mrb[0].mxu0
    %5243 = vdwg.mxu0
    %v5244 = vld [vmem:[#allocation3 + $0x3] sm:$0xff]
    %v5245 = vld [vmem:[#allocation3 + $0xb] sm:$0xff]
    %v5246 = vld [vmem:[#allocation3 + $0x13] sm:$0xff]
    %v5247 = vld [vmem:[#allocation3 + $0x1b] sm:$0xff]
    %v5248 = vld [vmem:[#allocation3 + $0x23] sm:$0xff]
    %v5249 = vld [vmem:[#allocation3 + $0x2b] sm:$0xff]
    %v5250 = vld [vmem:[%s16 + $0x10] sm:$0xff]
    %v5252 = vsel %vm86, %v5244, 0
    %v5255 = vsel %vm86, %v5245, 0
    %v5258 = vsel %vm86, %v5246, 0
    %v5261 = vsel %vm86, %v5247, 0
    %v5264 = vsel %vm86, %v5248, 0
    %v5267 = vsel %vm86, %v5249, 0
    %5269 = vmatprep.subr.mxu0 0.0
    %5270 = vmatpush1.msra.mxu0 %v5250
    %5271 = vmatprep.subr.mxu0 0.0
    %5272 = vmatpush1.msra.mxu0 0.0
    %5273 = vmatprep.subr.mxu0 0.0
    %5274 = vmatpush1.msra.mxu0 0.0
    %5275 = vmatprep.subr.mxu0 0.0
    %5276 = vmatpush1.msra.mxu0 0.0
    %5277 = vmatprep.subr.mxu0 0.0
    %5278 = vmatpush1.msra.mxu0 0.0
    %5279 = vmatprep.subr.mxu0 0.0
    %5280 = vmatpush1.msra.mxu0 0.0
    %5281 = vmatprep.subr.mxu0 0.0
    %5282 = vmatpush1.msra.mxu0 0.0
    %5283 = vmatprep.subr.mxu0 0.0
    %5284 = vmatpush1.msra.mxu0 0.0
    %5285 = vmatprep.subr.mxu0 0.0
    %5286 = vmatpush1.msra.mxu0 0.0
    %5287 = vmatprep.subr.mxu0 0.0
    %5288 = vmatpush1.msra.mxu0 0.0
    %5289 = vmatprep.subr.mxu0 0.0
    %5290 = vmatpush1.msra.mxu0 0.0
    %5291 = vmatprep.subr.mxu0 0.0
    %5292 = vmatpush1.msra.mxu0 0.0
    %5293 = vmatprep.subr.mxu0 0.0
    %5294 = vmatpush1.msra.mxu0 0.0
    %5295 = vmatprep.subr.mxu0 0.0
    %5296 = vmatpush1.msra.mxu0 0.0
    %5297 = vmatprep.subr.mxu0 0.0
    %5298 = vmatpush1.msra.mxu0 0.0
    %5299 = vmatprep.subr.mxu0 0.0
    %5300 = vmatpush1.msra.mxu0 0.0
    %5301 = vmatprep.subr.mxu0 0.0
    %5302 = vmatpush1.msra.mxu0 0.0
    %5303 = vmatprep.subr.mxu0 0.0
    %5304 = vmatpush1.msra.mxu0 0.0
    %5305 = vmatprep.subr.mxu0 0.0
    %5306 = vmatpush1.msra.mxu0 0.0
    %5307 = vmatprep.subr.mxu0 0.0
    %5308 = vmatpush1.msra.mxu0 0.0
    %5309 = vmatprep.subr.mxu0 0.0
    %5310 = vmatpush1.msra.mxu0 0.0
    %5311 = vmatprep.subr.mxu0 0.0
    %5312 = vmatpush1.msra.mxu0 0.0
    %5313 = vmatprep.subr.mxu0 0.0
    %5314 = vmatpush1.msra.mxu0 0.0
    %5315 = vmatprep.subr.mxu0 0.0
    %5316 = vmatpush1.msra.mxu0 0.0
    %5317 = vmatprep.subr.mxu0 0.0
    %5318 = vmatpush1.msra.mxu0 0.0
    %5319 = vmatprep.subr.mxu0 0.0
    %5320 = vmatpush1.msra.mxu0 0.0
    %5321 = vmatprep.subr.mxu0 0.0
    %5322 = vmatpush1.msra.mxu0 0.0
    %5323 = vmatprep.subr.mxu0 0.0
    %5324 = vmatpush1.msra.mxu0 0.0
    %5325 = vmatprep.subr.mxu0 0.0
    %5326 = vmatpush1.msra.mxu0 0.0
    %5327 = vmatprep.subr.mxu0 0.0
    %5328 = vmatpush1.msra.mxu0 0.0
    %5329 = vmatprep.subr.mxu0 0.0
    %5330 = vmatpush1.msra.mxu0 0.0
    %5331 = vmatprep.subr.mxu0 0.0
    %5332 = vmatpush1.msra.mxu0 0.0
    %5333 = vmatprep.mubr.f32.mxu0 0.0
    %5334 = vmatmul.mubr.f32.gmra.mrb[0].mxu0 %v5252
    %v5335 = vpop.f32.mrb[0].mxu0
    %v5336 = vadd.f32 0.0, %v5335
    %v5337 = vpop.f32.mrb[0].mxu0
    %5338 = vmatprep.mubr.f32.mxu0 0.0
    %5339 = vmatmul.mubr.f32.gmra.mrb[0].mxu0 %v5255
    %v5340 = vpop.f32.mrb[0].mxu0
    %v5341 = vadd.f32 0.0, %v5340
    %v5342 = vpop.f32.mrb[0].mxu0
    %5343 = vmatprep.mubr.f32.mxu0 0.0
    %5344 = vmatmul.mubr.f32.gmra.mrb[0].mxu0 %v5258
    %v5345 = vpop.f32.mrb[0].mxu0
    %v5346 = vadd.f32 0.0, %v5345
    %v5347 = vpop.f32.mrb[0].mxu0
    %5348 = vmatprep.mubr.f32.mxu0 0.0
    %5349 = vmatmul.mubr.f32.gmra.mrb[0].mxu0 %v5261
    %v5350 = vpop.f32.mrb[0].mxu0
    %v5351 = vadd.f32 0.0, %v5350
    %v5352 = vpop.f32.mrb[0].mxu0
    %5353 = vmatprep.mubr.f32.mxu0 0.0
    %5354 = vmatmul.mubr.f32.gmra.mrb[0].mxu0 %v5264
    %v5355 = vpop.f32.mrb[0].mxu0
    %v5356 = vadd.f32 0.0, %v5355
    %v5357 = vpop.f32.mrb[0].mxu0
    %5358 = vmatprep.mubr.f32.mxu0 0.0
    %5359 = vmatmul.mubr.f32.gmra.mrb[0].mxu0 %v5267
    %v5360 = vpop.f32.mrb[0].mxu0
    %v5361 = vadd.f32 0.0, %v5360
    %v5362 = vpop.f32.mrb[0].mxu0
    %5363 = vdwg.mxu0
    %v5364 = vadd.f32 %v5216, %v5336
    %v5365 = vadd.f32 %v5221, %v5341
    %v5366 = vadd.f32 %v5226, %v5346
    %v5367 = vadd.f32 %v5231, %v5351
    %v5368 = vadd.f32 %v5236, %v5356
    %v5369 = vadd.f32 %v5241, %v5361
    %v5370 = vld [vmem:[#allocation3 + $0x4] sm:$0xff]
    %v5371 = vld [vmem:[#allocation3 + $0xc] sm:$0xff]
    %v5372 = vld [vmem:[#allocation3 + $0x14] sm:$0xff]
    %v5373 = vld [vmem:[#allocation3 + $0x1c] sm:$0xff]
    %v5374 = vld [vmem:[#allocation3 + $0x24] sm:$0xff]
    %v5375 = vld [vmem:[#allocation3 + $0x2c] sm:$0xff]
    %v5376 = vld [vmem:[%s16 + $0x18] sm:$0xff]
    %v5378 = vsel %vm86, %v5370, 0
    %v5381 = vsel %vm86, %v5371, 0
    %v5384 = vsel %vm86, %v5372, 0
    %v5387 = vsel %vm86, %v5373, 0
    %v5390 = vsel %vm86, %v5374, 0
    %v5393 = vsel %vm86, %v5375, 0
    %5395 = vmatprep.subr.mxu0 0.0
    %5396 = vmatpush1.msra.mxu0 %v5376
    %5397 = vmatprep.subr.mxu0 0.0
    %5398 = vmatpush1.msra.mxu0 0.0
    %5399 = vmatprep.subr.mxu0 0.0
    %5400 = vmatpush1.msra.mxu0 0.0
    %5401 = vmatprep.subr.mxu0 0.0
    %5402 = vmatpush1.msra.mxu0 0.0
    %5403 = vmatprep.subr.mxu0 0.0
    %5404 = vmatpush1.msra.mxu0 0.0
    %5405 = vmatprep.subr.mxu0 0.0
    %5406 = vmatpush1.msra.mxu0 0.0
    %5407 = vmatprep.subr.mxu0 0.0
    %5408 = vmatpush1.msra.mxu0 0.0
    %5409 = vmatprep.subr.mxu0 0.0
    %5410 = vmatpush1.msra.mxu0 0.0
    %5411 = vmatprep.subr.mxu0 0.0
    %5412 = vmatpush1.msra.mxu0 0.0
    %5413 = vmatprep.subr.mxu0 0.0
    %5414 = vmatpush1.msra.mxu0 0.0
    %5415 = vmatprep.subr.mxu0 0.0
    %5416 = vmatpush1.msra.mxu0 0.0
    %5417 = vmatprep.subr.mxu0 0.0
    %5418 = vmatpush1.msra.mxu0 0.0
    %5419 = vmatprep.subr.mxu0 0.0
    %5420 = vmatpush1.msra.mxu0 0.0
    %5421 = vmatprep.subr.mxu0 0.0
    %5422 = vmatpush1.msra.mxu0 0.0
    %5423 = vmatprep.subr.mxu0 0.0
    %5424 = vmatpush1.msra.mxu0 0.0
    %5425 = vmatprep.subr.mxu0 0.0
    %5426 = vmatpush1.msra.mxu0 0.0
    %5427 = vmatprep.subr.mxu0 0.0
    %5428 = vmatpush1.msra.mxu0 0.0
    %5429 = vmatprep.subr.mxu0 0.0
    %5430 = vmatpush1.msra.mxu0 0.0
    %5431 = vmatprep.subr.mxu0 0.0
    %5432 = vmatpush1.msra.mxu0 0.0
    %5433 = vmatprep.subr.mxu0 0.0
    %5434 = vmatpush1.msra.mxu0 0.0
    %5435 = vmatprep.subr.mxu0 0.0
    %5436 = vmatpush1.msra.mxu0 0.0
    %5437 = vmatprep.subr.mxu0 0.0
    %5438 = vmatpush1.msra.mxu0 0.0
    %5439 = vmatprep.subr.mxu0 0.0
    %5440 = vmatpush1.msra.mxu0 0.0
    %5441 = vmatprep.subr.mxu0 0.0
    %5442 = vmatpush1.msra.mxu0 0.0
    %5443 = vmatprep.subr.mxu0 0.0
    %5444 = vmatpush1.msra.mxu0 0.0
    %5445 = vmatprep.subr.mxu0 0.0
    %5446 = vmatpush1.msra.mxu0 0.0
    %5447 = vmatprep.subr.mxu0 0.0
    %5448 = vmatpush1.msra.mxu0 0.0
    %5449 = vmatprep.subr.mxu0 0.0
    %5450 = vmatpush1.msra.mxu0 0.0
    %5451 = vmatprep.subr.mxu0 0.0
    %5452 = vmatpush1.msra.mxu0 0.0
    %5453 = vmatprep.subr.mxu0 0.0
    %5454 = vmatpush1.msra.mxu0 0.0
    %5455 = vmatprep.subr.mxu0 0.0
    %5456 = vmatpush1.msra.mxu0 0.0
    %5457 = vmatprep.subr.mxu0 0.0
    %5458 = vmatpush1.msra.mxu0 0.0
    %5459 = vmatprep.mubr.f32.mxu0 0.0
    %5460 = vmatmul.mubr.f32.gmra.mrb[0].mxu0 %v5378
    %v5461 = vpop.f32.mrb[0].mxu0
    %v5462 = vadd.f32 0.0, %v5461
    %v5463 = vpop.f32.mrb[0].mxu0
    %5464 = vmatprep.mubr.f32.mxu0 0.0
    %5465 = vmatmul.mubr.f32.gmra.mrb[0].mxu0 %v5381
    %v5466 = vpop.f32.mrb[0].mxu0
    %v5467 = vadd.f32 0.0, %v5466
    %v5468 = vpop.f32.mrb[0].mxu0
    %5469 = vmatprep.mubr.f32.mxu0 0.0
    %5470 = vmatmul.mubr.f32.gmra.mrb[0].mxu0 %v5384
    %v5471 = vpop.f32.mrb[0].mxu0
    %v5472 = vadd.f32 0.0, %v5471
    %v5473 = vpop.f32.mrb[0].mxu0
    %5474 = vmatprep.mubr.f32.mxu0 0.0
    %5475 = vmatmul.mubr.f32.gmra.mrb[0].mxu0 %v5387
    %v5476 = vpop.f32.mrb[0].mxu0
    %v5477 = vadd.f32 0.0, %v5476
    %v5478 = vpop.f32.mrb[0].mxu0
    %5479 = vmatprep.mubr.f32.mxu0 0.0
    %5480 = vmatmul.mubr.f32.gmra.mrb[0].mxu0 %v5390
    %v5481 = vpop.f32.mrb[0].mxu0
    %v5482 = vadd.f32 0.0, %v5481
    %v5483 = vpop.f32.mrb[0].mxu0
    %5484 = vmatprep.mubr.f32.mxu0 0.0
    %5485 = vmatmul.mubr.f32.gmra.mrb[0].mxu0 %v5393
    %v5486 = vpop.f32.mrb[0].mxu0
    %v5487 = vadd.f32 0.0, %v5486
    %v5488 = vpop.f32.mrb[0].mxu0
    %5489 = vdwg.mxu0
    %v5490 = vadd.f32 %v5364, %v5462
    %v5491 = vadd.f32 %v5365, %v5467
    %v5492 = vadd.f32 %v5366, %v5472
    %v5493 = vadd.f32 %v5367, %v5477
    %v5494 = vadd.f32 %v5368, %v5482
    %v5495 = vadd.f32 %v5369, %v5487
    %v5496 = vld [vmem:[#allocation3 + $0x5] sm:$0xff]
    %v5497 = vld [vmem:[#allocation3 + $0xd] sm:$0xff]
    %v5498 = vld [vmem:[#allocation3 + $0x15] sm:$0xff]
    %v5499 = vld [vmem:[#allocation3 + $0x1d] sm:$0xff]
    %v5500 = vld [vmem:[#allocation3 + $0x25] sm:$0xff]
    %v5501 = vld [vmem:[#allocation3 + $0x2d] sm:$0xff]
    %v5502 = vld [vmem:[%s16 + $0x20] sm:$0xff]
    %v5504 = vsel %vm86, %v5496, 0
    %v5507 = vsel %vm86, %v5497, 0
    %v5510 = vsel %vm86, %v5498, 0
    %v5513 = vsel %vm86, %v5499, 0
    %v5516 = vsel %vm86, %v5500, 0
    %v5519 = vsel %vm86, %v5501, 0
    %5521 = vmatprep.subr.mxu0 0.0
    %5522 = vmatpush1.msra.mxu0 %v5502
    %5523 = vmatprep.subr.mxu0 0.0
    %5524 = vmatpush1.msra.mxu0 0.0
    %5525 = vmatprep.subr.mxu0 0.0
    %5526 = vmatpush1.msra.mxu0 0.0
    %5527 = vmatprep.subr.mxu0 0.0
    %5528 = vmatpush1.msra.mxu0 0.0
    %5529 = vmatprep.subr.mxu0 0.0
    %5530 = vmatpush1.msra.mxu0 0.0
    %5531 = vmatprep.subr.mxu0 0.0
    %5532 = vmatpush1.msra.mxu0 0.0
    %5533 = vmatprep.subr.mxu0 0.0
    %5534 = vmatpush1.msra.mxu0 0.0
    %5535 = vmatprep.subr.mxu0 0.0
    %5536 = vmatpush1.msra.mxu0 0.0
    %5537 = vmatprep.subr.mxu0 0.0
    %5538 = vmatpush1.msra.mxu0 0.0
    %5539 = vmatprep.subr.mxu0 0.0
    %5540 = vmatpush1.msra.mxu0 0.0
    %5541 = vmatprep.subr.mxu0 0.0
    %5542 = vmatpush1.msra.mxu0 0.0
    %5543 = vmatprep.subr.mxu0 0.0
    %5544 = vmatpush1.msra.mxu0 0.0
    %5545 = vmatprep.subr.mxu0 0.0
    %5546 = vmatpush1.msra.mxu0 0.0
    %5547 = vmatprep.subr.mxu0 0.0
    %5548 = vmatpush1.msra.mxu0 0.0
    %5549 = vmatprep.subr.mxu0 0.0
    %5550 = vmatpush1.msra.mxu0 0.0
    %5551 = vmatprep.subr.mxu0 0.0
    %5552 = vmatpush1.msra.mxu0 0.0
    %5553 = vmatprep.subr.mxu0 0.0
    %5554 = vmatpush1.msra.mxu0 0.0
    %5555 = vmatprep.subr.mxu0 0.0
    %5556 = vmatpush1.msra.mxu0 0.0
    %5557 = vmatprep.subr.mxu0 0.0
    %5558 = vmatpush1.msra.mxu0 0.0
    %5559 = vmatprep.subr.mxu0 0.0
    %5560 = vmatpush1.msra.mxu0 0.0
    %5561 = vmatprep.subr.mxu0 0.0
    %5562 = vmatpush1.msra.mxu0 0.0
    %5563 = vmatprep.subr.mxu0 0.0
    %5564 = vmatpush1.msra.mxu0 0.0
    %5565 = vmatprep.subr.mxu0 0.0
    %5566 = vmatpush1.msra.mxu0 0.0
    %5567 = vmatprep.subr.mxu0 0.0
    %5568 = vmatpush1.msra.mxu0 0.0
    %5569 = vmatprep.subr.mxu0 0.0
    %5570 = vmatpush1.msra.mxu0 0.0
    %5571 = vmatprep.subr.mxu0 0.0
    %5572 = vmatpush1.msra.mxu0 0.0
    %5573 = vmatprep.subr.mxu0 0.0
    %5574 = vmatpush1.msra.mxu0 0.0
    %5575 = vmatprep.subr.mxu0 0.0
    %5576 = vmatpush1.msra.mxu0 0.0
    %5577 = vmatprep.subr.mxu0 0.0
    %5578 = vmatpush1.msra.mxu0 0.0
    %5579 = vmatprep.subr.mxu0 0.0
    %5580 = vmatpush1.msra.mxu0 0.0
    %5581 = vmatprep.subr.mxu0 0.0
    %5582 = vmatpush1.msra.mxu0 0.0
    %5583 = vmatprep.subr.mxu0 0.0
    %5584 = vmatpush1.msra.mxu0 0.0
    %5585 = vmatprep.mubr.f32.mxu0 0.0
    %5586 = vmatmul.mubr.f32.gmra.mrb[0].mxu0 %v5504
    %v5587 = vpop.f32.mrb[0].mxu0
    %v5588 = vadd.f32 0.0, %v5587
    %v5589 = vpop.f32.mrb[0].mxu0
    %5590 = vmatprep.mubr.f32.mxu0 0.0
    %5591 = vmatmul.mubr.f32.gmra.mrb[0].mxu0 %v5507
    %v5592 = vpop.f32.mrb[0].mxu0
    %v5593 = vadd.f32 0.0, %v5592
    %v5594 = vpop.f32.mrb[0].mxu0
    %5595 = vmatprep.mubr.f32.mxu0 0.0
    %5596 = vmatmul.mubr.f32.gmra.mrb[0].mxu0 %v5510
    %v5597 = vpop.f32.mrb[0].mxu0
    %v5598 = vadd.f32 0.0, %v5597
    %v5599 = vpop.f32.mrb[0].mxu0
    %5600 = vmatprep.mubr.f32.mxu0 0.0
    %5601 = vmatmul.mubr.f32.gmra.mrb[0].mxu0 %v5513
    %v5602 = vpop.f32.mrb[0].mxu0
    %v5603 = vadd.f32 0.0, %v5602
    %v5604 = vpop.f32.mrb[0].mxu0
    %5605 = vmatprep.mubr.f32.mxu0 0.0
    %5606 = vmatmul.mubr.f32.gmra.mrb[0].mxu0 %v5516
    %v5607 = vpop.f32.mrb[0].mxu0
    %v5608 = vadd.f32 0.0, %v5607
    %v5609 = vpop.f32.mrb[0].mxu0
    %5610 = vmatprep.mubr.f32.mxu0 0.0
    %5611 = vmatmul.mubr.f32.gmra.mrb[0].mxu0 %v5519
    %v5612 = vpop.f32.mrb[0].mxu0
    %v5613 = vadd.f32 0.0, %v5612
    %v5614 = vpop.f32.mrb[0].mxu0
    %5615 = vdwg.mxu0
    %v5616 = vadd.f32 %v5490, %v5588
    %v5617 = vadd.f32 %v5491, %v5593
    %v5618 = vadd.f32 %v5492, %v5598
    %v5619 = vadd.f32 %v5493, %v5603
    %v5620 = vadd.f32 %v5494, %v5608
    %v5621 = vadd.f32 %v5495, %v5613
    %v5622 = vld [vmem:[#allocation3 + $0x6] sm:$0xff]
    %v5623 = vld [vmem:[#allocation3 + $0xe] sm:$0xff]
    %v5624 = vld [vmem:[#allocation3 + $0x16] sm:$0xff]
    %v5625 = vld [vmem:[#allocation3 + $0x1e] sm:$0xff]
    %v5626 = vld [vmem:[#allocation3 + $0x26] sm:$0xff]
    %v5627 = vld [vmem:[#allocation3 + $0x2e] sm:$0xff]
    %v5628 = vld [vmem:[%s16 + $0x28] sm:$0xff]
    %v5630 = vsel %vm86, %v5622, 0
    %v5633 = vsel %vm86, %v5623, 0
    %v5636 = vsel %vm86, %v5624, 0
    %v5639 = vsel %vm86, %v5625, 0
    %v5642 = vsel %vm86, %v5626, 0
    %v5645 = vsel %vm86, %v5627, 0
    %5647 = vmatprep.subr.mxu0 0.0
    %5648 = vmatpush1.msra.mxu0 %v5628
    %5649 = vmatprep.subr.mxu0 0.0
    %5650 = vmatpush1.msra.mxu0 0.0
    %5651 = vmatprep.subr.mxu0 0.0
    %5652 = vmatpush1.msra.mxu0 0.0
    %5653 = vmatprep.subr.mxu0 0.0
    %5654 = vmatpush1.msra.mxu0 0.0
    %5655 = vmatprep.subr.mxu0 0.0
    %5656 = vmatpush1.msra.mxu0 0.0
    %5657 = vmatprep.subr.mxu0 0.0
    %5658 = vmatpush1.msra.mxu0 0.0
    %5659 = vmatprep.subr.mxu0 0.0
    %5660 = vmatpush1.msra.mxu0 0.0
    %5661 = vmatprep.subr.mxu0 0.0
    %5662 = vmatpush1.msra.mxu0 0.0
    %5663 = vmatprep.subr.mxu0 0.0
    %5664 = vmatpush1.msra.mxu0 0.0
    %5665 = vmatprep.subr.mxu0 0.0
    %5666 = vmatpush1.msra.mxu0 0.0
    %5667 = vmatprep.subr.mxu0 0.0
    %5668 = vmatpush1.msra.mxu0 0.0
    %5669 = vmatprep.subr.mxu0 0.0
    %5670 = vmatpush1.msra.mxu0 0.0
    %5671 = vmatprep.subr.mxu0 0.0
    %5672 = vmatpush1.msra.mxu0 0.0
    %5673 = vmatprep.subr.mxu0 0.0
    %5674 = vmatpush1.msra.mxu0 0.0
    %5675 = vmatprep.subr.mxu0 0.0
    %5676 = vmatpush1.msra.mxu0 0.0
    %5677 = vmatprep.subr.mxu0 0.0
    %5678 = vmatpush1.msra.mxu0 0.0
    %5679 = vmatprep.subr.mxu0 0.0
    %5680 = vmatpush1.msra.mxu0 0.0
    %5681 = vmatprep.subr.mxu0 0.0
    %5682 = vmatpush1.msra.mxu0 0.0
    %5683 = vmatprep.subr.mxu0 0.0
    %5684 = vmatpush1.msra.mxu0 0.0
    %5685 = vmatprep.subr.mxu0 0.0
    %5686 = vmatpush1.msra.mxu0 0.0
    %5687 = vmatprep.subr.mxu0 0.0
    %5688 = vmatpush1.msra.mxu0 0.0
    %5689 = vmatprep.subr.mxu0 0.0
    %5690 = vmatpush1.msra.mxu0 0.0
    %5691 = vmatprep.subr.mxu0 0.0
    %5692 = vmatpush1.msra.mxu0 0.0
    %5693 = vmatprep.subr.mxu0 0.0
    %5694 = vmatpush1.msra.mxu0 0.0
    %5695 = vmatprep.subr.mxu0 0.0
    %5696 = vmatpush1.msra.mxu0 0.0
    %5697 = vmatprep.subr.mxu0 0.0
    %5698 = vmatpush1.msra.mxu0 0.0
    %5699 = vmatprep.subr.mxu0 0.0
    %5700 = vmatpush1.msra.mxu0 0.0
    %5701 = vmatprep.subr.mxu0 0.0
    %5702 = vmatpush1.msra.mxu0 0.0
    %5703 = vmatprep.subr.mxu0 0.0
    %5704 = vmatpush1.msra.mxu0 0.0
    %5705 = vmatprep.subr.mxu0 0.0
    %5706 = vmatpush1.msra.mxu0 0.0
    %5707 = vmatprep.subr.mxu0 0.0
    %5708 = vmatpush1.msra.mxu0 0.0
    %5709 = vmatprep.subr.mxu0 0.0
    %5710 = vmatpush1.msra.mxu0 0.0
    %5711 = vmatprep.mubr.f32.mxu0 0.0
    %5712 = vmatmul.mubr.f32.gmra.mrb[0].mxu0 %v5630
    %v5713 = vpop.f32.mrb[0].mxu0
    %v5714 = vadd.f32 0.0, %v5713
    %v5715 = vpop.f32.mrb[0].mxu0
    %5716 = vmatprep.mubr.f32.mxu0 0.0
    %5717 = vmatmul.mubr.f32.gmra.mrb[0].mxu0 %v5633
    %v5718 = vpop.f32.mrb[0].mxu0
    %v5719 = vadd.f32 0.0, %v5718
    %v5720 = vpop.f32.mrb[0].mxu0
    %5721 = vmatprep.mubr.f32.mxu0 0.0
    %5722 = vmatmul.mubr.f32.gmra.mrb[0].mxu0 %v5636
    %v5723 = vpop.f32.mrb[0].mxu0
    %v5724 = vadd.f32 0.0, %v5723
    %v5725 = vpop.f32.mrb[0].mxu0
    %5726 = vmatprep.mubr.f32.mxu0 0.0
    %5727 = vmatmul.mubr.f32.gmra.mrb[0].mxu0 %v5639
    %v5728 = vpop.f32.mrb[0].mxu0
    %v5729 = vadd.f32 0.0, %v5728
    %v5730 = vpop.f32.mrb[0].mxu0
    %5731 = vmatprep.mubr.f32.mxu0 0.0
    %5732 = vmatmul.mubr.f32.gmra.mrb[0].mxu0 %v5642
    %v5733 = vpop.f32.mrb[0].mxu0
    %v5734 = vadd.f32 0.0, %v5733
    %v5735 = vpop.f32.mrb[0].mxu0
    %5736 = vmatprep.mubr.f32.mxu0 0.0
    %5737 = vmatmul.mubr.f32.gmra.mrb[0].mxu0 %v5645
    %v5738 = vpop.f32.mrb[0].mxu0
    %v5739 = vadd.f32 0.0, %v5738
    %v5740 = vpop.f32.mrb[0].mxu0
    %5741 = vdwg.mxu0
    %v5742 = vadd.f32 %v5616, %v5714
    %v5743 = vadd.f32 %v5617, %v5719
    %v5744 = vadd.f32 %v5618, %v5724
    %v5745 = vadd.f32 %v5619, %v5729
    %v5746 = vadd.f32 %v5620, %v5734
    %v5747 = vadd.f32 %v5621, %v5739
    %v5748 = vld [vmem:[#allocation3 + $0x8] sm:$0xff]
    %v5749 = vld [vmem:[#allocation3 + $0x10] sm:$0xff]
    %v5750 = vld [vmem:[#allocation3 + $0x18] sm:$0xff]
    %v5751 = vld [vmem:[#allocation3 + $0x20] sm:$0xff]
    %v5752 = vld [vmem:[#allocation3 + $0x28] sm:$0xff]
    %v5753 = vld [vmem:[#allocation3 + $0x30] sm:$0xff]
    %v5754 = vld [vmem:[%s16 + $0x30] sm:$0xff]
    %v5756 = vsel %vm86, %v5748, 0
    %v5759 = vsel %vm86, %v5749, 0
    %v5762 = vsel %vm86, %v5750, 0
    %v5765 = vsel %vm86, %v5751, 0
    %v5768 = vsel %vm86, %v5752, 0
    %v5771 = vsel %vm86, %v5753, 0
    %5773 = vmatprep.subr.mxu0 0.0
    %5774 = vmatpush1.msra.mxu0 %v5754
    %5775 = vmatprep.subr.mxu0 0.0
    %5776 = vmatpush1.msra.mxu0 0.0
    %5777 = vmatprep.subr.mxu0 0.0
    %5778 = vmatpush1.msra.mxu0 0.0
    %5779 = vmatprep.subr.mxu0 0.0
    %5780 = vmatpush1.msra.mxu0 0.0
    %5781 = vmatprep.subr.mxu0 0.0
    %5782 = vmatpush1.msra.mxu0 0.0
    %5783 = vmatprep.subr.mxu0 0.0
    %5784 = vmatpush1.msra.mxu0 0.0
    %5785 = vmatprep.subr.mxu0 0.0
    %5786 = vmatpush1.msra.mxu0 0.0
    %5787 = vmatprep.subr.mxu0 0.0
    %5788 = vmatpush1.msra.mxu0 0.0
    %5789 = vmatprep.subr.mxu0 0.0
    %5790 = vmatpush1.msra.mxu0 0.0
    %5791 = vmatprep.subr.mxu0 0.0
    %5792 = vmatpush1.msra.mxu0 0.0
    %5793 = vmatprep.subr.mxu0 0.0
    %5794 = vmatpush1.msra.mxu0 0.0
    %5795 = vmatprep.subr.mxu0 0.0
    %5796 = vmatpush1.msra.mxu0 0.0
    %5797 = vmatprep.subr.mxu0 0.0
    %5798 = vmatpush1.msra.mxu0 0.0
    %5799 = vmatprep.subr.mxu0 0.0
    %5800 = vmatpush1.msra.mxu0 0.0
    %5801 = vmatprep.subr.mxu0 0.0
    %5802 = vmatpush1.msra.mxu0 0.0
    %5803 = vmatprep.subr.mxu0 0.0
    %5804 = vmatpush1.msra.mxu0 0.0
    %5805 = vmatprep.subr.mxu0 0.0
    %5806 = vmatpush1.msra.mxu0 0.0
    %5807 = vmatprep.subr.mxu0 0.0
    %5808 = vmatpush1.msra.mxu0 0.0
    %5809 = vmatprep.subr.mxu0 0.0
    %5810 = vmatpush1.msra.mxu0 0.0
    %5811 = vmatprep.subr.mxu0 0.0
    %5812 = vmatpush1.msra.mxu0 0.0
    %5813 = vmatprep.subr.mxu0 0.0
    %5814 = vmatpush1.msra.mxu0 0.0
    %5815 = vmatprep.subr.mxu0 0.0
    %5816 = vmatpush1.msra.mxu0 0.0
    %5817 = vmatprep.subr.mxu0 0.0
    %5818 = vmatpush1.msra.mxu0 0.0
    %5819 = vmatprep.subr.mxu0 0.0
    %5820 = vmatpush1.msra.mxu0 0.0
    %5821 = vmatprep.subr.mxu0 0.0
    %5822 = vmatpush1.msra.mxu0 0.0
    %5823 = vmatprep.subr.mxu0 0.0
    %5824 = vmatpush1.msra.mxu0 0.0
    %5825 = vmatprep.subr.mxu0 0.0
    %5826 = vmatpush1.msra.mxu0 0.0
    %5827 = vmatprep.subr.mxu0 0.0
    %5828 = vmatpush1.msra.mxu0 0.0
    %5829 = vmatprep.subr.mxu0 0.0
    %5830 = vmatpush1.msra.mxu0 0.0
    %5831 = vmatprep.subr.mxu0 0.0
    %5832 = vmatpush1.msra.mxu0 0.0
    %5833 = vmatprep.subr.mxu0 0.0
    %5834 = vmatpush1.msra.mxu0 0.0
    %5835 = vmatprep.subr.mxu0 0.0
    %5836 = vmatpush1.msra.mxu0 0.0
    %5837 = vmatprep.mubr.f32.mxu0 0.0
    %5838 = vmatmul.mubr.f32.gmra.mrb[0].mxu0 %v5756
    %v5839 = vpop.f32.mrb[0].mxu0
    %v5840 = vadd.f32 0.0, %v5839
    %v5841 = vpop.f32.mrb[0].mxu0
    %5842 = vmatprep.mubr.f32.mxu0 0.0
    %5843 = vmatmul.mubr.f32.gmra.mrb[0].mxu0 %v5759
    %v5844 = vpop.f32.mrb[0].mxu0
    %v5845 = vadd.f32 0.0, %v5844
    %v5846 = vpop.f32.mrb[0].mxu0
    %5847 = vmatprep.mubr.f32.mxu0 0.0
    %5848 = vmatmul.mubr.f32.gmra.mrb[0].mxu0 %v5762
    %v5849 = vpop.f32.mrb[0].mxu0
    %v5850 = vadd.f32 0.0, %v5849
    %v5851 = vpop.f32.mrb[0].mxu0
    %5852 = vmatprep.mubr.f32.mxu0 0.0
    %5853 = vmatmul.mubr.f32.gmra.mrb[0].mxu0 %v5765
    %v5854 = vpop.f32.mrb[0].mxu0
    %v5855 = vadd.f32 0.0, %v5854
    %v5856 = vpop.f32.mrb[0].mxu0
    %5857 = vmatprep.mubr.f32.mxu0 0.0
    %5858 = vmatmul.mubr.f32.gmra.mrb[0].mxu0 %v5768
    %v5859 = vpop.f32.mrb[0].mxu0
    %v5860 = vadd.f32 0.0, %v5859
    %v5861 = vpop.f32.mrb[0].mxu0
    %5862 = vmatprep.mubr.f32.mxu0 0.0
    %5863 = vmatmul.mubr.f32.gmra.mrb[0].mxu0 %v5771
    %v5864 = vpop.f32.mrb[0].mxu0
    %v5865 = vadd.f32 0.0, %v5864
    %v5866 = vpop.f32.mrb[0].mxu0
    %5867 = vdwg.mxu0
    %v5868 = vadd.f32 %v5742, %v5840
    %v5869 = vadd.f32 %v5743, %v5845
    %v5870 = vadd.f32 %v5744, %v5850
    %v5871 = vadd.f32 %v5745, %v5855
    %v5872 = vadd.f32 %v5746, %v5860
    %v5873 = vadd.f32 %v5747, %v5865
    %v5874 = vld [vmem:[%s17] sm:$0x1]
    %v5876 = vlaneseq
    %v5877 = vshrl.u32 %v5876, 7
    %v5878 = vsub.s32 0, %v5877
    %v5879 = vrot.slane %v5874, %v5878
    %v5881 = vadd.f32 %v5868, %v5879
    %v5882 = vadd.f32 %v5869, %v5879
    %v5883 = vadd.f32 %v5870, %v5879
    %v5884 = vadd.f32 %v5871, %v5879
    %v5885 = vadd.f32 %v5872, %v5879
    %v5886 = vadd.f32 %v5873, %v5879
    %v5887 = vmax.f32 %v5881, 0.0
    %v5888 = vmax.f32 %v5882, 0.0
    %v5889 = vmax.f32 %v5883, 0.0
    %v5890 = vmax.f32 %v5884, 0.0
    %v5891 = vmax.f32 %v5885, 0.0
    %v5892 = vmax.f32 %v5886, 0.0
    %v5893 = vmul.f32 %v5887, %v1154
    %v5894 = vmul.f32 %v5888, %v1159
    %v5895 = vmul.f32 %v5889, %v1164
    %v5896 = vmul.f32 %v5890, %v1169
    %v5897 = vmul.f32 %v5891, %v1174
    %v5898 = vmul.f32 %v5892, %v1179
    %5905 = vrot.lane.b32.xlu0 %v5893, 16
    %v5906 = vpop.permute.xlu0 %5905
    %5907 = vrot.lane.b32.xlu0 %v5894, 16
    %v5908 = vpop.permute.xlu0 %5907
    %5909 = vrot.lane.b32.xlu0 %v5895, 16
    %v5910 = vpop.permute.xlu0 %5909
    %5911 = vrot.lane.b32.xlu0 %v5896, 16
    %v5912 = vpop.permute.xlu0 %5911
    %5913 = vrot.lane.b32.xlu0 %v5897, 16
    %v5914 = vpop.permute.xlu0 %5913
    %5915 = vrot.lane.b32.xlu0 %v5898, 16
    %v5916 = vpop.permute.xlu0 %5915
    %5923 = vst.msk [vmem:[#allocation2 + $0x4] sm:$0xff] %vm2112, %v5906
    %5924 = vst.msk [vmem:[#allocation2 + $0xc] sm:$0xff] %vm2112, %v5908
    %5925 = vst.msk [vmem:[#allocation2 + $0x14] sm:$0xff] %vm2112, %v5910
    %5926 = vst.msk [vmem:[#allocation2 + $0x1c] sm:$0xff] %vm2112, %v5912
    %5927 = vst.msk [vmem:[#allocation2 + $0x24] sm:$0xff] %vm2112, %v5914
    %5928 = vst.msk [vmem:[#allocation2 + $0x2c] sm:$0xff] %vm2112, %v5916
    %v5929 = vld [vmem:[#allocation2] sm:$0xff]
    %v5930 = vld [vmem:[#allocation2 + $0x8] sm:$0xff]
    %v5931 = vld [vmem:[#allocation2 + $0x10] sm:$0xff]
    %v5932 = vld [vmem:[#allocation2 + $0x18] sm:$0xff]
    %v5933 = vld [vmem:[#allocation2 + $0x20] sm:$0xff]
    %v5934 = vld [vmem:[#allocation2 + $0x28] sm:$0xff]
    %v5935 = vld [vmem:[%s18] sm:$0xff]
    %v5936 = vld [vmem:[%s18 + $0x8] sm:$0xff]
    %v5937 = vld [vmem:[%s18 + $0x10] sm:$0xff]
    %v5938 = vld [vmem:[#allocation2 + $0x2] sm:$0xff]
    %v5939 = vld [vmem:[#allocation2 + $0xa] sm:$0xff]
    %v5940 = vld [vmem:[#allocation2 + $0x12] sm:$0xff]
    %v5941 = vld [vmem:[#allocation2 + $0x1a] sm:$0xff]
    %v5942 = vld [vmem:[#allocation2 + $0x22] sm:$0xff]
    %v5943 = vld [vmem:[#allocation2 + $0x2a] sm:$0xff]
    %v5944 = vld [vmem:[%s18 + $0x18] sm:$0xff]
    %v5945 = vld [vmem:[%s18 + $0x20] sm:$0xff]
    %v5946 = vld [vmem:[%s18 + $0x28] sm:$0xff]
    %v5948 = vsel %vm2137, %v5938, 0
    %v5951 = vsel %vm2137, %v5939, 0
    %v5954 = vsel %vm2137, %v5940, 0
    %v5957 = vsel %vm2137, %v5941, 0
    %v5960 = vsel %vm2137, %v5942, 0
    %v5963 = vsel %vm2137, %v5943, 0
    %5965 = vmatprep.subr.mxu0 0.0
    %5966 = vmatpush1.msra.mxu0 %v5944
    %5967 = vmatprep.subr.mxu0 0.0
    %5968 = vmatpush1.msra.mxu0 %v5945
    %5969 = vmatprep.subr.mxu0 0.0
    %5970 = vmatpush1.msra.mxu0 %v5946
    %5971 = vmatprep.subr.mxu0 0.0
    %5972 = vmatpush1.msra.mxu0 0.0
    %5973 = vmatprep.subr.mxu0 0.0
    %5974 = vmatpush1.msra.mxu0 0.0
    %5975 = vmatprep.subr.mxu0 0.0
    %5976 = vmatpush1.msra.mxu0 0.0
    %5977 = vmatprep.subr.mxu0 0.0
    %5978 = vmatpush1.msra.mxu0 0.0
    %5979 = vmatprep.subr.mxu0 0.0
    %5980 = vmatpush1.msra.mxu0 0.0
    %5981 = vmatprep.subr.mxu0 0.0
    %5982 = vmatpush1.msra.mxu0 0.0
    %5983 = vmatprep.subr.mxu0 0.0
    %5984 = vmatpush1.msra.mxu0 0.0
    %5985 = vmatprep.subr.mxu0 0.0
    %5986 = vmatpush1.msra.mxu0 0.0
    %5987 = vmatprep.subr.mxu0 0.0
    %5988 = vmatpush1.msra.mxu0 0.0
    %5989 = vmatprep.subr.mxu0 0.0
    %5990 = vmatpush1.msra.mxu0 0.0
    %5991 = vmatprep.subr.mxu0 0.0
    %5992 = vmatpush1.msra.mxu0 0.0
    %5993 = vmatprep.subr.mxu0 0.0
    %5994 = vmatpush1.msra.mxu0 0.0
    %5995 = vmatprep.subr.mxu0 0.0
    %5996 = vmatpush1.msra.mxu0 0.0
    %5997 = vmatprep.subr.mxu0 0.0
    %5998 = vmatpush1.msra.mxu0 0.0
    %5999 = vmatprep.subr.mxu0 0.0
    %6000 = vmatpush1.msra.mxu0 0.0
    %6001 = vmatprep.subr.mxu0 0.0
    %6002 = vmatpush1.msra.mxu0 0.0
    %6003 = vmatprep.subr.mxu0 0.0
    %6004 = vmatpush1.msra.mxu0 0.0
    %6005 = vmatprep.subr.mxu0 0.0
    %6006 = vmatpush1.msra.mxu0 0.0
    %6007 = vmatprep.subr.mxu0 0.0
    %6008 = vmatpush1.msra.mxu0 0.0
    %6009 = vmatprep.subr.mxu0 0.0
    %6010 = vmatpush1.msra.mxu0 0.0
    %6011 = vmatprep.subr.mxu0 0.0
    %6012 = vmatpush1.msra.mxu0 0.0
    %6013 = vmatprep.subr.mxu0 0.0
    %6014 = vmatpush1.msra.mxu0 0.0
    %6015 = vmatprep.subr.mxu0 0.0
    %6016 = vmatpush1.msra.mxu0 0.0
    %6017 = vmatprep.subr.mxu0 0.0
    %6018 = vmatpush1.msra.mxu0 0.0
    %6019 = vmatprep.subr.mxu0 0.0
    %6020 = vmatpush1.msra.mxu0 0.0
    %6021 = vmatprep.subr.mxu0 0.0
    %6022 = vmatpush1.msra.mxu0 0.0
    %6023 = vmatprep.subr.mxu0 0.0
    %6024 = vmatpush1.msra.mxu0 0.0
    %6025 = vmatprep.subr.mxu0 0.0
    %6026 = vmatpush1.msra.mxu0 0.0
    %6027 = vmatprep.subr.mxu0 0.0
    %6028 = vmatpush1.msra.mxu0 0.0
    %6029 = vmatprep.mubr.f32.mxu0 0.0
    %6030 = vmatmul.mubr.f32.gmra.mrb[0].mxu0 %v5948
    %v6031 = vpop.f32.mrb[0].mxu0
    %v6032 = vadd.f32 0.0, %v6031
    %v6033 = vpop.f32.mrb[0].mxu0
    %6034 = vmatprep.mubr.f32.mxu0 0.0
    %6035 = vmatmul.mubr.f32.gmra.mrb[0].mxu0 %v5951
    %v6036 = vpop.f32.mrb[0].mxu0
    %v6037 = vadd.f32 0.0, %v6036
    %v6038 = vpop.f32.mrb[0].mxu0
    %6039 = vmatprep.mubr.f32.mxu0 0.0
    %6040 = vmatmul.mubr.f32.gmra.mrb[0].mxu0 %v5954
    %v6041 = vpop.f32.mrb[0].mxu0
    %v6042 = vadd.f32 0.0, %v6041
    %v6043 = vpop.f32.mrb[0].mxu0
    %6044 = vmatprep.mubr.f32.mxu0 0.0
    %6045 = vmatmul.mubr.f32.gmra.mrb[0].mxu0 %v5957
    %v6046 = vpop.f32.mrb[0].mxu0
    %v6047 = vadd.f32 0.0, %v6046
    %v6048 = vpop.f32.mrb[0].mxu0
    %6049 = vmatprep.mubr.f32.mxu0 0.0
    %6050 = vmatmul.mubr.f32.gmra.mrb[0].mxu0 %v5960
    %v6051 = vpop.f32.mrb[0].mxu0
    %v6052 = vadd.f32 0.0, %v6051
    %v6053 = vpop.f32.mrb[0].mxu0
    %6054 = vmatprep.mubr.f32.mxu0 0.0
    %6055 = vmatmul.mubr.f32.gmra.mrb[0].mxu0 %v5963
    %v6056 = vpop.f32.mrb[0].mxu0
    %v6057 = vadd.f32 0.0, %v6056
    %v6058 = vpop.f32.mrb[0].mxu0
    %6059 = vdwg.mxu0
    %v6061 = vsel %vm2137, %v5929, 0
    %v6064 = vsel %vm2137, %v5930, 0
    %v6067 = vsel %vm2137, %v5931, 0
    %v6070 = vsel %vm2137, %v5932, 0
    %v6073 = vsel %vm2137, %v5933, 0
    %v6076 = vsel %vm2137, %v5934, 0
    %6078 = vmatprep.subr.mxu0 0.0
    %6079 = vmatpush1.msra.mxu0 %v5935
    %6080 = vmatprep.subr.mxu0 0.0
    %6081 = vmatpush1.msra.mxu0 %v5936
    %6082 = vmatprep.subr.mxu0 0.0
    %6083 = vmatpush1.msra.mxu0 %v5937
    %6084 = vmatprep.subr.mxu0 0.0
    %6085 = vmatpush1.msra.mxu0 0.0
    %6086 = vmatprep.subr.mxu0 0.0
    %6087 = vmatpush1.msra.mxu0 0.0
    %6088 = vmatprep.subr.mxu0 0.0
    %6089 = vmatpush1.msra.mxu0 0.0
    %6090 = vmatprep.subr.mxu0 0.0
    %6091 = vmatpush1.msra.mxu0 0.0
    %6092 = vmatprep.subr.mxu0 0.0
    %6093 = vmatpush1.msra.mxu0 0.0
    %6094 = vmatprep.subr.mxu0 0.0
    %6095 = vmatpush1.msra.mxu0 0.0
    %6096 = vmatprep.subr.mxu0 0.0
    %6097 = vmatpush1.msra.mxu0 0.0
    %6098 = vmatprep.subr.mxu0 0.0
    %6099 = vmatpush1.msra.mxu0 0.0
    %6100 = vmatprep.subr.mxu0 0.0
    %6101 = vmatpush1.msra.mxu0 0.0
    %6102 = vmatprep.subr.mxu0 0.0
    %6103 = vmatpush1.msra.mxu0 0.0
    %6104 = vmatprep.subr.mxu0 0.0
    %6105 = vmatpush1.msra.mxu0 0.0
    %6106 = vmatprep.subr.mxu0 0.0
    %6107 = vmatpush1.msra.mxu0 0.0
    %6108 = vmatprep.subr.mxu0 0.0
    %6109 = vmatpush1.msra.mxu0 0.0
    %6110 = vmatprep.subr.mxu0 0.0
    %6111 = vmatpush1.msra.mxu0 0.0
    %6112 = vmatprep.subr.mxu0 0.0
    %6113 = vmatpush1.msra.mxu0 0.0
    %6114 = vmatprep.subr.mxu0 0.0
    %6115 = vmatpush1.msra.mxu0 0.0
    %6116 = vmatprep.subr.mxu0 0.0
    %6117 = vmatpush1.msra.mxu0 0.0
    %6118 = vmatprep.subr.mxu0 0.0
    %6119 = vmatpush1.msra.mxu0 0.0
    %6120 = vmatprep.subr.mxu0 0.0
    %6121 = vmatpush1.msra.mxu0 0.0
    %6122 = vmatprep.subr.mxu0 0.0
    %6123 = vmatpush1.msra.mxu0 0.0
    %6124 = vmatprep.subr.mxu0 0.0
    %6125 = vmatpush1.msra.mxu0 0.0
    %6126 = vmatprep.subr.mxu0 0.0
    %6127 = vmatpush1.msra.mxu0 0.0
    %6128 = vmatprep.subr.mxu0 0.0
    %6129 = vmatpush1.msra.mxu0 0.0
    %6130 = vmatprep.subr.mxu0 0.0
    %6131 = vmatpush1.msra.mxu0 0.0
    %6132 = vmatprep.subr.mxu0 0.0
    %6133 = vmatpush1.msra.mxu0 0.0
    %6134 = vmatprep.subr.mxu0 0.0
    %6135 = vmatpush1.msra.mxu0 0.0
    %6136 = vmatprep.subr.mxu0 0.0
    %6137 = vmatpush1.msra.mxu0 0.0
    %6138 = vmatprep.subr.mxu0 0.0
    %6139 = vmatpush1.msra.mxu0 0.0
    %6140 = vmatprep.subr.mxu0 0.0
    %6141 = vmatpush1.msra.mxu0 0.0
    %6142 = vmatprep.mubr.f32.mxu0 0.0
    %6143 = vmatmul.mubr.f32.gmra.mrb[0].mxu0 %v6061
    %v6144 = vpop.f32.mrb[0].mxu0
    %v6145 = vadd.f32 %v6032, %v6144
    %v6146 = vpop.f32.mrb[0].mxu0
    %6147 = vmatprep.mubr.f32.mxu0 0.0
    %6148 = vmatmul.mubr.f32.gmra.mrb[0].mxu0 %v6064
    %v6149 = vpop.f32.mrb[0].mxu0
    %v6150 = vadd.f32 %v6037, %v6149
    %v6151 = vpop.f32.mrb[0].mxu0
    %6152 = vmatprep.mubr.f32.mxu0 0.0
    %6153 = vmatmul.mubr.f32.gmra.mrb[0].mxu0 %v6067
    %v6154 = vpop.f32.mrb[0].mxu0
    %v6155 = vadd.f32 %v6042, %v6154
    %v6156 = vpop.f32.mrb[0].mxu0
    %6157 = vmatprep.mubr.f32.mxu0 0.0
    %6158 = vmatmul.mubr.f32.gmra.mrb[0].mxu0 %v6070
    %v6159 = vpop.f32.mrb[0].mxu0
    %v6160 = vadd.f32 %v6047, %v6159
    %v6161 = vpop.f32.mrb[0].mxu0
    %6162 = vmatprep.mubr.f32.mxu0 0.0
    %6163 = vmatmul.mubr.f32.gmra.mrb[0].mxu0 %v6073
    %v6164 = vpop.f32.mrb[0].mxu0
    %v6165 = vadd.f32 %v6052, %v6164
    %v6166 = vpop.f32.mrb[0].mxu0
    %6167 = vmatprep.mubr.f32.mxu0 0.0
    %6168 = vmatmul.mubr.f32.gmra.mrb[0].mxu0 %v6076
    %v6169 = vpop.f32.mrb[0].mxu0
    %v6170 = vadd.f32 %v6057, %v6169
    %v6171 = vpop.f32.mrb[0].mxu0
    %6172 = vdwg.mxu0
    %v6173 = vld [vmem:[#allocation2 + $0x3] sm:$0xff]
    %v6174 = vld [vmem:[#allocation2 + $0xb] sm:$0xff]
    %v6175 = vld [vmem:[#allocation2 + $0x13] sm:$0xff]
    %v6176 = vld [vmem:[#allocation2 + $0x1b] sm:$0xff]
    %v6177 = vld [vmem:[#allocation2 + $0x23] sm:$0xff]
    %v6178 = vld [vmem:[#allocation2 + $0x2b] sm:$0xff]
    %v6179 = vld [vmem:[%s18 + $0x30] sm:$0xff]
    %v6180 = vld [vmem:[%s18 + $0x38] sm:$0xff]
    %v6181 = vld [vmem:[%s18 + $0x40] sm:$0xff]
    %v6183 = vsel %vm2137, %v6173, 0
    %v6186 = vsel %vm2137, %v6174, 0
    %v6189 = vsel %vm2137, %v6175, 0
    %v6192 = vsel %vm2137, %v6176, 0
    %v6195 = vsel %vm2137, %v6177, 0
    %v6198 = vsel %vm2137, %v6178, 0
    %6200 = vmatprep.subr.mxu0 0.0
    %6201 = vmatpush1.msra.mxu0 %v6179
    %6202 = vmatprep.subr.mxu0 0.0
    %6203 = vmatpush1.msra.mxu0 %v6180
    %6204 = vmatprep.subr.mxu0 0.0
    %6205 = vmatpush1.msra.mxu0 %v6181
    %6206 = vmatprep.subr.mxu0 0.0
    %6207 = vmatpush1.msra.mxu0 0.0
    %6208 = vmatprep.subr.mxu0 0.0
    %6209 = vmatpush1.msra.mxu0 0.0
    %6210 = vmatprep.subr.mxu0 0.0
    %6211 = vmatpush1.msra.mxu0 0.0
    %6212 = vmatprep.subr.mxu0 0.0
    %6213 = vmatpush1.msra.mxu0 0.0
    %6214 = vmatprep.subr.mxu0 0.0
    %6215 = vmatpush1.msra.mxu0 0.0
    %6216 = vmatprep.subr.mxu0 0.0
    %6217 = vmatpush1.msra.mxu0 0.0
    %6218 = vmatprep.subr.mxu0 0.0
    %6219 = vmatpush1.msra.mxu0 0.0
    %6220 = vmatprep.subr.mxu0 0.0
    %6221 = vmatpush1.msra.mxu0 0.0
    %6222 = vmatprep.subr.mxu0 0.0
    %6223 = vmatpush1.msra.mxu0 0.0
    %6224 = vmatprep.subr.mxu0 0.0
    %6225 = vmatpush1.msra.mxu0 0.0
    %6226 = vmatprep.subr.mxu0 0.0
    %6227 = vmatpush1.msra.mxu0 0.0
    %6228 = vmatprep.subr.mxu0 0.0
    %6229 = vmatpush1.msra.mxu0 0.0
    %6230 = vmatprep.subr.mxu0 0.0
    %6231 = vmatpush1.msra.mxu0 0.0
    %6232 = vmatprep.subr.mxu0 0.0
    %6233 = vmatpush1.msra.mxu0 0.0
    %6234 = vmatprep.subr.mxu0 0.0
    %6235 = vmatpush1.msra.mxu0 0.0
    %6236 = vmatprep.subr.mxu0 0.0
    %6237 = vmatpush1.msra.mxu0 0.0
    %6238 = vmatprep.subr.mxu0 0.0
    %6239 = vmatpush1.msra.mxu0 0.0
    %6240 = vmatprep.subr.mxu0 0.0
    %6241 = vmatpush1.msra.mxu0 0.0
    %6242 = vmatprep.subr.mxu0 0.0
    %6243 = vmatpush1.msra.mxu0 0.0
    %6244 = vmatprep.subr.mxu0 0.0
    %6245 = vmatpush1.msra.mxu0 0.0
    %6246 = vmatprep.subr.mxu0 0.0
    %6247 = vmatpush1.msra.mxu0 0.0
    %6248 = vmatprep.subr.mxu0 0.0
    %6249 = vmatpush1.msra.mxu0 0.0
    %6250 = vmatprep.subr.mxu0 0.0
    %6251 = vmatpush1.msra.mxu0 0.0
    %6252 = vmatprep.subr.mxu0 0.0
    %6253 = vmatpush1.msra.mxu0 0.0
    %6254 = vmatprep.subr.mxu0 0.0
    %6255 = vmatpush1.msra.mxu0 0.0
    %6256 = vmatprep.subr.mxu0 0.0
    %6257 = vmatpush1.msra.mxu0 0.0
    %6258 = vmatprep.subr.mxu0 0.0
    %6259 = vmatpush1.msra.mxu0 0.0
    %6260 = vmatprep.subr.mxu0 0.0
    %6261 = vmatpush1.msra.mxu0 0.0
    %6262 = vmatprep.subr.mxu0 0.0
    %6263 = vmatpush1.msra.mxu0 0.0
    %6264 = vmatprep.mubr.f32.mxu0 0.0
    %6265 = vmatmul.mubr.f32.gmra.mrb[0].mxu0 %v6183
    %v6266 = vpop.f32.mrb[0].mxu0
    %v6267 = vadd.f32 0.0, %v6266
    %v6268 = vpop.f32.mrb[0].mxu0
    %6269 = vmatprep.mubr.f32.mxu0 0.0
    %6270 = vmatmul.mubr.f32.gmra.mrb[0].mxu0 %v6186
    %v6271 = vpop.f32.mrb[0].mxu0
    %v6272 = vadd.f32 0.0, %v6271
    %v6273 = vpop.f32.mrb[0].mxu0
    %6274 = vmatprep.mubr.f32.mxu0 0.0
    %6275 = vmatmul.mubr.f32.gmra.mrb[0].mxu0 %v6189
    %v6276 = vpop.f32.mrb[0].mxu0
    %v6277 = vadd.f32 0.0, %v6276
    %v6278 = vpop.f32.mrb[0].mxu0
    %6279 = vmatprep.mubr.f32.mxu0 0.0
    %6280 = vmatmul.mubr.f32.gmra.mrb[0].mxu0 %v6192
    %v6281 = vpop.f32.mrb[0].mxu0
    %v6282 = vadd.f32 0.0, %v6281
    %v6283 = vpop.f32.mrb[0].mxu0
    %6284 = vmatprep.mubr.f32.mxu0 0.0
    %6285 = vmatmul.mubr.f32.gmra.mrb[0].mxu0 %v6195
    %v6286 = vpop.f32.mrb[0].mxu0
    %v6287 = vadd.f32 0.0, %v6286
    %v6288 = vpop.f32.mrb[0].mxu0
    %6289 = vmatprep.mubr.f32.mxu0 0.0
    %6290 = vmatmul.mubr.f32.gmra.mrb[0].mxu0 %v6198
    %v6291 = vpop.f32.mrb[0].mxu0
    %v6292 = vadd.f32 0.0, %v6291
    %v6293 = vpop.f32.mrb[0].mxu0
    %6294 = vdwg.mxu0
    %v6295 = vadd.f32 %v6145, %v6267
    %v6296 = vadd.f32 %v6150, %v6272
    %v6297 = vadd.f32 %v6155, %v6277
    %v6298 = vadd.f32 %v6160, %v6282
    %v6299 = vadd.f32 %v6165, %v6287
    %v6300 = vadd.f32 %v6170, %v6292
    %v6301 = vld [vmem:[#allocation2 + $0x4] sm:$0xff]
    %v6302 = vld [vmem:[#allocation2 + $0xc] sm:$0xff]
    %v6303 = vld [vmem:[#allocation2 + $0x14] sm:$0xff]
    %v6304 = vld [vmem:[#allocation2 + $0x1c] sm:$0xff]
    %v6305 = vld [vmem:[#allocation2 + $0x24] sm:$0xff]
    %v6306 = vld [vmem:[#allocation2 + $0x2c] sm:$0xff]
    %v6307 = vld [vmem:[%s18 + $0x48] sm:$0xff]
    %v6308 = vld [vmem:[%s18 + $0x50] sm:$0xff]
    %v6309 = vld [vmem:[%s18 + $0x58] sm:$0xff]
    %v6311 = vsel %vm2137, %v6301, 0
    %v6314 = vsel %vm2137, %v6302, 0
    %v6317 = vsel %vm2137, %v6303, 0
    %v6320 = vsel %vm2137, %v6304, 0
    %v6323 = vsel %vm2137, %v6305, 0
    %v6326 = vsel %vm2137, %v6306, 0
    %6328 = vmatprep.subr.mxu0 0.0
    %6329 = vmatpush1.msra.mxu0 %v6307
    %6330 = vmatprep.subr.mxu0 0.0
    %6331 = vmatpush1.msra.mxu0 %v6308
    %6332 = vmatprep.subr.mxu0 0.0
    %6333 = vmatpush1.msra.mxu0 %v6309
    %6334 = vmatprep.subr.mxu0 0.0
    %6335 = vmatpush1.msra.mxu0 0.0
    %6336 = vmatprep.subr.mxu0 0.0
    %6337 = vmatpush1.msra.mxu0 0.0
    %6338 = vmatprep.subr.mxu0 0.0
    %6339 = vmatpush1.msra.mxu0 0.0
    %6340 = vmatprep.subr.mxu0 0.0
    %6341 = vmatpush1.msra.mxu0 0.0
    %6342 = vmatprep.subr.mxu0 0.0
    %6343 = vmatpush1.msra.mxu0 0.0
    %6344 = vmatprep.subr.mxu0 0.0
    %6345 = vmatpush1.msra.mxu0 0.0
    %6346 = vmatprep.subr.mxu0 0.0
    %6347 = vmatpush1.msra.mxu0 0.0
    %6348 = vmatprep.subr.mxu0 0.0
    %6349 = vmatpush1.msra.mxu0 0.0
    %6350 = vmatprep.subr.mxu0 0.0
    %6351 = vmatpush1.msra.mxu0 0.0
    %6352 = vmatprep.subr.mxu0 0.0
    %6353 = vmatpush1.msra.mxu0 0.0
    %6354 = vmatprep.subr.mxu0 0.0
    %6355 = vmatpush1.msra.mxu0 0.0
    %6356 = vmatprep.subr.mxu0 0.0
    %6357 = vmatpush1.msra.mxu0 0.0
    %6358 = vmatprep.subr.mxu0 0.0
    %6359 = vmatpush1.msra.mxu0 0.0
    %6360 = vmatprep.subr.mxu0 0.0
    %6361 = vmatpush1.msra.mxu0 0.0
    %6362 = vmatprep.subr.mxu0 0.0
    %6363 = vmatpush1.msra.mxu0 0.0
    %6364 = vmatprep.subr.mxu0 0.0
    %6365 = vmatpush1.msra.mxu0 0.0
    %6366 = vmatprep.subr.mxu0 0.0
    %6367 = vmatpush1.msra.mxu0 0.0
    %6368 = vmatprep.subr.mxu0 0.0
    %6369 = vmatpush1.msra.mxu0 0.0
    %6370 = vmatprep.subr.mxu0 0.0
    %6371 = vmatpush1.msra.mxu0 0.0
    %6372 = vmatprep.subr.mxu0 0.0
    %6373 = vmatpush1.msra.mxu0 0.0
    %6374 = vmatprep.subr.mxu0 0.0
    %6375 = vmatpush1.msra.mxu0 0.0
    %6376 = vmatprep.subr.mxu0 0.0
    %6377 = vmatpush1.msra.mxu0 0.0
    %6378 = vmatprep.subr.mxu0 0.0
    %6379 = vmatpush1.msra.mxu0 0.0
    %6380 = vmatprep.subr.mxu0 0.0
    %6381 = vmatpush1.msra.mxu0 0.0
    %6382 = vmatprep.subr.mxu0 0.0
    %6383 = vmatpush1.msra.mxu0 0.0
    %6384 = vmatprep.subr.mxu0 0.0
    %6385 = vmatpush1.msra.mxu0 0.0
    %6386 = vmatprep.subr.mxu0 0.0
    %6387 = vmatpush1.msra.mxu0 0.0
    %6388 = vmatprep.subr.mxu0 0.0
    %6389 = vmatpush1.msra.mxu0 0.0
    %6390 = vmatprep.subr.mxu0 0.0
    %6391 = vmatpush1.msra.mxu0 0.0
    %6392 = vmatprep.mubr.f32.mxu0 0.0
    %6393 = vmatmul.mubr.f32.gmra.mrb[0].mxu0 %v6311
    %v6394 = vpop.f32.mrb[0].mxu0
    %v6395 = vadd.f32 0.0, %v6394
    %v6396 = vpop.f32.mrb[0].mxu0
    %6397 = vmatprep.mubr.f32.mxu0 0.0
    %6398 = vmatmul.mubr.f32.gmra.mrb[0].mxu0 %v6314
    %v6399 = vpop.f32.mrb[0].mxu0
    %v6400 = vadd.f32 0.0, %v6399
    %v6401 = vpop.f32.mrb[0].mxu0
    %6402 = vmatprep.mubr.f32.mxu0 0.0
    %6403 = vmatmul.mubr.f32.gmra.mrb[0].mxu0 %v6317
    %v6404 = vpop.f32.mrb[0].mxu0
    %v6405 = vadd.f32 0.0, %v6404
    %v6406 = vpop.f32.mrb[0].mxu0
    %6407 = vmatprep.mubr.f32.mxu0 0.0
    %6408 = vmatmul.mubr.f32.gmra.mrb[0].mxu0 %v6320
    %v6409 = vpop.f32.mrb[0].mxu0
    %v6410 = vadd.f32 0.0, %v6409
    %v6411 = vpop.f32.mrb[0].mxu0
    %6412 = vmatprep.mubr.f32.mxu0 0.0
    %6413 = vmatmul.mubr.f32.gmra.mrb[0].mxu0 %v6323
    %v6414 = vpop.f32.mrb[0].mxu0
    %v6415 = vadd.f32 0.0, %v6414
    %v6416 = vpop.f32.mrb[0].mxu0
    %6417 = vmatprep.mubr.f32.mxu0 0.0
    %6418 = vmatmul.mubr.f32.gmra.mrb[0].mxu0 %v6326
    %v6419 = vpop.f32.mrb[0].mxu0
    %v6420 = vadd.f32 0.0, %v6419
    %v6421 = vpop.f32.mrb[0].mxu0
    %6422 = vdwg.mxu0
    %v6423 = vadd.f32 %v6295, %v6395
    %v6424 = vadd.f32 %v6296, %v6400
    %v6425 = vadd.f32 %v6297, %v6405
    %v6426 = vadd.f32 %v6298, %v6410
    %v6427 = vadd.f32 %v6299, %v6415
    %v6428 = vadd.f32 %v6300, %v6420
    %v6429 = vld [vmem:[#allocation2 + $0x5] sm:$0xff]
    %v6430 = vld [vmem:[#allocation2 + $0xd] sm:$0xff]
    %v6431 = vld [vmem:[#allocation2 + $0x15] sm:$0xff]
    %v6432 = vld [vmem:[#allocation2 + $0x1d] sm:$0xff]
    %v6433 = vld [vmem:[#allocation2 + $0x25] sm:$0xff]
    %v6434 = vld [vmem:[#allocation2 + $0x2d] sm:$0xff]
    %v6435 = vld [vmem:[%s18 + $0x60] sm:$0xff]
    %v6436 = vld [vmem:[%s18 + $0x68] sm:$0xff]
    %v6437 = vld [vmem:[%s18 + $0x70] sm:$0xff]
    %v6439 = vsel %vm2137, %v6429, 0
    %v6442 = vsel %vm2137, %v6430, 0
    %v6445 = vsel %vm2137, %v6431, 0
    %v6448 = vsel %vm2137, %v6432, 0
    %v6451 = vsel %vm2137, %v6433, 0
    %v6454 = vsel %vm2137, %v6434, 0
    %6456 = vmatprep.subr.mxu0 0.0
    %6457 = vmatpush1.msra.mxu0 %v6435
    %6458 = vmatprep.subr.mxu0 0.0
    %6459 = vmatpush1.msra.mxu0 %v6436
    %6460 = vmatprep.subr.mxu0 0.0
    %6461 = vmatpush1.msra.mxu0 %v6437
    %6462 = vmatprep.subr.mxu0 0.0
    %6463 = vmatpush1.msra.mxu0 0.0
    %6464 = vmatprep.subr.mxu0 0.0
    %6465 = vmatpush1.msra.mxu0 0.0
    %6466 = vmatprep.subr.mxu0 0.0
    %6467 = vmatpush1.msra.mxu0 0.0
    %6468 = vmatprep.subr.mxu0 0.0
    %6469 = vmatpush1.msra.mxu0 0.0
    %6470 = vmatprep.subr.mxu0 0.0
    %6471 = vmatpush1.msra.mxu0 0.0
    %6472 = vmatprep.subr.mxu0 0.0
    %6473 = vmatpush1.msra.mxu0 0.0
    %6474 = vmatprep.subr.mxu0 0.0
    %6475 = vmatpush1.msra.mxu0 0.0
    %6476 = vmatprep.subr.mxu0 0.0
    %6477 = vmatpush1.msra.mxu0 0.0
    %6478 = vmatprep.subr.mxu0 0.0
    %6479 = vmatpush1.msra.mxu0 0.0
    %6480 = vmatprep.subr.mxu0 0.0
    %6481 = vmatpush1.msra.mxu0 0.0
    %6482 = vmatprep.subr.mxu0 0.0
    %6483 = vmatpush1.msra.mxu0 0.0
    %6484 = vmatprep.subr.mxu0 0.0
    %6485 = vmatpush1.msra.mxu0 0.0
    %6486 = vmatprep.subr.mxu0 0.0
    %6487 = vmatpush1.msra.mxu0 0.0
    %6488 = vmatprep.subr.mxu0 0.0
    %6489 = vmatpush1.msra.mxu0 0.0
    %6490 = vmatprep.subr.mxu0 0.0
    %6491 = vmatpush1.msra.mxu0 0.0
    %6492 = vmatprep.subr.mxu0 0.0
    %6493 = vmatpush1.msra.mxu0 0.0
    %6494 = vmatprep.subr.mxu0 0.0
    %6495 = vmatpush1.msra.mxu0 0.0
    %6496 = vmatprep.subr.mxu0 0.0
    %6497 = vmatpush1.msra.mxu0 0.0
    %6498 = vmatprep.subr.mxu0 0.0
    %6499 = vmatpush1.msra.mxu0 0.0
    %6500 = vmatprep.subr.mxu0 0.0
    %6501 = vmatpush1.msra.mxu0 0.0
    %6502 = vmatprep.subr.mxu0 0.0
    %6503 = vmatpush1.msra.mxu0 0.0
    %6504 = vmatprep.subr.mxu0 0.0
    %6505 = vmatpush1.msra.mxu0 0.0
    %6506 = vmatprep.subr.mxu0 0.0
    %6507 = vmatpush1.msra.mxu0 0.0
    %6508 = vmatprep.subr.mxu0 0.0
    %6509 = vmatpush1.msra.mxu0 0.0
    %6510 = vmatprep.subr.mxu0 0.0
    %6511 = vmatpush1.msra.mxu0 0.0
    %6512 = vmatprep.subr.mxu0 0.0
    %6513 = vmatpush1.msra.mxu0 0.0
    %6514 = vmatprep.subr.mxu0 0.0
    %6515 = vmatpush1.msra.mxu0 0.0
    %6516 = vmatprep.subr.mxu0 0.0
    %6517 = vmatpush1.msra.mxu0 0.0
    %6518 = vmatprep.subr.mxu0 0.0
    %6519 = vmatpush1.msra.mxu0 0.0
    %6520 = vmatprep.mubr.f32.mxu0 0.0
    %6521 = vmatmul.mubr.f32.gmra.mrb[0].mxu0 %v6439
    %v6522 = vpop.f32.mrb[0].mxu0
    %v6523 = vadd.f32 0.0, %v6522
    %v6524 = vpop.f32.mrb[0].mxu0
    %6525 = vmatprep.mubr.f32.mxu0 0.0
    %6526 = vmatmul.mubr.f32.gmra.mrb[0].mxu0 %v6442
    %v6527 = vpop.f32.mrb[0].mxu0
    %v6528 = vadd.f32 0.0, %v6527
    %v6529 = vpop.f32.mrb[0].mxu0
    %6530 = vmatprep.mubr.f32.mxu0 0.0
    %6531 = vmatmul.mubr.f32.gmra.mrb[0].mxu0 %v6445
    %v6532 = vpop.f32.mrb[0].mxu0
    %v6533 = vadd.f32 0.0, %v6532
    %v6534 = vpop.f32.mrb[0].mxu0
    %6535 = vmatprep.mubr.f32.mxu0 0.0
    %6536 = vmatmul.mubr.f32.gmra.mrb[0].mxu0 %v6448
    %v6537 = vpop.f32.mrb[0].mxu0
    %v6538 = vadd.f32 0.0, %v6537
    %v6539 = vpop.f32.mrb[0].mxu0
    %6540 = vmatprep.mubr.f32.mxu0 0.0
    %6541 = vmatmul.mubr.f32.gmra.mrb[0].mxu0 %v6451
    %v6542 = vpop.f32.mrb[0].mxu0
    %v6543 = vadd.f32 0.0, %v6542
    %v6544 = vpop.f32.mrb[0].mxu0
    %6545 = vmatprep.mubr.f32.mxu0 0.0
    %6546 = vmatmul.mubr.f32.gmra.mrb[0].mxu0 %v6454
    %v6547 = vpop.f32.mrb[0].mxu0
    %v6548 = vadd.f32 0.0, %v6547
    %v6549 = vpop.f32.mrb[0].mxu0
    %6550 = vdwg.mxu0
    %v6551 = vadd.f32 %v6423, %v6523
    %v6552 = vadd.f32 %v6424, %v6528
    %v6553 = vadd.f32 %v6425, %v6533
    %v6554 = vadd.f32 %v6426, %v6538
    %v6555 = vadd.f32 %v6427, %v6543
    %v6556 = vadd.f32 %v6428, %v6548
    %v6557 = vld [vmem:[#allocation2 + $0x6] sm:$0xff]
    %v6558 = vld [vmem:[#allocation2 + $0xe] sm:$0xff]
    %v6559 = vld [vmem:[#allocation2 + $0x16] sm:$0xff]
    %v6560 = vld [vmem:[#allocation2 + $0x1e] sm:$0xff]
    %v6561 = vld [vmem:[#allocation2 + $0x26] sm:$0xff]
    %v6562 = vld [vmem:[#allocation2 + $0x2e] sm:$0xff]
    %v6563 = vld [vmem:[%s18 + $0x78] sm:$0xff]
    %v6564 = vld [vmem:[%s18 + $0x80] sm:$0xff]
    %v6565 = vld [vmem:[%s18 + $0x88] sm:$0xff]
    %v6567 = vsel %vm2137, %v6557, 0
    %v6570 = vsel %vm2137, %v6558, 0
    %v6573 = vsel %vm2137, %v6559, 0
    %v6576 = vsel %vm2137, %v6560, 0
    %v6579 = vsel %vm2137, %v6561, 0
    %v6582 = vsel %vm2137, %v6562, 0
    %6584 = vmatprep.subr.mxu0 0.0
    %6585 = vmatpush1.msra.mxu0 %v6563
    %6586 = vmatprep.subr.mxu0 0.0
    %6587 = vmatpush1.msra.mxu0 %v6564
    %6588 = vmatprep.subr.mxu0 0.0
    %6589 = vmatpush1.msra.mxu0 %v6565
    %6590 = vmatprep.subr.mxu0 0.0
    %6591 = vmatpush1.msra.mxu0 0.0
    %6592 = vmatprep.subr.mxu0 0.0
    %6593 = vmatpush1.msra.mxu0 0.0
    %6594 = vmatprep.subr.mxu0 0.0
    %6595 = vmatpush1.msra.mxu0 0.0
    %6596 = vmatprep.subr.mxu0 0.0
    %6597 = vmatpush1.msra.mxu0 0.0
    %6598 = vmatprep.subr.mxu0 0.0
    %6599 = vmatpush1.msra.mxu0 0.0
    %6600 = vmatprep.subr.mxu0 0.0
    %6601 = vmatpush1.msra.mxu0 0.0
    %6602 = vmatprep.subr.mxu0 0.0
    %6603 = vmatpush1.msra.mxu0 0.0
    %6604 = vmatprep.subr.mxu0 0.0
    %6605 = vmatpush1.msra.mxu0 0.0
    %6606 = vmatprep.subr.mxu0 0.0
    %6607 = vmatpush1.msra.mxu0 0.0
    %6608 = vmatprep.subr.mxu0 0.0
    %6609 = vmatpush1.msra.mxu0 0.0
    %6610 = vmatprep.subr.mxu0 0.0
    %6611 = vmatpush1.msra.mxu0 0.0
    %6612 = vmatprep.subr.mxu0 0.0
    %6613 = vmatpush1.msra.mxu0 0.0
    %6614 = vmatprep.subr.mxu0 0.0
    %6615 = vmatpush1.msra.mxu0 0.0
    %6616 = vmatprep.subr.mxu0 0.0
    %6617 = vmatpush1.msra.mxu0 0.0
    %6618 = vmatprep.subr.mxu0 0.0
    %6619 = vmatpush1.msra.mxu0 0.0
    %6620 = vmatprep.subr.mxu0 0.0
    %6621 = vmatpush1.msra.mxu0 0.0
    %6622 = vmatprep.subr.mxu0 0.0
    %6623 = vmatpush1.msra.mxu0 0.0
    %6624 = vmatprep.subr.mxu0 0.0
    %6625 = vmatpush1.msra.mxu0 0.0
    %6626 = vmatprep.subr.mxu0 0.0
    %6627 = vmatpush1.msra.mxu0 0.0
    %6628 = vmatprep.subr.mxu0 0.0
    %6629 = vmatpush1.msra.mxu0 0.0
    %6630 = vmatprep.subr.mxu0 0.0
    %6631 = vmatpush1.msra.mxu0 0.0
    %6632 = vmatprep.subr.mxu0 0.0
    %6633 = vmatpush1.msra.mxu0 0.0
    %6634 = vmatprep.subr.mxu0 0.0
    %6635 = vmatpush1.msra.mxu0 0.0
    %6636 = vmatprep.subr.mxu0 0.0
    %6637 = vmatpush1.msra.mxu0 0.0
    %6638 = vmatprep.subr.mxu0 0.0
    %6639 = vmatpush1.msra.mxu0 0.0
    %6640 = vmatprep.subr.mxu0 0.0
    %6641 = vmatpush1.msra.mxu0 0.0
    %6642 = vmatprep.subr.mxu0 0.0
    %6643 = vmatpush1.msra.mxu0 0.0
    %6644 = vmatprep.subr.mxu0 0.0
    %6645 = vmatpush1.msra.mxu0 0.0
    %6646 = vmatprep.subr.mxu0 0.0
    %6647 = vmatpush1.msra.mxu0 0.0
    %6648 = vmatprep.mubr.f32.mxu0 0.0
    %6649 = vmatmul.mubr.f32.gmra.mrb[0].mxu0 %v6567
    %v6650 = vpop.f32.mrb[0].mxu0
    %v6651 = vadd.f32 0.0, %v6650
    %v6652 = vpop.f32.mrb[0].mxu0
    %6653 = vmatprep.mubr.f32.mxu0 0.0
    %6654 = vmatmul.mubr.f32.gmra.mrb[0].mxu0 %v6570
    %v6655 = vpop.f32.mrb[0].mxu0
    %v6656 = vadd.f32 0.0, %v6655
    %v6657 = vpop.f32.mrb[0].mxu0
    %6658 = vmatprep.mubr.f32.mxu0 0.0
    %6659 = vmatmul.mubr.f32.gmra.mrb[0].mxu0 %v6573
    %v6660 = vpop.f32.mrb[0].mxu0
    %v6661 = vadd.f32 0.0, %v6660
    %v6662 = vpop.f32.mrb[0].mxu0
    %6663 = vmatprep.mubr.f32.mxu0 0.0
    %6664 = vmatmul.mubr.f32.gmra.mrb[0].mxu0 %v6576
    %v6665 = vpop.f32.mrb[0].mxu0
    %v6666 = vadd.f32 0.0, %v6665
    %v6667 = vpop.f32.mrb[0].mxu0
    %6668 = vmatprep.mubr.f32.mxu0 0.0
    %6669 = vmatmul.mubr.f32.gmra.mrb[0].mxu0 %v6579
    %v6670 = vpop.f32.mrb[0].mxu0
    %v6671 = vadd.f32 0.0, %v6670
    %v6672 = vpop.f32.mrb[0].mxu0
    %6673 = vmatprep.mubr.f32.mxu0 0.0
    %6674 = vmatmul.mubr.f32.gmra.mrb[0].mxu0 %v6582
    %v6675 = vpop.f32.mrb[0].mxu0
    %v6676 = vadd.f32 0.0, %v6675
    %v6677 = vpop.f32.mrb[0].mxu0
    %6678 = vdwg.mxu0
    %v6679 = vadd.f32 %v6551, %v6651
    %v6680 = vadd.f32 %v6552, %v6656
    %v6681 = vadd.f32 %v6553, %v6661
    %v6682 = vadd.f32 %v6554, %v6666
    %v6683 = vadd.f32 %v6555, %v6671
    %v6684 = vadd.f32 %v6556, %v6676
    %v6685 = vld [vmem:[#allocation2 + $0x8] sm:$0xff]
    %v6686 = vld [vmem:[#allocation2 + $0x10] sm:$0xff]
    %v6687 = vld [vmem:[#allocation2 + $0x18] sm:$0xff]
    %v6688 = vld [vmem:[#allocation2 + $0x20] sm:$0xff]
    %v6689 = vld [vmem:[#allocation2 + $0x28] sm:$0xff]
    %v6690 = vld [vmem:[#allocation2 + $0x30] sm:$0xff]
    %v6691 = vld [vmem:[%s18 + $0x90] sm:$0xff]
    %v6692 = vld [vmem:[%s18 + $0x98] sm:$0xff]
    %v6693 = vld [vmem:[%s18 + $0xa0] sm:$0xff]
    %v6695 = vsel %vm2137, %v6685, 0
    %v6698 = vsel %vm2137, %v6686, 0
    %v6701 = vsel %vm2137, %v6687, 0
    %v6704 = vsel %vm2137, %v6688, 0
    %v6707 = vsel %vm2137, %v6689, 0
    %v6710 = vsel %vm2137, %v6690, 0
    %6712 = vmatprep.subr.mxu0 0.0
    %6713 = vmatpush1.msra.mxu0 %v6691
    %6714 = vmatprep.subr.mxu0 0.0
    %6715 = vmatpush1.msra.mxu0 %v6692
    %6716 = vmatprep.subr.mxu0 0.0
    %6717 = vmatpush1.msra.mxu0 %v6693
    %6718 = vmatprep.subr.mxu0 0.0
    %6719 = vmatpush1.msra.mxu0 0.0
    %6720 = vmatprep.subr.mxu0 0.0
    %6721 = vmatpush1.msra.mxu0 0.0
    %6722 = vmatprep.subr.mxu0 0.0
    %6723 = vmatpush1.msra.mxu0 0.0
    %6724 = vmatprep.subr.mxu0 0.0
    %6725 = vmatpush1.msra.mxu0 0.0
    %6726 = vmatprep.subr.mxu0 0.0
    %6727 = vmatpush1.msra.mxu0 0.0
    %6728 = vmatprep.subr.mxu0 0.0
    %6729 = vmatpush1.msra.mxu0 0.0
    %6730 = vmatprep.subr.mxu0 0.0
    %6731 = vmatpush1.msra.mxu0 0.0
    %6732 = vmatprep.subr.mxu0 0.0
    %6733 = vmatpush1.msra.mxu0 0.0
    %6734 = vmatprep.subr.mxu0 0.0
    %6735 = vmatpush1.msra.mxu0 0.0
    %6736 = vmatprep.subr.mxu0 0.0
    %6737 = vmatpush1.msra.mxu0 0.0
    %6738 = vmatprep.subr.mxu0 0.0
    %6739 = vmatpush1.msra.mxu0 0.0
    %6740 = vmatprep.subr.mxu0 0.0
    %6741 = vmatpush1.msra.mxu0 0.0
    %6742 = vmatprep.subr.mxu0 0.0
    %6743 = vmatpush1.msra.mxu0 0.0
    %6744 = vmatprep.subr.mxu0 0.0
    %6745 = vmatpush1.msra.mxu0 0.0
    %6746 = vmatprep.subr.mxu0 0.0
    %6747 = vmatpush1.msra.mxu0 0.0
    %6748 = vmatprep.subr.mxu0 0.0
    %6749 = vmatpush1.msra.mxu0 0.0
    %6750 = vmatprep.subr.mxu0 0.0
    %6751 = vmatpush1.msra.mxu0 0.0
    %6752 = vmatprep.subr.mxu0 0.0
    %6753 = vmatpush1.msra.mxu0 0.0
    %6754 = vmatprep.subr.mxu0 0.0
    %6755 = vmatpush1.msra.mxu0 0.0
    %6756 = vmatprep.subr.mxu0 0.0
    %6757 = vmatpush1.msra.mxu0 0.0
    %6758 = vmatprep.subr.mxu0 0.0
    %6759 = vmatpush1.msra.mxu0 0.0
    %6760 = vmatprep.subr.mxu0 0.0
    %6761 = vmatpush1.msra.mxu0 0.0
    %6762 = vmatprep.subr.mxu0 0.0
    %6763 = vmatpush1.msra.mxu0 0.0
    %6764 = vmatprep.subr.mxu0 0.0
    %6765 = vmatpush1.msra.mxu0 0.0
    %6766 = vmatprep.subr.mxu0 0.0
    %6767 = vmatpush1.msra.mxu0 0.0
    %6768 = vmatprep.subr.mxu0 0.0
    %6769 = vmatpush1.msra.mxu0 0.0
    %6770 = vmatprep.subr.mxu0 0.0
    %6771 = vmatpush1.msra.mxu0 0.0
    %6772 = vmatprep.subr.mxu0 0.0
    %6773 = vmatpush1.msra.mxu0 0.0
    %6774 = vmatprep.subr.mxu0 0.0
    %6775 = vmatpush1.msra.mxu0 0.0
    %6776 = vmatprep.mubr.f32.mxu0 0.0
    %6777 = vmatmul.mubr.f32.gmra.mrb[0].mxu0 %v6695
    %v6778 = vpop.f32.mrb[0].mxu0
    %v6779 = vadd.f32 0.0, %v6778
    %v6780 = vpop.f32.mrb[0].mxu0
    %6781 = vmatprep.mubr.f32.mxu0 0.0
    %6782 = vmatmul.mubr.f32.gmra.mrb[0].mxu0 %v6698
    %v6783 = vpop.f32.mrb[0].mxu0
    %v6784 = vadd.f32 0.0, %v6783
    %v6785 = vpop.f32.mrb[0].mxu0
    %6786 = vmatprep.mubr.f32.mxu0 0.0
    %6787 = vmatmul.mubr.f32.gmra.mrb[0].mxu0 %v6701
    %v6788 = vpop.f32.mrb[0].mxu0
    %v6789 = vadd.f32 0.0, %v6788
    %v6790 = vpop.f32.mrb[0].mxu0
    %6791 = vmatprep.mubr.f32.mxu0 0.0
    %6792 = vmatmul.mubr.f32.gmra.mrb[0].mxu0 %v6704
    %v6793 = vpop.f32.mrb[0].mxu0
    %v6794 = vadd.f32 0.0, %v6793
    %v6795 = vpop.f32.mrb[0].mxu0
    %6796 = vmatprep.mubr.f32.mxu0 0.0
    %6797 = vmatmul.mubr.f32.gmra.mrb[0].mxu0 %v6707
    %v6798 = vpop.f32.mrb[0].mxu0
    %v6799 = vadd.f32 0.0, %v6798
    %v6800 = vpop.f32.mrb[0].mxu0
    %6801 = vmatprep.mubr.f32.mxu0 0.0
    %6802 = vmatmul.mubr.f32.gmra.mrb[0].mxu0 %v6710
    %v6803 = vpop.f32.mrb[0].mxu0
    %v6804 = vadd.f32 0.0, %v6803
    %v6805 = vpop.f32.mrb[0].mxu0
    %6806 = vdwg.mxu0
    %v6807 = vadd.f32 %v6679, %v6779
    %v6808 = vadd.f32 %v6680, %v6784
    %v6809 = vadd.f32 %v6681, %v6789
    %v6810 = vadd.f32 %v6682, %v6794
    %v6811 = vadd.f32 %v6683, %v6799
    %v6812 = vadd.f32 %v6684, %v6804
    %v6813 = vld [vmem:[%s19] sm:$0x1]
    %v6815 = vlaneseq
    %v6816 = vshrl.u32 %v6815, 7
    %v6817 = vsub.s32 0, %v6816
    %v6818 = vrot.slane %v6813, %v6817
    %v6820 = vadd.f32 %v6807, %v6818
    %v6821 = vadd.f32 %v6808, %v6818
    %v6822 = vadd.f32 %v6809, %v6818
    %v6823 = vadd.f32 %v6810, %v6818
    %v6824 = vadd.f32 %v6811, %v6818
    %v6825 = vadd.f32 %v6812, %v6818
    %v6826 = vmax.f32 %v6820, 0.0
    %v6827 = vmax.f32 %v6821, 0.0
    %v6828 = vmax.f32 %v6822, 0.0
    %v6829 = vmax.f32 %v6823, 0.0
    %v6830 = vmax.f32 %v6824, 0.0
    %v6831 = vmax.f32 %v6825, 0.0
    %v6832 = vmul.f32 %v6826, %v1154
    %v6833 = vmul.f32 %v6827, %v1159
    %v6834 = vmul.f32 %v6828, %v1164
    %v6835 = vmul.f32 %v6829, %v1169
    %v6836 = vmul.f32 %v6830, %v1174
    %v6837 = vmul.f32 %v6831, %v1179
    %6838 = vst.msk [vmem:[#allocation3 + $0x4] sm:$0xff] %vm86, %v6832
    %6839 = vst.msk [vmem:[#allocation3 + $0xc] sm:$0xff] %vm86, %v6833
    %6840 = vst.msk [vmem:[#allocation3 + $0x14] sm:$0xff] %vm86, %v6834
    %6841 = vst.msk [vmem:[#allocation3 + $0x1c] sm:$0xff] %vm86, %v6835
    %6842 = vst.msk [vmem:[#allocation3 + $0x24] sm:$0xff] %vm86, %v6836
    %6843 = vst.msk [vmem:[#allocation3 + $0x2c] sm:$0xff] %vm86, %v6837
    %v6844 = vld [vmem:[#allocation3] sm:$0xff]
    %v6845 = vld [vmem:[#allocation3 + $0x8] sm:$0xff]
    %v6846 = vld [vmem:[#allocation3 + $0x10] sm:$0xff]
    %v6847 = vld [vmem:[#allocation3 + $0x18] sm:$0xff]
    %v6848 = vld [vmem:[#allocation3 + $0x20] sm:$0xff]
    %v6849 = vld [vmem:[#allocation3 + $0x28] sm:$0xff]
    %v6850 = vld [vmem:[%s20] sm:$0xff]
    %v6851 = vld [vmem:[#allocation3 + $0x2] sm:$0xff]
    %v6852 = vld [vmem:[#allocation3 + $0xa] sm:$0xff]
    %v6853 = vld [vmem:[#allocation3 + $0x12] sm:$0xff]
    %v6854 = vld [vmem:[#allocation3 + $0x1a] sm:$0xff]
    %v6855 = vld [vmem:[#allocation3 + $0x22] sm:$0xff]
    %v6856 = vld [vmem:[#allocation3 + $0x2a] sm:$0xff]
    %v6857 = vld [vmem:[%s20 + $0x8] sm:$0xff]
    %v6859 = vsel %vm86, %v6851, 0
    %v6862 = vsel %vm86, %v6852, 0
    %v6865 = vsel %vm86, %v6853, 0
    %v6868 = vsel %vm86, %v6854, 0
    %v6871 = vsel %vm86, %v6855, 0
    %v6874 = vsel %vm86, %v6856, 0
    %6876 = vmatprep.subr.mxu0 0.0
    %6877 = vmatpush1.msra.mxu0 %v6857
    %6878 = vmatprep.subr.mxu0 0.0
    %6879 = vmatpush1.msra.mxu0 0.0
    %6880 = vmatprep.subr.mxu0 0.0
    %6881 = vmatpush1.msra.mxu0 0.0
    %6882 = vmatprep.subr.mxu0 0.0
    %6883 = vmatpush1.msra.mxu0 0.0
    %6884 = vmatprep.subr.mxu0 0.0
    %6885 = vmatpush1.msra.mxu0 0.0
    %6886 = vmatprep.subr.mxu0 0.0
    %6887 = vmatpush1.msra.mxu0 0.0
    %6888 = vmatprep.subr.mxu0 0.0
    %6889 = vmatpush1.msra.mxu0 0.0
    %6890 = vmatprep.subr.mxu0 0.0
    %6891 = vmatpush1.msra.mxu0 0.0
    %6892 = vmatprep.subr.mxu0 0.0
    %6893 = vmatpush1.msra.mxu0 0.0
    %6894 = vmatprep.subr.mxu0 0.0
    %6895 = vmatpush1.msra.mxu0 0.0
    %6896 = vmatprep.subr.mxu0 0.0
    %6897 = vmatpush1.msra.mxu0 0.0
    %6898 = vmatprep.subr.mxu0 0.0
    %6899 = vmatpush1.msra.mxu0 0.0
    %6900 = vmatprep.subr.mxu0 0.0
    %6901 = vmatpush1.msra.mxu0 0.0
    %6902 = vmatprep.subr.mxu0 0.0
    %6903 = vmatpush1.msra.mxu0 0.0
    %6904 = vmatprep.subr.mxu0 0.0
    %6905 = vmatpush1.msra.mxu0 0.0
    %6906 = vmatprep.subr.mxu0 0.0
    %6907 = vmatpush1.msra.mxu0 0.0
    %6908 = vmatprep.subr.mxu0 0.0
    %6909 = vmatpush1.msra.mxu0 0.0
    %6910 = vmatprep.subr.mxu0 0.0
    %6911 = vmatpush1.msra.mxu0 0.0
    %6912 = vmatprep.subr.mxu0 0.0
    %6913 = vmatpush1.msra.mxu0 0.0
    %6914 = vmatprep.subr.mxu0 0.0
    %6915 = vmatpush1.msra.mxu0 0.0
    %6916 = vmatprep.subr.mxu0 0.0
    %6917 = vmatpush1.msra.mxu0 0.0
    %6918 = vmatprep.subr.mxu0 0.0
    %6919 = vmatpush1.msra.mxu0 0.0
    %6920 = vmatprep.subr.mxu0 0.0
    %6921 = vmatpush1.msra.mxu0 0.0
    %6922 = vmatprep.subr.mxu0 0.0
    %6923 = vmatpush1.msra.mxu0 0.0
    %6924 = vmatprep.subr.mxu0 0.0
    %6925 = vmatpush1.msra.mxu0 0.0
    %6926 = vmatprep.subr.mxu0 0.0
    %6927 = vmatpush1.msra.mxu0 0.0
    %6928 = vmatprep.subr.mxu0 0.0
    %6929 = vmatpush1.msra.mxu0 0.0
    %6930 = vmatprep.subr.mxu0 0.0
    %6931 = vmatpush1.msra.mxu0 0.0
    %6932 = vmatprep.subr.mxu0 0.0
    %6933 = vmatpush1.msra.mxu0 0.0
    %6934 = vmatprep.subr.mxu0 0.0
    %6935 = vmatpush1.msra.mxu0 0.0
    %6936 = vmatprep.subr.mxu0 0.0
    %6937 = vmatpush1.msra.mxu0 0.0
    %6938 = vmatprep.subr.mxu0 0.0
    %6939 = vmatpush1.msra.mxu0 0.0
    %6940 = vmatprep.mubr.f32.mxu0 0.0
    %6941 = vmatmul.mubr.f32.gmra.mrb[0].mxu0 %v6859
    %v6942 = vpop.f32.mrb[0].mxu0
    %v6943 = vadd.f32 0.0, %v6942
    %v6944 = vpop.f32.mrb[0].mxu0
    %6945 = vmatprep.mubr.f32.mxu0 0.0
    %6946 = vmatmul.mubr.f32.gmra.mrb[0].mxu0 %v6862
    %v6947 = vpop.f32.mrb[0].mxu0
    %v6948 = vadd.f32 0.0, %v6947
    %v6949 = vpop.f32.mrb[0].mxu0
    %6950 = vmatprep.mubr.f32.mxu0 0.0
    %6951 = vmatmul.mubr.f32.gmra.mrb[0].mxu0 %v6865
    %v6952 = vpop.f32.mrb[0].mxu0
    %v6953 = vadd.f32 0.0, %v6952
    %v6954 = vpop.f32.mrb[0].mxu0
    %6955 = vmatprep.mubr.f32.mxu0 0.0
    %6956 = vmatmul.mubr.f32.gmra.mrb[0].mxu0 %v6868
    %v6957 = vpop.f32.mrb[0].mxu0
    %v6958 = vadd.f32 0.0, %v6957
    %v6959 = vpop.f32.mrb[0].mxu0
    %6960 = vmatprep.mubr.f32.mxu0 0.0
    %6961 = vmatmul.mubr.f32.gmra.mrb[0].mxu0 %v6871
    %v6962 = vpop.f32.mrb[0].mxu0
    %v6963 = vadd.f32 0.0, %v6962
    %v6964 = vpop.f32.mrb[0].mxu0
    %6965 = vmatprep.mubr.f32.mxu0 0.0
    %6966 = vmatmul.mubr.f32.gmra.mrb[0].mxu0 %v6874
    %v6967 = vpop.f32.mrb[0].mxu0
    %v6968 = vadd.f32 0.0, %v6967
    %v6969 = vpop.f32.mrb[0].mxu0
    %6970 = vdwg.mxu0
    %v6972 = vsel %vm86, %v6844, 0
    %v6975 = vsel %vm86, %v6845, 0
    %v6978 = vsel %vm86, %v6846, 0
    %v6981 = vsel %vm86, %v6847, 0
    %v6984 = vsel %vm86, %v6848, 0
    %v6987 = vsel %vm86, %v6849, 0
    %6989 = vmatprep.subr.mxu0 0.0
    %6990 = vmatpush1.msra.mxu0 %v6850
    %6991 = vmatprep.subr.mxu0 0.0
    %6992 = vmatpush1.msra.mxu0 0.0
    %6993 = vmatprep.subr.mxu0 0.0
    %6994 = vmatpush1.msra.mxu0 0.0
    %6995 = vmatprep.subr.mxu0 0.0
    %6996 = vmatpush1.msra.mxu0 0.0
    %6997 = vmatprep.subr.mxu0 0.0
    %6998 = vmatpush1.msra.mxu0 0.0
    %6999 = vmatprep.subr.mxu0 0.0
    %7000 = vmatpush1.msra.mxu0 0.0
    %7001 = vmatprep.subr.mxu0 0.0
    %7002 = vmatpush1.msra.mxu0 0.0
    %7003 = vmatprep.subr.mxu0 0.0
    %7004 = vmatpush1.msra.mxu0 0.0
    %7005 = vmatprep.subr.mxu0 0.0
    %7006 = vmatpush1.msra.mxu0 0.0
    %7007 = vmatprep.subr.mxu0 0.0
    %7008 = vmatpush1.msra.mxu0 0.0
    %7009 = vmatprep.subr.mxu0 0.0
    %7010 = vmatpush1.msra.mxu0 0.0
    %7011 = vmatprep.subr.mxu0 0.0
    %7012 = vmatpush1.msra.mxu0 0.0
    %7013 = vmatprep.subr.mxu0 0.0
    %7014 = vmatpush1.msra.mxu0 0.0
    %7015 = vmatprep.subr.mxu0 0.0
    %7016 = vmatpush1.msra.mxu0 0.0
    %7017 = vmatprep.subr.mxu0 0.0
    %7018 = vmatpush1.msra.mxu0 0.0
    %7019 = vmatprep.subr.mxu0 0.0
    %7020 = vmatpush1.msra.mxu0 0.0
    %7021 = vmatprep.subr.mxu0 0.0
    %7022 = vmatpush1.msra.mxu0 0.0
    %7023 = vmatprep.subr.mxu0 0.0
    %7024 = vmatpush1.msra.mxu0 0.0
    %7025 = vmatprep.subr.mxu0 0.0
    %7026 = vmatpush1.msra.mxu0 0.0
    %7027 = vmatprep.subr.mxu0 0.0
    %7028 = vmatpush1.msra.mxu0 0.0
    %7029 = vmatprep.subr.mxu0 0.0
    %7030 = vmatpush1.msra.mxu0 0.0
    %7031 = vmatprep.subr.mxu0 0.0
    %7032 = vmatpush1.msra.mxu0 0.0
    %7033 = vmatprep.subr.mxu0 0.0
    %7034 = vmatpush1.msra.mxu0 0.0
    %7035 = vmatprep.subr.mxu0 0.0
    %7036 = vmatpush1.msra.mxu0 0.0
    %7037 = vmatprep.subr.mxu0 0.0
    %7038 = vmatpush1.msra.mxu0 0.0
    %7039 = vmatprep.subr.mxu0 0.0
    %7040 = vmatpush1.msra.mxu0 0.0
    %7041 = vmatprep.subr.mxu0 0.0
    %7042 = vmatpush1.msra.mxu0 0.0
    %7043 = vmatprep.subr.mxu0 0.0
    %7044 = vmatpush1.msra.mxu0 0.0
    %7045 = vmatprep.subr.mxu0 0.0
    %7046 = vmatpush1.msra.mxu0 0.0
    %7047 = vmatprep.subr.mxu0 0.0
    %7048 = vmatpush1.msra.mxu0 0.0
    %7049 = vmatprep.subr.mxu0 0.0
    %7050 = vmatpush1.msra.mxu0 0.0
    %7051 = vmatprep.subr.mxu0 0.0
    %7052 = vmatpush1.msra.mxu0 0.0
    %7053 = vmatprep.mubr.f32.mxu0 0.0
    %7054 = vmatmul.mubr.f32.gmra.mrb[0].mxu0 %v6972
    %v7055 = vpop.f32.mrb[0].mxu0
    %v7056 = vadd.f32 %v6943, %v7055
    %v7057 = vpop.f32.mrb[0].mxu0
    %7058 = vmatprep.mubr.f32.mxu0 0.0
    %7059 = vmatmul.mubr.f32.gmra.mrb[0].mxu0 %v6975
    %v7060 = vpop.f32.mrb[0].mxu0
    %v7061 = vadd.f32 %v6948, %v7060
    %v7062 = vpop.f32.mrb[0].mxu0
    %7063 = vmatprep.mubr.f32.mxu0 0.0
    %7064 = vmatmul.mubr.f32.gmra.mrb[0].mxu0 %v6978
    %v7065 = vpop.f32.mrb[0].mxu0
    %v7066 = vadd.f32 %v6953, %v7065
    %v7067 = vpop.f32.mrb[0].mxu0
    %7068 = vmatprep.mubr.f32.mxu0 0.0
    %7069 = vmatmul.mubr.f32.gmra.mrb[0].mxu0 %v6981
    %v7070 = vpop.f32.mrb[0].mxu0
    %v7071 = vadd.f32 %v6958, %v7070
    %v7072 = vpop.f32.mrb[0].mxu0
    %7073 = vmatprep.mubr.f32.mxu0 0.0
    %7074 = vmatmul.mubr.f32.gmra.mrb[0].mxu0 %v6984
    %v7075 = vpop.f32.mrb[0].mxu0
    %v7076 = vadd.f32 %v6963, %v7075
    %v7077 = vpop.f32.mrb[0].mxu0
    %7078 = vmatprep.mubr.f32.mxu0 0.0
    %7079 = vmatmul.mubr.f32.gmra.mrb[0].mxu0 %v6987
    %v7080 = vpop.f32.mrb[0].mxu0
    %v7081 = vadd.f32 %v6968, %v7080
    %v7082 = vpop.f32.mrb[0].mxu0
    %7083 = vdwg.mxu0
    %v7084 = vld [vmem:[#allocation3 + $0x3] sm:$0xff]
    %v7085 = vld [vmem:[#allocation3 + $0xb] sm:$0xff]
    %v7086 = vld [vmem:[#allocation3 + $0x13] sm:$0xff]
    %v7087 = vld [vmem:[#allocation3 + $0x1b] sm:$0xff]
    %v7088 = vld [vmem:[#allocation3 + $0x23] sm:$0xff]
    %v7089 = vld [vmem:[#allocation3 + $0x2b] sm:$0xff]
    %v7090 = vld [vmem:[%s20 + $0x10] sm:$0xff]
    %v7092 = vsel %vm86, %v7084, 0
    %v7095 = vsel %vm86, %v7085, 0
    %v7098 = vsel %vm86, %v7086, 0
    %v7101 = vsel %vm86, %v7087, 0
    %v7104 = vsel %vm86, %v7088, 0
    %v7107 = vsel %vm86, %v7089, 0
    %7109 = vmatprep.subr.mxu0 0.0
    %7110 = vmatpush1.msra.mxu0 %v7090
    %7111 = vmatprep.subr.mxu0 0.0
    %7112 = vmatpush1.msra.mxu0 0.0
    %7113 = vmatprep.subr.mxu0 0.0
    %7114 = vmatpush1.msra.mxu0 0.0
    %7115 = vmatprep.subr.mxu0 0.0
    %7116 = vmatpush1.msra.mxu0 0.0
    %7117 = vmatprep.subr.mxu0 0.0
    %7118 = vmatpush1.msra.mxu0 0.0
    %7119 = vmatprep.subr.mxu0 0.0
    %7120 = vmatpush1.msra.mxu0 0.0
    %7121 = vmatprep.subr.mxu0 0.0
    %7122 = vmatpush1.msra.mxu0 0.0
    %7123 = vmatprep.subr.mxu0 0.0
    %7124 = vmatpush1.msra.mxu0 0.0
    %7125 = vmatprep.subr.mxu0 0.0
    %7126 = vmatpush1.msra.mxu0 0.0
    %7127 = vmatprep.subr.mxu0 0.0
    %7128 = vmatpush1.msra.mxu0 0.0
    %7129 = vmatprep.subr.mxu0 0.0
    %7130 = vmatpush1.msra.mxu0 0.0
    %7131 = vmatprep.subr.mxu0 0.0
    %7132 = vmatpush1.msra.mxu0 0.0
    %7133 = vmatprep.subr.mxu0 0.0
    %7134 = vmatpush1.msra.mxu0 0.0
    %7135 = vmatprep.subr.mxu0 0.0
    %7136 = vmatpush1.msra.mxu0 0.0
    %7137 = vmatprep.subr.mxu0 0.0
    %7138 = vmatpush1.msra.mxu0 0.0
    %7139 = vmatprep.subr.mxu0 0.0
    %7140 = vmatpush1.msra.mxu0 0.0
    %7141 = vmatprep.subr.mxu0 0.0
    %7142 = vmatpush1.msra.mxu0 0.0
    %7143 = vmatprep.subr.mxu0 0.0
    %7144 = vmatpush1.msra.mxu0 0.0
    %7145 = vmatprep.subr.mxu0 0.0
    %7146 = vmatpush1.msra.mxu0 0.0
    %7147 = vmatprep.subr.mxu0 0.0
    %7148 = vmatpush1.msra.mxu0 0.0
    %7149 = vmatprep.subr.mxu0 0.0
    %7150 = vmatpush1.msra.mxu0 0.0
    %7151 = vmatprep.subr.mxu0 0.0
    %7152 = vmatpush1.msra.mxu0 0.0
    %7153 = vmatprep.subr.mxu0 0.0
    %7154 = vmatpush1.msra.mxu0 0.0
    %7155 = vmatprep.subr.mxu0 0.0
    %7156 = vmatpush1.msra.mxu0 0.0
    %7157 = vmatprep.subr.mxu0 0.0
    %7158 = vmatpush1.msra.mxu0 0.0
    %7159 = vmatprep.subr.mxu0 0.0
    %7160 = vmatpush1.msra.mxu0 0.0
    %7161 = vmatprep.subr.mxu0 0.0
    %7162 = vmatpush1.msra.mxu0 0.0
    %7163 = vmatprep.subr.mxu0 0.0
    %7164 = vmatpush1.msra.mxu0 0.0
    %7165 = vmatprep.subr.mxu0 0.0
    %7166 = vmatpush1.msra.mxu0 0.0
    %7167 = vmatprep.subr.mxu0 0.0
    %7168 = vmatpush1.msra.mxu0 0.0
    %7169 = vmatprep.subr.mxu0 0.0
    %7170 = vmatpush1.msra.mxu0 0.0
    %7171 = vmatprep.subr.mxu0 0.0
    %7172 = vmatpush1.msra.mxu0 0.0
    %7173 = vmatprep.mubr.f32.mxu0 0.0
    %7174 = vmatmul.mubr.f32.gmra.mrb[0].mxu0 %v7092
    %v7175 = vpop.f32.mrb[0].mxu0
    %v7176 = vadd.f32 0.0, %v7175
    %v7177 = vpop.f32.mrb[0].mxu0
    %7178 = vmatprep.mubr.f32.mxu0 0.0
    %7179 = vmatmul.mubr.f32.gmra.mrb[0].mxu0 %v7095
    %v7180 = vpop.f32.mrb[0].mxu0
    %v7181 = vadd.f32 0.0, %v7180
    %v7182 = vpop.f32.mrb[0].mxu0
    %7183 = vmatprep.mubr.f32.mxu0 0.0
    %7184 = vmatmul.mubr.f32.gmra.mrb[0].mxu0 %v7098
    %v7185 = vpop.f32.mrb[0].mxu0
    %v7186 = vadd.f32 0.0, %v7185
    %v7187 = vpop.f32.mrb[0].mxu0
    %7188 = vmatprep.mubr.f32.mxu0 0.0
    %7189 = vmatmul.mubr.f32.gmra.mrb[0].mxu0 %v7101
    %v7190 = vpop.f32.mrb[0].mxu0
    %v7191 = vadd.f32 0.0, %v7190
    %v7192 = vpop.f32.mrb[0].mxu0
    %7193 = vmatprep.mubr.f32.mxu0 0.0
    %7194 = vmatmul.mubr.f32.gmra.mrb[0].mxu0 %v7104
    %v7195 = vpop.f32.mrb[0].mxu0
    %v7196 = vadd.f32 0.0, %v7195
    %v7197 = vpop.f32.mrb[0].mxu0
    %7198 = vmatprep.mubr.f32.mxu0 0.0
    %7199 = vmatmul.mubr.f32.gmra.mrb[0].mxu0 %v7107
    %v7200 = vpop.f32.mrb[0].mxu0
    %v7201 = vadd.f32 0.0, %v7200
    %v7202 = vpop.f32.mrb[0].mxu0
    %7203 = vdwg.mxu0
    %v7204 = vadd.f32 %v7056, %v7176
    %v7205 = vadd.f32 %v7061, %v7181
    %v7206 = vadd.f32 %v7066, %v7186
    %v7207 = vadd.f32 %v7071, %v7191
    %v7208 = vadd.f32 %v7076, %v7196
    %v7209 = vadd.f32 %v7081, %v7201
    %v7210 = vld [vmem:[#allocation3 + $0x4] sm:$0xff]
    %v7211 = vld [vmem:[#allocation3 + $0xc] sm:$0xff]
    %v7212 = vld [vmem:[#allocation3 + $0x14] sm:$0xff]
    %v7213 = vld [vmem:[#allocation3 + $0x1c] sm:$0xff]
    %v7214 = vld [vmem:[#allocation3 + $0x24] sm:$0xff]
    %v7215 = vld [vmem:[#allocation3 + $0x2c] sm:$0xff]
    %v7216 = vld [vmem:[%s20 + $0x18] sm:$0xff]
    %v7218 = vsel %vm86, %v7210, 0
    %v7221 = vsel %vm86, %v7211, 0
    %v7224 = vsel %vm86, %v7212, 0
    %v7227 = vsel %vm86, %v7213, 0
    %v7230 = vsel %vm86, %v7214, 0
    %v7233 = vsel %vm86, %v7215, 0
    %7235 = vmatprep.subr.mxu0 0.0
    %7236 = vmatpush1.msra.mxu0 %v7216
    %7237 = vmatprep.subr.mxu0 0.0
    %7238 = vmatpush1.msra.mxu0 0.0
    %7239 = vmatprep.subr.mxu0 0.0
    %7240 = vmatpush1.msra.mxu0 0.0
    %7241 = vmatprep.subr.mxu0 0.0
    %7242 = vmatpush1.msra.mxu0 0.0
    %7243 = vmatprep.subr.mxu0 0.0
    %7244 = vmatpush1.msra.mxu0 0.0
    %7245 = vmatprep.subr.mxu0 0.0
    %7246 = vmatpush1.msra.mxu0 0.0
    %7247 = vmatprep.subr.mxu0 0.0
    %7248 = vmatpush1.msra.mxu0 0.0
    %7249 = vmatprep.subr.mxu0 0.0
    %7250 = vmatpush1.msra.mxu0 0.0
    %7251 = vmatprep.subr.mxu0 0.0
    %7252 = vmatpush1.msra.mxu0 0.0
    %7253 = vmatprep.subr.mxu0 0.0
    %7254 = vmatpush1.msra.mxu0 0.0
    %7255 = vmatprep.subr.mxu0 0.0
    %7256 = vmatpush1.msra.mxu0 0.0
    %7257 = vmatprep.subr.mxu0 0.0
    %7258 = vmatpush1.msra.mxu0 0.0
    %7259 = vmatprep.subr.mxu0 0.0
    %7260 = vmatpush1.msra.mxu0 0.0
    %7261 = vmatprep.subr.mxu0 0.0
    %7262 = vmatpush1.msra.mxu0 0.0
    %7263 = vmatprep.subr.mxu0 0.0
    %7264 = vmatpush1.msra.mxu0 0.0
    %7265 = vmatprep.subr.mxu0 0.0
    %7266 = vmatpush1.msra.mxu0 0.0
    %7267 = vmatprep.subr.mxu0 0.0
    %7268 = vmatpush1.msra.mxu0 0.0
    %7269 = vmatprep.subr.mxu0 0.0
    %7270 = vmatpush1.msra.mxu0 0.0
    %7271 = vmatprep.subr.mxu0 0.0
    %7272 = vmatpush1.msra.mxu0 0.0
    %7273 = vmatprep.subr.mxu0 0.0
    %7274 = vmatpush1.msra.mxu0 0.0
    %7275 = vmatprep.subr.mxu0 0.0
    %7276 = vmatpush1.msra.mxu0 0.0
    %7277 = vmatprep.subr.mxu0 0.0
    %7278 = vmatpush1.msra.mxu0 0.0
    %7279 = vmatprep.subr.mxu0 0.0
    %7280 = vmatpush1.msra.mxu0 0.0
    %7281 = vmatprep.subr.mxu0 0.0
    %7282 = vmatpush1.msra.mxu0 0.0
    %7283 = vmatprep.subr.mxu0 0.0
    %7284 = vmatpush1.msra.mxu0 0.0
    %7285 = vmatprep.subr.mxu0 0.0
    %7286 = vmatpush1.msra.mxu0 0.0
    %7287 = vmatprep.subr.mxu0 0.0
    %7288 = vmatpush1.msra.mxu0 0.0
    %7289 = vmatprep.subr.mxu0 0.0
    %7290 = vmatpush1.msra.mxu0 0.0
    %7291 = vmatprep.subr.mxu0 0.0
    %7292 = vmatpush1.msra.mxu0 0.0
    %7293 = vmatprep.subr.mxu0 0.0
    %7294 = vmatpush1.msra.mxu0 0.0
    %7295 = vmatprep.subr.mxu0 0.0
    %7296 = vmatpush1.msra.mxu0 0.0
    %7297 = vmatprep.subr.mxu0 0.0
    %7298 = vmatpush1.msra.mxu0 0.0
    %7299 = vmatprep.mubr.f32.mxu0 0.0
    %7300 = vmatmul.mubr.f32.gmra.mrb[0].mxu0 %v7218
    %v7301 = vpop.f32.mrb[0].mxu0
    %v7302 = vadd.f32 0.0, %v7301
    %v7303 = vpop.f32.mrb[0].mxu0
    %7304 = vmatprep.mubr.f32.mxu0 0.0
    %7305 = vmatmul.mubr.f32.gmra.mrb[0].mxu0 %v7221
    %v7306 = vpop.f32.mrb[0].mxu0
    %v7307 = vadd.f32 0.0, %v7306
    %v7308 = vpop.f32.mrb[0].mxu0
    %7309 = vmatprep.mubr.f32.mxu0 0.0
    %7310 = vmatmul.mubr.f32.gmra.mrb[0].mxu0 %v7224
    %v7311 = vpop.f32.mrb[0].mxu0
    %v7312 = vadd.f32 0.0, %v7311
    %v7313 = vpop.f32.mrb[0].mxu0
    %7314 = vmatprep.mubr.f32.mxu0 0.0
    %7315 = vmatmul.mubr.f32.gmra.mrb[0].mxu0 %v7227
    %v7316 = vpop.f32.mrb[0].mxu0
    %v7317 = vadd.f32 0.0, %v7316
    %v7318 = vpop.f32.mrb[0].mxu0
    %7319 = vmatprep.mubr.f32.mxu0 0.0
    %7320 = vmatmul.mubr.f32.gmra.mrb[0].mxu0 %v7230
    %v7321 = vpop.f32.mrb[0].mxu0
    %v7322 = vadd.f32 0.0, %v7321
    %v7323 = vpop.f32.mrb[0].mxu0
    %7324 = vmatprep.mubr.f32.mxu0 0.0
    %7325 = vmatmul.mubr.f32.gmra.mrb[0].mxu0 %v7233
    %v7326 = vpop.f32.mrb[0].mxu0
    %v7327 = vadd.f32 0.0, %v7326
    %v7328 = vpop.f32.mrb[0].mxu0
    %7329 = vdwg.mxu0
    %v7330 = vadd.f32 %v7204, %v7302
    %v7331 = vadd.f32 %v7205, %v7307
    %v7332 = vadd.f32 %v7206, %v7312
    %v7333 = vadd.f32 %v7207, %v7317
    %v7334 = vadd.f32 %v7208, %v7322
    %v7335 = vadd.f32 %v7209, %v7327
    %v7336 = vld [vmem:[#allocation3 + $0x5] sm:$0xff]
    %v7337 = vld [vmem:[#allocation3 + $0xd] sm:$0xff]
    %v7338 = vld [vmem:[#allocation3 + $0x15] sm:$0xff]
    %v7339 = vld [vmem:[#allocation3 + $0x1d] sm:$0xff]
    %v7340 = vld [vmem:[#allocation3 + $0x25] sm:$0xff]
    %v7341 = vld [vmem:[#allocation3 + $0x2d] sm:$0xff]
    %v7342 = vld [vmem:[%s20 + $0x20] sm:$0xff]
    %v7344 = vsel %vm86, %v7336, 0
    %v7347 = vsel %vm86, %v7337, 0
    %v7350 = vsel %vm86, %v7338, 0
    %v7353 = vsel %vm86, %v7339, 0
    %v7356 = vsel %vm86, %v7340, 0
    %v7359 = vsel %vm86, %v7341, 0
    %7361 = vmatprep.subr.mxu0 0.0
    %7362 = vmatpush1.msra.mxu0 %v7342
    %7363 = vmatprep.subr.mxu0 0.0
    %7364 = vmatpush1.msra.mxu0 0.0
    %7365 = vmatprep.subr.mxu0 0.0
    %7366 = vmatpush1.msra.mxu0 0.0
    %7367 = vmatprep.subr.mxu0 0.0
    %7368 = vmatpush1.msra.mxu0 0.0
    %7369 = vmatprep.subr.mxu0 0.0
    %7370 = vmatpush1.msra.mxu0 0.0
    %7371 = vmatprep.subr.mxu0 0.0
    %7372 = vmatpush1.msra.mxu0 0.0
    %7373 = vmatprep.subr.mxu0 0.0
    %7374 = vmatpush1.msra.mxu0 0.0
    %7375 = vmatprep.subr.mxu0 0.0
    %7376 = vmatpush1.msra.mxu0 0.0
    %7377 = vmatprep.subr.mxu0 0.0
    %7378 = vmatpush1.msra.mxu0 0.0
    %7379 = vmatprep.subr.mxu0 0.0
    %7380 = vmatpush1.msra.mxu0 0.0
    %7381 = vmatprep.subr.mxu0 0.0
    %7382 = vmatpush1.msra.mxu0 0.0
    %7383 = vmatprep.subr.mxu0 0.0
    %7384 = vmatpush1.msra.mxu0 0.0
    %7385 = vmatprep.subr.mxu0 0.0
    %7386 = vmatpush1.msra.mxu0 0.0
    %7387 = vmatprep.subr.mxu0 0.0
    %7388 = vmatpush1.msra.mxu0 0.0
    %7389 = vmatprep.subr.mxu0 0.0
    %7390 = vmatpush1.msra.mxu0 0.0
    %7391 = vmatprep.subr.mxu0 0.0
    %7392 = vmatpush1.msra.mxu0 0.0
    %7393 = vmatprep.subr.mxu0 0.0
    %7394 = vmatpush1.msra.mxu0 0.0
    %7395 = vmatprep.subr.mxu0 0.0
    %7396 = vmatpush1.msra.mxu0 0.0
    %7397 = vmatprep.subr.mxu0 0.0
    %7398 = vmatpush1.msra.mxu0 0.0
    %7399 = vmatprep.subr.mxu0 0.0
    %7400 = vmatpush1.msra.mxu0 0.0
    %7401 = vmatprep.subr.mxu0 0.0
    %7402 = vmatpush1.msra.mxu0 0.0
    %7403 = vmatprep.subr.mxu0 0.0
    %7404 = vmatpush1.msra.mxu0 0.0
    %7405 = vmatprep.subr.mxu0 0.0
    %7406 = vmatpush1.msra.mxu0 0.0
    %7407 = vmatprep.subr.mxu0 0.0
    %7408 = vmatpush1.msra.mxu0 0.0
    %7409 = vmatprep.subr.mxu0 0.0
    %7410 = vmatpush1.msra.mxu0 0.0
    %7411 = vmatprep.subr.mxu0 0.0
    %7412 = vmatpush1.msra.mxu0 0.0
    %7413 = vmatprep.subr.mxu0 0.0
    %7414 = vmatpush1.msra.mxu0 0.0
    %7415 = vmatprep.subr.mxu0 0.0
    %7416 = vmatpush1.msra.mxu0 0.0
    %7417 = vmatprep.subr.mxu0 0.0
    %7418 = vmatpush1.msra.mxu0 0.0
    %7419 = vmatprep.subr.mxu0 0.0
    %7420 = vmatpush1.msra.mxu0 0.0
    %7421 = vmatprep.subr.mxu0 0.0
    %7422 = vmatpush1.msra.mxu0 0.0
    %7423 = vmatprep.subr.mxu0 0.0
    %7424 = vmatpush1.msra.mxu0 0.0
    %7425 = vmatprep.mubr.f32.mxu0 0.0
    %7426 = vmatmul.mubr.f32.gmra.mrb[0].mxu0 %v7344
    %v7427 = vpop.f32.mrb[0].mxu0
    %v7428 = vadd.f32 0.0, %v7427
    %v7429 = vpop.f32.mrb[0].mxu0
    %7430 = vmatprep.mubr.f32.mxu0 0.0
    %7431 = vmatmul.mubr.f32.gmra.mrb[0].mxu0 %v7347
    %v7432 = vpop.f32.mrb[0].mxu0
    %v7433 = vadd.f32 0.0, %v7432
    %v7434 = vpop.f32.mrb[0].mxu0
    %7435 = vmatprep.mubr.f32.mxu0 0.0
    %7436 = vmatmul.mubr.f32.gmra.mrb[0].mxu0 %v7350
    %v7437 = vpop.f32.mrb[0].mxu0
    %v7438 = vadd.f32 0.0, %v7437
    %v7439 = vpop.f32.mrb[0].mxu0
    %7440 = vmatprep.mubr.f32.mxu0 0.0
    %7441 = vmatmul.mubr.f32.gmra.mrb[0].mxu0 %v7353
    %v7442 = vpop.f32.mrb[0].mxu0
    %v7443 = vadd.f32 0.0, %v7442
    %v7444 = vpop.f32.mrb[0].mxu0
    %7445 = vmatprep.mubr.f32.mxu0 0.0
    %7446 = vmatmul.mubr.f32.gmra.mrb[0].mxu0 %v7356
    %v7447 = vpop.f32.mrb[0].mxu0
    %v7448 = vadd.f32 0.0, %v7447
    %v7449 = vpop.f32.mrb[0].mxu0
    %7450 = vmatprep.mubr.f32.mxu0 0.0
    %7451 = vmatmul.mubr.f32.gmra.mrb[0].mxu0 %v7359
    %v7452 = vpop.f32.mrb[0].mxu0
    %v7453 = vadd.f32 0.0, %v7452
    %v7454 = vpop.f32.mrb[0].mxu0
    %7455 = vdwg.mxu0
    %v7456 = vadd.f32 %v7330, %v7428
    %v7457 = vadd.f32 %v7331, %v7433
    %v7458 = vadd.f32 %v7332, %v7438
    %v7459 = vadd.f32 %v7333, %v7443
    %v7460 = vadd.f32 %v7334, %v7448
    %v7461 = vadd.f32 %v7335, %v7453
    %v7462 = vld [vmem:[#allocation3 + $0x6] sm:$0xff]
    %v7463 = vld [vmem:[#allocation3 + $0xe] sm:$0xff]
    %v7464 = vld [vmem:[#allocation3 + $0x16] sm:$0xff]
    %v7465 = vld [vmem:[#allocation3 + $0x1e] sm:$0xff]
    %v7466 = vld [vmem:[#allocation3 + $0x26] sm:$0xff]
    %v7467 = vld [vmem:[#allocation3 + $0x2e] sm:$0xff]
    %v7468 = vld [vmem:[%s20 + $0x28] sm:$0xff]
    %v7470 = vsel %vm86, %v7462, 0
    %v7473 = vsel %vm86, %v7463, 0
    %v7476 = vsel %vm86, %v7464, 0
    %v7479 = vsel %vm86, %v7465, 0
    %v7482 = vsel %vm86, %v7466, 0
    %v7485 = vsel %vm86, %v7467, 0
    %7487 = vmatprep.subr.mxu0 0.0
    %7488 = vmatpush1.msra.mxu0 %v7468
    %7489 = vmatprep.subr.mxu0 0.0
    %7490 = vmatpush1.msra.mxu0 0.0
    %7491 = vmatprep.subr.mxu0 0.0
    %7492 = vmatpush1.msra.mxu0 0.0
    %7493 = vmatprep.subr.mxu0 0.0
    %7494 = vmatpush1.msra.mxu0 0.0
    %7495 = vmatprep.subr.mxu0 0.0
    %7496 = vmatpush1.msra.mxu0 0.0
    %7497 = vmatprep.subr.mxu0 0.0
    %7498 = vmatpush1.msra.mxu0 0.0
    %7499 = vmatprep.subr.mxu0 0.0
    %7500 = vmatpush1.msra.mxu0 0.0
    %7501 = vmatprep.subr.mxu0 0.0
    %7502 = vmatpush1.msra.mxu0 0.0
    %7503 = vmatprep.subr.mxu0 0.0
    %7504 = vmatpush1.msra.mxu0 0.0
    %7505 = vmatprep.subr.mxu0 0.0
    %7506 = vmatpush1.msra.mxu0 0.0
    %7507 = vmatprep.subr.mxu0 0.0
    %7508 = vmatpush1.msra.mxu0 0.0
    %7509 = vmatprep.subr.mxu0 0.0
    %7510 = vmatpush1.msra.mxu0 0.0
    %7511 = vmatprep.subr.mxu0 0.0
    %7512 = vmatpush1.msra.mxu0 0.0
    %7513 = vmatprep.subr.mxu0 0.0
    %7514 = vmatpush1.msra.mxu0 0.0
    %7515 = vmatprep.subr.mxu0 0.0
    %7516 = vmatpush1.msra.mxu0 0.0
    %7517 = vmatprep.subr.mxu0 0.0
    %7518 = vmatpush1.msra.mxu0 0.0
    %7519 = vmatprep.subr.mxu0 0.0
    %7520 = vmatpush1.msra.mxu0 0.0
    %7521 = vmatprep.subr.mxu0 0.0
    %7522 = vmatpush1.msra.mxu0 0.0
    %7523 = vmatprep.subr.mxu0 0.0
    %7524 = vmatpush1.msra.mxu0 0.0
    %7525 = vmatprep.subr.mxu0 0.0
    %7526 = vmatpush1.msra.mxu0 0.0
    %7527 = vmatprep.subr.mxu0 0.0
    %7528 = vmatpush1.msra.mxu0 0.0
    %7529 = vmatprep.subr.mxu0 0.0
    %7530 = vmatpush1.msra.mxu0 0.0
    %7531 = vmatprep.subr.mxu0 0.0
    %7532 = vmatpush1.msra.mxu0 0.0
    %7533 = vmatprep.subr.mxu0 0.0
    %7534 = vmatpush1.msra.mxu0 0.0
    %7535 = vmatprep.subr.mxu0 0.0
    %7536 = vmatpush1.msra.mxu0 0.0
    %7537 = vmatprep.subr.mxu0 0.0
    %7538 = vmatpush1.msra.mxu0 0.0
    %7539 = vmatprep.subr.mxu0 0.0
    %7540 = vmatpush1.msra.mxu0 0.0
    %7541 = vmatprep.subr.mxu0 0.0
    %7542 = vmatpush1.msra.mxu0 0.0
    %7543 = vmatprep.subr.mxu0 0.0
    %7544 = vmatpush1.msra.mxu0 0.0
    %7545 = vmatprep.subr.mxu0 0.0
    %7546 = vmatpush1.msra.mxu0 0.0
    %7547 = vmatprep.subr.mxu0 0.0
    %7548 = vmatpush1.msra.mxu0 0.0
    %7549 = vmatprep.subr.mxu0 0.0
    %7550 = vmatpush1.msra.mxu0 0.0
    %7551 = vmatprep.mubr.f32.mxu0 0.0
    %7552 = vmatmul.mubr.f32.gmra.mrb[0].mxu0 %v7470
    %v7553 = vpop.f32.mrb[0].mxu0
    %v7554 = vadd.f32 0.0, %v7553
    %v7555 = vpop.f32.mrb[0].mxu0
    %7556 = vmatprep.mubr.f32.mxu0 0.0
    %7557 = vmatmul.mubr.f32.gmra.mrb[0].mxu0 %v7473
    %v7558 = vpop.f32.mrb[0].mxu0
    %v7559 = vadd.f32 0.0, %v7558
    %v7560 = vpop.f32.mrb[0].mxu0
    %7561 = vmatprep.mubr.f32.mxu0 0.0
    %7562 = vmatmul.mubr.f32.gmra.mrb[0].mxu0 %v7476
    %v7563 = vpop.f32.mrb[0].mxu0
    %v7564 = vadd.f32 0.0, %v7563
    %v7565 = vpop.f32.mrb[0].mxu0
    %7566 = vmatprep.mubr.f32.mxu0 0.0
    %7567 = vmatmul.mubr.f32.gmra.mrb[0].mxu0 %v7479
    %v7568 = vpop.f32.mrb[0].mxu0
    %v7569 = vadd.f32 0.0, %v7568
    %v7570 = vpop.f32.mrb[0].mxu0
    %7571 = vmatprep.mubr.f32.mxu0 0.0
    %7572 = vmatmul.mubr.f32.gmra.mrb[0].mxu0 %v7482
    %v7573 = vpop.f32.mrb[0].mxu0
    %v7574 = vadd.f32 0.0, %v7573
    %v7575 = vpop.f32.mrb[0].mxu0
    %7576 = vmatprep.mubr.f32.mxu0 0.0
    %7577 = vmatmul.mubr.f32.gmra.mrb[0].mxu0 %v7485
    %v7578 = vpop.f32.mrb[0].mxu0
    %v7579 = vadd.f32 0.0, %v7578
    %v7580 = vpop.f32.mrb[0].mxu0
    %7581 = vdwg.mxu0
    %v7582 = vadd.f32 %v7456, %v7554
    %v7583 = vadd.f32 %v7457, %v7559
    %v7584 = vadd.f32 %v7458, %v7564
    %v7585 = vadd.f32 %v7459, %v7569
    %v7586 = vadd.f32 %v7460, %v7574
    %v7587 = vadd.f32 %v7461, %v7579
    %v7588 = vld [vmem:[#allocation3 + $0x8] sm:$0xff]
    %v7589 = vld [vmem:[#allocation3 + $0x10] sm:$0xff]
    %v7590 = vld [vmem:[#allocation3 + $0x18] sm:$0xff]
    %v7591 = vld [vmem:[#allocation3 + $0x20] sm:$0xff]
    %v7592 = vld [vmem:[#allocation3 + $0x28] sm:$0xff]
    %v7593 = vld [vmem:[#allocation3 + $0x30] sm:$0xff]
    %v7594 = vld [vmem:[%s20 + $0x30] sm:$0xff]
    %v7596 = vsel %vm86, %v7588, 0
    %v7599 = vsel %vm86, %v7589, 0
    %v7602 = vsel %vm86, %v7590, 0
    %v7605 = vsel %vm86, %v7591, 0
    %v7608 = vsel %vm86, %v7592, 0
    %v7611 = vsel %vm86, %v7593, 0
    %7613 = vmatprep.subr.mxu0 0.0
    %7614 = vmatpush1.msra.mxu0 %v7594
    %7615 = vmatprep.subr.mxu0 0.0
    %7616 = vmatpush1.msra.mxu0 0.0
    %7617 = vmatprep.subr.mxu0 0.0
    %7618 = vmatpush1.msra.mxu0 0.0
    %7619 = vmatprep.subr.mxu0 0.0
    %7620 = vmatpush1.msra.mxu0 0.0
    %7621 = vmatprep.subr.mxu0 0.0
    %7622 = vmatpush1.msra.mxu0 0.0
    %7623 = vmatprep.subr.mxu0 0.0
    %7624 = vmatpush1.msra.mxu0 0.0
    %7625 = vmatprep.subr.mxu0 0.0
    %7626 = vmatpush1.msra.mxu0 0.0
    %7627 = vmatprep.subr.mxu0 0.0
    %7628 = vmatpush1.msra.mxu0 0.0
    %7629 = vmatprep.subr.mxu0 0.0
    %7630 = vmatpush1.msra.mxu0 0.0
    %7631 = vmatprep.subr.mxu0 0.0
    %7632 = vmatpush1.msra.mxu0 0.0
    %7633 = vmatprep.subr.mxu0 0.0
    %7634 = vmatpush1.msra.mxu0 0.0
    %7635 = vmatprep.subr.mxu0 0.0
    %7636 = vmatpush1.msra.mxu0 0.0
    %7637 = vmatprep.subr.mxu0 0.0
    %7638 = vmatpush1.msra.mxu0 0.0
    %7639 = vmatprep.subr.mxu0 0.0
    %7640 = vmatpush1.msra.mxu0 0.0
    %7641 = vmatprep.subr.mxu0 0.0
    %7642 = vmatpush1.msra.mxu0 0.0
    %7643 = vmatprep.subr.mxu0 0.0
    %7644 = vmatpush1.msra.mxu0 0.0
    %7645 = vmatprep.subr.mxu0 0.0
    %7646 = vmatpush1.msra.mxu0 0.0
    %7647 = vmatprep.subr.mxu0 0.0
    %7648 = vmatpush1.msra.mxu0 0.0
    %7649 = vmatprep.subr.mxu0 0.0
    %7650 = vmatpush1.msra.mxu0 0.0
    %7651 = vmatprep.subr.mxu0 0.0
    %7652 = vmatpush1.msra.mxu0 0.0
    %7653 = vmatprep.subr.mxu0 0.0
    %7654 = vmatpush1.msra.mxu0 0.0
    %7655 = vmatprep.subr.mxu0 0.0
    %7656 = vmatpush1.msra.mxu0 0.0
    %7657 = vmatprep.subr.mxu0 0.0
    %7658 = vmatpush1.msra.mxu0 0.0
    %7659 = vmatprep.subr.mxu0 0.0
    %7660 = vmatpush1.msra.mxu0 0.0
    %7661 = vmatprep.subr.mxu0 0.0
    %7662 = vmatpush1.msra.mxu0 0.0
    %7663 = vmatprep.subr.mxu0 0.0
    %7664 = vmatpush1.msra.mxu0 0.0
    %7665 = vmatprep.subr.mxu0 0.0
    %7666 = vmatpush1.msra.mxu0 0.0
    %7667 = vmatprep.subr.mxu0 0.0
    %7668 = vmatpush1.msra.mxu0 0.0
    %7669 = vmatprep.subr.mxu0 0.0
    %7670 = vmatpush1.msra.mxu0 0.0
    %7671 = vmatprep.subr.mxu0 0.0
    %7672 = vmatpush1.msra.mxu0 0.0
    %7673 = vmatprep.subr.mxu0 0.0
    %7674 = vmatpush1.msra.mxu0 0.0
    %7675 = vmatprep.subr.mxu0 0.0
    %7676 = vmatpush1.msra.mxu0 0.0
    %7677 = vmatprep.mubr.f32.mxu0 0.0
    %7678 = vmatmul.mubr.f32.gmra.mrb[0].mxu0 %v7596
    %v7679 = vpop.f32.mrb[0].mxu0
    %v7680 = vadd.f32 0.0, %v7679
    %v7681 = vpop.f32.mrb[0].mxu0
    %7682 = vmatprep.mubr.f32.mxu0 0.0
    %7683 = vmatmul.mubr.f32.gmra.mrb[0].mxu0 %v7599
    %v7684 = vpop.f32.mrb[0].mxu0
    %v7685 = vadd.f32 0.0, %v7684
    %v7686 = vpop.f32.mrb[0].mxu0
    %7687 = vmatprep.mubr.f32.mxu0 0.0
    %7688 = vmatmul.mubr.f32.gmra.mrb[0].mxu0 %v7602
    %v7689 = vpop.f32.mrb[0].mxu0
    %v7690 = vadd.f32 0.0, %v7689
    %v7691 = vpop.f32.mrb[0].mxu0
    %7692 = vmatprep.mubr.f32.mxu0 0.0
    %7693 = vmatmul.mubr.f32.gmra.mrb[0].mxu0 %v7605
    %v7694 = vpop.f32.mrb[0].mxu0
    %v7695 = vadd.f32 0.0, %v7694
    %v7696 = vpop.f32.mrb[0].mxu0
    %7697 = vmatprep.mubr.f32.mxu0 0.0
    %7698 = vmatmul.mubr.f32.gmra.mrb[0].mxu0 %v7608
    %v7699 = vpop.f32.mrb[0].mxu0
    %v7700 = vadd.f32 0.0, %v7699
    %v7701 = vpop.f32.mrb[0].mxu0
    %7702 = vmatprep.mubr.f32.mxu0 0.0
    %7703 = vmatmul.mubr.f32.gmra.mrb[0].mxu0 %v7611
    %v7704 = vpop.f32.mrb[0].mxu0
    %v7705 = vadd.f32 0.0, %v7704
    %v7706 = vpop.f32.mrb[0].mxu0
    %7707 = vdwg.mxu0
    %v7708 = vadd.f32 %v7582, %v7680
    %v7709 = vadd.f32 %v7583, %v7685
    %v7710 = vadd.f32 %v7584, %v7690
    %v7711 = vadd.f32 %v7585, %v7695
    %v7712 = vadd.f32 %v7586, %v7700
    %v7713 = vadd.f32 %v7587, %v7705
    %v7714 = vld [vmem:[%s21] sm:$0x1]
    %v7716 = vlaneseq
    %v7717 = vshrl.u32 %v7716, 7
    %v7718 = vsub.s32 0, %v7717
    %v7719 = vrot.slane %v7714, %v7718
    %v7721 = vadd.f32 %v7708, %v7719
    %v7722 = vadd.f32 %v7709, %v7719
    %v7723 = vadd.f32 %v7710, %v7719
    %v7724 = vadd.f32 %v7711, %v7719
    %v7725 = vadd.f32 %v7712, %v7719
    %v7726 = vadd.f32 %v7713, %v7719
    %v7727 = vmax.f32 %v7721, 0.0
    %v7728 = vmax.f32 %v7722, 0.0
    %v7729 = vmax.f32 %v7723, 0.0
    %v7730 = vmax.f32 %v7724, 0.0
    %v7731 = vmax.f32 %v7725, 0.0
    %v7732 = vmax.f32 %v7726, 0.0
    %v7733 = vmul.f32 %v7727, %v1154
    %v7734 = vmul.f32 %v7728, %v1159
    %v7735 = vmul.f32 %v7729, %v1164
    %v7736 = vmul.f32 %v7730, %v1169
    %v7737 = vmul.f32 %v7731, %v1174
    %v7738 = vmul.f32 %v7732, %v1179
    %7745 = vrot.lane.b32.xlu0 %v7733, 24
    %v7746 = vpop.permute.xlu0 %7745
    %7747 = vrot.lane.b32.xlu0 %v7734, 24
    %v7748 = vpop.permute.xlu0 %7747
    %7749 = vrot.lane.b32.xlu0 %v7735, 24
    %v7750 = vpop.permute.xlu0 %7749
    %7751 = vrot.lane.b32.xlu0 %v7736, 24
    %v7752 = vpop.permute.xlu0 %7751
    %7753 = vrot.lane.b32.xlu0 %v7737, 24
    %v7754 = vpop.permute.xlu0 %7753
    %7755 = vrot.lane.b32.xlu0 %v7738, 24
    %v7756 = vpop.permute.xlu0 %7755
    %7763 = vst.msk [vmem:[#allocation2 + $0x4] sm:$0xff] %vm3954, %v7746
    %7764 = vst.msk [vmem:[#allocation2 + $0xc] sm:$0xff] %vm3954, %v7748
    %7765 = vst.msk [vmem:[#allocation2 + $0x14] sm:$0xff] %vm3954, %v7750
    %7766 = vst.msk [vmem:[#allocation2 + $0x1c] sm:$0xff] %vm3954, %v7752
    %7767 = vst.msk [vmem:[#allocation2 + $0x24] sm:$0xff] %vm3954, %v7754
    %7768 = vst.msk [vmem:[#allocation2 + $0x2c] sm:$0xff] %vm3954, %v7756
    %v7769 = vld [vmem:[#allocation2 + $0x4] sm:$0xff]
    %v7770 = vld [vmem:[#allocation2 + $0xc] sm:$0xff]
    %v7771 = vld [vmem:[#allocation2 + $0x14] sm:$0xff]
    %v7772 = vld [vmem:[#allocation2 + $0x1c] sm:$0xff]
    %v7773 = vld [vmem:[#allocation2 + $0x24] sm:$0xff]
    %v7774 = vld [vmem:[#allocation2 + $0x2c] sm:$0xff]
    %v7775 = vld [vmem:[%s2] sm:$0x3]
    %vm7776 = vcmask 392192
    %v7778 = vsel %vm7776, %v7775, 0
    %7780 = vmatprep.subr.mxu0 0.0
    %7781 = vmatpush1.msra.mxu0 %v7769
    %7782 = vmatprep.subr.mxu0 0.0
    %7783 = vmatpush1.msra.mxu0 %v7770
    %7784 = vmatprep.subr.mxu0 0.0
    %7785 = vmatpush1.msra.mxu0 %v7771
    %7786 = vmatprep.subr.mxu0 0.0
    %7787 = vmatpush1.msra.mxu0 %v7772
    %7788 = vmatprep.subr.mxu0 0.0
    %7789 = vmatpush1.msra.mxu0 %v7773
    %7790 = vmatprep.subr.mxu0 0.0
    %7791 = vmatpush1.msra.mxu0 %v7774
    %7792 = vmatprep.subr.mxu0 0.0
    %7793 = vmatpush1.msra.mxu0 0.0
    %7794 = vmatprep.subr.mxu0 0.0
    %7795 = vmatpush1.msra.mxu0 0.0
    %7796 = vmatprep.subr.mxu0 0.0
    %7797 = vmatpush1.msra.mxu0 0.0
    %7798 = vmatprep.subr.mxu0 0.0
    %7799 = vmatpush1.msra.mxu0 0.0
    %7800 = vmatprep.subr.mxu0 0.0
    %7801 = vmatpush1.msra.mxu0 0.0
    %7802 = vmatprep.subr.mxu0 0.0
    %7803 = vmatpush1.msra.mxu0 0.0
    %7804 = vmatprep.subr.mxu0 0.0
    %7805 = vmatpush1.msra.mxu0 0.0
    %7806 = vmatprep.subr.mxu0 0.0
    %7807 = vmatpush1.msra.mxu0 0.0
    %7808 = vmatprep.subr.mxu0 0.0
    %7809 = vmatpush1.msra.mxu0 0.0
    %7810 = vmatprep.subr.mxu0 0.0
    %7811 = vmatpush1.msra.mxu0 0.0
    %7812 = vmatprep.subr.mxu0 0.0
    %7813 = vmatpush1.msra.mxu0 0.0
    %7814 = vmatprep.subr.mxu0 0.0
    %7815 = vmatpush1.msra.mxu0 0.0
    %7816 = vmatprep.subr.mxu0 0.0
    %7817 = vmatpush1.msra.mxu0 0.0
    %7818 = vmatprep.subr.mxu0 0.0
    %7819 = vmatpush1.msra.mxu0 0.0
    %7820 = vmatprep.subr.mxu0 0.0
    %7821 = vmatpush1.msra.mxu0 0.0
    %7822 = vmatprep.subr.mxu0 0.0
    %7823 = vmatpush1.msra.mxu0 0.0
    %7824 = vmatprep.subr.mxu0 0.0
    %7825 = vmatpush1.msra.mxu0 0.0
    %7826 = vmatprep.subr.mxu0 0.0
    %7827 = vmatpush1.msra.mxu0 0.0
    %7828 = vmatprep.subr.mxu0 0.0
    %7829 = vmatpush1.msra.mxu0 0.0
    %7830 = vmatprep.subr.mxu0 0.0
    %7831 = vmatpush1.msra.mxu0 0.0
    %7832 = vmatprep.subr.mxu0 0.0
    %7833 = vmatpush1.msra.mxu0 0.0
    %7834 = vmatprep.subr.mxu0 0.0
    %7835 = vmatpush1.msra.mxu0 0.0
    %7836 = vmatprep.subr.mxu0 0.0
    %7837 = vmatpush1.msra.mxu0 0.0
    %7838 = vmatprep.subr.mxu0 0.0
    %7839 = vmatpush1.msra.mxu0 0.0
    %7840 = vmatprep.subr.mxu0 0.0
    %7841 = vmatpush1.msra.mxu0 0.0
    %7842 = vmatprep.subr.mxu0 0.0
    %7843 = vmatpush1.msra.mxu0 0.0
    %7844 = vmatprep.mubr.f32.mxu0 0.0
    %7845 = vmatmul.mubr.f32.gmra.mrb[0].mxu0 %v7778
    %v7846 = vpop.f32.mrb[0].mxu0
    %v7847 = vadd.f32 0.0, %v7846
    %v7848 = vpop.f32.mrb[0].mxu0
    %7849 = vdwg.mxu0
    %v7850 = vld [vmem:[%s22] sm:$0xff]
    %v7851 = vld [vmem:[%s22 + $0x8] sm:$0xff]
    %v7852 = vld [vmem:[%s22 + $0x10] sm:$0xff]
    %v7853 = vld [vmem:[%s22 + $0x18] sm:$0xff]
    %v7854 = vld [vmem:[%s23] sm:$0x1]
    %v7856 = vlaneseq
    %v7857 = vshrl.u32 %v7856, 7
    %v7858 = vsub.s32 0, %v7857
    %v7859 = vrot.slane %v7854, %v7858
    %v7862 = vsel %vm78, %v7847, 0
    %7864 = vmatprep.subr.mxu0 0.0
    %7865 = vmatpush1.msra.mxu0 %v7850
    %7866 = vmatprep.subr.mxu0 0.0
    %7867 = vmatpush1.msra.mxu0 %v7851
    %7868 = vmatprep.subr.mxu0 0.0
    %7869 = vmatpush1.msra.mxu0 %v7852
    %7870 = vmatprep.subr.mxu0 0.0
    %7871 = vmatpush1.msra.mxu0 %v7853
    %7872 = vmatprep.subr.mxu0 0.0
    %7873 = vmatpush1.msra.mxu0 0.0
    %7874 = vmatprep.subr.mxu0 0.0
    %7875 = vmatpush1.msra.mxu0 0.0
    %7876 = vmatprep.subr.mxu0 0.0
    %7877 = vmatpush1.msra.mxu0 0.0
    %7878 = vmatprep.subr.mxu0 0.0
    %7879 = vmatpush1.msra.mxu0 0.0
    %7880 = vmatprep.subr.mxu0 0.0
    %7881 = vmatpush1.msra.mxu0 0.0
    %7882 = vmatprep.subr.mxu0 0.0
    %7883 = vmatpush1.msra.mxu0 0.0
    %7884 = vmatprep.subr.mxu0 0.0
    %7885 = vmatpush1.msra.mxu0 0.0
    %7886 = vmatprep.subr.mxu0 0.0
    %7887 = vmatpush1.msra.mxu0 0.0
    %7888 = vmatprep.subr.mxu0 0.0
    %7889 = vmatpush1.msra.mxu0 0.0
    %7890 = vmatprep.subr.mxu0 0.0
    %7891 = vmatpush1.msra.mxu0 0.0
    %7892 = vmatprep.subr.mxu0 0.0
    %7893 = vmatpush1.msra.mxu0 0.0
    %7894 = vmatprep.subr.mxu0 0.0
    %7895 = vmatpush1.msra.mxu0 0.0
    %7896 = vmatprep.subr.mxu0 0.0
    %7897 = vmatpush1.msra.mxu0 0.0
    %7898 = vmatprep.subr.mxu0 0.0
    %7899 = vmatpush1.msra.mxu0 0.0
    %7900 = vmatprep.subr.mxu0 0.0
    %7901 = vmatpush1.msra.mxu0 0.0
    %7902 = vmatprep.subr.mxu0 0.0
    %7903 = vmatpush1.msra.mxu0 0.0
    %7904 = vmatprep.subr.mxu0 0.0
    %7905 = vmatpush1.msra.mxu0 0.0
    %7906 = vmatprep.subr.mxu0 0.0
    %7907 = vmatpush1.msra.mxu0 0.0
    %7908 = vmatprep.subr.mxu0 0.0
    %7909 = vmatpush1.msra.mxu0 0.0
    %7910 = vmatprep.subr.mxu0 0.0
    %7911 = vmatpush1.msra.mxu0 0.0
    %7912 = vmatprep.subr.mxu0 0.0
    %7913 = vmatpush1.msra.mxu0 0.0
    %7914 = vmatprep.subr.mxu0 0.0
    %7915 = vmatpush1.msra.mxu0 0.0
    %7916 = vmatprep.subr.mxu0 0.0
    %7917 = vmatpush1.msra.mxu0 0.0
    %7918 = vmatprep.subr.mxu0 0.0
    %7919 = vmatpush1.msra.mxu0 0.0
    %7920 = vmatprep.subr.mxu0 0.0
    %7921 = vmatpush1.msra.mxu0 0.0
    %7922 = vmatprep.subr.mxu0 0.0
    %7923 = vmatpush1.msra.mxu0 0.0
    %7924 = vmatprep.subr.mxu0 0.0
    %7925 = vmatpush1.msra.mxu0 0.0
    %7926 = vmatprep.subr.mxu0 0.0
    %7927 = vmatpush1.msra.mxu0 0.0
    %7928 = vmatprep.mubr.f32.mxu0 0.0
    %7929 = vmatmul.mubr.f32.gmra.mrb[0].mxu0 %v7862
    %v7930 = vpop.f32.mrb[0].mxu0
    %v7931 = vadd.f32 %v7859, %v7930
    %v7932 = vpop.f32.mrb[0].mxu0
    %7933 = vdwg.mxu0
    %vm7934 = vcmask 74752
    %7935 = vst.msk [vmem:[#allocation4] sm:$0x3] %vm7934, %v7931
    // Predicated region
    $region98: #{_lambda_.1} parent=1 // pred_check
      _
    $region99: #{_lambda_.1} parent=1 // pred_check_branch
      %7937 = sbr.rel (0) target = $region101
    $region100: #{_lambda_.1} parent=1 // pred_region
      %s7939 = ssub.s32 32, 32
      %7940 = vsyncadd [#allocation5], %s7939
      %s7942 = sshll.u32 [#allocation4], 4
      %s7943 = int_to_ptr.vmem [resolvable:$true] %s7942
      %7945 = dma.vmem_to_hbm [thread:$0]  %s7943, 32, %s24, [#allocation5]
    $region101: #{_lambda_.1} parent=1 // pred_fallthru
      _
    // Predicated region
    $region102: #{_lambda_.1} parent=1 // pred_check
      _
    $region103: #{_lambda_.1} parent=1 // pred_check_branch
      %7947 = sbr.rel (0) target = $region105
    $region104: #{_lambda_.1} parent=1 // pred_region
      %7948 = dma.done [#allocation5], 32
    $region105: #{_lambda_.1} parent=1 // pred_fallthru
      _
    %7949 = vsyncpa [#allocation5], 1

</llo_original>
